<compile_context>
chip_gen: v5e
topology: v5e:2x2
jax: 0.10.0
libtpu: 0.0.40
codegen_flags: <defaults>
</compile_context>

<pallas_src>
import jax
import jax.numpy as jnp
from jax import lax
from jax.experimental import pallas as pl
from jax.experimental.pallas import tpu as pltpu  # noqa: F401  (TPU backend)


# ----------------------------- config (cfg) ---------------------------------
class cfg:
    num_bits_per_vector = 8
    input_size = num_bits_per_vector + 2          # 10
    num_units = 32
    num_layers = 1                                # kernel hard-codes 1 layer
    num_read_heads = 1                            # kernel hard-codes 1 read head
    num_write_heads = 1                           # kernel hard-codes 1 write head
    num_memory_locations = 16
    memory_size = 16
    conv_shift_range = 1
    clip_value = 20.0
    output_size = num_bits_per_vector             # 8
    init_mode = "constant"


HEAD_R = cfg.memory_size + 1 + 1 + (2 * cfg.conv_shift_range + 1) + 1   # 22
HEAD_W = HEAD_R + 2 * cfg.memory_size                                    # 54
SHIFT_S = 2 * cfg.conv_shift_range + 1                                   # 3
ADDR = HEAD_R                                                            # 22

# Unroll the in-kernel time loop fully for short sequences.
_UNROLL_MAX_T = 32


# ----------------------------- in-kernel helpers ----------------------------
def _sigmoid(x):
    return 1.0 / (1.0 + jnp.exp(-x))


def _softplus(x):
    # numerically stable log(1 + exp(x))
    return jnp.maximum(x, 0.0) + jnp.log(1.0 + jnp.exp(-jnp.abs(x)))


def _circ_shift(x, off, n):
    # y[:, i] = x[:, (i - off) % n], off is a static python int in [0, n)
    if off == 0:
        return x
    return jnp.concatenate([x[:, n - off:], x[:, :n - off]], axis=1)


def _addressing(head, m, a_tm1):
    """NTM addressing (content + interpolation + shift conv + sharpening).

    Works for any leading batch dimension; the kernel calls it once per step
    on the read+write heads stacked along the batch axis.
    """
    M = cfg.memory_size
    N = cfg.num_memory_locations
    S = SHIFT_S

    k = jnp.tanh(head[:, :M])                                  # (B2, M)
    beta = _softplus(head[:, M:M + 1])                         # (B2, 1)
    g = _sigmoid(head[:, M + 1:M + 2])                         # (B2, 1)
    s_logits = head[:, M + 2:M + 2 + S]                        # (B2, S)
    s_exp = jnp.exp(s_logits - jnp.max(s_logits, axis=1, keepdims=True))
    s = s_exp / jnp.sum(s_exp, axis=1, keepdims=True)          # softmax
    gamma = _softplus(head[:, M + 2 + S:M + 3 + S])            # (B2, 1)

    # cosine similarity content addressing
    inner = jnp.sum(m * k[:, None, :], axis=2)                 # (B2, N)
    k_norm = jnp.sqrt(jnp.sum(k * k, axis=1, keepdims=True))   # (B2, 1)
    m_norm = jnp.sqrt(jnp.sum(m * m, axis=2))                  # (B2, N)
    K = inner / (k_norm * m_norm + 1e-8)
    # stabilized softmax over beta*K (identical result, no overflow)
    bK = beta * K
    bK = bK - jnp.max(bK, axis=1, keepdims=True)
    K_exp = jnp.exp(bK)
    w_c = K_exp / jnp.sum(K_exp, axis=1, keepdims=True)

    # interpolation with previous attention
    w_g = g * w_c + (1.0 - g) * a_tm1

    # circular shift convolution (equivalent to the s_matrix construction in
    # the reference: w_conv[:, i] = sum_j s_pad[:, j] * w_g[:, (i - j) % N])
    w_conv = jnp.zeros_like(w_g)
    for j in range(S):
        off = j if j <= cfg.conv_shift_range else j - S        # signed shift
        w_conv = w_conv + s[:, j:j + 1] * _circ_shift(w_g, off % N, N)

    # sharpening: (w_conv + eps) ** gamma  (eps guards log(0) -> NaN)
    w_sharp = jnp.exp(gamma * jnp.log(w_conv + 1e-8))
    w = w_sharp / jnp.sum(w_sharp, axis=1, keepdims=True)
    return w


# ------------------------------- Pallas kernel ------------------------------
def make_ntm_kernel(unroll, batch):
    """Build a whole-sequence NTM kernel. `unroll` / `batch` are static."""
    B = batch

    def ntm_seq_kernel(
            # sequence input + initial state
            x_ref, h0_ref, c0_ref, m0_ref, r0_ref, ar0_ref, aw0_ref,
            # fused parameters (weights stored (in_features, out_features))
            wz_ref, bz_ref, wheads_ref, bheads_ref,
            wo_ref, bo_ref, wpost_ref, bpost_ref,
            # output: (T, B, output_size)
            y_ref):
        f32 = jnp.float32
        U = cfg.num_units
        M = cfg.memory_size
        T = x_ref.shape[0]

        # --- hoist all weight / bias reads out of the time loop -------------
        wz = wz_ref[...]              # (In + M + U, 4U)  fused prep+LSTM gates
        bz = bz_ref[...]              # (1, 4U)
        wheads = wheads_ref[...]      # (U, HEAD_R + HEAD_W)
        bheads = bheads_ref[...]
        wo = wo_ref[...]              # (U + M, U)
        bo = bo_ref[...]
        wpost = wpost_ref[...]        # (U, out)
        bpost = bpost_ref[...]

        init_carry = (h0_ref[...], c0_ref[...], m0_ref[...],
                      r0_ref[...], ar0_ref[...], aw0_ref[...])

        def step(t, carry):
            h_prev, c_prev, m, r_prev, a_r, a_w = carry
            x = x_ref[t]                                       # (B, In)

            # controller LSTM (single layer). line_prep is pre-folded into wz
            # on the host: gates = x@Wx + r_prev@(Wp@Wh_prep) + h_prev@Whh + b.
            # TODO(synk): the custom LSTMCell class is not provided in the
            #             reference; a standard (i,f,g,o) LSTM cell is used.
            z = jnp.concatenate([x, r_prev, h_prev], axis=1)   # (B, In+M+U)
            gates = jnp.dot(z, wz, preferred_element_type=f32) + bz
            i_g = _sigmoid(gates[:, 0 * U:1 * U])
            f_g = _sigmoid(gates[:, 1 * U:2 * U])
            g_g = jnp.tanh(gates[:, 2 * U:3 * U])
            o_g = _sigmoid(gates[:, 3 * U:4 * U])
            c_new = f_g * c_prev + i_g * g_g
            h_new = o_g * jnp.tanh(c_new)                      # stored un-clamped

            h_cl = jnp.clip(h_new, -cfg.clip_value, cfg.clip_value)

            # fused read+write head projection:
            # cols [0:22]=read addr, [22:44]=write addr, [44:60]=del, [60:76]=add
            heads = jnp.dot(h_cl, wheads, preferred_element_type=f32) + bheads

            # batched addressing for both heads in one pass over (2B, ...)
            addr_both = jnp.concatenate(
                [heads[:, :ADDR], heads[:, ADDR:2 * ADDR]], axis=0)   # (2B, 22)
            a_both = jnp.concatenate([a_r, a_w], axis=0)              # (2B, N)
            m_both = jnp.concatenate([m, m], axis=0)                  # (2B, N, M)
            w_both = _addressing(addr_both, m_both, a_both)           # (2B, N)
            w_r = w_both[:B]
            w_w = w_both[B:]

            # read from m_tm1
            r_new = jnp.sum(w_r[:, :, None] * m, axis=1)       # (B, M)

            # write (erase + add) into memory: single outer-product broadcast
            del_vec = _sigmoid(heads[:, 2 * ADDR:2 * ADDR + M])          # (B, M)
            add_vec = jnp.tanh(heads[:, 2 * ADDR + M:2 * ADDR + 2 * M])  # (B, M)
            m_new = m + w_w[:, :, None] * (add_vec[:, None, :]
                                           - m * del_vec[:, None, :])

            # line_ou on cat(h_cl, r_new), clamp, line_post + sigmoid.
            # TODO(synk): cfg.output_func is not given in the reference;
            #             sigmoid is assumed.
            yc = jnp.concatenate([h_cl, r_new], axis=1)        # (B, U + M)
            y_cell = jnp.clip(jnp.dot(yc, wo, preferred_element_type=f32) + bo,
                              -cfg.clip_value, cfg.clip_value)
            y = _sigmoid(jnp.dot(y_cell, wpost, preferred_element_type=f32)
                         + bpost)

            y_ref[t] = y
            return (h_new, c_new, m_new, r_new, w_r, w_w)

        if unroll:
            carry = init_carry
            for t in range(T):                 # trace-time unroll (short T)
                carry = step(t, carry)
        else:
            lax.fori_loop(0, T, step, init_carry)

    return ntm_seq_kernel


# ------------------------------ host-side glue -------------------------------
def init_params(key):
    """Deterministic parameter init; weights pre-fused for the kernel."""
    def lin(k, fan_in, fan_out):
        bound = 1.0 / jnp.sqrt(jnp.float32(fan_in))
        kw, kb = jax.random.split(k)
        w = jax.random.uniform(kw, (fan_in, fan_out), jnp.float32, -bound, bound)
        b = jax.random.uniform(kb, (1, fan_out), jnp.float32, -bound, bound)
        return w, b

    ks = jax.random.split(key, 8)
    U, In, M = cfg.num_units, cfg.input_size, cfg.memory_size
    wp, bp = lin(ks[0], cfg.num_read_heads * M, U)                  # line_prep
    wih, bih = lin(ks[1], In + U, 4 * U)                            # LSTM input-hidden
    whh, bhh = lin(ks[2], U, 4 * U)                                 # LSTM hidden-hidden
    wr, br = lin(ks[3], U, cfg.num_read_heads * HEAD_R)             # r_heads
    ww, bw = lin(ks[4], U, cfg.num_write_heads * HEAD_W)            # w_heads
    wo, bo = lin(ks[5], U + cfg.num_read_heads * M, U)              # line_ou
    wpost, bpost = lin(ks[6], U, cfg.output_size)                   # line_post

    # host-side fusion (done once; kernel sees fused matrices):
    #   gates = x @ Wx + prep(r_prev) @ Wh_prep + h_prev @ Whh + b
    #         = [x | r_prev | h_prev] @ [Wx ; Wp@Wh_prep ; Whh] + b_fused
    w_x = wih[:In]                                   # (In, 4U)
    w_hp = wih[In:]                                  # (U, 4U)
    wz = jnp.concatenate([w_x, wp @ w_hp, whh], axis=0)      # (In + M + U, 4U)
    bz = bih + bhh + bp @ w_hp                               # (1, 4U)

    wheads = jnp.concatenate([wr, ww], axis=1)       # (U, HEAD_R + HEAD_W)
    bheads = jnp.concatenate([br, bw], axis=1)       # (1, HEAD_R + HEAD_W)
    return (wz, bz, wheads, bheads, wo, bo, wpost, bpost)


def init_state(batch):
    """init_mode == 'constant' initial NTM state, expanded to the batch."""
    U, M, N = cfg.num_units, cfg.memory_size, cfg.num_memory_locations
    h0 = jnp.full((batch, U), 1e-6, jnp.float32)
    c0 = jnp.full((batch, U), 1e-6, jnp.float32)
    m0 = jnp.full((batch, N, M), 1e-6, jnp.float32)
    r0 = jnp.tanh(jnp.full((batch, M), 1e-6, jnp.float32))
    a0_logits = jnp.concatenate(
        [jnp.full((1, 1), 100.0, jnp.float32),
         jnp.full((1, N - 1), 1e-6, jnp.float32)], axis=1)
    a0 = jax.nn.softmax(a0_logits, axis=1)
    a0 = jnp.broadcast_to(a0, (batch, N))
    return h0, c0, m0, r0, a0, a0


@jax.jit
def ntm_forward(X, params):
    """X: (B, input_size, T) -> y: (B, output_size, T).

    Entire sequence runs inside one pallas_call; weights and recurrent state
    live in VMEM for all T steps.
    TODO(synk): the optional `mask` / `return_sequence` arguments of the
                PyTorch forward are not implemented (mask=None path only).
    """
    B, _, T = X.shape
    x_seq = jnp.transpose(X, (2, 0, 1)).astype(jnp.float32)      # (T, B, In)
    state = init_state(B)

    kernel = make_ntm_kernel(unroll=(T <= _UNROLL_MAX_T), batch=B)
    y_seq = pl.pallas_call(
        kernel,
        out_shape=jax.ShapeDtypeStruct((T, B, cfg.output_size), jnp.float32),
    )(x_seq, *state, *params)

    return jnp.transpose(y_seq, (1, 2, 0))                       # (B, out, T)


# ------------------------------------ main -----------------------------------
if __name__ == "__main__":
    key = jax.random.PRNGKey(0)
    k_x, k_p = jax.random.split(key)

    B, T = 2, 8
    X = jax.random.normal(k_x, (B, cfg.input_size, T), jnp.float32)
    params = init_params(k_p)

    y = ntm_forward(X, params)
    y = jax.block_until_ready(y)

    assert y.shape == (B, cfg.output_size, T), y.shape
    assert bool(jnp.all(jnp.isfinite(y)))
    print("KERNEL_OK")
</pallas_src>

<mosaic_0001>
module attributes {stable_mosaic.version = 11 : i64} {
  func.func @ntm_seq_kernel(%arg0: memref<8x2x10xf32, #tpu.memory_space<vmem>>, %arg1: memref<2x32xf32, #tpu.memory_space<vmem>>, %arg2: memref<2x32xf32, #tpu.memory_space<vmem>>, %arg3: memref<2x16x16xf32, #tpu.memory_space<vmem>>, %arg4: memref<2x16xf32, #tpu.memory_space<vmem>>, %arg5: memref<2x16xf32, #tpu.memory_space<vmem>>, %arg6: memref<2x16xf32, #tpu.memory_space<vmem>>, %arg7: memref<58x128xf32, #tpu.memory_space<vmem>>, %arg8: memref<1x128xf32, #tpu.memory_space<vmem>>, %arg9: memref<32x76xf32, #tpu.memory_space<vmem>>, %arg10: memref<1x76xf32, #tpu.memory_space<vmem>>, %arg11: memref<48x32xf32, #tpu.memory_space<vmem>>, %arg12: memref<1x32xf32, #tpu.memory_space<vmem>>, %arg13: memref<32x8xf32, #tpu.memory_space<vmem>>, %arg14: memref<1x8xf32, #tpu.memory_space<vmem>>, %arg15: memref<8x2x8xf32, #tpu.memory_space<vmem>>) attributes {dimension_semantics = [], scalar_prefetch = 0 : i64, scratch_operands = 0 : i64, tpu.core_type = #tpu.core_type<tc>} {
    %c0 = arith.constant 0 : index
    %c0_0 = arith.constant 0 : index
    %0 = vector.load %arg7[%c0, %c0_0] : memref<58x128xf32, #tpu.memory_space<vmem>>, vector<58x128xf32>
    %c0_1 = arith.constant 0 : index
    %c0_2 = arith.constant 0 : index
    %1 = vector.load %arg8[%c0_1, %c0_2] : memref<1x128xf32, #tpu.memory_space<vmem>>, vector<1x128xf32>
    %c0_3 = arith.constant 0 : index
    %c0_4 = arith.constant 0 : index
    %2 = vector.load %arg9[%c0_3, %c0_4] : memref<32x76xf32, #tpu.memory_space<vmem>>, vector<32x76xf32>
    %c0_5 = arith.constant 0 : index
    %c0_6 = arith.constant 0 : index
    %3 = vector.load %arg10[%c0_5, %c0_6] : memref<1x76xf32, #tpu.memory_space<vmem>>, vector<1x76xf32>
    %c0_7 = arith.constant 0 : index
    %c0_8 = arith.constant 0 : index
    %4 = vector.load %arg11[%c0_7, %c0_8] : memref<48x32xf32, #tpu.memory_space<vmem>>, vector<48x32xf32>
    %c0_9 = arith.constant 0 : index
    %c0_10 = arith.constant 0 : index
    %5 = vector.load %arg12[%c0_9, %c0_10] : memref<1x32xf32, #tpu.memory_space<vmem>>, vector<1x32xf32>
    %c0_11 = arith.constant 0 : index
    %c0_12 = arith.constant 0 : index
    %6 = vector.load %arg13[%c0_11, %c0_12] : memref<32x8xf32, #tpu.memory_space<vmem>>, vector<32x8xf32>
    %c0_13 = arith.constant 0 : index
    %c0_14 = arith.constant 0 : index
    %7 = vector.load %arg14[%c0_13, %c0_14] : memref<1x8xf32, #tpu.memory_space<vmem>>, vector<1x8xf32>
    %c0_15 = arith.constant 0 : index
    %c0_16 = arith.constant 0 : index
    %8 = vector.load %arg1[%c0_15, %c0_16] : memref<2x32xf32, #tpu.memory_space<vmem>>, vector<2x32xf32>
    %c0_17 = arith.constant 0 : index
    %c0_18 = arith.constant 0 : index
    %9 = vector.load %arg2[%c0_17, %c0_18] : memref<2x32xf32, #tpu.memory_space<vmem>>, vector<2x32xf32>
    %c0_19 = arith.constant 0 : index
    %c0_20 = arith.constant 0 : index
    %c0_21 = arith.constant 0 : index
    %10 = vector.load %arg3[%c0_19, %c0_20, %c0_21] : memref<2x16x16xf32, #tpu.memory_space<vmem>>, vector<2x16x16xf32>
    %c0_22 = arith.constant 0 : index
    %c0_23 = arith.constant 0 : index
    %11 = vector.load %arg4[%c0_22, %c0_23] : memref<2x16xf32, #tpu.memory_space<vmem>>, vector<2x16xf32>
    %c0_24 = arith.constant 0 : index
    %c0_25 = arith.constant 0 : index
    %12 = vector.load %arg5[%c0_24, %c0_25] : memref<2x16xf32, #tpu.memory_space<vmem>>, vector<2x16xf32>
    %c0_26 = arith.constant 0 : index
    %c0_27 = arith.constant 0 : index
    %13 = vector.load %arg6[%c0_26, %c0_27] : memref<2x16xf32, #tpu.memory_space<vmem>>, vector<2x16xf32>
    %c0_28 = arith.constant 0 : index
    %c0_29 = arith.constant 0 : index
    %c0_30 = arith.constant 0 : index
    %14 = vector.load %arg0[%c0_28, %c0_29, %c0_30] : memref<8x2x10xf32, #tpu.memory_space<vmem>>, vector<1x2x10xf32>
    %15 = vector.shape_cast %14 : vector<1x2x10xf32> to vector<2x10xf32>
    %16 = tpu.concatenate %15, %11, %8 in 1 : vector<2x10xf32>, vector<2x16xf32>, vector<2x32xf32> -> vector<2x58xf32>
    %cst = arith.constant dense<0.000000e+00> : vector<2x128xf32>
    %17 = tpu.matmul %16, %0, %cst {dimension_numbers = #tpu.dot_dimension_numbers<[1], [0], [0], [1], [0, 0, 1, 1], [], []>} : vector<2x58xf32>, vector<58x128xf32>, vector<2x128xf32> -> vector<2x128xf32>
    %18 = vector.broadcast %1 : vector<1x128xf32> to vector<2x128xf32>
    %19 = arith.addf %17, %18 : vector<2x128xf32>
    %20 = vector.extract_strided_slice %19 {offsets = [0, 0], sizes = [2, 32], strides = [1, 1]} : vector<2x128xf32> to vector<2x32xf32>
    %cst_31 = arith.constant 0.000000e+00 : f32
    %21 = vector.broadcast %cst_31 : f32 to vector<2x32xf32>
    %22 = arith.subf %21, %20 : vector<2x32xf32>
    %23 = math.exp %22 : vector<2x32xf32>
    %cst_32 = arith.constant 1.000000e+00 : f32
    %24 = vector.broadcast %cst_32 : f32 to vector<2x32xf32>
    %25 = arith.addf %24, %23 : vector<2x32xf32>
    %cst_33 = arith.constant 1.000000e+00 : f32
    %26 = vector.broadcast %cst_33 : f32 to vector<2x32xf32>
    %27 = arith.divf %26, %25 : vector<2x32xf32>
    %28 = vector.extract_strided_slice %19 {offsets = [0, 32], sizes = [2, 32], strides = [1, 1]} : vector<2x128xf32> to vector<2x32xf32>
    %cst_34 = arith.constant 0.000000e+00 : f32
    %29 = vector.broadcast %cst_34 : f32 to vector<2x32xf32>
    %30 = arith.subf %29, %28 : vector<2x32xf32>
    %31 = math.exp %30 : vector<2x32xf32>
    %cst_35 = arith.constant 1.000000e+00 : f32
    %32 = vector.broadcast %cst_35 : f32 to vector<2x32xf32>
    %33 = arith.addf %32, %31 : vector<2x32xf32>
    %cst_36 = arith.constant 1.000000e+00 : f32
    %34 = vector.broadcast %cst_36 : f32 to vector<2x32xf32>
    %35 = arith.divf %34, %33 : vector<2x32xf32>
    %36 = vector.extract_strided_slice %19 {offsets = [0, 64], sizes = [2, 32], strides = [1, 1]} : vector<2x128xf32> to vector<2x32xf32>
    %37 = math.tanh %36 : vector<2x32xf32>
    %38 = vector.extract_strided_slice %19 {offsets = [0, 96], sizes = [2, 32], strides = [1, 1]} : vector<2x128xf32> to vector<2x32xf32>
    %cst_37 = arith.constant 0.000000e+00 : f32
    %39 = vector.broadcast %cst_37 : f32 to vector<2x32xf32>
    %40 = arith.subf %39, %38 : vector<2x32xf32>
    %41 = math.exp %40 : vector<2x32xf32>
    %cst_38 = arith.constant 1.000000e+00 : f32
    %42 = vector.broadcast %cst_38 : f32 to vector<2x32xf32>
    %43 = arith.addf %42, %41 : vector<2x32xf32>
    %cst_39 = arith.constant 1.000000e+00 : f32
    %44 = vector.broadcast %cst_39 : f32 to vector<2x32xf32>
    %45 = arith.divf %44, %43 : vector<2x32xf32>
    %46 = arith.mulf %35, %9 : vector<2x32xf32>
    %47 = arith.mulf %27, %37 : vector<2x32xf32>
    %48 = arith.addf %46, %47 : vector<2x32xf32>
    %49 = math.tanh %48 : vector<2x32xf32>
    %50 = arith.mulf %45, %49 : vector<2x32xf32>
    %cst_40 = arith.constant -2.000000e+01 : f32
    %cst_41 = arith.constant 2.000000e+01 : f32
    %51 = vector.broadcast %cst_40 : f32 to vector<2x32xf32>
    %52 = arith.maximumf %51, %50 : vector<2x32xf32>
    %53 = vector.broadcast %cst_41 : f32 to vector<2x32xf32>
    %54 = arith.minimumf %53, %52 : vector<2x32xf32>
    %cst_42 = arith.constant dense<0.000000e+00> : vector<2x76xf32>
    %55 = tpu.matmul %54, %2, %cst_42 {dimension_numbers = #tpu.dot_dimension_numbers<[1], [0], [0], [1], [0, 0, 1, 1], [], []>} : vector<2x32xf32>, vector<32x76xf32>, vector<2x76xf32> -> vector<2x76xf32>
    %56 = vector.broadcast %3 : vector<1x76xf32> to vector<2x76xf32>
    %57 = arith.addf %55, %56 : vector<2x76xf32>
    %58 = vector.extract_strided_slice %57 {offsets = [0, 0], sizes = [2, 22], strides = [1, 1]} : vector<2x76xf32> to vector<2x22xf32>
    %59 = vector.extract_strided_slice %57 {offsets = [0, 22], sizes = [2, 22], strides = [1, 1]} : vector<2x76xf32> to vector<2x22xf32>
    %60 = tpu.concatenate %58, %59 in 0 : vector<2x22xf32>, vector<2x22xf32> -> vector<4x22xf32>
    %61 = tpu.concatenate %12, %13 in 0 : vector<2x16xf32>, vector<2x16xf32> -> vector<4x16xf32>
    %62 = tpu.concatenate %10, %10 in 0 : vector<2x16x16xf32>, vector<2x16x16xf32> -> vector<4x16x16xf32>
    %63 = vector.extract_strided_slice %60 {offsets = [0, 0], sizes = [4, 16], strides = [1, 1]} : vector<4x22xf32> to vector<4x16xf32>
    %64 = math.tanh %63 : vector<4x16xf32>
    %65 = vector.extract_strided_slice %60 {offsets = [0, 16], sizes = [4, 1], strides = [1, 1]} : vector<4x22xf32> to vector<4x1xf32>
    %cst_43 = arith.constant 0.000000e+00 : f32
    %66 = vector.broadcast %cst_43 : f32 to vector<4x1xf32>
    %67 = arith.maximumf %65, %66 : vector<4x1xf32>
    %68 = math.absf %65 : vector<4x1xf32>
    %cst_44 = arith.constant 0.000000e+00 : f32
    %69 = vector.broadcast %cst_44 : f32 to vector<4x1xf32>
    %70 = arith.subf %69, %68 : vector<4x1xf32>
    %71 = math.exp %70 : vector<4x1xf32>
    %cst_45 = arith.constant 1.000000e+00 : f32
    %72 = vector.broadcast %cst_45 : f32 to vector<4x1xf32>
    %73 = arith.addf %72, %71 : vector<4x1xf32>
    %74 = math.log %73 : vector<4x1xf32>
    %75 = arith.addf %67, %74 : vector<4x1xf32>
    %76 = vector.extract_strided_slice %60 {offsets = [0, 17], sizes = [4, 1], strides = [1, 1]} : vector<4x22xf32> to vector<4x1xf32>
    %cst_46 = arith.constant 0.000000e+00 : f32
    %77 = vector.broadcast %cst_46 : f32 to vector<4x1xf32>
    %78 = arith.subf %77, %76 : vector<4x1xf32>
    %79 = math.exp %78 : vector<4x1xf32>
    %cst_47 = arith.constant 1.000000e+00 : f32
    %80 = vector.broadcast %cst_47 : f32 to vector<4x1xf32>
    %81 = arith.addf %80, %79 : vector<4x1xf32>
    %cst_48 = arith.constant 1.000000e+00 : f32
    %82 = vector.broadcast %cst_48 : f32 to vector<4x1xf32>
    %83 = arith.divf %82, %81 : vector<4x1xf32>
    %84 = vector.extract_strided_slice %60 {offsets = [0, 18], sizes = [4, 3], strides = [1, 1]} : vector<4x22xf32> to vector<4x3xf32>
    %cst_49 = arith.constant dense<0xFF800000> : vector<4xf32>
    %85 = vector.multi_reduction <maximumf>, %84, %cst_49 [1] : vector<4x3xf32> to vector<4xf32>
    %86 = vector.shape_cast %85 : vector<4xf32> to vector<4x1xf32>
    %87 = vector.broadcast %86 : vector<4x1xf32> to vector<4x3xf32>
    %88 = arith.subf %84, %87 : vector<4x3xf32>
    %89 = math.exp %88 : vector<4x3xf32>
    %cst_50 = arith.constant dense<0.000000e+00> : vector<4xf32>
    %90 = vector.multi_reduction <add>, %89, %cst_50 [1] : vector<4x3xf32> to vector<4xf32>
    %91 = vector.shape_cast %90 : vector<4xf32> to vector<4x1xf32>
    %92 = vector.broadcast %91 : vector<4x1xf32> to vector<4x3xf32>
    %93 = arith.divf %89, %92 : vector<4x3xf32>
    %94 = vector.extract_strided_slice %60 {offsets = [0, 21], sizes = [4, 1], strides = [1, 1]} : vector<4x22xf32> to vector<4x1xf32>
    %cst_51 = arith.constant 0.000000e+00 : f32
    %95 = vector.broadcast %cst_51 : f32 to vector<4x1xf32>
    %96 = arith.maximumf %94, %95 : vector<4x1xf32>
    %97 = math.absf %94 : vector<4x1xf32>
    %cst_52 = arith.constant 0.000000e+00 : f32
    %98 = vector.broadcast %cst_52 : f32 to vector<4x1xf32>
    %99 = arith.subf %98, %97 : vector<4x1xf32>
    %100 = math.exp %99 : vector<4x1xf32>
    %cst_53 = arith.constant 1.000000e+00 : f32
    %101 = vector.broadcast %cst_53 : f32 to vector<4x1xf32>
    %102 = arith.addf %101, %100 : vector<4x1xf32>
    %103 = math.log %102 : vector<4x1xf32>
    %104 = arith.addf %96, %103 : vector<4x1xf32>
    %105 = vector.shape_cast %64 : vector<4x16xf32> to vector<4x1x16xf32>
    %106 = vector.broadcast %105 : vector<4x1x16xf32> to vector<4x16x16xf32>
    %107 = arith.mulf %62, %106 : vector<4x16x16xf32>
    %cst_54 = arith.constant dense<0.000000e+00> : vector<4x16xf32>
    %108 = vector.multi_reduction <add>, %107, %cst_54 [2] : vector<4x16x16xf32> to vector<4x16xf32>
    %109 = arith.mulf %64, %64 : vector<4x16xf32>
    %cst_55 = arith.constant dense<0.000000e+00> : vector<4xf32>
    %110 = vector.multi_reduction <add>, %109, %cst_55 [1] : vector<4x16xf32> to vector<4xf32>
    %111 = vector.shape_cast %110 : vector<4xf32> to vector<4x1xf32>
    %112 = math.sqrt %111 : vector<4x1xf32>
    %113 = arith.mulf %62, %62 : vector<4x16x16xf32>
    %cst_56 = arith.constant dense<0.000000e+00> : vector<4x16xf32>
    %114 = vector.multi_reduction <add>, %113, %cst_56 [2] : vector<4x16x16xf32> to vector<4x16xf32>
    %115 = math.sqrt %114 : vector<4x16xf32>
    %116 = vector.broadcast %112 : vector<4x1xf32> to vector<4x16xf32>
    %117 = arith.mulf %116, %115 : vector<4x16xf32>
    %cst_57 = arith.constant 9.99999993E-9 : f32
    %118 = vector.broadcast %cst_57 : f32 to vector<4x16xf32>
    %119 = arith.addf %117, %118 : vector<4x16xf32>
    %120 = arith.divf %108, %119 : vector<4x16xf32>
    %121 = vector.broadcast %75 : vector<4x1xf32> to vector<4x16xf32>
    %122 = arith.mulf %121, %120 : vector<4x16xf32>
    %cst_58 = arith.constant dense<0xFF800000> : vector<4xf32>
    %123 = vector.multi_reduction <maximumf>, %122, %cst_58 [1] : vector<4x16xf32> to vector<4xf32>
    %124 = vector.shape_cast %123 : vector<4xf32> to vector<4x1xf32>
    %125 = vector.broadcast %124 : vector<4x1xf32> to vector<4x16xf32>
    %126 = arith.subf %122, %125 : vector<4x16xf32>
    %127 = math.exp %126 : vector<4x16xf32>
    %cst_59 = arith.constant dense<0.000000e+00> : vector<4xf32>
    %128 = vector.multi_reduction <add>, %127, %cst_59 [1] : vector<4x16xf32> to vector<4xf32>
    %129 = vector.shape_cast %128 : vector<4xf32> to vector<4x1xf32>
    %130 = vector.broadcast %129 : vector<4x1xf32> to vector<4x16xf32>
    %131 = arith.divf %127, %130 : vector<4x16xf32>
    %132 = vector.broadcast %83 : vector<4x1xf32> to vector<4x16xf32>
    %133 = arith.mulf %132, %131 : vector<4x16xf32>
    %cst_60 = arith.constant 1.000000e+00 : f32
    %134 = vector.broadcast %cst_60 : f32 to vector<4x1xf32>
    %135 = arith.subf %134, %83 : vector<4x1xf32>
    %136 = vector.broadcast %135 : vector<4x1xf32> to vector<4x16xf32>
    %137 = arith.mulf %136, %61 : vector<4x16xf32>
    %138 = arith.addf %133, %137 : vector<4x16xf32>
    %cst_61 = arith.constant 0.000000e+00 : f32
    %139 = vector.broadcast %cst_61 : f32 to vector<4x16xf32>
    %140 = vector.extract_strided_slice %93 {offsets = [0, 0], sizes = [4, 1], strides = [1, 1]} : vector<4x3xf32> to vector<4x1xf32>
    %141 = vector.broadcast %140 : vector<4x1xf32> to vector<4x16xf32>
    %142 = arith.mulf %141, %138 : vector<4x16xf32>
    %143 = arith.addf %139, %142 : vector<4x16xf32>
    %144 = vector.extract_strided_slice %93 {offsets = [0, 1], sizes = [4, 1], strides = [1, 1]} : vector<4x3xf32> to vector<4x1xf32>
    %145 = vector.extract_strided_slice %138 {offsets = [0, 15], sizes = [4, 1], strides = [1, 1]} : vector<4x16xf32> to vector<4x1xf32>
    %146 = vector.extract_strided_slice %138 {offsets = [0, 0], sizes = [4, 15], strides = [1, 1]} : vector<4x16xf32> to vector<4x15xf32>
    %147 = tpu.concatenate %145, %146 in 1 : vector<4x1xf32>, vector<4x15xf32> -> vector<4x16xf32>
    %148 = vector.broadcast %144 : vector<4x1xf32> to vector<4x16xf32>
    %149 = arith.mulf %148, %147 : vector<4x16xf32>
    %150 = arith.addf %143, %149 : vector<4x16xf32>
    %151 = vector.extract_strided_slice %93 {offsets = [0, 2], sizes = [4, 1], strides = [1, 1]} : vector<4x3xf32> to vector<4x1xf32>
    %152 = vector.extract_strided_slice %138 {offsets = [0, 1], sizes = [4, 15], strides = [1, 1]} : vector<4x16xf32> to vector<4x15xf32>
    %153 = vector.extract_strided_slice %138 {offsets = [0, 0], sizes = [4, 1], strides = [1, 1]} : vector<4x16xf32> to vector<4x1xf32>
    %154 = tpu.concatenate %152, %153 in 1 : vector<4x15xf32>, vector<4x1xf32> -> vector<4x16xf32>
    %155 = vector.broadcast %151 : vector<4x1xf32> to vector<4x16xf32>
    %156 = arith.mulf %155, %154 : vector<4x16xf32>
    %157 = arith.addf %150, %156 : vector<4x16xf32>
    %cst_62 = arith.constant 9.99999993E-9 : f32
    %158 = vector.broadcast %cst_62 : f32 to vector<4x16xf32>
    %159 = arith.addf %157, %158 : vector<4x16xf32>
    %160 = math.log %159 : vector<4x16xf32>
    %161 = vector.broadcast %104 : vector<4x1xf32> to vector<4x16xf32>
    %162 = arith.mulf %161, %160 : vector<4x16xf32>
    %163 = math.exp %162 : vector<4x16xf32>
    %cst_63 = arith.constant dense<0.000000e+00> : vector<4xf32>
    %164 = vector.multi_reduction <add>, %163, %cst_63 [1] : vector<4x16xf32> to vector<4xf32>
    %165 = vector.shape_cast %164 : vector<4xf32> to vector<4x1xf32>
    %166 = vector.broadcast %165 : vector<4x1xf32> to vector<4x16xf32>
    %167 = arith.divf %163, %166 : vector<4x16xf32>
    %168 = vector.extract_strided_slice %167 {offsets = [0, 0], sizes = [2, 16], strides = [1, 1]} : vector<4x16xf32> to vector<2x16xf32>
    %169 = vector.extract_strided_slice %167 {offsets = [2, 0], sizes = [2, 16], strides = [1, 1]} : vector<4x16xf32> to vector<2x16xf32>
    %170 = vector.shape_cast %168 : vector<2x16xf32> to vector<2x16x1xf32>
    %171 = vector.broadcast %170 : vector<2x16x1xf32> to vector<2x16x16xf32>
    %172 = arith.mulf %171, %10 : vector<2x16x16xf32>
    %cst_64 = arith.constant dense<0.000000e+00> : vector<2x16xf32>
    %173 = vector.multi_reduction <add>, %172, %cst_64 [1] : vector<2x16x16xf32> to vector<2x16xf32>
    %174 = vector.extract_strided_slice %57 {offsets = [0, 44], sizes = [2, 16], strides = [1, 1]} : vector<2x76xf32> to vector<2x16xf32>
    %cst_65 = arith.constant 0.000000e+00 : f32
    %175 = vector.broadcast %cst_65 : f32 to vector<2x16xf32>
    %176 = arith.subf %175, %174 : vector<2x16xf32>
    %177 = math.exp %176 : vector<2x16xf32>
    %cst_66 = arith.constant 1.000000e+00 : f32
    %178 = vector.broadcast %cst_66 : f32 to vector<2x16xf32>
    %179 = arith.addf %178, %177 : vector<2x16xf32>
    %cst_67 = arith.constant 1.000000e+00 : f32
    %180 = vector.broadcast %cst_67 : f32 to vector<2x16xf32>
    %181 = arith.divf %180, %179 : vector<2x16xf32>
    %182 = vector.extract_strided_slice %57 {offsets = [0, 60], sizes = [2, 16], strides = [1, 1]} : vector<2x76xf32> to vector<2x16xf32>
    %183 = math.tanh %182 : vector<2x16xf32>
    %184 = vector.shape_cast %169 : vector<2x16xf32> to vector<2x16x1xf32>
    %185 = vector.shape_cast %183 : vector<2x16xf32> to vector<2x1x16xf32>
    %186 = vector.shape_cast %181 : vector<2x16xf32> to vector<2x1x16xf32>
    %187 = vector.broadcast %186 : vector<2x1x16xf32> to vector<2x16x16xf32>
    %188 = arith.mulf %10, %187 : vector<2x16x16xf32>
    %189 = vector.broadcast %185 : vector<2x1x16xf32> to vector<2x16x16xf32>
    %190 = arith.subf %189, %188 : vector<2x16x16xf32>
    %191 = vector.broadcast %184 : vector<2x16x1xf32> to vector<2x16x16xf32>
    %192 = arith.mulf %191, %190 : vector<2x16x16xf32>
    %193 = arith.addf %10, %192 : vector<2x16x16xf32>
    %194 = tpu.concatenate %54, %173 in 1 : vector<2x32xf32>, vector<2x16xf32> -> vector<2x48xf32>
    %cst_68 = arith.constant dense<0.000000e+00> : vector<2x32xf32>
    %195 = tpu.matmul %194, %4, %cst_68 {dimension_numbers = #tpu.dot_dimension_numbers<[1], [0], [0], [1], [0, 0, 1, 1], [], []>} : vector<2x48xf32>, vector<48x32xf32>, vector<2x32xf32> -> vector<2x32xf32>
    %196 = vector.broadcast %5 : vector<1x32xf32> to vector<2x32xf32>
    %197 = arith.addf %195, %196 : vector<2x32xf32>
    %cst_69 = arith.constant -2.000000e+01 : f32
    %cst_70 = arith.constant 2.000000e+01 : f32
    %198 = vector.broadcast %cst_69 : f32 to vector<2x32xf32>
    %199 = arith.maximumf %198, %197 : vector<2x32xf32>
    %200 = vector.broadcast %cst_70 : f32 to vector<2x32xf32>
    %201 = arith.minimumf %200, %199 : vector<2x32xf32>
    %cst_71 = arith.constant dense<0.000000e+00> : vector<2x8xf32>
    %202 = tpu.matmul %201, %6, %cst_71 {dimension_numbers = #tpu.dot_dimension_numbers<[1], [0], [0], [1], [0, 0, 1, 1], [], []>} : vector<2x32xf32>, vector<32x8xf32>, vector<2x8xf32> -> vector<2x8xf32>
    %203 = vector.broadcast %7 : vector<1x8xf32> to vector<2x8xf32>
    %204 = arith.addf %202, %203 : vector<2x8xf32>
    %cst_72 = arith.constant 0.000000e+00 : f32
    %205 = vector.broadcast %cst_72 : f32 to vector<2x8xf32>
    %206 = arith.subf %205, %204 : vector<2x8xf32>
    %207 = math.exp %206 : vector<2x8xf32>
    %cst_73 = arith.constant 1.000000e+00 : f32
    %208 = vector.broadcast %cst_73 : f32 to vector<2x8xf32>
    %209 = arith.addf %208, %207 : vector<2x8xf32>
    %cst_74 = arith.constant 1.000000e+00 : f32
    %210 = vector.broadcast %cst_74 : f32 to vector<2x8xf32>
    %211 = arith.divf %210, %209 : vector<2x8xf32>
    %c0_75 = arith.constant 0 : index
    %c0_76 = arith.constant 0 : index
    %c0_77 = arith.constant 0 : index
    %212 = vector.load %arg15[%c0_75, %c0_76, %c0_77] : memref<8x2x8xf32, #tpu.memory_space<vmem>>, vector<1x2x8xf32>
    %213 = vector.shape_cast %212 : vector<1x2x8xf32> to vector<2x8xf32>
    %214 = vector.shape_cast %211 : vector<2x8xf32> to vector<1x2x8xf32>
    tpu.vector_store %arg15[%c0_75, %c0_76, %c0_77], %214 {strides = array<i32>} : memref<8x2x8xf32, #tpu.memory_space<vmem>>, vector<1x2x8xf32>,
    %c1 = arith.constant 1 : index
    %c0_78 = arith.constant 0 : index
    %c0_79 = arith.constant 0 : index
    %215 = vector.load %arg0[%c1, %c0_78, %c0_79] : memref<8x2x10xf32, #tpu.memory_space<vmem>>, vector<1x2x10xf32>
    %216 = vector.shape_cast %215 : vector<1x2x10xf32> to vector<2x10xf32>
    %217 = tpu.concatenate %216, %173, %50 in 1 : vector<2x10xf32>, vector<2x16xf32>, vector<2x32xf32> -> vector<2x58xf32>
    %cst_80 = arith.constant dense<0.000000e+00> : vector<2x128xf32>
    %218 = tpu.matmul %217, %0, %cst_80 {dimension_numbers = #tpu.dot_dimension_numbers<[1], [0], [0], [1], [0, 0, 1, 1], [], []>} : vector<2x58xf32>, vector<58x128xf32>, vector<2x128xf32> -> vector<2x128xf32>
    %219 = vector.broadcast %1 : vector<1x128xf32> to vector<2x128xf32>
    %220 = arith.addf %218, %219 : vector<2x128xf32>
    %221 = vector.extract_strided_slice %220 {offsets = [0, 0], sizes = [2, 32], strides = [1, 1]} : vector<2x128xf32> to vector<2x32xf32>
    %cst_81 = arith.constant 0.000000e+00 : f32
    %222 = vector.broadcast %cst_81 : f32 to vector<2x32xf32>
    %223 = arith.subf %222, %221 : vector<2x32xf32>
    %224 = math.exp %223 : vector<2x32xf32>
    %cst_82 = arith.constant 1.000000e+00 : f32
    %225 = vector.broadcast %cst_82 : f32 to vector<2x32xf32>
    %226 = arith.addf %225, %224 : vector<2x32xf32>
    %cst_83 = arith.constant 1.000000e+00 : f32
    %227 = vector.broadcast %cst_83 : f32 to vector<2x32xf32>
    %228 = arith.divf %227, %226 : vector<2x32xf32>
    %229 = vector.extract_strided_slice %220 {offsets = [0, 32], sizes = [2, 32], strides = [1, 1]} : vector<2x128xf32> to vector<2x32xf32>
    %cst_84 = arith.constant 0.000000e+00 : f32
    %230 = vector.broadcast %cst_84 : f32 to vector<2x32xf32>
    %231 = arith.subf %230, %229 : vector<2x32xf32>
    %232 = math.exp %231 : vector<2x32xf32>
    %cst_85 = arith.constant 1.000000e+00 : f32
    %233 = vector.broadcast %cst_85 : f32 to vector<2x32xf32>
    %234 = arith.addf %233, %232 : vector<2x32xf32>
    %cst_86 = arith.constant 1.000000e+00 : f32
    %235 = vector.broadcast %cst_86 : f32 to vector<2x32xf32>
    %236 = arith.divf %235, %234 : vector<2x32xf32>
    %237 = vector.extract_strided_slice %220 {offsets = [0, 64], sizes = [2, 32], strides = [1, 1]} : vector<2x128xf32> to vector<2x32xf32>
    %238 = math.tanh %237 : vector<2x32xf32>
    %239 = vector.extract_strided_slice %220 {offsets = [0, 96], sizes = [2, 32], strides = [1, 1]} : vector<2x128xf32> to vector<2x32xf32>
    %cst_87 = arith.constant 0.000000e+00 : f32
    %240 = vector.broadcast %cst_87 : f32 to vector<2x32xf32>
    %241 = arith.subf %240, %239 : vector<2x32xf32>
    %242 = math.exp %241 : vector<2x32xf32>
    %cst_88 = arith.constant 1.000000e+00 : f32
    %243 = vector.broadcast %cst_88 : f32 to vector<2x32xf32>
    %244 = arith.addf %243, %242 : vector<2x32xf32>
    %cst_89 = arith.constant 1.000000e+00 : f32
    %245 = vector.broadcast %cst_89 : f32 to vector<2x32xf32>
    %246 = arith.divf %245, %244 : vector<2x32xf32>
    %247 = arith.mulf %236, %48 : vector<2x32xf32>
    %248 = arith.mulf %228, %238 : vector<2x32xf32>
    %249 = arith.addf %247, %248 : vector<2x32xf32>
    %250 = math.tanh %249 : vector<2x32xf32>
    %251 = arith.mulf %246, %250 : vector<2x32xf32>
    %cst_90 = arith.constant -2.000000e+01 : f32
    %cst_91 = arith.constant 2.000000e+01 : f32
    %252 = vector.broadcast %cst_90 : f32 to vector<2x32xf32>
    %253 = arith.maximumf %252, %251 : vector<2x32xf32>
    %254 = vector.broadcast %cst_91 : f32 to vector<2x32xf32>
    %255 = arith.minimumf %254, %253 : vector<2x32xf32>
    %cst_92 = arith.constant dense<0.000000e+00> : vector<2x76xf32>
    %256 = tpu.matmul %255, %2, %cst_92 {dimension_numbers = #tpu.dot_dimension_numbers<[1], [0], [0], [1], [0, 0, 1, 1], [], []>} : vector<2x32xf32>, vector<32x76xf32>, vector<2x76xf32> -> vector<2x76xf32>
    %257 = vector.broadcast %3 : vector<1x76xf32> to vector<2x76xf32>
    %258 = arith.addf %256, %257 : vector<2x76xf32>
    %259 = vector.extract_strided_slice %258 {offsets = [0, 0], sizes = [2, 22], strides = [1, 1]} : vector<2x76xf32> to vector<2x22xf32>
    %260 = vector.extract_strided_slice %258 {offsets = [0, 22], sizes = [2, 22], strides = [1, 1]} : vector<2x76xf32> to vector<2x22xf32>
    %261 = tpu.concatenate %259, %260 in 0 : vector<2x22xf32>, vector<2x22xf32> -> vector<4x22xf32>
    %262 = tpu.concatenate %168, %169 in 0 : vector<2x16xf32>, vector<2x16xf32> -> vector<4x16xf32>
    %263 = tpu.concatenate %193, %193 in 0 : vector<2x16x16xf32>, vector<2x16x16xf32> -> vector<4x16x16xf32>
    %264 = vector.extract_strided_slice %261 {offsets = [0, 0], sizes = [4, 16], strides = [1, 1]} : vector<4x22xf32> to vector<4x16xf32>
    %265 = math.tanh %264 : vector<4x16xf32>
    %266 = vector.extract_strided_slice %261 {offsets = [0, 16], sizes = [4, 1], strides = [1, 1]} : vector<4x22xf32> to vector<4x1xf32>
    %cst_93 = arith.constant 0.000000e+00 : f32
    %267 = vector.broadcast %cst_93 : f32 to vector<4x1xf32>
    %268 = arith.maximumf %266, %267 : vector<4x1xf32>
    %269 = math.absf %266 : vector<4x1xf32>
    %cst_94 = arith.constant 0.000000e+00 : f32
    %270 = vector.broadcast %cst_94 : f32 to vector<4x1xf32>
    %271 = arith.subf %270, %269 : vector<4x1xf32>
    %272 = math.exp %271 : vector<4x1xf32>
    %cst_95 = arith.constant 1.000000e+00 : f32
    %273 = vector.broadcast %cst_95 : f32 to vector<4x1xf32>
    %274 = arith.addf %273, %272 : vector<4x1xf32>
    %275 = math.log %274 : vector<4x1xf32>
    %276 = arith.addf %268, %275 : vector<4x1xf32>
    %277 = vector.extract_strided_slice %261 {offsets = [0, 17], sizes = [4, 1], strides = [1, 1]} : vector<4x22xf32> to vector<4x1xf32>
    %cst_96 = arith.constant 0.000000e+00 : f32
    %278 = vector.broadcast %cst_96 : f32 to vector<4x1xf32>
    %279 = arith.subf %278, %277 : vector<4x1xf32>
    %280 = math.exp %279 : vector<4x1xf32>
    %cst_97 = arith.constant 1.000000e+00 : f32
    %281 = vector.broadcast %cst_97 : f32 to vector<4x1xf32>
    %282 = arith.addf %281, %280 : vector<4x1xf32>
    %cst_98 = arith.constant 1.000000e+00 : f32
    %283 = vector.broadcast %cst_98 : f32 to vector<4x1xf32>
    %284 = arith.divf %283, %282 : vector<4x1xf32>
    %285 = vector.extract_strided_slice %261 {offsets = [0, 18], sizes = [4, 3], strides = [1, 1]} : vector<4x22xf32> to vector<4x3xf32>
    %cst_99 = arith.constant dense<0xFF800000> : vector<4xf32>
    %286 = vector.multi_reduction <maximumf>, %285, %cst_99 [1] : vector<4x3xf32> to vector<4xf32>
    %287 = vector.shape_cast %286 : vector<4xf32> to vector<4x1xf32>
    %288 = vector.broadcast %287 : vector<4x1xf32> to vector<4x3xf32>
    %289 = arith.subf %285, %288 : vector<4x3xf32>
    %290 = math.exp %289 : vector<4x3xf32>
    %cst_100 = arith.constant dense<0.000000e+00> : vector<4xf32>
    %291 = vector.multi_reduction <add>, %290, %cst_100 [1] : vector<4x3xf32> to vector<4xf32>
    %292 = vector.shape_cast %291 : vector<4xf32> to vector<4x1xf32>
    %293 = vector.broadcast %292 : vector<4x1xf32> to vector<4x3xf32>
    %294 = arith.divf %290, %293 : vector<4x3xf32>
    %295 = vector.extract_strided_slice %261 {offsets = [0, 21], sizes = [4, 1], strides = [1, 1]} : vector<4x22xf32> to vector<4x1xf32>
    %cst_101 = arith.constant 0.000000e+00 : f32
    %296 = vector.broadcast %cst_101 : f32 to vector<4x1xf32>
    %297 = arith.maximumf %295, %296 : vector<4x1xf32>
    %298 = math.absf %295 : vector<4x1xf32>
    %cst_102 = arith.constant 0.000000e+00 : f32
    %299 = vector.broadcast %cst_102 : f32 to vector<4x1xf32>
    %300 = arith.subf %299, %298 : vector<4x1xf32>
    %301 = math.exp %300 : vector<4x1xf32>
    %cst_103 = arith.constant 1.000000e+00 : f32
    %302 = vector.broadcast %cst_103 : f32 to vector<4x1xf32>
    %303 = arith.addf %302, %301 : vector<4x1xf32>
    %304 = math.log %303 : vector<4x1xf32>
    %305 = arith.addf %297, %304 : vector<4x1xf32>
    %306 = vector.shape_cast %265 : vector<4x16xf32> to vector<4x1x16xf32>
    %307 = vector.broadcast %306 : vector<4x1x16xf32> to vector<4x16x16xf32>
    %308 = arith.mulf %263, %307 : vector<4x16x16xf32>
    %cst_104 = arith.constant dense<0.000000e+00> : vector<4x16xf32>
    %309 = vector.multi_reduction <add>, %308, %cst_104 [2] : vector<4x16x16xf32> to vector<4x16xf32>
    %310 = arith.mulf %265, %265 : vector<4x16xf32>
    %cst_105 = arith.constant dense<0.000000e+00> : vector<4xf32>
    %311 = vector.multi_reduction <add>, %310, %cst_105 [1] : vector<4x16xf32> to vector<4xf32>
    %312 = vector.shape_cast %311 : vector<4xf32> to vector<4x1xf32>
    %313 = math.sqrt %312 : vector<4x1xf32>
    %314 = arith.mulf %263, %263 : vector<4x16x16xf32>
    %cst_106 = arith.constant dense<0.000000e+00> : vector<4x16xf32>
    %315 = vector.multi_reduction <add>, %314, %cst_106 [2] : vector<4x16x16xf32> to vector<4x16xf32>
    %316 = math.sqrt %315 : vector<4x16xf32>
    %317 = vector.broadcast %313 : vector<4x1xf32> to vector<4x16xf32>
    %318 = arith.mulf %317, %316 : vector<4x16xf32>
    %cst_107 = arith.constant 9.99999993E-9 : f32
    %319 = vector.broadcast %cst_107 : f32 to vector<4x16xf32>
    %320 = arith.addf %318, %319 : vector<4x16xf32>
    %321 = arith.divf %309, %320 : vector<4x16xf32>
    %322 = vector.broadcast %276 : vector<4x1xf32> to vector<4x16xf32>
    %323 = arith.mulf %322, %321 : vector<4x16xf32>
    %cst_108 = arith.constant dense<0xFF800000> : vector<4xf32>
    %324 = vector.multi_reduction <maximumf>, %323, %cst_108 [1] : vector<4x16xf32> to vector<4xf32>
    %325 = vector.shape_cast %324 : vector<4xf32> to vector<4x1xf32>
    %326 = vector.broadcast %325 : vector<4x1xf32> to vector<4x16xf32>
    %327 = arith.subf %323, %326 : vector<4x16xf32>
    %328 = math.exp %327 : vector<4x16xf32>
    %cst_109 = arith.constant dense<0.000000e+00> : vector<4xf32>
    %329 = vector.multi_reduction <add>, %328, %cst_109 [1] : vector<4x16xf32> to vector<4xf32>
    %330 = vector.shape_cast %329 : vector<4xf32> to vector<4x1xf32>
    %331 = vector.broadcast %330 : vector<4x1xf32> to vector<4x16xf32>
    %332 = arith.divf %328, %331 : vector<4x16xf32>
    %333 = vector.broadcast %284 : vector<4x1xf32> to vector<4x16xf32>
    %334 = arith.mulf %333, %332 : vector<4x16xf32>
    %cst_110 = arith.constant 1.000000e+00 : f32
    %335 = vector.broadcast %cst_110 : f32 to vector<4x1xf32>
    %336 = arith.subf %335, %284 : vector<4x1xf32>
    %337 = vector.broadcast %336 : vector<4x1xf32> to vector<4x16xf32>
    %338 = arith.mulf %337, %262 : vector<4x16xf32>
    %339 = arith.addf %334, %338 : vector<4x16xf32>
    %cst_111 = arith.constant 0.000000e+00 : f32
    %340 = vector.broadcast %cst_111 : f32 to vector<4x16xf32>
    %341 = vector.extract_strided_slice %294 {offsets = [0, 0], sizes = [4, 1], strides = [1, 1]} : vector<4x3xf32> to vector<4x1xf32>
    %342 = vector.broadcast %341 : vector<4x1xf32> to vector<4x16xf32>
    %343 = arith.mulf %342, %339 : vector<4x16xf32>
    %344 = arith.addf %340, %343 : vector<4x16xf32>
    %345 = vector.extract_strided_slice %294 {offsets = [0, 1], sizes = [4, 1], strides = [1, 1]} : vector<4x3xf32> to vector<4x1xf32>
    %346 = vector.extract_strided_slice %339 {offsets = [0, 15], sizes = [4, 1], strides = [1, 1]} : vector<4x16xf32> to vector<4x1xf32>
    %347 = vector.extract_strided_slice %339 {offsets = [0, 0], sizes = [4, 15], strides = [1, 1]} : vector<4x16xf32> to vector<4x15xf32>
    %348 = tpu.concatenate %346, %347 in 1 : vector<4x1xf32>, vector<4x15xf32> -> vector<4x16xf32>
    %349 = vector.broadcast %345 : vector<4x1xf32> to vector<4x16xf32>
    %350 = arith.mulf %349, %348 : vector<4x16xf32>
    %351 = arith.addf %344, %350 : vector<4x16xf32>
    %352 = vector.extract_strided_slice %294 {offsets = [0, 2], sizes = [4, 1], strides = [1, 1]} : vector<4x3xf32> to vector<4x1xf32>
    %353 = vector.extract_strided_slice %339 {offsets = [0, 1], sizes = [4, 15], strides = [1, 1]} : vector<4x16xf32> to vector<4x15xf32>
    %354 = vector.extract_strided_slice %339 {offsets = [0, 0], sizes = [4, 1], strides = [1, 1]} : vector<4x16xf32> to vector<4x1xf32>
    %355 = tpu.concatenate %353, %354 in 1 : vector<4x15xf32>, vector<4x1xf32> -> vector<4x16xf32>
    %356 = vector.broadcast %352 : vector<4x1xf32> to vector<4x16xf32>
    %357 = arith.mulf %356, %355 : vector<4x16xf32>
    %358 = arith.addf %351, %357 : vector<4x16xf32>
    %cst_112 = arith.constant 9.99999993E-9 : f32
    %359 = vector.broadcast %cst_112 : f32 to vector<4x16xf32>
    %360 = arith.addf %358, %359 : vector<4x16xf32>
    %361 = math.log %360 : vector<4x16xf32>
    %362 = vector.broadcast %305 : vector<4x1xf32> to vector<4x16xf32>
    %363 = arith.mulf %362, %361 : vector<4x16xf32>
    %364 = math.exp %363 : vector<4x16xf32>
    %cst_113 = arith.constant dense<0.000000e+00> : vector<4xf32>
    %365 = vector.multi_reduction <add>, %364, %cst_113 [1] : vector<4x16xf32> to vector<4xf32>
    %366 = vector.shape_cast %365 : vector<4xf32> to vector<4x1xf32>
    %367 = vector.broadcast %366 : vector<4x1xf32> to vector<4x16xf32>
    %368 = arith.divf %364, %367 : vector<4x16xf32>
    %369 = vector.extract_strided_slice %368 {offsets = [0, 0], sizes = [2, 16], strides = [1, 1]} : vector<4x16xf32> to vector<2x16xf32>
    %370 = vector.extract_strided_slice %368 {offsets = [2, 0], sizes = [2, 16], strides = [1, 1]} : vector<4x16xf32> to vector<2x16xf32>
    %371 = vector.shape_cast %369 : vector<2x16xf32> to vector<2x16x1xf32>
    %372 = vector.broadcast %371 : vector<2x16x1xf32> to vector<2x16x16xf32>
    %373 = arith.mulf %372, %193 : vector<2x16x16xf32>
    %cst_114 = arith.constant dense<0.000000e+00> : vector<2x16xf32>
    %374 = vector.multi_reduction <add>, %373, %cst_114 [1] : vector<2x16x16xf32> to vector<2x16xf32>
    %375 = vector.extract_strided_slice %258 {offsets = [0, 44], sizes = [2, 16], strides = [1, 1]} : vector<2x76xf32> to vector<2x16xf32>
    %cst_115 = arith.constant 0.000000e+00 : f32
    %376 = vector.broadcast %cst_115 : f32 to vector<2x16xf32>
    %377 = arith.subf %376, %375 : vector<2x16xf32>
    %378 = math.exp %377 : vector<2x16xf32>
    %cst_116 = arith.constant 1.000000e+00 : f32
    %379 = vector.broadcast %cst_116 : f32 to vector<2x16xf32>
    %380 = arith.addf %379, %378 : vector<2x16xf32>
    %cst_117 = arith.constant 1.000000e+00 : f32
    %381 = vector.broadcast %cst_117 : f32 to vector<2x16xf32>
    %382 = arith.divf %381, %380 : vector<2x16xf32>
    %383 = vector.extract_strided_slice %258 {offsets = [0, 60], sizes = [2, 16], strides = [1, 1]} : vector<2x76xf32> to vector<2x16xf32>
    %384 = math.tanh %383 : vector<2x16xf32>
    %385 = vector.shape_cast %370 : vector<2x16xf32> to vector<2x16x1xf32>
    %386 = vector.shape_cast %384 : vector<2x16xf32> to vector<2x1x16xf32>
    %387 = vector.shape_cast %382 : vector<2x16xf32> to vector<2x1x16xf32>
    %388 = vector.broadcast %387 : vector<2x1x16xf32> to vector<2x16x16xf32>
    %389 = arith.mulf %193, %388 : vector<2x16x16xf32>
    %390 = vector.broadcast %386 : vector<2x1x16xf32> to vector<2x16x16xf32>
    %391 = arith.subf %390, %389 : vector<2x16x16xf32>
    %392 = vector.broadcast %385 : vector<2x16x1xf32> to vector<2x16x16xf32>
    %393 = arith.mulf %392, %391 : vector<2x16x16xf32>
    %394 = arith.addf %193, %393 : vector<2x16x16xf32>
    %395 = tpu.concatenate %255, %374 in 1 : vector<2x32xf32>, vector<2x16xf32> -> vector<2x48xf32>
    %cst_118 = arith.constant dense<0.000000e+00> : vector<2x32xf32>
    %396 = tpu.matmul %395, %4, %cst_118 {dimension_numbers = #tpu.dot_dimension_numbers<[1], [0], [0], [1], [0, 0, 1, 1], [], []>} : vector<2x48xf32>, vector<48x32xf32>, vector<2x32xf32> -> vector<2x32xf32>
    %397 = vector.broadcast %5 : vector<1x32xf32> to vector<2x32xf32>
    %398 = arith.addf %396, %397 : vector<2x32xf32>
    %cst_119 = arith.constant -2.000000e+01 : f32
    %cst_120 = arith.constant 2.000000e+01 : f32
    %399 = vector.broadcast %cst_119 : f32 to vector<2x32xf32>
    %400 = arith.maximumf %399, %398 : vector<2x32xf32>
    %401 = vector.broadcast %cst_120 : f32 to vector<2x32xf32>
    %402 = arith.minimumf %401, %400 : vector<2x32xf32>
    %cst_121 = arith.constant dense<0.000000e+00> : vector<2x8xf32>
    %403 = tpu.matmul %402, %6, %cst_121 {dimension_numbers = #tpu.dot_dimension_numbers<[1], [0], [0], [1], [0, 0, 1, 1], [], []>} : vector<2x32xf32>, vector<32x8xf32>, vector<2x8xf32> -> vector<2x8xf32>
    %404 = vector.broadcast %7 : vector<1x8xf32> to vector<2x8xf32>
    %405 = arith.addf %403, %404 : vector<2x8xf32>
    %cst_122 = arith.constant 0.000000e+00 : f32
    %406 = vector.broadcast %cst_122 : f32 to vector<2x8xf32>
    %407 = arith.subf %406, %405 : vector<2x8xf32>
    %408 = math.exp %407 : vector<2x8xf32>
    %cst_123 = arith.constant 1.000000e+00 : f32
    %409 = vector.broadcast %cst_123 : f32 to vector<2x8xf32>
    %410 = arith.addf %409, %408 : vector<2x8xf32>
    %cst_124 = arith.constant 1.000000e+00 : f32
    %411 = vector.broadcast %cst_124 : f32 to vector<2x8xf32>
    %412 = arith.divf %411, %410 : vector<2x8xf32>
    %c1_125 = arith.constant 1 : index
    %c0_126 = arith.constant 0 : index
    %c0_127 = arith.constant 0 : index
    %413 = vector.load %arg15[%c1_125, %c0_126, %c0_127] : memref<8x2x8xf32, #tpu.memory_space<vmem>>, vector<1x2x8xf32>
    %414 = vector.shape_cast %413 : vector<1x2x8xf32> to vector<2x8xf32>
    %415 = vector.shape_cast %412 : vector<2x8xf32> to vector<1x2x8xf32>
    tpu.vector_store %arg15[%c1_125, %c0_126, %c0_127], %415 {strides = array<i32>} : memref<8x2x8xf32, #tpu.memory_space<vmem>>, vector<1x2x8xf32>,
    %c2 = arith.constant 2 : index
    %c0_128 = arith.constant 0 : index
    %c0_129 = arith.constant 0 : index
    %416 = vector.load %arg0[%c2, %c0_128, %c0_129] : memref<8x2x10xf32, #tpu.memory_space<vmem>>, vector<1x2x10xf32>
    %417 = vector.shape_cast %416 : vector<1x2x10xf32> to vector<2x10xf32>
    %418 = tpu.concatenate %417, %374, %251 in 1 : vector<2x10xf32>, vector<2x16xf32>, vector<2x32xf32> -> vector<2x58xf32>
    %cst_130 = arith.constant dense<0.000000e+00> : vector<2x128xf32>
    %419 = tpu.matmul %418, %0, %cst_130 {dimension_numbers = #tpu.dot_dimension_numbers<[1], [0], [0], [1], [0, 0, 1, 1], [], []>} : vector<2x58xf32>, vector<58x128xf32>, vector<2x128xf32> -> vector<2x128xf32>
    %420 = vector.broadcast %1 : vector<1x128xf32> to vector<2x128xf32>
    %421 = arith.addf %419, %420 : vector<2x128xf32>
    %422 = vector.extract_strided_slice %421 {offsets = [0, 0], sizes = [2, 32], strides = [1, 1]} : vector<2x128xf32> to vector<2x32xf32>
    %cst_131 = arith.constant 0.000000e+00 : f32
    %423 = vector.broadcast %cst_131 : f32 to vector<2x32xf32>
    %424 = arith.subf %423, %422 : vector<2x32xf32>
    %425 = math.exp %424 : vector<2x32xf32>
    %cst_132 = arith.constant 1.000000e+00 : f32
    %426 = vector.broadcast %cst_132 : f32 to vector<2x32xf32>
    %427 = arith.addf %426, %425 : vector<2x32xf32>
    %cst_133 = arith.constant 1.000000e+00 : f32
    %428 = vector.broadcast %cst_133 : f32 to vector<2x32xf32>
    %429 = arith.divf %428, %427 : vector<2x32xf32>
    %430 = vector.extract_strided_slice %421 {offsets = [0, 32], sizes = [2, 32], strides = [1, 1]} : vector<2x128xf32> to vector<2x32xf32>
    %cst_134 = arith.constant 0.000000e+00 : f32
    %431 = vector.broadcast %cst_134 : f32 to vector<2x32xf32>
    %432 = arith.subf %431, %430 : vector<2x32xf32>
    %433 = math.exp %432 : vector<2x32xf32>
    %cst_135 = arith.constant 1.000000e+00 : f32
    %434 = vector.broadcast %cst_135 : f32 to vector<2x32xf32>
    %435 = arith.addf %434, %433 : vector<2x32xf32>
    %cst_136 = arith.constant 1.000000e+00 : f32
    %436 = vector.broadcast %cst_136 : f32 to vector<2x32xf32>
    %437 = arith.divf %436, %435 : vector<2x32xf32>
    %438 = vector.extract_strided_slice %421 {offsets = [0, 64], sizes = [2, 32], strides = [1, 1]} : vector<2x128xf32> to vector<2x32xf32>
    %439 = math.tanh %438 : vector<2x32xf32>
    %440 = vector.extract_strided_slice %421 {offsets = [0, 96], sizes = [2, 32], strides = [1, 1]} : vector<2x128xf32> to vector<2x32xf32>
    %cst_137 = arith.constant 0.000000e+00 : f32
    %441 = vector.broadcast %cst_137 : f32 to vector<2x32xf32>
    %442 = arith.subf %441, %440 : vector<2x32xf32>
    %443 = math.exp %442 : vector<2x32xf32>
    %cst_138 = arith.constant 1.000000e+00 : f32
    %444 = vector.broadcast %cst_138 : f32 to vector<2x32xf32>
    %445 = arith.addf %444, %443 : vector<2x32xf32>
    %cst_139 = arith.constant 1.000000e+00 : f32
    %446 = vector.broadcast %cst_139 : f32 to vector<2x32xf32>
    %447 = arith.divf %446, %445 : vector<2x32xf32>
    %448 = arith.mulf %437, %249 : vector<2x32xf32>
    %449 = arith.mulf %429, %439 : vector<2x32xf32>
    %450 = arith.addf %448, %449 : vector<2x32xf32>
    %451 = math.tanh %450 : vector<2x32xf32>
    %452 = arith.mulf %447, %451 : vector<2x32xf32>
    %cst_140 = arith.constant -2.000000e+01 : f32
    %cst_141 = arith.constant 2.000000e+01 : f32
    %453 = vector.broadcast %cst_140 : f32 to vector<2x32xf32>
    %454 = arith.maximumf %453, %452 : vector<2x32xf32>
    %455 = vector.broadcast %cst_141 : f32 to vector<2x32xf32>
    %456 = arith.minimumf %455, %454 : vector<2x32xf32>
    %cst_142 = arith.constant dense<0.000000e+00> : vector<2x76xf32>
    %457 = tpu.matmul %456, %2, %cst_142 {dimension_numbers = #tpu.dot_dimension_numbers<[1], [0], [0], [1], [0, 0, 1, 1], [], []>} : vector<2x32xf32>, vector<32x76xf32>, vector<2x76xf32> -> vector<2x76xf32>
    %458 = vector.broadcast %3 : vector<1x76xf32> to vector<2x76xf32>
    %459 = arith.addf %457, %458 : vector<2x76xf32>
    %460 = vector.extract_strided_slice %459 {offsets = [0, 0], sizes = [2, 22], strides = [1, 1]} : vector<2x76xf32> to vector<2x22xf32>
    %461 = vector.extract_strided_slice %459 {offsets = [0, 22], sizes = [2, 22], strides = [1, 1]} : vector<2x76xf32> to vector<2x22xf32>
    %462 = tpu.concatenate %460, %461 in 0 : vector<2x22xf32>, vector<2x22xf32> -> vector<4x22xf32>
    %463 = tpu.concatenate %369, %370 in 0 : vector<2x16xf32>, vector<2x16xf32> -> vector<4x16xf32>
    %464 = tpu.concatenate %394, %394 in 0 : vector<2x16x16xf32>, vector<2x16x16xf32> -> vector<4x16x16xf32>
    %465 = vector.extract_strided_slice %462 {offsets = [0, 0], sizes = [4, 16], strides = [1, 1]} : vector<4x22xf32> to vector<4x16xf32>
    %466 = math.tanh %465 : vector<4x16xf32>
    %467 = vector.extract_strided_slice %462 {offsets = [0, 16], sizes = [4, 1], strides = [1, 1]} : vector<4x22xf32> to vector<4x1xf32>
    %cst_143 = arith.constant 0.000000e+00 : f32
    %468 = vector.broadcast %cst_143 : f32 to vector<4x1xf32>
    %469 = arith.maximumf %467, %468 : vector<4x1xf32>
    %470 = math.absf %467 : vector<4x1xf32>
    %cst_144 = arith.constant 0.000000e+00 : f32
    %471 = vector.broadcast %cst_144 : f32 to vector<4x1xf32>
    %472 = arith.subf %471, %470 : vector<4x1xf32>
    %473 = math.exp %472 : vector<4x1xf32>
    %cst_145 = arith.constant 1.000000e+00 : f32
    %474 = vector.broadcast %cst_145 : f32 to vector<4x1xf32>
    %475 = arith.addf %474, %473 : vector<4x1xf32>
    %476 = math.log %475 : vector<4x1xf32>
    %477 = arith.addf %469, %476 : vector<4x1xf32>
    %478 = vector.extract_strided_slice %462 {offsets = [0, 17], sizes = [4, 1], strides = [1, 1]} : vector<4x22xf32> to vector<4x1xf32>
    %cst_146 = arith.constant 0.000000e+00 : f32
    %479 = vector.broadcast %cst_146 : f32 to vector<4x1xf32>
    %480 = arith.subf %479, %478 : vector<4x1xf32>
    %481 = math.exp %480 : vector<4x1xf32>
    %cst_147 = arith.constant 1.000000e+00 : f32
    %482 = vector.broadcast %cst_147 : f32 to vector<4x1xf32>
    %483 = arith.addf %482, %481 : vector<4x1xf32>
    %cst_148 = arith.constant 1.000000e+00 : f32
    %484 = vector.broadcast %cst_148 : f32 to vector<4x1xf32>
    %485 = arith.divf %484, %483 : vector<4x1xf32>
    %486 = vector.extract_strided_slice %462 {offsets = [0, 18], sizes = [4, 3], strides = [1, 1]} : vector<4x22xf32> to vector<4x3xf32>
    %cst_149 = arith.constant dense<0xFF800000> : vector<4xf32>
    %487 = vector.multi_reduction <maximumf>, %486, %cst_149 [1] : vector<4x3xf32> to vector<4xf32>
    %488 = vector.shape_cast %487 : vector<4xf32> to vector<4x1xf32>
    %489 = vector.broadcast %488 : vector<4x1xf32> to vector<4x3xf32>
    %490 = arith.subf %486, %489 : vector<4x3xf32>
    %491 = math.exp %490 : vector<4x3xf32>
    %cst_150 = arith.constant dense<0.000000e+00> : vector<4xf32>
    %492 = vector.multi_reduction <add>, %491, %cst_150 [1] : vector<4x3xf32> to vector<4xf32>
    %493 = vector.shape_cast %492 : vector<4xf32> to vector<4x1xf32>
    %494 = vector.broadcast %493 : vector<4x1xf32> to vector<4x3xf32>
    %495 = arith.divf %491, %494 : vector<4x3xf32>
    %496 = vector.extract_strided_slice %462 {offsets = [0, 21], sizes = [4, 1], strides = [1, 1]} : vector<4x22xf32> to vector<4x1xf32>
    %cst_151 = arith.constant 0.000000e+00 : f32
    %497 = vector.broadcast %cst_151 : f32 to vector<4x1xf32>
    %498 = arith.maximumf %496, %497 : vector<4x1xf32>
    %499 = math.absf %496 : vector<4x1xf32>
    %cst_152 = arith.constant 0.000000e+00 : f32
    %500 = vector.broadcast %cst_152 : f32 to vector<4x1xf32>
    %501 = arith.subf %500, %499 : vector<4x1xf32>
    %502 = math.exp %501 : vector<4x1xf32>
    %cst_153 = arith.constant 1.000000e+00 : f32
    %503 = vector.broadcast %cst_153 : f32 to vector<4x1xf32>
    %504 = arith.addf %503, %502 : vector<4x1xf32>
    %505 = math.log %504 : vector<4x1xf32>
    %506 = arith.addf %498, %505 : vector<4x1xf32>
    %507 = vector.shape_cast %466 : vector<4x16xf32> to vector<4x1x16xf32>
    %508 = vector.broadcast %507 : vector<4x1x16xf32> to vector<4x16x16xf32>
    %509 = arith.mulf %464, %508 : vector<4x16x16xf32>
    %cst_154 = arith.constant dense<0.000000e+00> : vector<4x16xf32>
    %510 = vector.multi_reduction <add>, %509, %cst_154 [2] : vector<4x16x16xf32> to vector<4x16xf32>
    %511 = arith.mulf %466, %466 : vector<4x16xf32>
    %cst_155 = arith.constant dense<0.000000e+00> : vector<4xf32>
    %512 = vector.multi_reduction <add>, %511, %cst_155 [1] : vector<4x16xf32> to vector<4xf32>
    %513 = vector.shape_cast %512 : vector<4xf32> to vector<4x1xf32>
    %514 = math.sqrt %513 : vector<4x1xf32>
    %515 = arith.mulf %464, %464 : vector<4x16x16xf32>
    %cst_156 = arith.constant dense<0.000000e+00> : vector<4x16xf32>
    %516 = vector.multi_reduction <add>, %515, %cst_156 [2] : vector<4x16x16xf32> to vector<4x16xf32>
    %517 = math.sqrt %516 : vector<4x16xf32>
    %518 = vector.broadcast %514 : vector<4x1xf32> to vector<4x16xf32>
    %519 = arith.mulf %518, %517 : vector<4x16xf32>
    %cst_157 = arith.constant 9.99999993E-9 : f32
    %520 = vector.broadcast %cst_157 : f32 to vector<4x16xf32>
    %521 = arith.addf %519, %520 : vector<4x16xf32>
    %522 = arith.divf %510, %521 : vector<4x16xf32>
    %523 = vector.broadcast %477 : vector<4x1xf32> to vector<4x16xf32>
    %524 = arith.mulf %523, %522 : vector<4x16xf32>
    %cst_158 = arith.constant dense<0xFF800000> : vector<4xf32>
    %525 = vector.multi_reduction <maximumf>, %524, %cst_158 [1] : vector<4x16xf32> to vector<4xf32>
    %526 = vector.shape_cast %525 : vector<4xf32> to vector<4x1xf32>
    %527 = vector.broadcast %526 : vector<4x1xf32> to vector<4x16xf32>
    %528 = arith.subf %524, %527 : vector<4x16xf32>
    %529 = math.exp %528 : vector<4x16xf32>
    %cst_159 = arith.constant dense<0.000000e+00> : vector<4xf32>
    %530 = vector.multi_reduction <add>, %529, %cst_159 [1] : vector<4x16xf32> to vector<4xf32>
    %531 = vector.shape_cast %530 : vector<4xf32> to vector<4x1xf32>
    %532 = vector.broadcast %531 : vector<4x1xf32> to vector<4x16xf32>
    %533 = arith.divf %529, %532 : vector<4x16xf32>
    %534 = vector.broadcast %485 : vector<4x1xf32> to vector<4x16xf32>
    %535 = arith.mulf %534, %533 : vector<4x16xf32>
    %cst_160 = arith.constant 1.000000e+00 : f32
    %536 = vector.broadcast %cst_160 : f32 to vector<4x1xf32>
    %537 = arith.subf %536, %485 : vector<4x1xf32>
    %538 = vector.broadcast %537 : vector<4x1xf32> to vector<4x16xf32>
    %539 = arith.mulf %538, %463 : vector<4x16xf32>
    %540 = arith.addf %535, %539 : vector<4x16xf32>
    %cst_161 = arith.constant 0.000000e+00 : f32
    %541 = vector.broadcast %cst_161 : f32 to vector<4x16xf32>
    %542 = vector.extract_strided_slice %495 {offsets = [0, 0], sizes = [4, 1], strides = [1, 1]} : vector<4x3xf32> to vector<4x1xf32>
    %543 = vector.broadcast %542 : vector<4x1xf32> to vector<4x16xf32>
    %544 = arith.mulf %543, %540 : vector<4x16xf32>
    %545 = arith.addf %541, %544 : vector<4x16xf32>
    %546 = vector.extract_strided_slice %495 {offsets = [0, 1], sizes = [4, 1], strides = [1, 1]} : vector<4x3xf32> to vector<4x1xf32>
    %547 = vector.extract_strided_slice %540 {offsets = [0, 15], sizes = [4, 1], strides = [1, 1]} : vector<4x16xf32> to vector<4x1xf32>
    %548 = vector.extract_strided_slice %540 {offsets = [0, 0], sizes = [4, 15], strides = [1, 1]} : vector<4x16xf32> to vector<4x15xf32>
    %549 = tpu.concatenate %547, %548 in 1 : vector<4x1xf32>, vector<4x15xf32> -> vector<4x16xf32>
    %550 = vector.broadcast %546 : vector<4x1xf32> to vector<4x16xf32>
    %551 = arith.mulf %550, %549 : vector<4x16xf32>
    %552 = arith.addf %545, %551 : vector<4x16xf32>
    %553 = vector.extract_strided_slice %495 {offsets = [0, 2], sizes = [4, 1], strides = [1, 1]} : vector<4x3xf32> to vector<4x1xf32>
    %554 = vector.extract_strided_slice %540 {offsets = [0, 1], sizes = [4, 15], strides = [1, 1]} : vector<4x16xf32> to vector<4x15xf32>
    %555 = vector.extract_strided_slice %540 {offsets = [0, 0], sizes = [4, 1], strides = [1, 1]} : vector<4x16xf32> to vector<4x1xf32>
    %556 = tpu.concatenate %554, %555 in 1 : vector<4x15xf32>, vector<4x1xf32> -> vector<4x16xf32>
    %557 = vector.broadcast %553 : vector<4x1xf32> to vector<4x16xf32>
    %558 = arith.mulf %557, %556 : vector<4x16xf32>
    %559 = arith.addf %552, %558 : vector<4x16xf32>
    %cst_162 = arith.constant 9.99999993E-9 : f32
    %560 = vector.broadcast %cst_162 : f32 to vector<4x16xf32>
    %561 = arith.addf %559, %560 : vector<4x16xf32>
    %562 = math.log %561 : vector<4x16xf32>
    %563 = vector.broadcast %506 : vector<4x1xf32> to vector<4x16xf32>
    %564 = arith.mulf %563, %562 : vector<4x16xf32>
    %565 = math.exp %564 : vector<4x16xf32>
    %cst_163 = arith.constant dense<0.000000e+00> : vector<4xf32>
    %566 = vector.multi_reduction <add>, %565, %cst_163 [1] : vector<4x16xf32> to vector<4xf32>
    %567 = vector.shape_cast %566 : vector<4xf32> to vector<4x1xf32>
    %568 = vector.broadcast %567 : vector<4x1xf32> to vector<4x16xf32>
    %569 = arith.divf %565, %568 : vector<4x16xf32>
    %570 = vector.extract_strided_slice %569 {offsets = [0, 0], sizes = [2, 16], strides = [1, 1]} : vector<4x16xf32> to vector<2x16xf32>
    %571 = vector.extract_strided_slice %569 {offsets = [2, 0], sizes = [2, 16], strides = [1, 1]} : vector<4x16xf32> to vector<2x16xf32>
    %572 = vector.shape_cast %570 : vector<2x16xf32> to vector<2x16x1xf32>
    %573 = vector.broadcast %572 : vector<2x16x1xf32> to vector<2x16x16xf32>
    %574 = arith.mulf %573, %394 : vector<2x16x16xf32>
    %cst_164 = arith.constant dense<0.000000e+00> : vector<2x16xf32>
    %575 = vector.multi_reduction <add>, %574, %cst_164 [1] : vector<2x16x16xf32> to vector<2x16xf32>
    %576 = vector.extract_strided_slice %459 {offsets = [0, 44], sizes = [2, 16], strides = [1, 1]} : vector<2x76xf32> to vector<2x16xf32>
    %cst_165 = arith.constant 0.000000e+00 : f32
    %577 = vector.broadcast %cst_165 : f32 to vector<2x16xf32>
    %578 = arith.subf %577, %576 : vector<2x16xf32>
    %579 = math.exp %578 : vector<2x16xf32>
    %cst_166 = arith.constant 1.000000e+00 : f32
    %580 = vector.broadcast %cst_166 : f32 to vector<2x16xf32>
    %581 = arith.addf %580, %579 : vector<2x16xf32>
    %cst_167 = arith.constant 1.000000e+00 : f32
    %582 = vector.broadcast %cst_167 : f32 to vector<2x16xf32>
    %583 = arith.divf %582, %581 : vector<2x16xf32>
    %584 = vector.extract_strided_slice %459 {offsets = [0, 60], sizes = [2, 16], strides = [1, 1]} : vector<2x76xf32> to vector<2x16xf32>
    %585 = math.tanh %584 : vector<2x16xf32>
    %586 = vector.shape_cast %571 : vector<2x16xf32> to vector<2x16x1xf32>
    %587 = vector.shape_cast %585 : vector<2x16xf32> to vector<2x1x16xf32>
    %588 = vector.shape_cast %583 : vector<2x16xf32> to vector<2x1x16xf32>
    %589 = vector.broadcast %588 : vector<2x1x16xf32> to vector<2x16x16xf32>
    %590 = arith.mulf %394, %589 : vector<2x16x16xf32>
    %591 = vector.broadcast %587 : vector<2x1x16xf32> to vector<2x16x16xf32>
    %592 = arith.subf %591, %590 : vector<2x16x16xf32>
    %593 = vector.broadcast %586 : vector<2x16x1xf32> to vector<2x16x16xf32>
    %594 = arith.mulf %593, %592 : vector<2x16x16xf32>
    %595 = arith.addf %394, %594 : vector<2x16x16xf32>
    %596 = tpu.concatenate %456, %575 in 1 : vector<2x32xf32>, vector<2x16xf32> -> vector<2x48xf32>
    %cst_168 = arith.constant dense<0.000000e+00> : vector<2x32xf32>
    %597 = tpu.matmul %596, %4, %cst_168 {dimension_numbers = #tpu.dot_dimension_numbers<[1], [0], [0], [1], [0, 0, 1, 1], [], []>} : vector<2x48xf32>, vector<48x32xf32>, vector<2x32xf32> -> vector<2x32xf32>
    %598 = vector.broadcast %5 : vector<1x32xf32> to vector<2x32xf32>
    %599 = arith.addf %597, %598 : vector<2x32xf32>
    %cst_169 = arith.constant -2.000000e+01 : f32
    %cst_170 = arith.constant 2.000000e+01 : f32
    %600 = vector.broadcast %cst_169 : f32 to vector<2x32xf32>
    %601 = arith.maximumf %600, %599 : vector<2x32xf32>
    %602 = vector.broadcast %cst_170 : f32 to vector<2x32xf32>
    %603 = arith.minimumf %602, %601 : vector<2x32xf32>
    %cst_171 = arith.constant dense<0.000000e+00> : vector<2x8xf32>
    %604 = tpu.matmul %603, %6, %cst_171 {dimension_numbers = #tpu.dot_dimension_numbers<[1], [0], [0], [1], [0, 0, 1, 1], [], []>} : vector<2x32xf32>, vector<32x8xf32>, vector<2x8xf32> -> vector<2x8xf32>
    %605 = vector.broadcast %7 : vector<1x8xf32> to vector<2x8xf32>
    %606 = arith.addf %604, %605 : vector<2x8xf32>
    %cst_172 = arith.constant 0.000000e+00 : f32
    %607 = vector.broadcast %cst_172 : f32 to vector<2x8xf32>
    %608 = arith.subf %607, %606 : vector<2x8xf32>
    %609 = math.exp %608 : vector<2x8xf32>
    %cst_173 = arith.constant 1.000000e+00 : f32
    %610 = vector.broadcast %cst_173 : f32 to vector<2x8xf32>
    %611 = arith.addf %610, %609 : vector<2x8xf32>
    %cst_174 = arith.constant 1.000000e+00 : f32
    %612 = vector.broadcast %cst_174 : f32 to vector<2x8xf32>
    %613 = arith.divf %612, %611 : vector<2x8xf32>
    %c2_175 = arith.constant 2 : index
    %c0_176 = arith.constant 0 : index
    %c0_177 = arith.constant 0 : index
    %614 = vector.load %arg15[%c2_175, %c0_176, %c0_177] : memref<8x2x8xf32, #tpu.memory_space<vmem>>, vector<1x2x8xf32>
    %615 = vector.shape_cast %614 : vector<1x2x8xf32> to vector<2x8xf32>
    %616 = vector.shape_cast %613 : vector<2x8xf32> to vector<1x2x8xf32>
    tpu.vector_store %arg15[%c2_175, %c0_176, %c0_177], %616 {strides = array<i32>} : memref<8x2x8xf32, #tpu.memory_space<vmem>>, vector<1x2x8xf32>,
    %c3 = arith.constant 3 : index
    %c0_178 = arith.constant 0 : index
    %c0_179 = arith.constant 0 : index
    %617 = vector.load %arg0[%c3, %c0_178, %c0_179] : memref<8x2x10xf32, #tpu.memory_space<vmem>>, vector<1x2x10xf32>
    %618 = vector.shape_cast %617 : vector<1x2x10xf32> to vector<2x10xf32>
    %619 = tpu.concatenate %618, %575, %452 in 1 : vector<2x10xf32>, vector<2x16xf32>, vector<2x32xf32> -> vector<2x58xf32>
    %cst_180 = arith.constant dense<0.000000e+00> : vector<2x128xf32>
    %620 = tpu.matmul %619, %0, %cst_180 {dimension_numbers = #tpu.dot_dimension_numbers<[1], [0], [0], [1], [0, 0, 1, 1], [], []>} : vector<2x58xf32>, vector<58x128xf32>, vector<2x128xf32> -> vector<2x128xf32>
    %621 = vector.broadcast %1 : vector<1x128xf32> to vector<2x128xf32>
    %622 = arith.addf %620, %621 : vector<2x128xf32>
    %623 = vector.extract_strided_slice %622 {offsets = [0, 0], sizes = [2, 32], strides = [1, 1]} : vector<2x128xf32> to vector<2x32xf32>
    %cst_181 = arith.constant 0.000000e+00 : f32
    %624 = vector.broadcast %cst_181 : f32 to vector<2x32xf32>
    %625 = arith.subf %624, %623 : vector<2x32xf32>
    %626 = math.exp %625 : vector<2x32xf32>
    %cst_182 = arith.constant 1.000000e+00 : f32
    %627 = vector.broadcast %cst_182 : f32 to vector<2x32xf32>
    %628 = arith.addf %627, %626 : vector<2x32xf32>
    %cst_183 = arith.constant 1.000000e+00 : f32
    %629 = vector.broadcast %cst_183 : f32 to vector<2x32xf32>
    %630 = arith.divf %629, %628 : vector<2x32xf32>
    %631 = vector.extract_strided_slice %622 {offsets = [0, 32], sizes = [2, 32], strides = [1, 1]} : vector<2x128xf32> to vector<2x32xf32>
    %cst_184 = arith.constant 0.000000e+00 : f32
    %632 = vector.broadcast %cst_184 : f32 to vector<2x32xf32>
    %633 = arith.subf %632, %631 : vector<2x32xf32>
    %634 = math.exp %633 : vector<2x32xf32>
    %cst_185 = arith.constant 1.000000e+00 : f32
    %635 = vector.broadcast %cst_185 : f32 to vector<2x32xf32>
    %636 = arith.addf %635, %634 : vector<2x32xf32>
    %cst_186 = arith.constant 1.000000e+00 : f32
    %637 = vector.broadcast %cst_186 : f32 to vector<2x32xf32>
    %638 = arith.divf %637, %636 : vector<2x32xf32>
    %639 = vector.extract_strided_slice %622 {offsets = [0, 64], sizes = [2, 32], strides = [1, 1]} : vector<2x128xf32> to vector<2x32xf32>
    %640 = math.tanh %639 : vector<2x32xf32>
    %641 = vector.extract_strided_slice %622 {offsets = [0, 96], sizes = [2, 32], strides = [1, 1]} : vector<2x128xf32> to vector<2x32xf32>
    %cst_187 = arith.constant 0.000000e+00 : f32
    %642 = vector.broadcast %cst_187 : f32 to vector<2x32xf32>
    %643 = arith.subf %642, %641 : vector<2x32xf32>
    %644 = math.exp %643 : vector<2x32xf32>
    %cst_188 = arith.constant 1.000000e+00 : f32
    %645 = vector.broadcast %cst_188 : f32 to vector<2x32xf32>
    %646 = arith.addf %645, %644 : vector<2x32xf32>
    %cst_189 = arith.constant 1.000000e+00 : f32
    %647 = vector.broadcast %cst_189 : f32 to vector<2x32xf32>
    %648 = arith.divf %647, %646 : vector<2x32xf32>
    %649 = arith.mulf %638, %450 : vector<2x32xf32>
    %650 = arith.mulf %630, %640 : vector<2x32xf32>
    %651 = arith.addf %649, %650 : vector<2x32xf32>
    %652 = math.tanh %651 : vector<2x32xf32>
    %653 = arith.mulf %648, %652 : vector<2x32xf32>
    %cst_190 = arith.constant -2.000000e+01 : f32
    %cst_191 = arith.constant 2.000000e+01 : f32
    %654 = vector.broadcast %cst_190 : f32 to vector<2x32xf32>
    %655 = arith.maximumf %654, %653 : vector<2x32xf32>
    %656 = vector.broadcast %cst_191 : f32 to vector<2x32xf32>
    %657 = arith.minimumf %656, %655 : vector<2x32xf32>
    %cst_192 = arith.constant dense<0.000000e+00> : vector<2x76xf32>
    %658 = tpu.matmul %657, %2, %cst_192 {dimension_numbers = #tpu.dot_dimension_numbers<[1], [0], [0], [1], [0, 0, 1, 1], [], []>} : vector<2x32xf32>, vector<32x76xf32>, vector<2x76xf32> -> vector<2x76xf32>
    %659 = vector.broadcast %3 : vector<1x76xf32> to vector<2x76xf32>
    %660 = arith.addf %658, %659 : vector<2x76xf32>
    %661 = vector.extract_strided_slice %660 {offsets = [0, 0], sizes = [2, 22], strides = [1, 1]} : vector<2x76xf32> to vector<2x22xf32>
    %662 = vector.extract_strided_slice %660 {offsets = [0, 22], sizes = [2, 22], strides = [1, 1]} : vector<2x76xf32> to vector<2x22xf32>
    %663 = tpu.concatenate %661, %662 in 0 : vector<2x22xf32>, vector<2x22xf32> -> vector<4x22xf32>
    %664 = tpu.concatenate %570, %571 in 0 : vector<2x16xf32>, vector<2x16xf32> -> vector<4x16xf32>
    %665 = tpu.concatenate %595, %595 in 0 : vector<2x16x16xf32>, vector<2x16x16xf32> -> vector<4x16x16xf32>
    %666 = vector.extract_strided_slice %663 {offsets = [0, 0], sizes = [4, 16], strides = [1, 1]} : vector<4x22xf32> to vector<4x16xf32>
    %667 = math.tanh %666 : vector<4x16xf32>
    %668 = vector.extract_strided_slice %663 {offsets = [0, 16], sizes = [4, 1], strides = [1, 1]} : vector<4x22xf32> to vector<4x1xf32>
    %cst_193 = arith.constant 0.000000e+00 : f32
    %669 = vector.broadcast %cst_193 : f32 to vector<4x1xf32>
    %670 = arith.maximumf %668, %669 : vector<4x1xf32>
    %671 = math.absf %668 : vector<4x1xf32>
    %cst_194 = arith.constant 0.000000e+00 : f32
    %672 = vector.broadcast %cst_194 : f32 to vector<4x1xf32>
    %673 = arith.subf %672, %671 : vector<4x1xf32>
    %674 = math.exp %673 : vector<4x1xf32>
    %cst_195 = arith.constant 1.000000e+00 : f32
    %675 = vector.broadcast %cst_195 : f32 to vector<4x1xf32>
    %676 = arith.addf %675, %674 : vector<4x1xf32>
    %677 = math.log %676 : vector<4x1xf32>
    %678 = arith.addf %670, %677 : vector<4x1xf32>
    %679 = vector.extract_strided_slice %663 {offsets = [0, 17], sizes = [4, 1], strides = [1, 1]} : vector<4x22xf32> to vector<4x1xf32>
    %cst_196 = arith.constant 0.000000e+00 : f32
    %680 = vector.broadcast %cst_196 : f32 to vector<4x1xf32>
    %681 = arith.subf %680, %679 : vector<4x1xf32>
    %682 = math.exp %681 : vector<4x1xf32>
    %cst_197 = arith.constant 1.000000e+00 : f32
    %683 = vector.broadcast %cst_197 : f32 to vector<4x1xf32>
    %684 = arith.addf %683, %682 : vector<4x1xf32>
    %cst_198 = arith.constant 1.000000e+00 : f32
    %685 = vector.broadcast %cst_198 : f32 to vector<4x1xf32>
    %686 = arith.divf %685, %684 : vector<4x1xf32>
    %687 = vector.extract_strided_slice %663 {offsets = [0, 18], sizes = [4, 3], strides = [1, 1]} : vector<4x22xf32> to vector<4x3xf32>
    %cst_199 = arith.constant dense<0xFF800000> : vector<4xf32>
    %688 = vector.multi_reduction <maximumf>, %687, %cst_199 [1] : vector<4x3xf32> to vector<4xf32>
    %689 = vector.shape_cast %688 : vector<4xf32> to vector<4x1xf32>
    %690 = vector.broadcast %689 : vector<4x1xf32> to vector<4x3xf32>
    %691 = arith.subf %687, %690 : vector<4x3xf32>
    %692 = math.exp %691 : vector<4x3xf32>
    %cst_200 = arith.constant dense<0.000000e+00> : vector<4xf32>
    %693 = vector.multi_reduction <add>, %692, %cst_200 [1] : vector<4x3xf32> to vector<4xf32>
    %694 = vector.shape_cast %693 : vector<4xf32> to vector<4x1xf32>
    %695 = vector.broadcast %694 : vector<4x1xf32> to vector<4x3xf32>
    %696 = arith.divf %692, %695 : vector<4x3xf32>
    %697 = vector.extract_strided_slice %663 {offsets = [0, 21], sizes = [4, 1], strides = [1, 1]} : vector<4x22xf32> to vector<4x1xf32>
    %cst_201 = arith.constant 0.000000e+00 : f32
    %698 = vector.broadcast %cst_201 : f32 to vector<4x1xf32>
    %699 = arith.maximumf %697, %698 : vector<4x1xf32>
    %700 = math.absf %697 : vector<4x1xf32>
    %cst_202 = arith.constant 0.000000e+00 : f32
    %701 = vector.broadcast %cst_202 : f32 to vector<4x1xf32>
    %702 = arith.subf %701, %700 : vector<4x1xf32>
    %703 = math.exp %702 : vector<4x1xf32>
    %cst_203 = arith.constant 1.000000e+00 : f32
    %704 = vector.broadcast %cst_203 : f32 to vector<4x1xf32>
    %705 = arith.addf %704, %703 : vector<4x1xf32>
    %706 = math.log %705 : vector<4x1xf32>
    %707 = arith.addf %699, %706 : vector<4x1xf32>
    %708 = vector.shape_cast %667 : vector<4x16xf32> to vector<4x1x16xf32>
    %709 = vector.broadcast %708 : vector<4x1x16xf32> to vector<4x16x16xf32>
    %710 = arith.mulf %665, %709 : vector<4x16x16xf32>
    %cst_204 = arith.constant dense<0.000000e+00> : vector<4x16xf32>
    %711 = vector.multi_reduction <add>, %710, %cst_204 [2] : vector<4x16x16xf32> to vector<4x16xf32>
    %712 = arith.mulf %667, %667 : vector<4x16xf32>
    %cst_205 = arith.constant dense<0.000000e+00> : vector<4xf32>
    %713 = vector.multi_reduction <add>, %712, %cst_205 [1] : vector<4x16xf32> to vector<4xf32>
    %714 = vector.shape_cast %713 : vector<4xf32> to vector<4x1xf32>
    %715 = math.sqrt %714 : vector<4x1xf32>
    %716 = arith.mulf %665, %665 : vector<4x16x16xf32>
    %cst_206 = arith.constant dense<0.000000e+00> : vector<4x16xf32>
    %717 = vector.multi_reduction <add>, %716, %cst_206 [2] : vector<4x16x16xf32> to vector<4x16xf32>
    %718 = math.sqrt %717 : vector<4x16xf32>
    %719 = vector.broadcast %715 : vector<4x1xf32> to vector<4x16xf32>
    %720 = arith.mulf %719, %718 : vector<4x16xf32>
    %cst_207 = arith.constant 9.99999993E-9 : f32
    %721 = vector.broadcast %cst_207 : f32 to vector<4x16xf32>
    %722 = arith.addf %720, %721 : vector<4x16xf32>
    %723 = arith.divf %711, %722 : vector<4x16xf32>
    %724 = vector.broadcast %678 : vector<4x1xf32> to vector<4x16xf32>
    %725 = arith.mulf %724, %723 : vector<4x16xf32>
    %cst_208 = arith.constant dense<0xFF800000> : vector<4xf32>
    %726 = vector.multi_reduction <maximumf>, %725, %cst_208 [1] : vector<4x16xf32> to vector<4xf32>
    %727 = vector.shape_cast %726 : vector<4xf32> to vector<4x1xf32>
    %728 = vector.broadcast %727 : vector<4x1xf32> to vector<4x16xf32>
    %729 = arith.subf %725, %728 : vector<4x16xf32>
    %730 = math.exp %729 : vector<4x16xf32>
    %cst_209 = arith.constant dense<0.000000e+00> : vector<4xf32>
    %731 = vector.multi_reduction <add>, %730, %cst_209 [1] : vector<4x16xf32> to vector<4xf32>
    %732 = vector.shape_cast %731 : vector<4xf32> to vector<4x1xf32>
    %733 = vector.broadcast %732 : vector<4x1xf32> to vector<4x16xf32>
    %734 = arith.divf %730, %733 : vector<4x16xf32>
    %735 = vector.broadcast %686 : vector<4x1xf32> to vector<4x16xf32>
    %736 = arith.mulf %735, %734 : vector<4x16xf32>
    %cst_210 = arith.constant 1.000000e+00 : f32
    %737 = vector.broadcast %cst_210 : f32 to vector<4x1xf32>
    %738 = arith.subf %737, %686 : vector<4x1xf32>
    %739 = vector.broadcast %738 : vector<4x1xf32> to vector<4x16xf32>
    %740 = arith.mulf %739, %664 : vector<4x16xf32>
    %741 = arith.addf %736, %740 : vector<4x16xf32>
    %cst_211 = arith.constant 0.000000e+00 : f32
    %742 = vector.broadcast %cst_211 : f32 to vector<4x16xf32>
    %743 = vector.extract_strided_slice %696 {offsets = [0, 0], sizes = [4, 1], strides = [1, 1]} : vector<4x3xf32> to vector<4x1xf32>
    %744 = vector.broadcast %743 : vector<4x1xf32> to vector<4x16xf32>
    %745 = arith.mulf %744, %741 : vector<4x16xf32>
    %746 = arith.addf %742, %745 : vector<4x16xf32>
    %747 = vector.extract_strided_slice %696 {offsets = [0, 1], sizes = [4, 1], strides = [1, 1]} : vector<4x3xf32> to vector<4x1xf32>
    %748 = vector.extract_strided_slice %741 {offsets = [0, 15], sizes = [4, 1], strides = [1, 1]} : vector<4x16xf32> to vector<4x1xf32>
    %749 = vector.extract_strided_slice %741 {offsets = [0, 0], sizes = [4, 15], strides = [1, 1]} : vector<4x16xf32> to vector<4x15xf32>
    %750 = tpu.concatenate %748, %749 in 1 : vector<4x1xf32>, vector<4x15xf32> -> vector<4x16xf32>
    %751 = vector.broadcast %747 : vector<4x1xf32> to vector<4x16xf32>
    %752 = arith.mulf %751, %750 : vector<4x16xf32>
    %753 = arith.addf %746, %752 : vector<4x16xf32>
    %754 = vector.extract_strided_slice %696 {offsets = [0, 2], sizes = [4, 1], strides = [1, 1]} : vector<4x3xf32> to vector<4x1xf32>
    %755 = vector.extract_strided_slice %741 {offsets = [0, 1], sizes = [4, 15], strides = [1, 1]} : vector<4x16xf32> to vector<4x15xf32>
    %756 = vector.extract_strided_slice %741 {offsets = [0, 0], sizes = [4, 1], strides = [1, 1]} : vector<4x16xf32> to vector<4x1xf32>
    %757 = tpu.concatenate %755, %756 in 1 : vector<4x15xf32>, vector<4x1xf32> -> vector<4x16xf32>
    %758 = vector.broadcast %754 : vector<4x1xf32> to vector<4x16xf32>
    %759 = arith.mulf %758, %757 : vector<4x16xf32>
    %760 = arith.addf %753, %759 : vector<4x16xf32>
    %cst_212 = arith.constant 9.99999993E-9 : f32
    %761 = vector.broadcast %cst_212 : f32 to vector<4x16xf32>
    %762 = arith.addf %760, %761 : vector<4x16xf32>
    %763 = math.log %762 : vector<4x16xf32>
    %764 = vector.broadcast %707 : vector<4x1xf32> to vector<4x16xf32>
    %765 = arith.mulf %764, %763 : vector<4x16xf32>
    %766 = math.exp %765 : vector<4x16xf32>
    %cst_213 = arith.constant dense<0.000000e+00> : vector<4xf32>
    %767 = vector.multi_reduction <add>, %766, %cst_213 [1] : vector<4x16xf32> to vector<4xf32>
    %768 = vector.shape_cast %767 : vector<4xf32> to vector<4x1xf32>
    %769 = vector.broadcast %768 : vector<4x1xf32> to vector<4x16xf32>
    %770 = arith.divf %766, %769 : vector<4x16xf32>
    %771 = vector.extract_strided_slice %770 {offsets = [0, 0], sizes = [2, 16], strides = [1, 1]} : vector<4x16xf32> to vector<2x16xf32>
    %772 = vector.extract_strided_slice %770 {offsets = [2, 0], sizes = [2, 16], strides = [1, 1]} : vector<4x16xf32> to vector<2x16xf32>
    %773 = vector.shape_cast %771 : vector<2x16xf32> to vector<2x16x1xf32>
    %774 = vector.broadcast %773 : vector<2x16x1xf32> to vector<2x16x16xf32>
    %775 = arith.mulf %774, %595 : vector<2x16x16xf32>
    %cst_214 = arith.constant dense<0.000000e+00> : vector<2x16xf32>
    %776 = vector.multi_reduction <add>, %775, %cst_214 [1] : vector<2x16x16xf32> to vector<2x16xf32>
    %777 = vector.extract_strided_slice %660 {offsets = [0, 44], sizes = [2, 16], strides = [1, 1]} : vector<2x76xf32> to vector<2x16xf32>
    %cst_215 = arith.constant 0.000000e+00 : f32
    %778 = vector.broadcast %cst_215 : f32 to vector<2x16xf32>
    %779 = arith.subf %778, %777 : vector<2x16xf32>
    %780 = math.exp %779 : vector<2x16xf32>
    %cst_216 = arith.constant 1.000000e+00 : f32
    %781 = vector.broadcast %cst_216 : f32 to vector<2x16xf32>
    %782 = arith.addf %781, %780 : vector<2x16xf32>
    %cst_217 = arith.constant 1.000000e+00 : f32
    %783 = vector.broadcast %cst_217 : f32 to vector<2x16xf32>
    %784 = arith.divf %783, %782 : vector<2x16xf32>
    %785 = vector.extract_strided_slice %660 {offsets = [0, 60], sizes = [2, 16], strides = [1, 1]} : vector<2x76xf32> to vector<2x16xf32>
    %786 = math.tanh %785 : vector<2x16xf32>
    %787 = vector.shape_cast %772 : vector<2x16xf32> to vector<2x16x1xf32>
    %788 = vector.shape_cast %786 : vector<2x16xf32> to vector<2x1x16xf32>
    %789 = vector.shape_cast %784 : vector<2x16xf32> to vector<2x1x16xf32>
    %790 = vector.broadcast %789 : vector<2x1x16xf32> to vector<2x16x16xf32>
    %791 = arith.mulf %595, %790 : vector<2x16x16xf32>
    %792 = vector.broadcast %788 : vector<2x1x16xf32> to vector<2x16x16xf32>
    %793 = arith.subf %792, %791 : vector<2x16x16xf32>
    %794 = vector.broadcast %787 : vector<2x16x1xf32> to vector<2x16x16xf32>
    %795 = arith.mulf %794, %793 : vector<2x16x16xf32>
    %796 = arith.addf %595, %795 : vector<2x16x16xf32>
    %797 = tpu.concatenate %657, %776 in 1 : vector<2x32xf32>, vector<2x16xf32> -> vector<2x48xf32>
    %cst_218 = arith.constant dense<0.000000e+00> : vector<2x32xf32>
    %798 = tpu.matmul %797, %4, %cst_218 {dimension_numbers = #tpu.dot_dimension_numbers<[1], [0], [0], [1], [0, 0, 1, 1], [], []>} : vector<2x48xf32>, vector<48x32xf32>, vector<2x32xf32> -> vector<2x32xf32>
    %799 = vector.broadcast %5 : vector<1x32xf32> to vector<2x32xf32>
    %800 = arith.addf %798, %799 : vector<2x32xf32>
    %cst_219 = arith.constant -2.000000e+01 : f32
    %cst_220 = arith.constant 2.000000e+01 : f32
    %801 = vector.broadcast %cst_219 : f32 to vector<2x32xf32>
    %802 = arith.maximumf %801, %800 : vector<2x32xf32>
    %803 = vector.broadcast %cst_220 : f32 to vector<2x32xf32>
    %804 = arith.minimumf %803, %802 : vector<2x32xf32>
    %cst_221 = arith.constant dense<0.000000e+00> : vector<2x8xf32>
    %805 = tpu.matmul %804, %6, %cst_221 {dimension_numbers = #tpu.dot_dimension_numbers<[1], [0], [0], [1], [0, 0, 1, 1], [], []>} : vector<2x32xf32>, vector<32x8xf32>, vector<2x8xf32> -> vector<2x8xf32>
    %806 = vector.broadcast %7 : vector<1x8xf32> to vector<2x8xf32>
    %807 = arith.addf %805, %806 : vector<2x8xf32>
    %cst_222 = arith.constant 0.000000e+00 : f32
    %808 = vector.broadcast %cst_222 : f32 to vector<2x8xf32>
    %809 = arith.subf %808, %807 : vector<2x8xf32>
    %810 = math.exp %809 : vector<2x8xf32>
    %cst_223 = arith.constant 1.000000e+00 : f32
    %811 = vector.broadcast %cst_223 : f32 to vector<2x8xf32>
    %812 = arith.addf %811, %810 : vector<2x8xf32>
    %cst_224 = arith.constant 1.000000e+00 : f32
    %813 = vector.broadcast %cst_224 : f32 to vector<2x8xf32>
    %814 = arith.divf %813, %812 : vector<2x8xf32>
    %c3_225 = arith.constant 3 : index
    %c0_226 = arith.constant 0 : index
    %c0_227 = arith.constant 0 : index
    %815 = vector.load %arg15[%c3_225, %c0_226, %c0_227] : memref<8x2x8xf32, #tpu.memory_space<vmem>>, vector<1x2x8xf32>
    %816 = vector.shape_cast %815 : vector<1x2x8xf32> to vector<2x8xf32>
    %817 = vector.shape_cast %814 : vector<2x8xf32> to vector<1x2x8xf32>
    tpu.vector_store %arg15[%c3_225, %c0_226, %c0_227], %817 {strides = array<i32>} : memref<8x2x8xf32, #tpu.memory_space<vmem>>, vector<1x2x8xf32>,
    %c4 = arith.constant 4 : index
    %c0_228 = arith.constant 0 : index
    %c0_229 = arith.constant 0 : index
    %818 = vector.load %arg0[%c4, %c0_228, %c0_229] : memref<8x2x10xf32, #tpu.memory_space<vmem>>, vector<1x2x10xf32>
    %819 = vector.shape_cast %818 : vector<1x2x10xf32> to vector<2x10xf32>
    %820 = tpu.concatenate %819, %776, %653 in 1 : vector<2x10xf32>, vector<2x16xf32>, vector<2x32xf32> -> vector<2x58xf32>
    %cst_230 = arith.constant dense<0.000000e+00> : vector<2x128xf32>
    %821 = tpu.matmul %820, %0, %cst_230 {dimension_numbers = #tpu.dot_dimension_numbers<[1], [0], [0], [1], [0, 0, 1, 1], [], []>} : vector<2x58xf32>, vector<58x128xf32>, vector<2x128xf32> -> vector<2x128xf32>
    %822 = vector.broadcast %1 : vector<1x128xf32> to vector<2x128xf32>
    %823 = arith.addf %821, %822 : vector<2x128xf32>
    %824 = vector.extract_strided_slice %823 {offsets = [0, 0], sizes = [2, 32], strides = [1, 1]} : vector<2x128xf32> to vector<2x32xf32>
    %cst_231 = arith.constant 0.000000e+00 : f32
    %825 = vector.broadcast %cst_231 : f32 to vector<2x32xf32>
    %826 = arith.subf %825, %824 : vector<2x32xf32>
    %827 = math.exp %826 : vector<2x32xf32>
    %cst_232 = arith.constant 1.000000e+00 : f32
    %828 = vector.broadcast %cst_232 : f32 to vector<2x32xf32>
    %829 = arith.addf %828, %827 : vector<2x32xf32>
    %cst_233 = arith.constant 1.000000e+00 : f32
    %830 = vector.broadcast %cst_233 : f32 to vector<2x32xf32>
    %831 = arith.divf %830, %829 : vector<2x32xf32>
    %832 = vector.extract_strided_slice %823 {offsets = [0, 32], sizes = [2, 32], strides = [1, 1]} : vector<2x128xf32> to vector<2x32xf32>
    %cst_234 = arith.constant 0.000000e+00 : f32
    %833 = vector.broadcast %cst_234 : f32 to vector<2x32xf32>
    %834 = arith.subf %833, %832 : vector<2x32xf32>
    %835 = math.exp %834 : vector<2x32xf32>
    %cst_235 = arith.constant 1.000000e+00 : f32
    %836 = vector.broadcast %cst_235 : f32 to vector<2x32xf32>
    %837 = arith.addf %836, %835 : vector<2x32xf32>
    %cst_236 = arith.constant 1.000000e+00 : f32
    %838 = vector.broadcast %cst_236 : f32 to vector<2x32xf32>
    %839 = arith.divf %838, %837 : vector<2x32xf32>
    %840 = vector.extract_strided_slice %823 {offsets = [0, 64], sizes = [2, 32], strides = [1, 1]} : vector<2x128xf32> to vector<2x32xf32>
    %841 = math.tanh %840 : vector<2x32xf32>
    %842 = vector.extract_strided_slice %823 {offsets = [0, 96], sizes = [2, 32], strides = [1, 1]} : vector<2x128xf32> to vector<2x32xf32>
    %cst_237 = arith.constant 0.000000e+00 : f32
    %843 = vector.broadcast %cst_237 : f32 to vector<2x32xf32>
    %844 = arith.subf %843, %842 : vector<2x32xf32>
    %845 = math.exp %844 : vector<2x32xf32>
    %cst_238 = arith.constant 1.000000e+00 : f32
    %846 = vector.broadcast %cst_238 : f32 to vector<2x32xf32>
    %847 = arith.addf %846, %845 : vector<2x32xf32>
    %cst_239 = arith.constant 1.000000e+00 : f32
    %848 = vector.broadcast %cst_239 : f32 to vector<2x32xf32>
    %849 = arith.divf %848, %847 : vector<2x32xf32>
    %850 = arith.mulf %839, %651 : vector<2x32xf32>
    %851 = arith.mulf %831, %841 : vector<2x32xf32>
    %852 = arith.addf %850, %851 : vector<2x32xf32>
    %853 = math.tanh %852 : vector<2x32xf32>
    %854 = arith.mulf %849, %853 : vector<2x32xf32>
    %cst_240 = arith.constant -2.000000e+01 : f32
    %cst_241 = arith.constant 2.000000e+01 : f32
    %855 = vector.broadcast %cst_240 : f32 to vector<2x32xf32>
    %856 = arith.maximumf %855, %854 : vector<2x32xf32>
    %857 = vector.broadcast %cst_241 : f32 to vector<2x32xf32>
    %858 = arith.minimumf %857, %856 : vector<2x32xf32>
    %cst_242 = arith.constant dense<0.000000e+00> : vector<2x76xf32>
    %859 = tpu.matmul %858, %2, %cst_242 {dimension_numbers = #tpu.dot_dimension_numbers<[1], [0], [0], [1], [0, 0, 1, 1], [], []>} : vector<2x32xf32>, vector<32x76xf32>, vector<2x76xf32> -> vector<2x76xf32>
    %860 = vector.broadcast %3 : vector<1x76xf32> to vector<2x76xf32>
    %861 = arith.addf %859, %860 : vector<2x76xf32>
    %862 = vector.extract_strided_slice %861 {offsets = [0, 0], sizes = [2, 22], strides = [1, 1]} : vector<2x76xf32> to vector<2x22xf32>
    %863 = vector.extract_strided_slice %861 {offsets = [0, 22], sizes = [2, 22], strides = [1, 1]} : vector<2x76xf32> to vector<2x22xf32>
    %864 = tpu.concatenate %862, %863 in 0 : vector<2x22xf32>, vector<2x22xf32> -> vector<4x22xf32>
    %865 = tpu.concatenate %771, %772 in 0 : vector<2x16xf32>, vector<2x16xf32> -> vector<4x16xf32>
    %866 = tpu.concatenate %796, %796 in 0 : vector<2x16x16xf32>, vector<2x16x16xf32> -> vector<4x16x16xf32>
    %867 = vector.extract_strided_slice %864 {offsets = [0, 0], sizes = [4, 16], strides = [1, 1]} : vector<4x22xf32> to vector<4x16xf32>
    %868 = math.tanh %867 : vector<4x16xf32>
    %869 = vector.extract_strided_slice %864 {offsets = [0, 16], sizes = [4, 1], strides = [1, 1]} : vector<4x22xf32> to vector<4x1xf32>
    %cst_243 = arith.constant 0.000000e+00 : f32
    %870 = vector.broadcast %cst_243 : f32 to vector<4x1xf32>
    %871 = arith.maximumf %869, %870 : vector<4x1xf32>
    %872 = math.absf %869 : vector<4x1xf32>
    %cst_244 = arith.constant 0.000000e+00 : f32
    %873 = vector.broadcast %cst_244 : f32 to vector<4x1xf32>
    %874 = arith.subf %873, %872 : vector<4x1xf32>
    %875 = math.exp %874 : vector<4x1xf32>
    %cst_245 = arith.constant 1.000000e+00 : f32
    %876 = vector.broadcast %cst_245 : f32 to vector<4x1xf32>
    %877 = arith.addf %876, %875 : vector<4x1xf32>
    %878 = math.log %877 : vector<4x1xf32>
    %879 = arith.addf %871, %878 : vector<4x1xf32>
    %880 = vector.extract_strided_slice %864 {offsets = [0, 17], sizes = [4, 1], strides = [1, 1]} : vector<4x22xf32> to vector<4x1xf32>
    %cst_246 = arith.constant 0.000000e+00 : f32
    %881 = vector.broadcast %cst_246 : f32 to vector<4x1xf32>
    %882 = arith.subf %881, %880 : vector<4x1xf32>
    %883 = math.exp %882 : vector<4x1xf32>
    %cst_247 = arith.constant 1.000000e+00 : f32
    %884 = vector.broadcast %cst_247 : f32 to vector<4x1xf32>
    %885 = arith.addf %884, %883 : vector<4x1xf32>
    %cst_248 = arith.constant 1.000000e+00 : f32
    %886 = vector.broadcast %cst_248 : f32 to vector<4x1xf32>
    %887 = arith.divf %886, %885 : vector<4x1xf32>
    %888 = vector.extract_strided_slice %864 {offsets = [0, 18], sizes = [4, 3], strides = [1, 1]} : vector<4x22xf32> to vector<4x3xf32>
    %cst_249 = arith.constant dense<0xFF800000> : vector<4xf32>
    %889 = vector.multi_reduction <maximumf>, %888, %cst_249 [1] : vector<4x3xf32> to vector<4xf32>
    %890 = vector.shape_cast %889 : vector<4xf32> to vector<4x1xf32>
    %891 = vector.broadcast %890 : vector<4x1xf32> to vector<4x3xf32>
    %892 = arith.subf %888, %891 : vector<4x3xf32>
    %893 = math.exp %892 : vector<4x3xf32>
    %cst_250 = arith.constant dense<0.000000e+00> : vector<4xf32>
    %894 = vector.multi_reduction <add>, %893, %cst_250 [1] : vector<4x3xf32> to vector<4xf32>
    %895 = vector.shape_cast %894 : vector<4xf32> to vector<4x1xf32>
    %896 = vector.broadcast %895 : vector<4x1xf32> to vector<4x3xf32>
    %897 = arith.divf %893, %896 : vector<4x3xf32>
    %898 = vector.extract_strided_slice %864 {offsets = [0, 21], sizes = [4, 1], strides = [1, 1]} : vector<4x22xf32> to vector<4x1xf32>
    %cst_251 = arith.constant 0.000000e+00 : f32
    %899 = vector.broadcast %cst_251 : f32 to vector<4x1xf32>
    %900 = arith.maximumf %898, %899 : vector<4x1xf32>
    %901 = math.absf %898 : vector<4x1xf32>
    %cst_252 = arith.constant 0.000000e+00 : f32
    %902 = vector.broadcast %cst_252 : f32 to vector<4x1xf32>
    %903 = arith.subf %902, %901 : vector<4x1xf32>
    %904 = math.exp %903 : vector<4x1xf32>
    %cst_253 = arith.constant 1.000000e+00 : f32
    %905 = vector.broadcast %cst_253 : f32 to vector<4x1xf32>
    %906 = arith.addf %905, %904 : vector<4x1xf32>
    %907 = math.log %906 : vector<4x1xf32>
    %908 = arith.addf %900, %907 : vector<4x1xf32>
    %909 = vector.shape_cast %868 : vector<4x16xf32> to vector<4x1x16xf32>
    %910 = vector.broadcast %909 : vector<4x1x16xf32> to vector<4x16x16xf32>
    %911 = arith.mulf %866, %910 : vector<4x16x16xf32>
    %cst_254 = arith.constant dense<0.000000e+00> : vector<4x16xf32>
    %912 = vector.multi_reduction <add>, %911, %cst_254 [2] : vector<4x16x16xf32> to vector<4x16xf32>
    %913 = arith.mulf %868, %868 : vector<4x16xf32>
    %cst_255 = arith.constant dense<0.000000e+00> : vector<4xf32>
    %914 = vector.multi_reduction <add>, %913, %cst_255 [1] : vector<4x16xf32> to vector<4xf32>
    %915 = vector.shape_cast %914 : vector<4xf32> to vector<4x1xf32>
    %916 = math.sqrt %915 : vector<4x1xf32>
    %917 = arith.mulf %866, %866 : vector<4x16x16xf32>
    %cst_256 = arith.constant dense<0.000000e+00> : vector<4x16xf32>
    %918 = vector.multi_reduction <add>, %917, %cst_256 [2] : vector<4x16x16xf32> to vector<4x16xf32>
    %919 = math.sqrt %918 : vector<4x16xf32>
    %920 = vector.broadcast %916 : vector<4x1xf32> to vector<4x16xf32>
    %921 = arith.mulf %920, %919 : vector<4x16xf32>
    %cst_257 = arith.constant 9.99999993E-9 : f32
    %922 = vector.broadcast %cst_257 : f32 to vector<4x16xf32>
    %923 = arith.addf %921, %922 : vector<4x16xf32>
    %924 = arith.divf %912, %923 : vector<4x16xf32>
    %925 = vector.broadcast %879 : vector<4x1xf32> to vector<4x16xf32>
    %926 = arith.mulf %925, %924 : vector<4x16xf32>
    %cst_258 = arith.constant dense<0xFF800000> : vector<4xf32>
    %927 = vector.multi_reduction <maximumf>, %926, %cst_258 [1] : vector<4x16xf32> to vector<4xf32>
    %928 = vector.shape_cast %927 : vector<4xf32> to vector<4x1xf32>
    %929 = vector.broadcast %928 : vector<4x1xf32> to vector<4x16xf32>
    %930 = arith.subf %926, %929 : vector<4x16xf32>
    %931 = math.exp %930 : vector<4x16xf32>
    %cst_259 = arith.constant dense<0.000000e+00> : vector<4xf32>
    %932 = vector.multi_reduction <add>, %931, %cst_259 [1] : vector<4x16xf32> to vector<4xf32>
    %933 = vector.shape_cast %932 : vector<4xf32> to vector<4x1xf32>
    %934 = vector.broadcast %933 : vector<4x1xf32> to vector<4x16xf32>
    %935 = arith.divf %931, %934 : vector<4x16xf32>
    %936 = vector.broadcast %887 : vector<4x1xf32> to vector<4x16xf32>
    %937 = arith.mulf %936, %935 : vector<4x16xf32>
    %cst_260 = arith.constant 1.000000e+00 : f32
    %938 = vector.broadcast %cst_260 : f32 to vector<4x1xf32>
    %939 = arith.subf %938, %887 : vector<4x1xf32>
    %940 = vector.broadcast %939 : vector<4x1xf32> to vector<4x16xf32>
    %941 = arith.mulf %940, %865 : vector<4x16xf32>
    %942 = arith.addf %937, %941 : vector<4x16xf32>
    %cst_261 = arith.constant 0.000000e+00 : f32
    %943 = vector.broadcast %cst_261 : f32 to vector<4x16xf32>
    %944 = vector.extract_strided_slice %897 {offsets = [0, 0], sizes = [4, 1], strides = [1, 1]} : vector<4x3xf32> to vector<4x1xf32>
    %945 = vector.broadcast %944 : vector<4x1xf32> to vector<4x16xf32>
    %946 = arith.mulf %945, %942 : vector<4x16xf32>
    %947 = arith.addf %943, %946 : vector<4x16xf32>
    %948 = vector.extract_strided_slice %897 {offsets = [0, 1], sizes = [4, 1], strides = [1, 1]} : vector<4x3xf32> to vector<4x1xf32>
    %949 = vector.extract_strided_slice %942 {offsets = [0, 15], sizes = [4, 1], strides = [1, 1]} : vector<4x16xf32> to vector<4x1xf32>
    %950 = vector.extract_strided_slice %942 {offsets = [0, 0], sizes = [4, 15], strides = [1, 1]} : vector<4x16xf32> to vector<4x15xf32>
    %951 = tpu.concatenate %949, %950 in 1 : vector<4x1xf32>, vector<4x15xf32> -> vector<4x16xf32>
    %952 = vector.broadcast %948 : vector<4x1xf32> to vector<4x16xf32>
    %953 = arith.mulf %952, %951 : vector<4x16xf32>
    %954 = arith.addf %947, %953 : vector<4x16xf32>
    %955 = vector.extract_strided_slice %897 {offsets = [0, 2], sizes = [4, 1], strides = [1, 1]} : vector<4x3xf32> to vector<4x1xf32>
    %956 = vector.extract_strided_slice %942 {offsets = [0, 1], sizes = [4, 15], strides = [1, 1]} : vector<4x16xf32> to vector<4x15xf32>
    %957 = vector.extract_strided_slice %942 {offsets = [0, 0], sizes = [4, 1], strides = [1, 1]} : vector<4x16xf32> to vector<4x1xf32>
    %958 = tpu.concatenate %956, %957 in 1 : vector<4x15xf32>, vector<4x1xf32> -> vector<4x16xf32>
    %959 = vector.broadcast %955 : vector<4x1xf32> to vector<4x16xf32>
    %960 = arith.mulf %959, %958 : vector<4x16xf32>
    %961 = arith.addf %954, %960 : vector<4x16xf32>
    %cst_262 = arith.constant 9.99999993E-9 : f32
    %962 = vector.broadcast %cst_262 : f32 to vector<4x16xf32>
    %963 = arith.addf %961, %962 : vector<4x16xf32>
    %964 = math.log %963 : vector<4x16xf32>
    %965 = vector.broadcast %908 : vector<4x1xf32> to vector<4x16xf32>
    %966 = arith.mulf %965, %964 : vector<4x16xf32>
    %967 = math.exp %966 : vector<4x16xf32>
    %cst_263 = arith.constant dense<0.000000e+00> : vector<4xf32>
    %968 = vector.multi_reduction <add>, %967, %cst_263 [1] : vector<4x16xf32> to vector<4xf32>
    %969 = vector.shape_cast %968 : vector<4xf32> to vector<4x1xf32>
    %970 = vector.broadcast %969 : vector<4x1xf32> to vector<4x16xf32>
    %971 = arith.divf %967, %970 : vector<4x16xf32>
    %972 = vector.extract_strided_slice %971 {offsets = [0, 0], sizes = [2, 16], strides = [1, 1]} : vector<4x16xf32> to vector<2x16xf32>
    %973 = vector.extract_strided_slice %971 {offsets = [2, 0], sizes = [2, 16], strides = [1, 1]} : vector<4x16xf32> to vector<2x16xf32>
    %974 = vector.shape_cast %972 : vector<2x16xf32> to vector<2x16x1xf32>
    %975 = vector.broadcast %974 : vector<2x16x1xf32> to vector<2x16x16xf32>
    %976 = arith.mulf %975, %796 : vector<2x16x16xf32>
    %cst_264 = arith.constant dense<0.000000e+00> : vector<2x16xf32>
    %977 = vector.multi_reduction <add>, %976, %cst_264 [1] : vector<2x16x16xf32> to vector<2x16xf32>
    %978 = vector.extract_strided_slice %861 {offsets = [0, 44], sizes = [2, 16], strides = [1, 1]} : vector<2x76xf32> to vector<2x16xf32>
    %cst_265 = arith.constant 0.000000e+00 : f32
    %979 = vector.broadcast %cst_265 : f32 to vector<2x16xf32>
    %980 = arith.subf %979, %978 : vector<2x16xf32>
    %981 = math.exp %980 : vector<2x16xf32>
    %cst_266 = arith.constant 1.000000e+00 : f32
    %982 = vector.broadcast %cst_266 : f32 to vector<2x16xf32>
    %983 = arith.addf %982, %981 : vector<2x16xf32>
    %cst_267 = arith.constant 1.000000e+00 : f32
    %984 = vector.broadcast %cst_267 : f32 to vector<2x16xf32>
    %985 = arith.divf %984, %983 : vector<2x16xf32>
    %986 = vector.extract_strided_slice %861 {offsets = [0, 60], sizes = [2, 16], strides = [1, 1]} : vector<2x76xf32> to vector<2x16xf32>
    %987 = math.tanh %986 : vector<2x16xf32>
    %988 = vector.shape_cast %973 : vector<2x16xf32> to vector<2x16x1xf32>
    %989 = vector.shape_cast %987 : vector<2x16xf32> to vector<2x1x16xf32>
    %990 = vector.shape_cast %985 : vector<2x16xf32> to vector<2x1x16xf32>
    %991 = vector.broadcast %990 : vector<2x1x16xf32> to vector<2x16x16xf32>
    %992 = arith.mulf %796, %991 : vector<2x16x16xf32>
    %993 = vector.broadcast %989 : vector<2x1x16xf32> to vector<2x16x16xf32>
    %994 = arith.subf %993, %992 : vector<2x16x16xf32>
    %995 = vector.broadcast %988 : vector<2x16x1xf32> to vector<2x16x16xf32>
    %996 = arith.mulf %995, %994 : vector<2x16x16xf32>
    %997 = arith.addf %796, %996 : vector<2x16x16xf32>
    %998 = tpu.concatenate %858, %977 in 1 : vector<2x32xf32>, vector<2x16xf32> -> vector<2x48xf32>
    %cst_268 = arith.constant dense<0.000000e+00> : vector<2x32xf32>
    %999 = tpu.matmul %998, %4, %cst_268 {dimension_numbers = #tpu.dot_dimension_numbers<[1], [0], [0], [1], [0, 0, 1, 1], [], []>} : vector<2x48xf32>, vector<48x32xf32>, vector<2x32xf32> -> vector<2x32xf32>
    %1000 = vector.broadcast %5 : vector<1x32xf32> to vector<2x32xf32>
    %1001 = arith.addf %999, %1000 : vector<2x32xf32>
    %cst_269 = arith.constant -2.000000e+01 : f32
    %cst_270 = arith.constant 2.000000e+01 : f32
    %1002 = vector.broadcast %cst_269 : f32 to vector<2x32xf32>
    %1003 = arith.maximumf %1002, %1001 : vector<2x32xf32>
    %1004 = vector.broadcast %cst_270 : f32 to vector<2x32xf32>
    %1005 = arith.minimumf %1004, %1003 : vector<2x32xf32>
    %cst_271 = arith.constant dense<0.000000e+00> : vector<2x8xf32>
    %1006 = tpu.matmul %1005, %6, %cst_271 {dimension_numbers = #tpu.dot_dimension_numbers<[1], [0], [0], [1], [0, 0, 1, 1], [], []>} : vector<2x32xf32>, vector<32x8xf32>, vector<2x8xf32> -> vector<2x8xf32>
    %1007 = vector.broadcast %7 : vector<1x8xf32> to vector<2x8xf32>
    %1008 = arith.addf %1006, %1007 : vector<2x8xf32>
    %cst_272 = arith.constant 0.000000e+00 : f32
    %1009 = vector.broadcast %cst_272 : f32 to vector<2x8xf32>
    %1010 = arith.subf %1009, %1008 : vector<2x8xf32>
    %1011 = math.exp %1010 : vector<2x8xf32>
    %cst_273 = arith.constant 1.000000e+00 : f32
    %1012 = vector.broadcast %cst_273 : f32 to vector<2x8xf32>
    %1013 = arith.addf %1012, %1011 : vector<2x8xf32>
    %cst_274 = arith.constant 1.000000e+00 : f32
    %1014 = vector.broadcast %cst_274 : f32 to vector<2x8xf32>
    %1015 = arith.divf %1014, %1013 : vector<2x8xf32>
    %c4_275 = arith.constant 4 : index
    %c0_276 = arith.constant 0 : index
    %c0_277 = arith.constant 0 : index
    %1016 = vector.load %arg15[%c4_275, %c0_276, %c0_277] : memref<8x2x8xf32, #tpu.memory_space<vmem>>, vector<1x2x8xf32>
    %1017 = vector.shape_cast %1016 : vector<1x2x8xf32> to vector<2x8xf32>
    %1018 = vector.shape_cast %1015 : vector<2x8xf32> to vector<1x2x8xf32>
    tpu.vector_store %arg15[%c4_275, %c0_276, %c0_277], %1018 {strides = array<i32>} : memref<8x2x8xf32, #tpu.memory_space<vmem>>, vector<1x2x8xf32>,
    %c5 = arith.constant 5 : index
    %c0_278 = arith.constant 0 : index
    %c0_279 = arith.constant 0 : index
    %1019 = vector.load %arg0[%c5, %c0_278, %c0_279] : memref<8x2x10xf32, #tpu.memory_space<vmem>>, vector<1x2x10xf32>
    %1020 = vector.shape_cast %1019 : vector<1x2x10xf32> to vector<2x10xf32>
    %1021 = tpu.concatenate %1020, %977, %854 in 1 : vector<2x10xf32>, vector<2x16xf32>, vector<2x32xf32> -> vector<2x58xf32>
    %cst_280 = arith.constant dense<0.000000e+00> : vector<2x128xf32>
    %1022 = tpu.matmul %1021, %0, %cst_280 {dimension_numbers = #tpu.dot_dimension_numbers<[1], [0], [0], [1], [0, 0, 1, 1], [], []>} : vector<2x58xf32>, vector<58x128xf32>, vector<2x128xf32> -> vector<2x128xf32>
    %1023 = vector.broadcast %1 : vector<1x128xf32> to vector<2x128xf32>
    %1024 = arith.addf %1022, %1023 : vector<2x128xf32>
    %1025 = vector.extract_strided_slice %1024 {offsets = [0, 0], sizes = [2, 32], strides = [1, 1]} : vector<2x128xf32> to vector<2x32xf32>
    %cst_281 = arith.constant 0.000000e+00 : f32
    %1026 = vector.broadcast %cst_281 : f32 to vector<2x32xf32>
    %1027 = arith.subf %1026, %1025 : vector<2x32xf32>
    %1028 = math.exp %1027 : vector<2x32xf32>
    %cst_282 = arith.constant 1.000000e+00 : f32
    %1029 = vector.broadcast %cst_282 : f32 to vector<2x32xf32>
    %1030 = arith.addf %1029, %1028 : vector<2x32xf32>
    %cst_283 = arith.constant 1.000000e+00 : f32
    %1031 = vector.broadcast %cst_283 : f32 to vector<2x32xf32>
    %1032 = arith.divf %1031, %1030 : vector<2x32xf32>
    %1033 = vector.extract_strided_slice %1024 {offsets = [0, 32], sizes = [2, 32], strides = [1, 1]} : vector<2x128xf32> to vector<2x32xf32>
    %cst_284 = arith.constant 0.000000e+00 : f32
    %1034 = vector.broadcast %cst_284 : f32 to vector<2x32xf32>
    %1035 = arith.subf %1034, %1033 : vector<2x32xf32>
    %1036 = math.exp %1035 : vector<2x32xf32>
    %cst_285 = arith.constant 1.000000e+00 : f32
    %1037 = vector.broadcast %cst_285 : f32 to vector<2x32xf32>
    %1038 = arith.addf %1037, %1036 : vector<2x32xf32>
    %cst_286 = arith.constant 1.000000e+00 : f32
    %1039 = vector.broadcast %cst_286 : f32 to vector<2x32xf32>
    %1040 = arith.divf %1039, %1038 : vector<2x32xf32>
    %1041 = vector.extract_strided_slice %1024 {offsets = [0, 64], sizes = [2, 32], strides = [1, 1]} : vector<2x128xf32> to vector<2x32xf32>
    %1042 = math.tanh %1041 : vector<2x32xf32>
    %1043 = vector.extract_strided_slice %1024 {offsets = [0, 96], sizes = [2, 32], strides = [1, 1]} : vector<2x128xf32> to vector<2x32xf32>
    %cst_287 = arith.constant 0.000000e+00 : f32
    %1044 = vector.broadcast %cst_287 : f32 to vector<2x32xf32>
    %1045 = arith.subf %1044, %1043 : vector<2x32xf32>
    %1046 = math.exp %1045 : vector<2x32xf32>
    %cst_288 = arith.constant 1.000000e+00 : f32
    %1047 = vector.broadcast %cst_288 : f32 to vector<2x32xf32>
    %1048 = arith.addf %1047, %1046 : vector<2x32xf32>
    %cst_289 = arith.constant 1.000000e+00 : f32
    %1049 = vector.broadcast %cst_289 : f32 to vector<2x32xf32>
    %1050 = arith.divf %1049, %1048 : vector<2x32xf32>
    %1051 = arith.mulf %1040, %852 : vector<2x32xf32>
    %1052 = arith.mulf %1032, %1042 : vector<2x32xf32>
    %1053 = arith.addf %1051, %1052 : vector<2x32xf32>
    %1054 = math.tanh %1053 : vector<2x32xf32>
    %1055 = arith.mulf %1050, %1054 : vector<2x32xf32>
    %cst_290 = arith.constant -2.000000e+01 : f32
    %cst_291 = arith.constant 2.000000e+01 : f32
    %1056 = vector.broadcast %cst_290 : f32 to vector<2x32xf32>
    %1057 = arith.maximumf %1056, %1055 : vector<2x32xf32>
    %1058 = vector.broadcast %cst_291 : f32 to vector<2x32xf32>
    %1059 = arith.minimumf %1058, %1057 : vector<2x32xf32>
    %cst_292 = arith.constant dense<0.000000e+00> : vector<2x76xf32>
    %1060 = tpu.matmul %1059, %2, %cst_292 {dimension_numbers = #tpu.dot_dimension_numbers<[1], [0], [0], [1], [0, 0, 1, 1], [], []>} : vector<2x32xf32>, vector<32x76xf32>, vector<2x76xf32> -> vector<2x76xf32>
    %1061 = vector.broadcast %3 : vector<1x76xf32> to vector<2x76xf32>
    %1062 = arith.addf %1060, %1061 : vector<2x76xf32>
    %1063 = vector.extract_strided_slice %1062 {offsets = [0, 0], sizes = [2, 22], strides = [1, 1]} : vector<2x76xf32> to vector<2x22xf32>
    %1064 = vector.extract_strided_slice %1062 {offsets = [0, 22], sizes = [2, 22], strides = [1, 1]} : vector<2x76xf32> to vector<2x22xf32>
    %1065 = tpu.concatenate %1063, %1064 in 0 : vector<2x22xf32>, vector<2x22xf32> -> vector<4x22xf32>
    %1066 = tpu.concatenate %972, %973 in 0 : vector<2x16xf32>, vector<2x16xf32> -> vector<4x16xf32>
    %1067 = tpu.concatenate %997, %997 in 0 : vector<2x16x16xf32>, vector<2x16x16xf32> -> vector<4x16x16xf32>
    %1068 = vector.extract_strided_slice %1065 {offsets = [0, 0], sizes = [4, 16], strides = [1, 1]} : vector<4x22xf32> to vector<4x16xf32>
    %1069 = math.tanh %1068 : vector<4x16xf32>
    %1070 = vector.extract_strided_slice %1065 {offsets = [0, 16], sizes = [4, 1], strides = [1, 1]} : vector<4x22xf32> to vector<4x1xf32>
    %cst_293 = arith.constant 0.000000e+00 : f32
    %1071 = vector.broadcast %cst_293 : f32 to vector<4x1xf32>
    %1072 = arith.maximumf %1070, %1071 : vector<4x1xf32>
    %1073 = math.absf %1070 : vector<4x1xf32>
    %cst_294 = arith.constant 0.000000e+00 : f32
    %1074 = vector.broadcast %cst_294 : f32 to vector<4x1xf32>
    %1075 = arith.subf %1074, %1073 : vector<4x1xf32>
    %1076 = math.exp %1075 : vector<4x1xf32>
    %cst_295 = arith.constant 1.000000e+00 : f32
    %1077 = vector.broadcast %cst_295 : f32 to vector<4x1xf32>
    %1078 = arith.addf %1077, %1076 : vector<4x1xf32>
    %1079 = math.log %1078 : vector<4x1xf32>
    %1080 = arith.addf %1072, %1079 : vector<4x1xf32>
    %1081 = vector.extract_strided_slice %1065 {offsets = [0, 17], sizes = [4, 1], strides = [1, 1]} : vector<4x22xf32> to vector<4x1xf32>
    %cst_296 = arith.constant 0.000000e+00 : f32
    %1082 = vector.broadcast %cst_296 : f32 to vector<4x1xf32>
    %1083 = arith.subf %1082, %1081 : vector<4x1xf32>
    %1084 = math.exp %1083 : vector<4x1xf32>
    %cst_297 = arith.constant 1.000000e+00 : f32
    %1085 = vector.broadcast %cst_297 : f32 to vector<4x1xf32>
    %1086 = arith.addf %1085, %1084 : vector<4x1xf32>
    %cst_298 = arith.constant 1.000000e+00 : f32
    %1087 = vector.broadcast %cst_298 : f32 to vector<4x1xf32>
    %1088 = arith.divf %1087, %1086 : vector<4x1xf32>
    %1089 = vector.extract_strided_slice %1065 {offsets = [0, 18], sizes = [4, 3], strides = [1, 1]} : vector<4x22xf32> to vector<4x3xf32>
    %cst_299 = arith.constant dense<0xFF800000> : vector<4xf32>
    %1090 = vector.multi_reduction <maximumf>, %1089, %cst_299 [1] : vector<4x3xf32> to vector<4xf32>
    %1091 = vector.shape_cast %1090 : vector<4xf32> to vector<4x1xf32>
    %1092 = vector.broadcast %1091 : vector<4x1xf32> to vector<4x3xf32>
    %1093 = arith.subf %1089, %1092 : vector<4x3xf32>
    %1094 = math.exp %1093 : vector<4x3xf32>
    %cst_300 = arith.constant dense<0.000000e+00> : vector<4xf32>
    %1095 = vector.multi_reduction <add>, %1094, %cst_300 [1] : vector<4x3xf32> to vector<4xf32>
    %1096 = vector.shape_cast %1095 : vector<4xf32> to vector<4x1xf32>
    %1097 = vector.broadcast %1096 : vector<4x1xf32> to vector<4x3xf32>
    %1098 = arith.divf %1094, %1097 : vector<4x3xf32>
    %1099 = vector.extract_strided_slice %1065 {offsets = [0, 21], sizes = [4, 1], strides = [1, 1]} : vector<4x22xf32> to vector<4x1xf32>
    %cst_301 = arith.constant 0.000000e+00 : f32
    %1100 = vector.broadcast %cst_301 : f32 to vector<4x1xf32>
    %1101 = arith.maximumf %1099, %1100 : vector<4x1xf32>
    %1102 = math.absf %1099 : vector<4x1xf32>
    %cst_302 = arith.constant 0.000000e+00 : f32
    %1103 = vector.broadcast %cst_302 : f32 to vector<4x1xf32>
    %1104 = arith.subf %1103, %1102 : vector<4x1xf32>
    %1105 = math.exp %1104 : vector<4x1xf32>
    %cst_303 = arith.constant 1.000000e+00 : f32
    %1106 = vector.broadcast %cst_303 : f32 to vector<4x1xf32>
    %1107 = arith.addf %1106, %1105 : vector<4x1xf32>
    %1108 = math.log %1107 : vector<4x1xf32>
    %1109 = arith.addf %1101, %1108 : vector<4x1xf32>
    %1110 = vector.shape_cast %1069 : vector<4x16xf32> to vector<4x1x16xf32>
    %1111 = vector.broadcast %1110 : vector<4x1x16xf32> to vector<4x16x16xf32>
    %1112 = arith.mulf %1067, %1111 : vector<4x16x16xf32>
    %cst_304 = arith.constant dense<0.000000e+00> : vector<4x16xf32>
    %1113 = vector.multi_reduction <add>, %1112, %cst_304 [2] : vector<4x16x16xf32> to vector<4x16xf32>
    %1114 = arith.mulf %1069, %1069 : vector<4x16xf32>
    %cst_305 = arith.constant dense<0.000000e+00> : vector<4xf32>
    %1115 = vector.multi_reduction <add>, %1114, %cst_305 [1] : vector<4x16xf32> to vector<4xf32>
    %1116 = vector.shape_cast %1115 : vector<4xf32> to vector<4x1xf32>
    %1117 = math.sqrt %1116 : vector<4x1xf32>
    %1118 = arith.mulf %1067, %1067 : vector<4x16x16xf32>
    %cst_306 = arith.constant dense<0.000000e+00> : vector<4x16xf32>
    %1119 = vector.multi_reduction <add>, %1118, %cst_306 [2] : vector<4x16x16xf32> to vector<4x16xf32>
    %1120 = math.sqrt %1119 : vector<4x16xf32>
    %1121 = vector.broadcast %1117 : vector<4x1xf32> to vector<4x16xf32>
    %1122 = arith.mulf %1121, %1120 : vector<4x16xf32>
    %cst_307 = arith.constant 9.99999993E-9 : f32
    %1123 = vector.broadcast %cst_307 : f32 to vector<4x16xf32>
    %1124 = arith.addf %1122, %1123 : vector<4x16xf32>
    %1125 = arith.divf %1113, %1124 : vector<4x16xf32>
    %1126 = vector.broadcast %1080 : vector<4x1xf32> to vector<4x16xf32>
    %1127 = arith.mulf %1126, %1125 : vector<4x16xf32>
    %cst_308 = arith.constant dense<0xFF800000> : vector<4xf32>
    %1128 = vector.multi_reduction <maximumf>, %1127, %cst_308 [1] : vector<4x16xf32> to vector<4xf32>
    %1129 = vector.shape_cast %1128 : vector<4xf32> to vector<4x1xf32>
    %1130 = vector.broadcast %1129 : vector<4x1xf32> to vector<4x16xf32>
    %1131 = arith.subf %1127, %1130 : vector<4x16xf32>
    %1132 = math.exp %1131 : vector<4x16xf32>
    %cst_309 = arith.constant dense<0.000000e+00> : vector<4xf32>
    %1133 = vector.multi_reduction <add>, %1132, %cst_309 [1] : vector<4x16xf32> to vector<4xf32>
    %1134 = vector.shape_cast %1133 : vector<4xf32> to vector<4x1xf32>
    %1135 = vector.broadcast %1134 : vector<4x1xf32> to vector<4x16xf32>
    %1136 = arith.divf %1132, %1135 : vector<4x16xf32>
    %1137 = vector.broadcast %1088 : vector<4x1xf32> to vector<4x16xf32>
    %1138 = arith.mulf %1137, %1136 : vector<4x16xf32>
    %cst_310 = arith.constant 1.000000e+00 : f32
    %1139 = vector.broadcast %cst_310 : f32 to vector<4x1xf32>
    %1140 = arith.subf %1139, %1088 : vector<4x1xf32>
    %1141 = vector.broadcast %1140 : vector<4x1xf32> to vector<4x16xf32>
    %1142 = arith.mulf %1141, %1066 : vector<4x16xf32>
    %1143 = arith.addf %1138, %1142 : vector<4x16xf32>
    %cst_311 = arith.constant 0.000000e+00 : f32
    %1144 = vector.broadcast %cst_311 : f32 to vector<4x16xf32>
    %1145 = vector.extract_strided_slice %1098 {offsets = [0, 0], sizes = [4, 1], strides = [1, 1]} : vector<4x3xf32> to vector<4x1xf32>
    %1146 = vector.broadcast %1145 : vector<4x1xf32> to vector<4x16xf32>
    %1147 = arith.mulf %1146, %1143 : vector<4x16xf32>
    %1148 = arith.addf %1144, %1147 : vector<4x16xf32>
    %1149 = vector.extract_strided_slice %1098 {offsets = [0, 1], sizes = [4, 1], strides = [1, 1]} : vector<4x3xf32> to vector<4x1xf32>
    %1150 = vector.extract_strided_slice %1143 {offsets = [0, 15], sizes = [4, 1], strides = [1, 1]} : vector<4x16xf32> to vector<4x1xf32>
    %1151 = vector.extract_strided_slice %1143 {offsets = [0, 0], sizes = [4, 15], strides = [1, 1]} : vector<4x16xf32> to vector<4x15xf32>
    %1152 = tpu.concatenate %1150, %1151 in 1 : vector<4x1xf32>, vector<4x15xf32> -> vector<4x16xf32>
    %1153 = vector.broadcast %1149 : vector<4x1xf32> to vector<4x16xf32>
    %1154 = arith.mulf %1153, %1152 : vector<4x16xf32>
    %1155 = arith.addf %1148, %1154 : vector<4x16xf32>
    %1156 = vector.extract_strided_slice %1098 {offsets = [0, 2], sizes = [4, 1], strides = [1, 1]} : vector<4x3xf32> to vector<4x1xf32>
    %1157 = vector.extract_strided_slice %1143 {offsets = [0, 1], sizes = [4, 15], strides = [1, 1]} : vector<4x16xf32> to vector<4x15xf32>
    %1158 = vector.extract_strided_slice %1143 {offsets = [0, 0], sizes = [4, 1], strides = [1, 1]} : vector<4x16xf32> to vector<4x1xf32>
    %1159 = tpu.concatenate %1157, %1158 in 1 : vector<4x15xf32>, vector<4x1xf32> -> vector<4x16xf32>
    %1160 = vector.broadcast %1156 : vector<4x1xf32> to vector<4x16xf32>
    %1161 = arith.mulf %1160, %1159 : vector<4x16xf32>
    %1162 = arith.addf %1155, %1161 : vector<4x16xf32>
    %cst_312 = arith.constant 9.99999993E-9 : f32
    %1163 = vector.broadcast %cst_312 : f32 to vector<4x16xf32>
    %1164 = arith.addf %1162, %1163 : vector<4x16xf32>
    %1165 = math.log %1164 : vector<4x16xf32>
    %1166 = vector.broadcast %1109 : vector<4x1xf32> to vector<4x16xf32>
    %1167 = arith.mulf %1166, %1165 : vector<4x16xf32>
    %1168 = math.exp %1167 : vector<4x16xf32>
    %cst_313 = arith.constant dense<0.000000e+00> : vector<4xf32>
    %1169 = vector.multi_reduction <add>, %1168, %cst_313 [1] : vector<4x16xf32> to vector<4xf32>
    %1170 = vector.shape_cast %1169 : vector<4xf32> to vector<4x1xf32>
    %1171 = vector.broadcast %1170 : vector<4x1xf32> to vector<4x16xf32>
    %1172 = arith.divf %1168, %1171 : vector<4x16xf32>
    %1173 = vector.extract_strided_slice %1172 {offsets = [0, 0], sizes = [2, 16], strides = [1, 1]} : vector<4x16xf32> to vector<2x16xf32>
    %1174 = vector.extract_strided_slice %1172 {offsets = [2, 0], sizes = [2, 16], strides = [1, 1]} : vector<4x16xf32> to vector<2x16xf32>
    %1175 = vector.shape_cast %1173 : vector<2x16xf32> to vector<2x16x1xf32>
    %1176 = vector.broadcast %1175 : vector<2x16x1xf32> to vector<2x16x16xf32>
    %1177 = arith.mulf %1176, %997 : vector<2x16x16xf32>
    %cst_314 = arith.constant dense<0.000000e+00> : vector<2x16xf32>
    %1178 = vector.multi_reduction <add>, %1177, %cst_314 [1] : vector<2x16x16xf32> to vector<2x16xf32>
    %1179 = vector.extract_strided_slice %1062 {offsets = [0, 44], sizes = [2, 16], strides = [1, 1]} : vector<2x76xf32> to vector<2x16xf32>
    %cst_315 = arith.constant 0.000000e+00 : f32
    %1180 = vector.broadcast %cst_315 : f32 to vector<2x16xf32>
    %1181 = arith.subf %1180, %1179 : vector<2x16xf32>
    %1182 = math.exp %1181 : vector<2x16xf32>
    %cst_316 = arith.constant 1.000000e+00 : f32
    %1183 = vector.broadcast %cst_316 : f32 to vector<2x16xf32>
    %1184 = arith.addf %1183, %1182 : vector<2x16xf32>
    %cst_317 = arith.constant 1.000000e+00 : f32
    %1185 = vector.broadcast %cst_317 : f32 to vector<2x16xf32>
    %1186 = arith.divf %1185, %1184 : vector<2x16xf32>
    %1187 = vector.extract_strided_slice %1062 {offsets = [0, 60], sizes = [2, 16], strides = [1, 1]} : vector<2x76xf32> to vector<2x16xf32>
    %1188 = math.tanh %1187 : vector<2x16xf32>
    %1189 = vector.shape_cast %1174 : vector<2x16xf32> to vector<2x16x1xf32>
    %1190 = vector.shape_cast %1188 : vector<2x16xf32> to vector<2x1x16xf32>
    %1191 = vector.shape_cast %1186 : vector<2x16xf32> to vector<2x1x16xf32>
    %1192 = vector.broadcast %1191 : vector<2x1x16xf32> to vector<2x16x16xf32>
    %1193 = arith.mulf %997, %1192 : vector<2x16x16xf32>
    %1194 = vector.broadcast %1190 : vector<2x1x16xf32> to vector<2x16x16xf32>
    %1195 = arith.subf %1194, %1193 : vector<2x16x16xf32>
    %1196 = vector.broadcast %1189 : vector<2x16x1xf32> to vector<2x16x16xf32>
    %1197 = arith.mulf %1196, %1195 : vector<2x16x16xf32>
    %1198 = arith.addf %997, %1197 : vector<2x16x16xf32>
    %1199 = tpu.concatenate %1059, %1178 in 1 : vector<2x32xf32>, vector<2x16xf32> -> vector<2x48xf32>
    %cst_318 = arith.constant dense<0.000000e+00> : vector<2x32xf32>
    %1200 = tpu.matmul %1199, %4, %cst_318 {dimension_numbers = #tpu.dot_dimension_numbers<[1], [0], [0], [1], [0, 0, 1, 1], [], []>} : vector<2x48xf32>, vector<48x32xf32>, vector<2x32xf32> -> vector<2x32xf32>
    %1201 = vector.broadcast %5 : vector<1x32xf32> to vector<2x32xf32>
    %1202 = arith.addf %1200, %1201 : vector<2x32xf32>
    %cst_319 = arith.constant -2.000000e+01 : f32
    %cst_320 = arith.constant 2.000000e+01 : f32
    %1203 = vector.broadcast %cst_319 : f32 to vector<2x32xf32>
    %1204 = arith.maximumf %1203, %1202 : vector<2x32xf32>
    %1205 = vector.broadcast %cst_320 : f32 to vector<2x32xf32>
    %1206 = arith.minimumf %1205, %1204 : vector<2x32xf32>
    %cst_321 = arith.constant dense<0.000000e+00> : vector<2x8xf32>
    %1207 = tpu.matmul %1206, %6, %cst_321 {dimension_numbers = #tpu.dot_dimension_numbers<[1], [0], [0], [1], [0, 0, 1, 1], [], []>} : vector<2x32xf32>, vector<32x8xf32>, vector<2x8xf32> -> vector<2x8xf32>
    %1208 = vector.broadcast %7 : vector<1x8xf32> to vector<2x8xf32>
    %1209 = arith.addf %1207, %1208 : vector<2x8xf32>
    %cst_322 = arith.constant 0.000000e+00 : f32
    %1210 = vector.broadcast %cst_322 : f32 to vector<2x8xf32>
    %1211 = arith.subf %1210, %1209 : vector<2x8xf32>
    %1212 = math.exp %1211 : vector<2x8xf32>
    %cst_323 = arith.constant 1.000000e+00 : f32
    %1213 = vector.broadcast %cst_323 : f32 to vector<2x8xf32>
    %1214 = arith.addf %1213, %1212 : vector<2x8xf32>
    %cst_324 = arith.constant 1.000000e+00 : f32
    %1215 = vector.broadcast %cst_324 : f32 to vector<2x8xf32>
    %1216 = arith.divf %1215, %1214 : vector<2x8xf32>
    %c5_325 = arith.constant 5 : index
    %c0_326 = arith.constant 0 : index
    %c0_327 = arith.constant 0 : index
    %1217 = vector.load %arg15[%c5_325, %c0_326, %c0_327] : memref<8x2x8xf32, #tpu.memory_space<vmem>>, vector<1x2x8xf32>
    %1218 = vector.shape_cast %1217 : vector<1x2x8xf32> to vector<2x8xf32>
    %1219 = vector.shape_cast %1216 : vector<2x8xf32> to vector<1x2x8xf32>
    tpu.vector_store %arg15[%c5_325, %c0_326, %c0_327], %1219 {strides = array<i32>} : memref<8x2x8xf32, #tpu.memory_space<vmem>>, vector<1x2x8xf32>,
    %c6 = arith.constant 6 : index
    %c0_328 = arith.constant 0 : index
    %c0_329 = arith.constant 0 : index
    %1220 = vector.load %arg0[%c6, %c0_328, %c0_329] : memref<8x2x10xf32, #tpu.memory_space<vmem>>, vector<1x2x10xf32>
    %1221 = vector.shape_cast %1220 : vector<1x2x10xf32> to vector<2x10xf32>
    %1222 = tpu.concatenate %1221, %1178, %1055 in 1 : vector<2x10xf32>, vector<2x16xf32>, vector<2x32xf32> -> vector<2x58xf32>
    %cst_330 = arith.constant dense<0.000000e+00> : vector<2x128xf32>
    %1223 = tpu.matmul %1222, %0, %cst_330 {dimension_numbers = #tpu.dot_dimension_numbers<[1], [0], [0], [1], [0, 0, 1, 1], [], []>} : vector<2x58xf32>, vector<58x128xf32>, vector<2x128xf32> -> vector<2x128xf32>
    %1224 = vector.broadcast %1 : vector<1x128xf32> to vector<2x128xf32>
    %1225 = arith.addf %1223, %1224 : vector<2x128xf32>
    %1226 = vector.extract_strided_slice %1225 {offsets = [0, 0], sizes = [2, 32], strides = [1, 1]} : vector<2x128xf32> to vector<2x32xf32>
    %cst_331 = arith.constant 0.000000e+00 : f32
    %1227 = vector.broadcast %cst_331 : f32 to vector<2x32xf32>
    %1228 = arith.subf %1227, %1226 : vector<2x32xf32>
    %1229 = math.exp %1228 : vector<2x32xf32>
    %cst_332 = arith.constant 1.000000e+00 : f32
    %1230 = vector.broadcast %cst_332 : f32 to vector<2x32xf32>
    %1231 = arith.addf %1230, %1229 : vector<2x32xf32>
    %cst_333 = arith.constant 1.000000e+00 : f32
    %1232 = vector.broadcast %cst_333 : f32 to vector<2x32xf32>
    %1233 = arith.divf %1232, %1231 : vector<2x32xf32>
    %1234 = vector.extract_strided_slice %1225 {offsets = [0, 32], sizes = [2, 32], strides = [1, 1]} : vector<2x128xf32> to vector<2x32xf32>
    %cst_334 = arith.constant 0.000000e+00 : f32
    %1235 = vector.broadcast %cst_334 : f32 to vector<2x32xf32>
    %1236 = arith.subf %1235, %1234 : vector<2x32xf32>
    %1237 = math.exp %1236 : vector<2x32xf32>
    %cst_335 = arith.constant 1.000000e+00 : f32
    %1238 = vector.broadcast %cst_335 : f32 to vector<2x32xf32>
    %1239 = arith.addf %1238, %1237 : vector<2x32xf32>
    %cst_336 = arith.constant 1.000000e+00 : f32
    %1240 = vector.broadcast %cst_336 : f32 to vector<2x32xf32>
    %1241 = arith.divf %1240, %1239 : vector<2x32xf32>
    %1242 = vector.extract_strided_slice %1225 {offsets = [0, 64], sizes = [2, 32], strides = [1, 1]} : vector<2x128xf32> to vector<2x32xf32>
    %1243 = math.tanh %1242 : vector<2x32xf32>
    %1244 = vector.extract_strided_slice %1225 {offsets = [0, 96], sizes = [2, 32], strides = [1, 1]} : vector<2x128xf32> to vector<2x32xf32>
    %cst_337 = arith.constant 0.000000e+00 : f32
    %1245 = vector.broadcast %cst_337 : f32 to vector<2x32xf32>
    %1246 = arith.subf %1245, %1244 : vector<2x32xf32>
    %1247 = math.exp %1246 : vector<2x32xf32>
    %cst_338 = arith.constant 1.000000e+00 : f32
    %1248 = vector.broadcast %cst_338 : f32 to vector<2x32xf32>
    %1249 = arith.addf %1248, %1247 : vector<2x32xf32>
    %cst_339 = arith.constant 1.000000e+00 : f32
    %1250 = vector.broadcast %cst_339 : f32 to vector<2x32xf32>
    %1251 = arith.divf %1250, %1249 : vector<2x32xf32>
    %1252 = arith.mulf %1241, %1053 : vector<2x32xf32>
    %1253 = arith.mulf %1233, %1243 : vector<2x32xf32>
    %1254 = arith.addf %1252, %1253 : vector<2x32xf32>
    %1255 = math.tanh %1254 : vector<2x32xf32>
    %1256 = arith.mulf %1251, %1255 : vector<2x32xf32>
    %cst_340 = arith.constant -2.000000e+01 : f32
    %cst_341 = arith.constant 2.000000e+01 : f32
    %1257 = vector.broadcast %cst_340 : f32 to vector<2x32xf32>
    %1258 = arith.maximumf %1257, %1256 : vector<2x32xf32>
    %1259 = vector.broadcast %cst_341 : f32 to vector<2x32xf32>
    %1260 = arith.minimumf %1259, %1258 : vector<2x32xf32>
    %cst_342 = arith.constant dense<0.000000e+00> : vector<2x76xf32>
    %1261 = tpu.matmul %1260, %2, %cst_342 {dimension_numbers = #tpu.dot_dimension_numbers<[1], [0], [0], [1], [0, 0, 1, 1], [], []>} : vector<2x32xf32>, vector<32x76xf32>, vector<2x76xf32> -> vector<2x76xf32>
    %1262 = vector.broadcast %3 : vector<1x76xf32> to vector<2x76xf32>
    %1263 = arith.addf %1261, %1262 : vector<2x76xf32>
    %1264 = vector.extract_strided_slice %1263 {offsets = [0, 0], sizes = [2, 22], strides = [1, 1]} : vector<2x76xf32> to vector<2x22xf32>
    %1265 = vector.extract_strided_slice %1263 {offsets = [0, 22], sizes = [2, 22], strides = [1, 1]} : vector<2x76xf32> to vector<2x22xf32>
    %1266 = tpu.concatenate %1264, %1265 in 0 : vector<2x22xf32>, vector<2x22xf32> -> vector<4x22xf32>
    %1267 = tpu.concatenate %1173, %1174 in 0 : vector<2x16xf32>, vector<2x16xf32> -> vector<4x16xf32>
    %1268 = tpu.concatenate %1198, %1198 in 0 : vector<2x16x16xf32>, vector<2x16x16xf32> -> vector<4x16x16xf32>
    %1269 = vector.extract_strided_slice %1266 {offsets = [0, 0], sizes = [4, 16], strides = [1, 1]} : vector<4x22xf32> to vector<4x16xf32>
    %1270 = math.tanh %1269 : vector<4x16xf32>
    %1271 = vector.extract_strided_slice %1266 {offsets = [0, 16], sizes = [4, 1], strides = [1, 1]} : vector<4x22xf32> to vector<4x1xf32>
    %cst_343 = arith.constant 0.000000e+00 : f32
    %1272 = vector.broadcast %cst_343 : f32 to vector<4x1xf32>
    %1273 = arith.maximumf %1271, %1272 : vector<4x1xf32>
    %1274 = math.absf %1271 : vector<4x1xf32>
    %cst_344 = arith.constant 0.000000e+00 : f32
    %1275 = vector.broadcast %cst_344 : f32 to vector<4x1xf32>
    %1276 = arith.subf %1275, %1274 : vector<4x1xf32>
    %1277 = math.exp %1276 : vector<4x1xf32>
    %cst_345 = arith.constant 1.000000e+00 : f32
    %1278 = vector.broadcast %cst_345 : f32 to vector<4x1xf32>
    %1279 = arith.addf %1278, %1277 : vector<4x1xf32>
    %1280 = math.log %1279 : vector<4x1xf32>
    %1281 = arith.addf %1273, %1280 : vector<4x1xf32>
    %1282 = vector.extract_strided_slice %1266 {offsets = [0, 17], sizes = [4, 1], strides = [1, 1]} : vector<4x22xf32> to vector<4x1xf32>
    %cst_346 = arith.constant 0.000000e+00 : f32
    %1283 = vector.broadcast %cst_346 : f32 to vector<4x1xf32>
    %1284 = arith.subf %1283, %1282 : vector<4x1xf32>
    %1285 = math.exp %1284 : vector<4x1xf32>
    %cst_347 = arith.constant 1.000000e+00 : f32
    %1286 = vector.broadcast %cst_347 : f32 to vector<4x1xf32>
    %1287 = arith.addf %1286, %1285 : vector<4x1xf32>
    %cst_348 = arith.constant 1.000000e+00 : f32
    %1288 = vector.broadcast %cst_348 : f32 to vector<4x1xf32>
    %1289 = arith.divf %1288, %1287 : vector<4x1xf32>
    %1290 = vector.extract_strided_slice %1266 {offsets = [0, 18], sizes = [4, 3], strides = [1, 1]} : vector<4x22xf32> to vector<4x3xf32>
    %cst_349 = arith.constant dense<0xFF800000> : vector<4xf32>
    %1291 = vector.multi_reduction <maximumf>, %1290, %cst_349 [1] : vector<4x3xf32> to vector<4xf32>
    %1292 = vector.shape_cast %1291 : vector<4xf32> to vector<4x1xf32>
    %1293 = vector.broadcast %1292 : vector<4x1xf32> to vector<4x3xf32>
    %1294 = arith.subf %1290, %1293 : vector<4x3xf32>
    %1295 = math.exp %1294 : vector<4x3xf32>
    %cst_350 = arith.constant dense<0.000000e+00> : vector<4xf32>
    %1296 = vector.multi_reduction <add>, %1295, %cst_350 [1] : vector<4x3xf32> to vector<4xf32>
    %1297 = vector.shape_cast %1296 : vector<4xf32> to vector<4x1xf32>
    %1298 = vector.broadcast %1297 : vector<4x1xf32> to vector<4x3xf32>
    %1299 = arith.divf %1295, %1298 : vector<4x3xf32>
    %1300 = vector.extract_strided_slice %1266 {offsets = [0, 21], sizes = [4, 1], strides = [1, 1]} : vector<4x22xf32> to vector<4x1xf32>
    %cst_351 = arith.constant 0.000000e+00 : f32
    %1301 = vector.broadcast %cst_351 : f32 to vector<4x1xf32>
    %1302 = arith.maximumf %1300, %1301 : vector<4x1xf32>
    %1303 = math.absf %1300 : vector<4x1xf32>
    %cst_352 = arith.constant 0.000000e+00 : f32
    %1304 = vector.broadcast %cst_352 : f32 to vector<4x1xf32>
    %1305 = arith.subf %1304, %1303 : vector<4x1xf32>
    %1306 = math.exp %1305 : vector<4x1xf32>
    %cst_353 = arith.constant 1.000000e+00 : f32
    %1307 = vector.broadcast %cst_353 : f32 to vector<4x1xf32>
    %1308 = arith.addf %1307, %1306 : vector<4x1xf32>
    %1309 = math.log %1308 : vector<4x1xf32>
    %1310 = arith.addf %1302, %1309 : vector<4x1xf32>
    %1311 = vector.shape_cast %1270 : vector<4x16xf32> to vector<4x1x16xf32>
    %1312 = vector.broadcast %1311 : vector<4x1x16xf32> to vector<4x16x16xf32>
    %1313 = arith.mulf %1268, %1312 : vector<4x16x16xf32>
    %cst_354 = arith.constant dense<0.000000e+00> : vector<4x16xf32>
    %1314 = vector.multi_reduction <add>, %1313, %cst_354 [2] : vector<4x16x16xf32> to vector<4x16xf32>
    %1315 = arith.mulf %1270, %1270 : vector<4x16xf32>
    %cst_355 = arith.constant dense<0.000000e+00> : vector<4xf32>
    %1316 = vector.multi_reduction <add>, %1315, %cst_355 [1] : vector<4x16xf32> to vector<4xf32>
    %1317 = vector.shape_cast %1316 : vector<4xf32> to vector<4x1xf32>
    %1318 = math.sqrt %1317 : vector<4x1xf32>
    %1319 = arith.mulf %1268, %1268 : vector<4x16x16xf32>
    %cst_356 = arith.constant dense<0.000000e+00> : vector<4x16xf32>
    %1320 = vector.multi_reduction <add>, %1319, %cst_356 [2] : vector<4x16x16xf32> to vector<4x16xf32>
    %1321 = math.sqrt %1320 : vector<4x16xf32>
    %1322 = vector.broadcast %1318 : vector<4x1xf32> to vector<4x16xf32>
    %1323 = arith.mulf %1322, %1321 : vector<4x16xf32>
    %cst_357 = arith.constant 9.99999993E-9 : f32
    %1324 = vector.broadcast %cst_357 : f32 to vector<4x16xf32>
    %1325 = arith.addf %1323, %1324 : vector<4x16xf32>
    %1326 = arith.divf %1314, %1325 : vector<4x16xf32>
    %1327 = vector.broadcast %1281 : vector<4x1xf32> to vector<4x16xf32>
    %1328 = arith.mulf %1327, %1326 : vector<4x16xf32>
    %cst_358 = arith.constant dense<0xFF800000> : vector<4xf32>
    %1329 = vector.multi_reduction <maximumf>, %1328, %cst_358 [1] : vector<4x16xf32> to vector<4xf32>
    %1330 = vector.shape_cast %1329 : vector<4xf32> to vector<4x1xf32>
    %1331 = vector.broadcast %1330 : vector<4x1xf32> to vector<4x16xf32>
    %1332 = arith.subf %1328, %1331 : vector<4x16xf32>
    %1333 = math.exp %1332 : vector<4x16xf32>
    %cst_359 = arith.constant dense<0.000000e+00> : vector<4xf32>
    %1334 = vector.multi_reduction <add>, %1333, %cst_359 [1] : vector<4x16xf32> to vector<4xf32>
    %1335 = vector.shape_cast %1334 : vector<4xf32> to vector<4x1xf32>
    %1336 = vector.broadcast %1335 : vector<4x1xf32> to vector<4x16xf32>
    %1337 = arith.divf %1333, %1336 : vector<4x16xf32>
    %1338 = vector.broadcast %1289 : vector<4x1xf32> to vector<4x16xf32>
    %1339 = arith.mulf %1338, %1337 : vector<4x16xf32>
    %cst_360 = arith.constant 1.000000e+00 : f32
    %1340 = vector.broadcast %cst_360 : f32 to vector<4x1xf32>
    %1341 = arith.subf %1340, %1289 : vector<4x1xf32>
    %1342 = vector.broadcast %1341 : vector<4x1xf32> to vector<4x16xf32>
    %1343 = arith.mulf %1342, %1267 : vector<4x16xf32>
    %1344 = arith.addf %1339, %1343 : vector<4x16xf32>
    %cst_361 = arith.constant 0.000000e+00 : f32
    %1345 = vector.broadcast %cst_361 : f32 to vector<4x16xf32>
    %1346 = vector.extract_strided_slice %1299 {offsets = [0, 0], sizes = [4, 1], strides = [1, 1]} : vector<4x3xf32> to vector<4x1xf32>
    %1347 = vector.broadcast %1346 : vector<4x1xf32> to vector<4x16xf32>
    %1348 = arith.mulf %1347, %1344 : vector<4x16xf32>
    %1349 = arith.addf %1345, %1348 : vector<4x16xf32>
    %1350 = vector.extract_strided_slice %1299 {offsets = [0, 1], sizes = [4, 1], strides = [1, 1]} : vector<4x3xf32> to vector<4x1xf32>
    %1351 = vector.extract_strided_slice %1344 {offsets = [0, 15], sizes = [4, 1], strides = [1, 1]} : vector<4x16xf32> to vector<4x1xf32>
    %1352 = vector.extract_strided_slice %1344 {offsets = [0, 0], sizes = [4, 15], strides = [1, 1]} : vector<4x16xf32> to vector<4x15xf32>
    %1353 = tpu.concatenate %1351, %1352 in 1 : vector<4x1xf32>, vector<4x15xf32> -> vector<4x16xf32>
    %1354 = vector.broadcast %1350 : vector<4x1xf32> to vector<4x16xf32>
    %1355 = arith.mulf %1354, %1353 : vector<4x16xf32>
    %1356 = arith.addf %1349, %1355 : vector<4x16xf32>
    %1357 = vector.extract_strided_slice %1299 {offsets = [0, 2], sizes = [4, 1], strides = [1, 1]} : vector<4x3xf32> to vector<4x1xf32>
    %1358 = vector.extract_strided_slice %1344 {offsets = [0, 1], sizes = [4, 15], strides = [1, 1]} : vector<4x16xf32> to vector<4x15xf32>
    %1359 = vector.extract_strided_slice %1344 {offsets = [0, 0], sizes = [4, 1], strides = [1, 1]} : vector<4x16xf32> to vector<4x1xf32>
    %1360 = tpu.concatenate %1358, %1359 in 1 : vector<4x15xf32>, vector<4x1xf32> -> vector<4x16xf32>
    %1361 = vector.broadcast %1357 : vector<4x1xf32> to vector<4x16xf32>
    %1362 = arith.mulf %1361, %1360 : vector<4x16xf32>
    %1363 = arith.addf %1356, %1362 : vector<4x16xf32>
    %cst_362 = arith.constant 9.99999993E-9 : f32
    %1364 = vector.broadcast %cst_362 : f32 to vector<4x16xf32>
    %1365 = arith.addf %1363, %1364 : vector<4x16xf32>
    %1366 = math.log %1365 : vector<4x16xf32>
    %1367 = vector.broadcast %1310 : vector<4x1xf32> to vector<4x16xf32>
    %1368 = arith.mulf %1367, %1366 : vector<4x16xf32>
    %1369 = math.exp %1368 : vector<4x16xf32>
    %cst_363 = arith.constant dense<0.000000e+00> : vector<4xf32>
    %1370 = vector.multi_reduction <add>, %1369, %cst_363 [1] : vector<4x16xf32> to vector<4xf32>
    %1371 = vector.shape_cast %1370 : vector<4xf32> to vector<4x1xf32>
    %1372 = vector.broadcast %1371 : vector<4x1xf32> to vector<4x16xf32>
    %1373 = arith.divf %1369, %1372 : vector<4x16xf32>
    %1374 = vector.extract_strided_slice %1373 {offsets = [0, 0], sizes = [2, 16], strides = [1, 1]} : vector<4x16xf32> to vector<2x16xf32>
    %1375 = vector.extract_strided_slice %1373 {offsets = [2, 0], sizes = [2, 16], strides = [1, 1]} : vector<4x16xf32> to vector<2x16xf32>
    %1376 = vector.shape_cast %1374 : vector<2x16xf32> to vector<2x16x1xf32>
    %1377 = vector.broadcast %1376 : vector<2x16x1xf32> to vector<2x16x16xf32>
    %1378 = arith.mulf %1377, %1198 : vector<2x16x16xf32>
    %cst_364 = arith.constant dense<0.000000e+00> : vector<2x16xf32>
    %1379 = vector.multi_reduction <add>, %1378, %cst_364 [1] : vector<2x16x16xf32> to vector<2x16xf32>
    %1380 = vector.extract_strided_slice %1263 {offsets = [0, 44], sizes = [2, 16], strides = [1, 1]} : vector<2x76xf32> to vector<2x16xf32>
    %cst_365 = arith.constant 0.000000e+00 : f32
    %1381 = vector.broadcast %cst_365 : f32 to vector<2x16xf32>
    %1382 = arith.subf %1381, %1380 : vector<2x16xf32>
    %1383 = math.exp %1382 : vector<2x16xf32>
    %cst_366 = arith.constant 1.000000e+00 : f32
    %1384 = vector.broadcast %cst_366 : f32 to vector<2x16xf32>
    %1385 = arith.addf %1384, %1383 : vector<2x16xf32>
    %cst_367 = arith.constant 1.000000e+00 : f32
    %1386 = vector.broadcast %cst_367 : f32 to vector<2x16xf32>
    %1387 = arith.divf %1386, %1385 : vector<2x16xf32>
    %1388 = vector.extract_strided_slice %1263 {offsets = [0, 60], sizes = [2, 16], strides = [1, 1]} : vector<2x76xf32> to vector<2x16xf32>
    %1389 = math.tanh %1388 : vector<2x16xf32>
    %1390 = vector.shape_cast %1375 : vector<2x16xf32> to vector<2x16x1xf32>
    %1391 = vector.shape_cast %1389 : vector<2x16xf32> to vector<2x1x16xf32>
    %1392 = vector.shape_cast %1387 : vector<2x16xf32> to vector<2x1x16xf32>
    %1393 = vector.broadcast %1392 : vector<2x1x16xf32> to vector<2x16x16xf32>
    %1394 = arith.mulf %1198, %1393 : vector<2x16x16xf32>
    %1395 = vector.broadcast %1391 : vector<2x1x16xf32> to vector<2x16x16xf32>
    %1396 = arith.subf %1395, %1394 : vector<2x16x16xf32>
    %1397 = vector.broadcast %1390 : vector<2x16x1xf32> to vector<2x16x16xf32>
    %1398 = arith.mulf %1397, %1396 : vector<2x16x16xf32>
    %1399 = arith.addf %1198, %1398 : vector<2x16x16xf32>
    %1400 = tpu.concatenate %1260, %1379 in 1 : vector<2x32xf32>, vector<2x16xf32> -> vector<2x48xf32>
    %cst_368 = arith.constant dense<0.000000e+00> : vector<2x32xf32>
    %1401 = tpu.matmul %1400, %4, %cst_368 {dimension_numbers = #tpu.dot_dimension_numbers<[1], [0], [0], [1], [0, 0, 1, 1], [], []>} : vector<2x48xf32>, vector<48x32xf32>, vector<2x32xf32> -> vector<2x32xf32>
    %1402 = vector.broadcast %5 : vector<1x32xf32> to vector<2x32xf32>
    %1403 = arith.addf %1401, %1402 : vector<2x32xf32>
    %cst_369 = arith.constant -2.000000e+01 : f32
    %cst_370 = arith.constant 2.000000e+01 : f32
    %1404 = vector.broadcast %cst_369 : f32 to vector<2x32xf32>
    %1405 = arith.maximumf %1404, %1403 : vector<2x32xf32>
    %1406 = vector.broadcast %cst_370 : f32 to vector<2x32xf32>
    %1407 = arith.minimumf %1406, %1405 : vector<2x32xf32>
    %cst_371 = arith.constant dense<0.000000e+00> : vector<2x8xf32>
    %1408 = tpu.matmul %1407, %6, %cst_371 {dimension_numbers = #tpu.dot_dimension_numbers<[1], [0], [0], [1], [0, 0, 1, 1], [], []>} : vector<2x32xf32>, vector<32x8xf32>, vector<2x8xf32> -> vector<2x8xf32>
    %1409 = vector.broadcast %7 : vector<1x8xf32> to vector<2x8xf32>
    %1410 = arith.addf %1408, %1409 : vector<2x8xf32>
    %cst_372 = arith.constant 0.000000e+00 : f32
    %1411 = vector.broadcast %cst_372 : f32 to vector<2x8xf32>
    %1412 = arith.subf %1411, %1410 : vector<2x8xf32>
    %1413 = math.exp %1412 : vector<2x8xf32>
    %cst_373 = arith.constant 1.000000e+00 : f32
    %1414 = vector.broadcast %cst_373 : f32 to vector<2x8xf32>
    %1415 = arith.addf %1414, %1413 : vector<2x8xf32>
    %cst_374 = arith.constant 1.000000e+00 : f32
    %1416 = vector.broadcast %cst_374 : f32 to vector<2x8xf32>
    %1417 = arith.divf %1416, %1415 : vector<2x8xf32>
    %c6_375 = arith.constant 6 : index
    %c0_376 = arith.constant 0 : index
    %c0_377 = arith.constant 0 : index
    %1418 = vector.load %arg15[%c6_375, %c0_376, %c0_377] : memref<8x2x8xf32, #tpu.memory_space<vmem>>, vector<1x2x8xf32>
    %1419 = vector.shape_cast %1418 : vector<1x2x8xf32> to vector<2x8xf32>
    %1420 = vector.shape_cast %1417 : vector<2x8xf32> to vector<1x2x8xf32>
    tpu.vector_store %arg15[%c6_375, %c0_376, %c0_377], %1420 {strides = array<i32>} : memref<8x2x8xf32, #tpu.memory_space<vmem>>, vector<1x2x8xf32>,
    %c7 = arith.constant 7 : index
    %c0_378 = arith.constant 0 : index
    %c0_379 = arith.constant 0 : index
    %1421 = vector.load %arg0[%c7, %c0_378, %c0_379] : memref<8x2x10xf32, #tpu.memory_space<vmem>>, vector<1x2x10xf32>
    %1422 = vector.shape_cast %1421 : vector<1x2x10xf32> to vector<2x10xf32>
    %1423 = tpu.concatenate %1422, %1379, %1256 in 1 : vector<2x10xf32>, vector<2x16xf32>, vector<2x32xf32> -> vector<2x58xf32>
    %cst_380 = arith.constant dense<0.000000e+00> : vector<2x128xf32>
    %1424 = tpu.matmul %1423, %0, %cst_380 {dimension_numbers = #tpu.dot_dimension_numbers<[1], [0], [0], [1], [0, 0, 1, 1], [], []>} : vector<2x58xf32>, vector<58x128xf32>, vector<2x128xf32> -> vector<2x128xf32>
    %1425 = vector.broadcast %1 : vector<1x128xf32> to vector<2x128xf32>
    %1426 = arith.addf %1424, %1425 : vector<2x128xf32>
    %1427 = vector.extract_strided_slice %1426 {offsets = [0, 0], sizes = [2, 32], strides = [1, 1]} : vector<2x128xf32> to vector<2x32xf32>
    %cst_381 = arith.constant 0.000000e+00 : f32
    %1428 = vector.broadcast %cst_381 : f32 to vector<2x32xf32>
    %1429 = arith.subf %1428, %1427 : vector<2x32xf32>
    %1430 = math.exp %1429 : vector<2x32xf32>
    %cst_382 = arith.constant 1.000000e+00 : f32
    %1431 = vector.broadcast %cst_382 : f32 to vector<2x32xf32>
    %1432 = arith.addf %1431, %1430 : vector<2x32xf32>
    %cst_383 = arith.constant 1.000000e+00 : f32
    %1433 = vector.broadcast %cst_383 : f32 to vector<2x32xf32>
    %1434 = arith.divf %1433, %1432 : vector<2x32xf32>
    %1435 = vector.extract_strided_slice %1426 {offsets = [0, 32], sizes = [2, 32], strides = [1, 1]} : vector<2x128xf32> to vector<2x32xf32>
    %cst_384 = arith.constant 0.000000e+00 : f32
    %1436 = vector.broadcast %cst_384 : f32 to vector<2x32xf32>
    %1437 = arith.subf %1436, %1435 : vector<2x32xf32>
    %1438 = math.exp %1437 : vector<2x32xf32>
    %cst_385 = arith.constant 1.000000e+00 : f32
    %1439 = vector.broadcast %cst_385 : f32 to vector<2x32xf32>
    %1440 = arith.addf %1439, %1438 : vector<2x32xf32>
    %cst_386 = arith.constant 1.000000e+00 : f32
    %1441 = vector.broadcast %cst_386 : f32 to vector<2x32xf32>
    %1442 = arith.divf %1441, %1440 : vector<2x32xf32>
    %1443 = vector.extract_strided_slice %1426 {offsets = [0, 64], sizes = [2, 32], strides = [1, 1]} : vector<2x128xf32> to vector<2x32xf32>
    %1444 = math.tanh %1443 : vector<2x32xf32>
    %1445 = vector.extract_strided_slice %1426 {offsets = [0, 96], sizes = [2, 32], strides = [1, 1]} : vector<2x128xf32> to vector<2x32xf32>
    %cst_387 = arith.constant 0.000000e+00 : f32
    %1446 = vector.broadcast %cst_387 : f32 to vector<2x32xf32>
    %1447 = arith.subf %1446, %1445 : vector<2x32xf32>
    %1448 = math.exp %1447 : vector<2x32xf32>
    %cst_388 = arith.constant 1.000000e+00 : f32
    %1449 = vector.broadcast %cst_388 : f32 to vector<2x32xf32>
    %1450 = arith.addf %1449, %1448 : vector<2x32xf32>
    %cst_389 = arith.constant 1.000000e+00 : f32
    %1451 = vector.broadcast %cst_389 : f32 to vector<2x32xf32>
    %1452 = arith.divf %1451, %1450 : vector<2x32xf32>
    %1453 = arith.mulf %1442, %1254 : vector<2x32xf32>
    %1454 = arith.mulf %1434, %1444 : vector<2x32xf32>
    %1455 = arith.addf %1453, %1454 : vector<2x32xf32>
    %1456 = math.tanh %1455 : vector<2x32xf32>
    %1457 = arith.mulf %1452, %1456 : vector<2x32xf32>
    %cst_390 = arith.constant -2.000000e+01 : f32
    %cst_391 = arith.constant 2.000000e+01 : f32
    %1458 = vector.broadcast %cst_390 : f32 to vector<2x32xf32>
    %1459 = arith.maximumf %1458, %1457 : vector<2x32xf32>
    %1460 = vector.broadcast %cst_391 : f32 to vector<2x32xf32>
    %1461 = arith.minimumf %1460, %1459 : vector<2x32xf32>
    %cst_392 = arith.constant dense<0.000000e+00> : vector<2x76xf32>
    %1462 = tpu.matmul %1461, %2, %cst_392 {dimension_numbers = #tpu.dot_dimension_numbers<[1], [0], [0], [1], [0, 0, 1, 1], [], []>} : vector<2x32xf32>, vector<32x76xf32>, vector<2x76xf32> -> vector<2x76xf32>
    %1463 = vector.broadcast %3 : vector<1x76xf32> to vector<2x76xf32>
    %1464 = arith.addf %1462, %1463 : vector<2x76xf32>
    %1465 = vector.extract_strided_slice %1464 {offsets = [0, 0], sizes = [2, 22], strides = [1, 1]} : vector<2x76xf32> to vector<2x22xf32>
    %1466 = vector.extract_strided_slice %1464 {offsets = [0, 22], sizes = [2, 22], strides = [1, 1]} : vector<2x76xf32> to vector<2x22xf32>
    %1467 = tpu.concatenate %1465, %1466 in 0 : vector<2x22xf32>, vector<2x22xf32> -> vector<4x22xf32>
    %1468 = tpu.concatenate %1374, %1375 in 0 : vector<2x16xf32>, vector<2x16xf32> -> vector<4x16xf32>
    %1469 = tpu.concatenate %1399, %1399 in 0 : vector<2x16x16xf32>, vector<2x16x16xf32> -> vector<4x16x16xf32>
    %1470 = vector.extract_strided_slice %1467 {offsets = [0, 0], sizes = [4, 16], strides = [1, 1]} : vector<4x22xf32> to vector<4x16xf32>
    %1471 = math.tanh %1470 : vector<4x16xf32>
    %1472 = vector.extract_strided_slice %1467 {offsets = [0, 16], sizes = [4, 1], strides = [1, 1]} : vector<4x22xf32> to vector<4x1xf32>
    %cst_393 = arith.constant 0.000000e+00 : f32
    %1473 = vector.broadcast %cst_393 : f32 to vector<4x1xf32>
    %1474 = arith.maximumf %1472, %1473 : vector<4x1xf32>
    %1475 = math.absf %1472 : vector<4x1xf32>
    %cst_394 = arith.constant 0.000000e+00 : f32
    %1476 = vector.broadcast %cst_394 : f32 to vector<4x1xf32>
    %1477 = arith.subf %1476, %1475 : vector<4x1xf32>
    %1478 = math.exp %1477 : vector<4x1xf32>
    %cst_395 = arith.constant 1.000000e+00 : f32
    %1479 = vector.broadcast %cst_395 : f32 to vector<4x1xf32>
    %1480 = arith.addf %1479, %1478 : vector<4x1xf32>
    %1481 = math.log %1480 : vector<4x1xf32>
    %1482 = arith.addf %1474, %1481 : vector<4x1xf32>
    %1483 = vector.extract_strided_slice %1467 {offsets = [0, 17], sizes = [4, 1], strides = [1, 1]} : vector<4x22xf32> to vector<4x1xf32>
    %cst_396 = arith.constant 0.000000e+00 : f32
    %1484 = vector.broadcast %cst_396 : f32 to vector<4x1xf32>
    %1485 = arith.subf %1484, %1483 : vector<4x1xf32>
    %1486 = math.exp %1485 : vector<4x1xf32>
    %cst_397 = arith.constant 1.000000e+00 : f32
    %1487 = vector.broadcast %cst_397 : f32 to vector<4x1xf32>
    %1488 = arith.addf %1487, %1486 : vector<4x1xf32>
    %cst_398 = arith.constant 1.000000e+00 : f32
    %1489 = vector.broadcast %cst_398 : f32 to vector<4x1xf32>
    %1490 = arith.divf %1489, %1488 : vector<4x1xf32>
    %1491 = vector.extract_strided_slice %1467 {offsets = [0, 18], sizes = [4, 3], strides = [1, 1]} : vector<4x22xf32> to vector<4x3xf32>
    %cst_399 = arith.constant dense<0xFF800000> : vector<4xf32>
    %1492 = vector.multi_reduction <maximumf>, %1491, %cst_399 [1] : vector<4x3xf32> to vector<4xf32>
    %1493 = vector.shape_cast %1492 : vector<4xf32> to vector<4x1xf32>
    %1494 = vector.broadcast %1493 : vector<4x1xf32> to vector<4x3xf32>
    %1495 = arith.subf %1491, %1494 : vector<4x3xf32>
    %1496 = math.exp %1495 : vector<4x3xf32>
    %cst_400 = arith.constant dense<0.000000e+00> : vector<4xf32>
    %1497 = vector.multi_reduction <add>, %1496, %cst_400 [1] : vector<4x3xf32> to vector<4xf32>
    %1498 = vector.shape_cast %1497 : vector<4xf32> to vector<4x1xf32>
    %1499 = vector.broadcast %1498 : vector<4x1xf32> to vector<4x3xf32>
    %1500 = arith.divf %1496, %1499 : vector<4x3xf32>
    %1501 = vector.extract_strided_slice %1467 {offsets = [0, 21], sizes = [4, 1], strides = [1, 1]} : vector<4x22xf32> to vector<4x1xf32>
    %cst_401 = arith.constant 0.000000e+00 : f32
    %1502 = vector.broadcast %cst_401 : f32 to vector<4x1xf32>
    %1503 = arith.maximumf %1501, %1502 : vector<4x1xf32>
    %1504 = math.absf %1501 : vector<4x1xf32>
    %cst_402 = arith.constant 0.000000e+00 : f32
    %1505 = vector.broadcast %cst_402 : f32 to vector<4x1xf32>
    %1506 = arith.subf %1505, %1504 : vector<4x1xf32>
    %1507 = math.exp %1506 : vector<4x1xf32>
    %cst_403 = arith.constant 1.000000e+00 : f32
    %1508 = vector.broadcast %cst_403 : f32 to vector<4x1xf32>
    %1509 = arith.addf %1508, %1507 : vector<4x1xf32>
    %1510 = math.log %1509 : vector<4x1xf32>
    %1511 = arith.addf %1503, %1510 : vector<4x1xf32>
    %1512 = vector.shape_cast %1471 : vector<4x16xf32> to vector<4x1x16xf32>
    %1513 = vector.broadcast %1512 : vector<4x1x16xf32> to vector<4x16x16xf32>
    %1514 = arith.mulf %1469, %1513 : vector<4x16x16xf32>
    %cst_404 = arith.constant dense<0.000000e+00> : vector<4x16xf32>
    %1515 = vector.multi_reduction <add>, %1514, %cst_404 [2] : vector<4x16x16xf32> to vector<4x16xf32>
    %1516 = arith.mulf %1471, %1471 : vector<4x16xf32>
    %cst_405 = arith.constant dense<0.000000e+00> : vector<4xf32>
    %1517 = vector.multi_reduction <add>, %1516, %cst_405 [1] : vector<4x16xf32> to vector<4xf32>
    %1518 = vector.shape_cast %1517 : vector<4xf32> to vector<4x1xf32>
    %1519 = math.sqrt %1518 : vector<4x1xf32>
    %1520 = arith.mulf %1469, %1469 : vector<4x16x16xf32>
    %cst_406 = arith.constant dense<0.000000e+00> : vector<4x16xf32>
    %1521 = vector.multi_reduction <add>, %1520, %cst_406 [2] : vector<4x16x16xf32> to vector<4x16xf32>
    %1522 = math.sqrt %1521 : vector<4x16xf32>
    %1523 = vector.broadcast %1519 : vector<4x1xf32> to vector<4x16xf32>
    %1524 = arith.mulf %1523, %1522 : vector<4x16xf32>
    %cst_407 = arith.constant 9.99999993E-9 : f32
    %1525 = vector.broadcast %cst_407 : f32 to vector<4x16xf32>
    %1526 = arith.addf %1524, %1525 : vector<4x16xf32>
    %1527 = arith.divf %1515, %1526 : vector<4x16xf32>
    %1528 = vector.broadcast %1482 : vector<4x1xf32> to vector<4x16xf32>
    %1529 = arith.mulf %1528, %1527 : vector<4x16xf32>
    %cst_408 = arith.constant dense<0xFF800000> : vector<4xf32>
    %1530 = vector.multi_reduction <maximumf>, %1529, %cst_408 [1] : vector<4x16xf32> to vector<4xf32>
    %1531 = vector.shape_cast %1530 : vector<4xf32> to vector<4x1xf32>
    %1532 = vector.broadcast %1531 : vector<4x1xf32> to vector<4x16xf32>
    %1533 = arith.subf %1529, %1532 : vector<4x16xf32>
    %1534 = math.exp %1533 : vector<4x16xf32>
    %cst_409 = arith.constant dense<0.000000e+00> : vector<4xf32>
    %1535 = vector.multi_reduction <add>, %1534, %cst_409 [1] : vector<4x16xf32> to vector<4xf32>
    %1536 = vector.shape_cast %1535 : vector<4xf32> to vector<4x1xf32>
    %1537 = vector.broadcast %1536 : vector<4x1xf32> to vector<4x16xf32>
    %1538 = arith.divf %1534, %1537 : vector<4x16xf32>
    %1539 = vector.broadcast %1490 : vector<4x1xf32> to vector<4x16xf32>
    %1540 = arith.mulf %1539, %1538 : vector<4x16xf32>
    %cst_410 = arith.constant 1.000000e+00 : f32
    %1541 = vector.broadcast %cst_410 : f32 to vector<4x1xf32>
    %1542 = arith.subf %1541, %1490 : vector<4x1xf32>
    %1543 = vector.broadcast %1542 : vector<4x1xf32> to vector<4x16xf32>
    %1544 = arith.mulf %1543, %1468 : vector<4x16xf32>
    %1545 = arith.addf %1540, %1544 : vector<4x16xf32>
    %cst_411 = arith.constant 0.000000e+00 : f32
    %1546 = vector.broadcast %cst_411 : f32 to vector<4x16xf32>
    %1547 = vector.extract_strided_slice %1500 {offsets = [0, 0], sizes = [4, 1], strides = [1, 1]} : vector<4x3xf32> to vector<4x1xf32>
    %1548 = vector.broadcast %1547 : vector<4x1xf32> to vector<4x16xf32>
    %1549 = arith.mulf %1548, %1545 : vector<4x16xf32>
    %1550 = arith.addf %1546, %1549 : vector<4x16xf32>
    %1551 = vector.extract_strided_slice %1500 {offsets = [0, 1], sizes = [4, 1], strides = [1, 1]} : vector<4x3xf32> to vector<4x1xf32>
    %1552 = vector.extract_strided_slice %1545 {offsets = [0, 15], sizes = [4, 1], strides = [1, 1]} : vector<4x16xf32> to vector<4x1xf32>
    %1553 = vector.extract_strided_slice %1545 {offsets = [0, 0], sizes = [4, 15], strides = [1, 1]} : vector<4x16xf32> to vector<4x15xf32>
    %1554 = tpu.concatenate %1552, %1553 in 1 : vector<4x1xf32>, vector<4x15xf32> -> vector<4x16xf32>
    %1555 = vector.broadcast %1551 : vector<4x1xf32> to vector<4x16xf32>
    %1556 = arith.mulf %1555, %1554 : vector<4x16xf32>
    %1557 = arith.addf %1550, %1556 : vector<4x16xf32>
    %1558 = vector.extract_strided_slice %1500 {offsets = [0, 2], sizes = [4, 1], strides = [1, 1]} : vector<4x3xf32> to vector<4x1xf32>
    %1559 = vector.extract_strided_slice %1545 {offsets = [0, 1], sizes = [4, 15], strides = [1, 1]} : vector<4x16xf32> to vector<4x15xf32>
    %1560 = vector.extract_strided_slice %1545 {offsets = [0, 0], sizes = [4, 1], strides = [1, 1]} : vector<4x16xf32> to vector<4x1xf32>
    %1561 = tpu.concatenate %1559, %1560 in 1 : vector<4x15xf32>, vector<4x1xf32> -> vector<4x16xf32>
    %1562 = vector.broadcast %1558 : vector<4x1xf32> to vector<4x16xf32>
    %1563 = arith.mulf %1562, %1561 : vector<4x16xf32>
    %1564 = arith.addf %1557, %1563 : vector<4x16xf32>
    %cst_412 = arith.constant 9.99999993E-9 : f32
    %1565 = vector.broadcast %cst_412 : f32 to vector<4x16xf32>
    %1566 = arith.addf %1564, %1565 : vector<4x16xf32>
    %1567 = math.log %1566 : vector<4x16xf32>
    %1568 = vector.broadcast %1511 : vector<4x1xf32> to vector<4x16xf32>
    %1569 = arith.mulf %1568, %1567 : vector<4x16xf32>
    %1570 = math.exp %1569 : vector<4x16xf32>
    %cst_413 = arith.constant dense<0.000000e+00> : vector<4xf32>
    %1571 = vector.multi_reduction <add>, %1570, %cst_413 [1] : vector<4x16xf32> to vector<4xf32>
    %1572 = vector.shape_cast %1571 : vector<4xf32> to vector<4x1xf32>
    %1573 = vector.broadcast %1572 : vector<4x1xf32> to vector<4x16xf32>
    %1574 = arith.divf %1570, %1573 : vector<4x16xf32>
    %1575 = vector.extract_strided_slice %1574 {offsets = [0, 0], sizes = [2, 16], strides = [1, 1]} : vector<4x16xf32> to vector<2x16xf32>
    %1576 = vector.shape_cast %1575 : vector<2x16xf32> to vector<2x16x1xf32>
    %1577 = vector.broadcast %1576 : vector<2x16x1xf32> to vector<2x16x16xf32>
    %1578 = arith.mulf %1577, %1399 : vector<2x16x16xf32>
    %cst_414 = arith.constant dense<0.000000e+00> : vector<2x16xf32>
    %1579 = vector.multi_reduction <add>, %1578, %cst_414 [1] : vector<2x16x16xf32> to vector<2x16xf32>
    %1580 = tpu.concatenate %1461, %1579 in 1 : vector<2x32xf32>, vector<2x16xf32> -> vector<2x48xf32>
    %cst_415 = arith.constant dense<0.000000e+00> : vector<2x32xf32>
    %1581 = tpu.matmul %1580, %4, %cst_415 {dimension_numbers = #tpu.dot_dimension_numbers<[1], [0], [0], [1], [0, 0, 1, 1], [], []>} : vector<2x48xf32>, vector<48x32xf32>, vector<2x32xf32> -> vector<2x32xf32>
    %1582 = vector.broadcast %5 : vector<1x32xf32> to vector<2x32xf32>
    %1583 = arith.addf %1581, %1582 : vector<2x32xf32>
    %cst_416 = arith.constant -2.000000e+01 : f32
    %cst_417 = arith.constant 2.000000e+01 : f32
    %1584 = vector.broadcast %cst_416 : f32 to vector<2x32xf32>
    %1585 = arith.maximumf %1584, %1583 : vector<2x32xf32>
    %1586 = vector.broadcast %cst_417 : f32 to vector<2x32xf32>
    %1587 = arith.minimumf %1586, %1585 : vector<2x32xf32>
    %cst_418 = arith.constant dense<0.000000e+00> : vector<2x8xf32>
    %1588 = tpu.matmul %1587, %6, %cst_418 {dimension_numbers = #tpu.dot_dimension_numbers<[1], [0], [0], [1], [0, 0, 1, 1], [], []>} : vector<2x32xf32>, vector<32x8xf32>, vector<2x8xf32> -> vector<2x8xf32>
    %1589 = vector.broadcast %7 : vector<1x8xf32> to vector<2x8xf32>
    %1590 = arith.addf %1588, %1589 : vector<2x8xf32>
    %cst_419 = arith.constant 0.000000e+00 : f32
    %1591 = vector.broadcast %cst_419 : f32 to vector<2x8xf32>
    %1592 = arith.subf %1591, %1590 : vector<2x8xf32>
    %1593 = math.exp %1592 : vector<2x8xf32>
    %cst_420 = arith.constant 1.000000e+00 : f32
    %1594 = vector.broadcast %cst_420 : f32 to vector<2x8xf32>
    %1595 = arith.addf %1594, %1593 : vector<2x8xf32>
    %cst_421 = arith.constant 1.000000e+00 : f32
    %1596 = vector.broadcast %cst_421 : f32 to vector<2x8xf32>
    %1597 = arith.divf %1596, %1595 : vector<2x8xf32>
    %c7_422 = arith.constant 7 : index
    %c0_423 = arith.constant 0 : index
    %c0_424 = arith.constant 0 : index
    %1598 = vector.load %arg15[%c7_422, %c0_423, %c0_424] : memref<8x2x8xf32, #tpu.memory_space<vmem>>, vector<1x2x8xf32>
    %1599 = vector.shape_cast %1598 : vector<1x2x8xf32> to vector<2x8xf32>
    %1600 = vector.shape_cast %1597 : vector<2x8xf32> to vector<1x2x8xf32>
    tpu.vector_store %arg15[%c7_422, %c0_423, %c0_424], %1600 {strides = array<i32>} : memref<8x2x8xf32, #tpu.memory_space<vmem>>, vector<1x2x8xf32>,
    return
  }
}

</mosaic_0001>

<llo_original>
// kernel: ntm_forward.1
$region0: #{ntm_forward.1}
  #allocation0 [shape = 'u32[]', space=smem, size = 0x4, offset = 0x4, fixed_abs, tag = 'smem constant byte address 0x4 - core index']
  #allocation1 [shape = 'u32[72,128]{1,0:T(1,128)}', space=vmem, size = 0x9000, scoped, tag = 'internal scratch']
  %s0 = inlined_call_operand.vmem [shape: f32[8,2,10], index: 0, kind: input, shape index: {}]
  %s1 = inlined_call_operand.vmem [shape: f32[2,32], index: 1, kind: input, shape index: {}, may-alias: {1,2}]
  %s2 = inlined_call_operand.vmem [shape: f32[2,32], index: 2, kind: input, shape index: {}, may-alias: {1,2}]
  %s3 = inlined_call_operand.vmem [shape: f32[2,16,16], index: 3, kind: input, shape index: {}]
  %s4 = inlined_call_operand.vmem [shape: f32[2,16], index: 4, kind: input, shape index: {}]
  %s5 = inlined_call_operand.vmem [shape: f32[2,16], index: 5, kind: input, shape index: {}, may-alias: {5,6}]
  %s6 = inlined_call_operand.vmem [shape: f32[2,16], index: 6, kind: input, shape index: {}, may-alias: {5,6}]
  %s7 = inlined_call_operand.vmem [shape: f32[58,128], index: 7, kind: input, shape index: {}]
  %s8 = inlined_call_operand.vmem [shape: f32[1,128], index: 8, kind: input, shape index: {}]
  %s9 = inlined_call_operand.vmem [shape: f32[32,76], index: 9, kind: input, shape index: {}]
  %s10 = inlined_call_operand.vmem [shape: f32[1,76], index: 10, kind: input, shape index: {}]
  %s11 = inlined_call_operand.vmem [shape: f32[48,32], index: 11, kind: input, shape index: {}]
  %s12 = inlined_call_operand.vmem [shape: f32[1,32], index: 12, kind: input, shape index: {}]
  %s13 = inlined_call_operand.vmem [shape: f32[32,8], index: 13, kind: input, shape index: {}]
  %s14 = inlined_call_operand.vmem [shape: f32[1,8], index: 14, kind: input, shape index: {}]
  %s15 = inlined_call_operand.vmem [shape: f32[8,2,8], index: 15, kind: output, shape index: {}]
  %s16 = sld [smem:[#allocation0]]
  $region70: #{ntm_forward.1} parent=0
    _
  %s18 = ssub.s32 1, %s16
  %s19 = scalar_select 0, %s18, %s16
  // Predicated region
  $region2: #{ntm_forward.1} parent=0 // pred_check
    _
  $region3: #{ntm_forward.1} parent=0 // pred_check_branch
    %21 = sbr.rel (0) target = $region5
  $region4: #{ntm_forward.1} parent=0 // pred_region
    _
  $region5: #{ntm_forward.1} parent=0 // pred_fallthru
    _
  // Predicated region
  $region6: #{ntm_forward.1} parent=0 // pred_check
    _
  $region7: #{ntm_forward.1} parent=0 // pred_check_branch
    %23 = sbr.rel (0) target = $region9
  $region8: #{ntm_forward.1} parent=0 // pred_region
    _
  $region9: #{ntm_forward.1} parent=0 // pred_fallthru
    _
  // Predicated region
  $region10: #{ntm_forward.1} parent=0 // pred_check
    _
  $region11: #{ntm_forward.1} parent=0 // pred_check_branch
    %25 = sbr.rel (0) target = $region13
  $region12: #{ntm_forward.1} parent=0 // pred_region
    _
  $region13: #{ntm_forward.1} parent=0 // pred_fallthru
    _
  // Predicated region
  $region14: #{ntm_forward.1} parent=0 // pred_check
    _
  $region15: #{ntm_forward.1} parent=0 // pred_check_branch
    %27 = sbr.rel (0) target = $region17
  $region16: #{ntm_forward.1} parent=0 // pred_region
    _
  $region17: #{ntm_forward.1} parent=0 // pred_fallthru
    _
  // Predicated region
  $region18: #{ntm_forward.1} parent=0 // pred_check
    _
  $region19: #{ntm_forward.1} parent=0 // pred_check_branch
    %29 = sbr.rel (0) target = $region21
  $region20: #{ntm_forward.1} parent=0 // pred_region
    _
  $region21: #{ntm_forward.1} parent=0 // pred_fallthru
    _
  // Predicated region
  $region22: #{ntm_forward.1} parent=0 // pred_check
    _
  $region23: #{ntm_forward.1} parent=0 // pred_check_branch
    %31 = sbr.rel (0) target = $region25
  $region24: #{ntm_forward.1} parent=0 // pred_region
    _
  $region25: #{ntm_forward.1} parent=0 // pred_fallthru
    _
  // Predicated region
  $region26: #{ntm_forward.1} parent=0 // pred_check
    _
  $region27: #{ntm_forward.1} parent=0 // pred_check_branch
    %33 = sbr.rel (0) target = $region29
  $region28: #{ntm_forward.1} parent=0 // pred_region
    _
  $region29: #{ntm_forward.1} parent=0 // pred_fallthru
    _
  // Predicated region
  $region30: #{ntm_forward.1} parent=0 // pred_check
    _
  $region31: #{ntm_forward.1} parent=0 // pred_check_branch
    %35 = sbr.rel (0) target = $region33
  $region32: #{ntm_forward.1} parent=0 // pred_region
    _
  $region33: #{ntm_forward.1} parent=0 // pred_fallthru
    _
  // Predicated region
  $region34: #{ntm_forward.1} parent=0 // pred_check
    _
  $region35: #{ntm_forward.1} parent=0 // pred_check_branch
    %37 = sbr.rel (0) target = $region37
  $region36: #{ntm_forward.1} parent=0 // pred_region
    _
  $region37: #{ntm_forward.1} parent=0 // pred_fallthru
    _
  // Predicated region
  $region38: #{ntm_forward.1} parent=0 // pred_check
    _
  $region39: #{ntm_forward.1} parent=0 // pred_check_branch
    %39 = sbr.rel (0) target = $region41
  $region40: #{ntm_forward.1} parent=0 // pred_region
    _
  $region41: #{ntm_forward.1} parent=0 // pred_fallthru
    _
  // Predicated region
  $region42: #{ntm_forward.1} parent=0 // pred_check
    _
  $region43: #{ntm_forward.1} parent=0 // pred_check_branch
    %41 = sbr.rel (0) target = $region45
  $region44: #{ntm_forward.1} parent=0 // pred_region
    _
  $region45: #{ntm_forward.1} parent=0 // pred_fallthru
    _
  // Predicated region
  $region46: #{ntm_forward.1} parent=0 // pred_check
    _
  $region47: #{ntm_forward.1} parent=0 // pred_check_branch
    %43 = sbr.rel (0) target = $region49
  $region48: #{ntm_forward.1} parent=0 // pred_region
    _
  $region49: #{ntm_forward.1} parent=0 // pred_fallthru
    _
  // Predicated region
  $region50: #{ntm_forward.1} parent=0 // pred_check
    _
  $region51: #{ntm_forward.1} parent=0 // pred_check_branch
    %45 = sbr.rel (0) target = $region53
  $region52: #{ntm_forward.1} parent=0 // pred_region
    _
  $region53: #{ntm_forward.1} parent=0 // pred_fallthru
    _
  // Predicated region
  $region54: #{ntm_forward.1} parent=0 // pred_check
    _
  $region55: #{ntm_forward.1} parent=0 // pred_check_branch
    %47 = sbr.rel (0) target = $region57
  $region56: #{ntm_forward.1} parent=0 // pred_region
    _
  $region57: #{ntm_forward.1} parent=0 // pred_fallthru
    _
  // Predicated region
  $region58: #{ntm_forward.1} parent=0 // pred_check
    _
  $region59: #{ntm_forward.1} parent=0 // pred_check_branch
    %49 = sbr.rel (0) target = $region61
  $region60: #{ntm_forward.1} parent=0 // pred_region
    _
  $region61: #{ntm_forward.1} parent=0 // pred_fallthru
    _
  %v50 = vld [vmem:[%s7] sm:$0xff]
  %v51 = vld [vmem:[%s7 + $0x8] sm:$0xff]
  %v52 = vld [vmem:[%s7 + $0x10] sm:$0xff]
  %v53 = vld [vmem:[%s7 + $0x18] sm:$0xff]
  %v54 = vld [vmem:[%s7 + $0x20] sm:$0xff]
  %v55 = vld [vmem:[%s7 + $0x28] sm:$0xff]
  %v56 = vld [vmem:[%s7 + $0x30] sm:$0xff]
  %v57 = vld [vmem:[%s7 + $0x38] sm:$0x3]
  %v58 = vld [vmem:[%s8] sm:$0x1]
  %v59 = vld [vmem:[%s9] sm:$0xff]
  %v60 = vld [vmem:[%s9 + $0x8] sm:$0xff]
  %v61 = vld [vmem:[%s9 + $0x10] sm:$0xff]
  %v62 = vld [vmem:[%s9 + $0x18] sm:$0xff]
  %v63 = vld [vmem:[%s10] sm:$0x1]
  %v64 = vld [vmem:[%s11] sm:$0xff]
  %v65 = vld [vmem:[%s11 + $0x8] sm:$0xff]
  %v66 = vld [vmem:[%s11 + $0x10] sm:$0xff]
  %v67 = vld [vmem:[%s11 + $0x18] sm:$0xff]
  %v68 = vld [vmem:[%s11 + $0x20] sm:$0xff]
  %v69 = vld [vmem:[%s11 + $0x28] sm:$0xff]
  %v70 = vld [vmem:[%s12] sm:$0x1]
  %v71 = vld [vmem:[%s13] sm:$0xff]
  %v72 = vld [vmem:[%s13 + $0x8] sm:$0xff]
  %v73 = vld [vmem:[%s13 + $0x10] sm:$0xff]
  %v74 = vld [vmem:[%s13 + $0x18] sm:$0xff]
  %v75 = vld [vmem:[%s14] sm:$0x1]
  %v76 = vld [vmem:[%s1] sm:$0x3]
  %v77 = vld [vmem:[%s2] sm:$0x3]
  %v78 = vld [vmem:[%s3] sm:$0xff]
  %v79 = vld [vmem:[%s3 + $0x8] sm:$0xff]
  %v80 = vld [vmem:[%s3 + $0x10] sm:$0xff]
  %v81 = vld [vmem:[%s3 + $0x18] sm:$0xff]
  %v82 = vld [vmem:[%s4] sm:$0x3]
  %v83 = vld [vmem:[%s5] sm:$0x3]
  %v84 = vld [vmem:[%s6] sm:$0x3]
  %v85 = vld [vmem:[%s0] sm:$0x3]
  %87 = vrot.lane.b32.xlu0 %v82, 10
  %v88 = vpop.permute.xlu0 %87
  %91 = vrot.lane.b32.xlu0 %v76, 26
  %v92 = vpop.permute.xlu0 %91
  %vm94 = vcmask 80896
  %v95 = vsel %vm94, %v85, %v88
  %vm96 = vcmask 211968
  %v97 = vsel %vm96, %v95, %v92
  %v99 = vperm.slane %v58, 0
  %vm101 = vcmask 474112
  %v103 = vsel %vm101, %v97, 0
  %vm105 = vcmask 1041408
  %v107 = vsel %vm105, %v57, 0
  %109 = vmatpush.msra.mxu0 0.0
  %110 = vmatpush.msra.mxu0 0.0
  %111 = vmatpush.msra.mxu0 0.0
  %112 = vmatpush.msra.mxu0 0.0
  %113 = vmatpush.msra.mxu0 0.0
  %114 = vmatpush.msra.mxu0 0.0
  %115 = vmatpush.msra.mxu0 0.0
  %116 = vmatpush.msra.mxu0 0.0
  %117 = vmatpush.msra.mxu0 %v107
  %118 = vmatpush.msra.mxu0 %v56
  %119 = vmatpush.msra.mxu0 %v55
  %120 = vmatpush.msra.mxu0 %v54
  %121 = vmatpush.msra.mxu0 %v53
  %122 = vmatpush.msra.mxu0 %v52
  %123 = vmatpush.msra.mxu0 %v51
  %124 = vmatpush.msra.mxu0 %v50
  %125 = vmatmul.f32.gmra.mxu0 %v103
  %v126 = vpop.f32.mrf.mxu0
  %v127 = vadd.f32 %v99, %v126
  %128 = vdwg.mxu0
  %v129 = vsub.f32 0.0, %v127
  %v130 = vmul.f32 %v129, 1.442695
  %v131 = vpow.pop %v130
  %v132 = vadd.f32 %v131, 1.0
  %v133 = vrcp.pop %v132
  %v134 = vmul.f32 %v132, %v133
  %v135 = vsub.f32 1.0, %v134
  %v136 = vmul.f32 %v133, %v135
  %v137 = vadd.f32 %v133, %v136
  %vm138 = vweird.f32 %v132
  %vm139 = vweird.f32 %v133
  %vm140 = vmor %vm138, %vm139
  %v141 = vsel %vm140, %v133, %v137
  %v142 = vand.u32 2147483647, %v132
  %vm143 = vcmp.eq.f32.partialorder %v142, 8.507059e+37
  %v144 = vand.u32 %v132, 2147483648
  %v145 = vor.u32 1.1754944e-38, %v144
  %v146 = vsel %vm143, %v145, %v141
  %v147 = vmul.f32 1.0, %v146
  %v148 = vtanh.pop %v127
  %150 = vrot.lane.b32.xlu0 %v77, 32
  %v151 = vpop.permute.xlu0 %150
  %v153 = vmul.f32 %v147, %v151
  %155 = vrot.lane.b32.xlu0 %v148, 64
  %v156 = vpop.permute.xlu0 %155
  %v158 = vmul.f32 %v147, %v156
  %160 = vrot.lane.b32.xlu0 %v158, 32
  %v161 = vpop.permute.xlu0 %160
  %v163 = vadd.f32 %v153, %v161
  %v164 = vtanh.pop %v163
  %166 = vrot.lane.b32.xlu0 %v164, 64
  %v167 = vpop.permute.xlu0 %166
  %v169 = vmul.f32 %v147, %v167
  %v170 = vmax.f32 %v169, -20.0
  %v171 = vmin.f32 %v170, 20.0
  %v173 = vperm.slane %v63, 0
  %176 = vrot.lane.b32.xlu0 %v171, 32
  %v177 = vpop.permute.xlu0 %176
  %vm178 = vcmask 261120
  %v179 = vsel %vm178, %v177, 0
  %181 = vmatpush.msra.mxu0 0.0
  %182 = vmatpush.msra.mxu0 0.0
  %183 = vmatpush.msra.mxu0 0.0
  %184 = vmatpush.msra.mxu0 0.0
  %185 = vmatpush.msra.mxu0 0.0
  %186 = vmatpush.msra.mxu0 0.0
  %187 = vmatpush.msra.mxu0 0.0
  %188 = vmatpush.msra.mxu0 0.0
  %189 = vmatpush.msra.mxu0 0.0
  %190 = vmatpush.msra.mxu0 0.0
  %191 = vmatpush.msra.mxu0 0.0
  %192 = vmatpush.msra.mxu0 0.0
  %193 = vmatpush.msra.mxu0 %v62
  %194 = vmatpush.msra.mxu0 %v61
  %195 = vmatpush.msra.mxu0 %v60
  %196 = vmatpush.msra.mxu0 %v59
  %197 = vmatmul.f32.gmra.mxu0 %v179
  %v198 = vpop.f32.mrf.mxu0
  %v199 = vadd.f32 %v173, %v198
  %200 = vdwg.mxu0
  %v202 = vrot.slane %v199, 6
  %203 = vrot.lane.b32.xlu0 %v202, 106
  %v204 = vpop.permute.xlu0 %203
  %v206 = vsel %vm105, %v199, %v204
  %v208 = vrot.slane %v84, 6
  %v210 = vsel %vm105, %v83, %v208
  %v211 = vtanh.pop %v206
  %v212 = vmax.f32 %v206, 0.0
  %v213 = vand.u32 2147483647, %v206
  %v214 = vsub.f32 0.0, %v213
  %v215 = vmul.f32 %v214, 1.442695
  %v216 = vpow.pop %v215
  %v217 = vadd.f32 %v216, 1.0
  %v218 = vlog2.pop %v217
  %v219 = vmul.f32 %v218, 0.6931472
  %v220 = vadd.f32 %v212, %v219
  %v221 = vsub.f32 0.0, %v206
  %v222 = vmul.f32 %v221, 1.442695
  %v223 = vpow.pop %v222
  %v224 = vadd.f32 %v223, 1.0
  %v225 = vrcp.pop %v224
  %v226 = vmul.f32 %v224, %v225
  %v227 = vsub.f32 1.0, %v226
  %v228 = vmul.f32 %v225, %v227
  %v229 = vadd.f32 %v225, %v228
  %vm230 = vweird.f32 %v224
  %vm231 = vweird.f32 %v225
  %vm232 = vmor %vm230, %vm231
  %v233 = vsel %vm232, %v225, %v229
  %v234 = vand.u32 2147483647, %v224
  %vm235 = vcmp.eq.f32.partialorder %v234, 8.507059e+37
  %v236 = vand.u32 %v224, 2147483648
  %v237 = vor.u32 1.1754944e-38, %v236
  %v238 = vsel %vm235, %v237, %v233
  %v239 = vmul.f32 1.0, %v238
  %vm240 = vcmask 167056
  %v241 = vsel %vm240, %v206, -inf
  %242 = vmax.xlane.f32.xlu0 %v241
  %v243 = vpop.xlane.xlu0 %242
  %v244 = vsub.f32 %v206, %v243
  %v245 = vmul.f32 %v244, 1.442695
  %v246 = vpow.pop %v245
  %248 = vrot.lane.b32.xlu0 %v246, 110
  %v249 = vpop.permute.xlu0 %248
  %vm251 = vcmask 19456
  %v252 = vsel %vm251, %v249, 0.0
  %253 = vadd.xlane.f32.xlu0 %v252
  %v254 = vpop.xlane.xlu0 %253
  %v255 = vrcp.pop %v254
  %v256 = vmul.f32 %v254, %v255
  %v257 = vsub.f32 1.0, %v256
  %v258 = vmul.f32 %v255, %v257
  %v259 = vadd.f32 %v255, %v258
  %vm260 = vweird.f32 %v254
  %vm261 = vweird.f32 %v255
  %vm262 = vmor %vm260, %vm261
  %v263 = vsel %vm262, %v255, %v259
  %v264 = vand.u32 2147483647, %v254
  %vm265 = vcmp.eq.f32.partialorder %v264, 8.507059e+37
  %v266 = vand.u32 %v254, 2147483648
  %v267 = vor.u32 1.1754944e-38, %v266
  %v268 = vsel %vm265, %v267, %v263
  %v269 = vmul.f32 %v246, %v268
  %v271 = vrot.slane %v211, 1
  %v272 = vrot.slane %v211, 2
  %v273 = vrot.slane %v211, 3
  %v274 = vperm.slane %v211, 0
  %v275 = vperm.slane %v271, 0
  %v276 = vperm.slane %v272, 0
  %v277 = vperm.slane %v273, 0
  %v282 = vmul.f32 %v78, %v274
  %v283 = vmul.f32 %v79, %v274
  %v284 = vmul.f32 %v80, %v275
  %v285 = vmul.f32 %v81, %v275
  %v286 = vmul.f32 %v78, %v276
  %v287 = vmul.f32 %v79, %v276
  %v288 = vmul.f32 %v80, %v277
  %v289 = vmul.f32 %v81, %v277
  %vm290 = vcmask 130048
  %v291 = vsel %vm290, %v282, 0.0
  %292 = vadd.xlane.f32.xlu0 %v291
  %v293 = vpop.xlane.xlu0 %292
  %v294 = vsel %vm290, %v283, 0.0
  %295 = vadd.xlane.f32.xlu0 %v294
  %v296 = vpop.xlane.xlu0 %295
  %v297 = vsel %vm290, %v284, 0.0
  %298 = vadd.xlane.f32.xlu0 %v297
  %v299 = vpop.xlane.xlu0 %298
  %v300 = vsel %vm290, %v285, 0.0
  %301 = vadd.xlane.f32.xlu0 %v300
  %v302 = vpop.xlane.xlu0 %301
  %v303 = vsel %vm290, %v286, 0.0
  %304 = vadd.xlane.f32.xlu0 %v303
  %v305 = vpop.xlane.xlu0 %304
  %v306 = vsel %vm290, %v287, 0.0
  %307 = vadd.xlane.f32.xlu0 %v306
  %v308 = vpop.xlane.xlu0 %307
  %v309 = vsel %vm290, %v288, 0.0
  %310 = vadd.xlane.f32.xlu0 %v309
  %v311 = vpop.xlane.xlu0 %310
  %v312 = vsel %vm290, %v289, 0.0
  %313 = vadd.xlane.f32.xlu0 %v312
  %v314 = vpop.xlane.xlu0 %313
  %v315 = vmul.f32 %v211, %v211
  %vm316 = vcmask 125952
  %v317 = vsel %vm316, %v315, 0.0
  %318 = vadd.xlane.f32.xlu0 %v317
  %v319 = vpop.xlane.xlu0 %318
  %v320 = vrsqrt.pop %v319
  %v321 = vmul.f32 %v320, %v319
  %v322 = vmul.f32 %v321, %v320
  %v323 = vmul.f32 0.5, %v322
  %v324 = vsub.f32 1.5, %v323
  %v325 = vmul.f32 %v320, %v324
  %v326 = vmul.f32 %v319, %v325
  %vm327 = vcmp.eq.f32.partialorder %v319, inf
  %v328 = vsel %vm327, %v319, %v326
  %vm329 = vcmp.eq.f32.partialorder %v319, 0.0
  %v330 = vand.u32 %v319, 2147483648
  %v331 = vsel %vm329, %v330, %v328
  %v332 = vmul.f32 %v78, %v78
  %v333 = vmul.f32 %v79, %v79
  %v334 = vmul.f32 %v80, %v80
  %v335 = vmul.f32 %v81, %v81
  %v336 = vsel %vm290, %v332, 0.0
  %337 = vadd.xlane.f32.xlu0 %v336
  %v338 = vpop.xlane.xlu0 %337
  %v339 = vsel %vm290, %v333, 0.0
  %340 = vadd.xlane.f32.xlu0 %v339
  %v341 = vpop.xlane.xlu0 %340
  %v342 = vsel %vm290, %v334, 0.0
  %343 = vadd.xlane.f32.xlu0 %v342
  %v344 = vpop.xlane.xlu0 %343
  %v345 = vsel %vm290, %v335, 0.0
  %346 = vadd.xlane.f32.xlu0 %v345
  %v347 = vpop.xlane.xlu0 %346
  %v348 = vrsqrt.pop %v338
  %v349 = vmul.f32 %v348, %v338
  %v350 = vmul.f32 %v349, %v348
  %v351 = vmul.f32 0.5, %v350
  %v352 = vsub.f32 1.5, %v351
  %v353 = vmul.f32 %v348, %v352
  %v354 = vmul.f32 %v338, %v353
  %vm355 = vcmp.eq.f32.partialorder %v338, inf
  %v356 = vsel %vm355, %v338, %v354
  %vm357 = vcmp.eq.f32.partialorder %v338, 0.0
  %v358 = vand.u32 %v338, 2147483648
  %v359 = vsel %vm357, %v358, %v356
  %v360 = vrsqrt.pop %v341
  %v361 = vmul.f32 %v360, %v341
  %v362 = vmul.f32 %v361, %v360
  %v363 = vmul.f32 0.5, %v362
  %v364 = vsub.f32 1.5, %v363
  %v365 = vmul.f32 %v360, %v364
  %v366 = vmul.f32 %v341, %v365
  %vm367 = vcmp.eq.f32.partialorder %v341, inf
  %v368 = vsel %vm367, %v341, %v366
  %vm369 = vcmp.eq.f32.partialorder %v341, 0.0
  %v370 = vand.u32 %v341, 2147483648
  %v371 = vsel %vm369, %v370, %v368
  %v372 = vrsqrt.pop %v344
  %v373 = vmul.f32 %v372, %v344
  %v374 = vmul.f32 %v373, %v372
  %v375 = vmul.f32 0.5, %v374
  %v376 = vsub.f32 1.5, %v375
  %v377 = vmul.f32 %v372, %v376
  %v378 = vmul.f32 %v344, %v377
  %vm379 = vcmp.eq.f32.partialorder %v344, inf
  %v380 = vsel %vm379, %v344, %v378
  %vm381 = vcmp.eq.f32.partialorder %v344, 0.0
  %v382 = vand.u32 %v344, 2147483648
  %v383 = vsel %vm381, %v382, %v380
  %v384 = vrsqrt.pop %v347
  %v385 = vmul.f32 %v384, %v347
  %v386 = vmul.f32 %v385, %v384
  %v387 = vmul.f32 0.5, %v386
  %v388 = vsub.f32 1.5, %v387
  %v389 = vmul.f32 %v384, %v388
  %v390 = vmul.f32 %v347, %v389
  %vm391 = vcmp.eq.f32.partialorder %v347, inf
  %v392 = vsel %vm391, %v347, %v390
  %vm393 = vcmp.eq.f32.partialorder %v347, 0.0
  %v394 = vand.u32 %v347, 2147483648
  %v395 = vsel %vm393, %v394, %v392
  %v400 = vlaneseq
  %v401 = vand.u32 %v400, 127
  %v402 = vperm.slane %v359, %v401
  %v403 = vadd.s32 %v401, 4294967288
  %v404 = vperm.slane %v371, %v403
  %vm405 = vcmask 130112
  %v406 = vsel %vm405, %v404, %v402
  %v407 = vperm.slane %v383, %v401
  %v408 = vperm.slane %v395, %v403
  %v409 = vsel %vm405, %v408, %v407
  %vm410 = vcmask 1041409
  %v411 = vsel %vm410, %v409, %v406
  %vm412 = vcmask 1042434
  %v413 = vsel %vm412, %v406, %v411
  %vm414 = vcmask 1043459
  %v415 = vsel %vm414, %v409, %v413
  %v417 = vmul.f32 %v331, %v415
  %v418 = vadd.f32 %v417, 1e-08
  %v420 = vperm.slane %v418, 0
  %v421 = vlaneseq
  %v422 = vshrl.u32 %v421, 7
  %424 = vset.pattern.permute.xlu0 %v422
  %425 = vperm.xlu0 %424, %v420
  %v426 = vpop.permute.xlu0 %425
  %v427 = vlaneseq
  %v428 = vshrl.u32 %v427, 7
  %v429 = vadd.s32 %v428, 8
  %430 = vset.pattern.permute.xlu0 %v429
  %431 = vperm.xlu0 %430, %v420
  %v432 = vpop.permute.xlu0 %431
  %v433 = vperm.slane %v418, 1
  %v434 = vlaneseq
  %v435 = vshrl.u32 %v434, 7
  %437 = vset.pattern.permute.xlu0 %v435
  %438 = vperm.xlu0 %437, %v433
  %v439 = vpop.permute.xlu0 %438
  %v440 = vlaneseq
  %v441 = vshrl.u32 %v440, 7
  %v442 = vadd.s32 %v441, 8
  %443 = vset.pattern.permute.xlu0 %v442
  %444 = vperm.xlu0 %443, %v433
  %v445 = vpop.permute.xlu0 %444
  %v446 = vperm.slane %v418, 2
  %v447 = vlaneseq
  %v448 = vshrl.u32 %v447, 7
  %450 = vset.pattern.permute.xlu0 %v448
  %451 = vperm.xlu0 %450, %v446
  %v452 = vpop.permute.xlu0 %451
  %v453 = vlaneseq
  %v454 = vshrl.u32 %v453, 7
  %v455 = vadd.s32 %v454, 8
  %456 = vset.pattern.permute.xlu0 %v455
  %457 = vperm.xlu0 %456, %v446
  %v458 = vpop.permute.xlu0 %457
  %v459 = vperm.slane %v418, 3
  %v460 = vlaneseq
  %v461 = vshrl.u32 %v460, 7
  %463 = vset.pattern.permute.xlu0 %v461
  %464 = vperm.xlu0 %463, %v459
  %v465 = vpop.permute.xlu0 %464
  %v466 = vlaneseq
  %v467 = vshrl.u32 %v466, 7
  %v468 = vadd.s32 %v467, 8
  %469 = vset.pattern.permute.xlu0 %v468
  %470 = vperm.xlu0 %469, %v459
  %v471 = vpop.permute.xlu0 %470
  %v480 = vrcp.pop %v426
  %v481 = vmul.f32 %v426, %v480
  %v482 = vsub.f32 1.0, %v481
  %v483 = vmul.f32 %v480, %v482
  %v484 = vadd.f32 %v480, %v483
  %vm485 = vweird.f32 %v426
  %vm486 = vweird.f32 %v480
  %vm487 = vmor %vm485, %vm486
  %v488 = vsel %vm487, %v480, %v484
  %v489 = vand.u32 2147483647, %v426
  %vm490 = vcmp.eq.f32.partialorder %v489, 8.507059e+37
  %v491 = vand.u32 %v426, 2147483648
  %v492 = vor.u32 1.1754944e-38, %v491
  %v493 = vsel %vm490, %v492, %v488
  %v494 = vmul.f32 %v293, %v493
  %v495 = vrcp.pop %v432
  %v496 = vmul.f32 %v432, %v495
  %v497 = vsub.f32 1.0, %v496
  %v498 = vmul.f32 %v495, %v497
  %v499 = vadd.f32 %v495, %v498
  %vm500 = vweird.f32 %v432
  %vm501 = vweird.f32 %v495
  %vm502 = vmor %vm500, %vm501
  %v503 = vsel %vm502, %v495, %v499
  %v504 = vand.u32 2147483647, %v432
  %vm505 = vcmp.eq.f32.partialorder %v504, 8.507059e+37
  %v506 = vand.u32 %v432, 2147483648
  %v507 = vor.u32 1.1754944e-38, %v506
  %v508 = vsel %vm505, %v507, %v503
  %v509 = vmul.f32 %v296, %v508
  %v510 = vrcp.pop %v439
  %v511 = vmul.f32 %v439, %v510
  %v512 = vsub.f32 1.0, %v511
  %v513 = vmul.f32 %v510, %v512
  %v514 = vadd.f32 %v510, %v513
  %vm515 = vweird.f32 %v439
  %vm516 = vweird.f32 %v510
  %vm517 = vmor %vm515, %vm516
  %v518 = vsel %vm517, %v510, %v514
  %v519 = vand.u32 2147483647, %v439
  %vm520 = vcmp.eq.f32.partialorder %v519, 8.507059e+37
  %v521 = vand.u32 %v439, 2147483648
  %v522 = vor.u32 1.1754944e-38, %v521
  %v523 = vsel %vm520, %v522, %v518
  %v524 = vmul.f32 %v299, %v523
  %v525 = vrcp.pop %v445
  %v526 = vmul.f32 %v445, %v525
  %v527 = vsub.f32 1.0, %v526
  %v528 = vmul.f32 %v525, %v527
  %v529 = vadd.f32 %v525, %v528
  %vm530 = vweird.f32 %v445
  %vm531 = vweird.f32 %v525
  %vm532 = vmor %vm530, %vm531
  %v533 = vsel %vm532, %v525, %v529
  %v534 = vand.u32 2147483647, %v445
  %vm535 = vcmp.eq.f32.partialorder %v534, 8.507059e+37
  %v536 = vand.u32 %v445, 2147483648
  %v537 = vor.u32 1.1754944e-38, %v536
  %v538 = vsel %vm535, %v537, %v533
  %v539 = vmul.f32 %v302, %v538
  %v540 = vrcp.pop %v452
  %v541 = vmul.f32 %v452, %v540
  %v542 = vsub.f32 1.0, %v541
  %v543 = vmul.f32 %v540, %v542
  %v544 = vadd.f32 %v540, %v543
  %vm545 = vweird.f32 %v452
  %vm546 = vweird.f32 %v540
  %vm547 = vmor %vm545, %vm546
  %v548 = vsel %vm547, %v540, %v544
  %v549 = vand.u32 2147483647, %v452
  %vm550 = vcmp.eq.f32.partialorder %v549, 8.507059e+37
  %v551 = vand.u32 %v452, 2147483648
  %v552 = vor.u32 1.1754944e-38, %v551
  %v553 = vsel %vm550, %v552, %v548
  %v554 = vmul.f32 %v305, %v553
  %v555 = vrcp.pop %v458
  %v556 = vmul.f32 %v458, %v555
  %v557 = vsub.f32 1.0, %v556
  %v558 = vmul.f32 %v555, %v557
  %v559 = vadd.f32 %v555, %v558
  %vm560 = vweird.f32 %v458
  %vm561 = vweird.f32 %v555
  %vm562 = vmor %vm560, %vm561
  %v563 = vsel %vm562, %v555, %v559
  %v564 = vand.u32 2147483647, %v458
  %vm565 = vcmp.eq.f32.partialorder %v564, 8.507059e+37
  %v566 = vand.u32 %v458, 2147483648
  %v567 = vor.u32 1.1754944e-38, %v566
  %v568 = vsel %vm565, %v567, %v563
  %v569 = vmul.f32 %v308, %v568
  %v570 = vrcp.pop %v465
  %v571 = vmul.f32 %v465, %v570
  %v572 = vsub.f32 1.0, %v571
  %v573 = vmul.f32 %v570, %v572
  %v574 = vadd.f32 %v570, %v573
  %vm575 = vweird.f32 %v465
  %vm576 = vweird.f32 %v570
  %vm577 = vmor %vm575, %vm576
  %v578 = vsel %vm577, %v570, %v574
  %v579 = vand.u32 2147483647, %v465
  %vm580 = vcmp.eq.f32.partialorder %v579, 8.507059e+37
  %v581 = vand.u32 %v465, 2147483648
  %v582 = vor.u32 1.1754944e-38, %v581
  %v583 = vsel %vm580, %v582, %v578
  %v584 = vmul.f32 %v311, %v583
  %v585 = vrcp.pop %v471
  %v586 = vmul.f32 %v471, %v585
  %v587 = vsub.f32 1.0, %v586
  %v588 = vmul.f32 %v585, %v587
  %v589 = vadd.f32 %v585, %v588
  %vm590 = vweird.f32 %v471
  %vm591 = vweird.f32 %v585
  %vm592 = vmor %vm590, %vm591
  %v593 = vsel %vm592, %v585, %v589
  %v594 = vand.u32 2147483647, %v471
  %vm595 = vcmp.eq.f32.partialorder %v594, 8.507059e+37
  %v596 = vand.u32 %v471, 2147483648
  %v597 = vor.u32 1.1754944e-38, %v596
  %v598 = vsel %vm595, %v597, %v593
  %v599 = vmul.f32 %v314, %v598
  %601 = vset.pattern.permute.xlu0 16
  %602 = vperm.xlu0 %601, %v220
  %v603 = vpop.permute.xlu0 %602
  %613 = vset.pattern.permute.xlu0 0
  %614 = vperm.xlu0 %613, %v494
  %v615 = vpop.permute.xlu0 %614
  %616 = vset.pattern.permute.xlu0 0
  %617 = vperm.xlu0 %616, %v509
  %v618 = vpop.permute.xlu0 %617
  %619 = vset.pattern.permute.xlu0 0
  %620 = vperm.xlu0 %619, %v524
  %v621 = vpop.permute.xlu0 %620
  %622 = vset.pattern.permute.xlu0 0
  %623 = vperm.xlu0 %622, %v539
  %v624 = vpop.permute.xlu0 %623
  %625 = vset.pattern.permute.xlu0 0
  %626 = vperm.xlu0 %625, %v554
  %v627 = vpop.permute.xlu0 %626
  %628 = vset.pattern.permute.xlu0 0
  %629 = vperm.xlu0 %628, %v569
  %v630 = vpop.permute.xlu0 %629
  %631 = vset.pattern.permute.xlu0 0
  %632 = vperm.xlu0 %631, %v584
  %v633 = vpop.permute.xlu0 %632
  %634 = vset.pattern.permute.xlu0 0
  %635 = vperm.xlu0 %634, %v599
  %v636 = vpop.permute.xlu0 %635
  %v637 = vperm.slane %v615, %v401
  %v638 = vperm.slane %v618, %v403
  %v639 = vsel %vm405, %v638, %v637
  %v640 = vperm.slane %v621, %v401
  %v641 = vperm.slane %v624, %v403
  %v642 = vsel %vm405, %v641, %v640
  %v643 = vperm.slane %v627, %v401
  %v644 = vperm.slane %v630, %v403
  %v645 = vsel %vm405, %v644, %v643
  %v646 = vperm.slane %v633, %v401
  %v647 = vperm.slane %v636, %v403
  %v648 = vsel %vm405, %v647, %v646
  %v649 = vsel %vm410, %v642, %v639
  %v650 = vsel %vm412, %v645, %v649
  %v651 = vsel %vm414, %v648, %v650
  %v653 = vmul.f32 %v603, %v651
  %v654 = vsel %vm316, %v653, -inf
  %655 = vmax.xlane.f32.xlu0 %v654
  %v656 = vpop.xlane.xlu0 %655
  %v657 = vsub.f32 %v653, %v656
  %v658 = vmul.f32 %v657, 1.442695
  %v659 = vpow.pop %v658
  %v660 = vsel %vm316, %v659, 0.0
  %661 = vadd.xlane.f32.xlu0 %v660
  %v662 = vpop.xlane.xlu0 %661
  %v663 = vrcp.pop %v662
  %v664 = vmul.f32 %v662, %v663
  %v665 = vsub.f32 1.0, %v664
  %v666 = vmul.f32 %v663, %v665
  %v667 = vadd.f32 %v663, %v666
  %vm668 = vweird.f32 %v662
  %vm669 = vweird.f32 %v663
  %vm670 = vmor %vm668, %vm669
  %v671 = vsel %vm670, %v663, %v667
  %v672 = vand.u32 2147483647, %v662
  %vm673 = vcmp.eq.f32.partialorder %v672, 8.507059e+37
  %v674 = vand.u32 %v662, 2147483648
  %v675 = vor.u32 1.1754944e-38, %v674
  %v676 = vsel %vm673, %v675, %v671
  %v677 = vmul.f32 %v659, %v676
  %679 = vset.pattern.permute.xlu0 17
  %680 = vperm.xlu0 %679, %v239
  %v681 = vpop.permute.xlu0 %680
  %v683 = vmul.f32 %v681, %v677
  %v684 = vsub.f32 1.0, %v239
  %686 = vset.pattern.permute.xlu0 17
  %687 = vperm.xlu0 %686, %v684
  %v688 = vpop.permute.xlu0 %687
  %v690 = vmul.f32 %v688, %v210
  %v691 = vadd.f32 %v683, %v690
  %693 = vset.pattern.permute.xlu0 18
  %694 = vperm.xlu0 %693, %v269
  %v695 = vpop.permute.xlu0 %694
  %v697 = vmul.f32 %v695, %v691
  %v698 = vadd.f32 %v697, 0.0
  %700 = vrot.lane.b32.xlu0 %v691, 113
  %v701 = vpop.permute.xlu0 %700
  %703 = vrot.lane.b32.xlu0 %v691, 1
  %v704 = vpop.permute.xlu0 %703
  %vm706 = vcmask 7168
  %v707 = vsel %vm706, %v701, %v704
  %708 = vset.pattern.permute.xlu0 19
  %709 = vperm.xlu0 %708, %v269
  %v710 = vpop.permute.xlu0 %709
  %v712 = vmul.f32 %v710, %v707
  %v713 = vadd.f32 %v698, %v712
  %714 = vrot.lane.b32.xlu0 %v691, 127
  %v715 = vpop.permute.xlu0 %714
  %717 = vrot.lane.b32.xlu0 %v691, 15
  %v718 = vpop.permute.xlu0 %717
  %vm720 = vcmask 121856
  %v721 = vsel %vm720, %v715, %v718
  %722 = vset.pattern.permute.xlu0 20
  %723 = vperm.xlu0 %722, %v269
  %v724 = vpop.permute.xlu0 %723
  %v726 = vmul.f32 %v724, %v721
  %v727 = vadd.f32 %v713, %v726
  %v728 = vadd.f32 %v727, 1e-08
  %v729 = vlog2.pop %v728
  %v730 = vmul.f32 %v729, 0.6931472
  %731 = vset.pattern.permute.xlu0 21
  %732 = vperm.xlu0 %731, %v220
  %v733 = vpop.permute.xlu0 %732
  %v735 = vmul.f32 %v733, %v730
  %v736 = vmul.f32 %v735, 1.442695
  %v737 = vpow.pop %v736
  %v738 = vsel %vm316, %v737, 0.0
  %739 = vadd.xlane.f32.xlu0 %v738
  %v740 = vpop.xlane.xlu0 %739
  %v741 = vrcp.pop %v740
  %v742 = vmul.f32 %v740, %v741
  %v743 = vsub.f32 1.0, %v742
  %v744 = vmul.f32 %v741, %v743
  %v745 = vadd.f32 %v741, %v744
  %vm746 = vweird.f32 %v740
  %vm747 = vweird.f32 %v741
  %vm748 = vmor %vm746, %vm747
  %v749 = vsel %vm748, %v741, %v745
  %v750 = vand.u32 2147483647, %v740
  %vm751 = vcmp.eq.f32.partialorder %v750, 8.507059e+37
  %v752 = vand.u32 %v740, 2147483648
  %v753 = vor.u32 1.1754944e-38, %v752
  %v754 = vsel %vm751, %v753, %v749
  %v755 = vmul.f32 %v737, %v754
  %v756 = vperm.slane %v755, 0
  %v757 = vlaneseq
  %v758 = vshrl.u32 %v757, 7
  %760 = vset.pattern.permute.xlu0 %v758
  %761 = vperm.xlu0 %760, %v756
  %v762 = vpop.permute.xlu0 %761
  %v763 = vlaneseq
  %v764 = vshrl.u32 %v763, 7
  %v765 = vadd.s32 %v764, 8
  %766 = vset.pattern.permute.xlu0 %v765
  %767 = vperm.xlu0 %766, %v756
  %v768 = vpop.permute.xlu0 %767
  %v769 = vperm.slane %v755, 1
  %v770 = vlaneseq
  %v771 = vshrl.u32 %v770, 7
  %773 = vset.pattern.permute.xlu0 %v771
  %774 = vperm.xlu0 %773, %v769
  %v775 = vpop.permute.xlu0 %774
  %v776 = vlaneseq
  %v777 = vshrl.u32 %v776, 7
  %v778 = vadd.s32 %v777, 8
  %779 = vset.pattern.permute.xlu0 %v778
  %780 = vperm.xlu0 %779, %v769
  %v781 = vpop.permute.xlu0 %780
  %v782 = vmul.f32 %v762, %v78
  %v783 = vmul.f32 %v768, %v79
  %v784 = vmul.f32 %v775, %v80
  %v785 = vmul.f32 %v781, %v81
  %v786 = vsel %vm290, %v782, 0.0
  %v787 = vsel %vm290, %v783, 0.0
  %v788 = vadd.f32 %v786, %v787
  %v789 = vrot.slane %v788, 4
  %v790 = vadd.f32 %v788, %v789
  %v791 = vrot.slane %v790, 2
  %v792 = vadd.f32 %v790, %v791
  %v793 = vrot.slane %v792, 1
  %v794 = vadd.f32 %v792, %v793
  %v795 = vsel %vm290, %v784, 0.0
  %v796 = vsel %vm290, %v785, 0.0
  %v797 = vadd.f32 %v795, %v796
  %v798 = vrot.slane %v797, 4
  %v799 = vadd.f32 %v797, %v798
  %v800 = vrot.slane %v799, 2
  %v801 = vadd.f32 %v799, %v800
  %v802 = vrot.slane %v801, 1
  %v803 = vadd.f32 %v801, %v802
  %v804 = vsub.f32 0.0, %v199
  %v805 = vmul.f32 %v804, 1.442695
  %v806 = vpow.pop %v805
  %v807 = vadd.f32 %v806, 1.0
  %v808 = vrcp.pop %v807
  %v809 = vmul.f32 %v807, %v808
  %v810 = vsub.f32 1.0, %v809
  %v811 = vmul.f32 %v808, %v810
  %v812 = vadd.f32 %v808, %v811
  %vm813 = vweird.f32 %v807
  %vm814 = vweird.f32 %v808
  %vm815 = vmor %vm813, %vm814
  %v816 = vsel %vm815, %v808, %v812
  %v817 = vand.u32 2147483647, %v807
  %vm818 = vcmp.eq.f32.partialorder %v817, 8.507059e+37
  %v819 = vand.u32 %v807, 2147483648
  %v820 = vor.u32 1.1754944e-38, %v819
  %v821 = vsel %vm818, %v820, %v816
  %v822 = vmul.f32 1.0, %v821
  %v823 = vtanh.pop %v199
  %v824 = vperm.slane %v755, 2
  %v825 = vlaneseq
  %v826 = vshrl.u32 %v825, 7
  %828 = vset.pattern.permute.xlu0 %v826
  %829 = vperm.xlu0 %828, %v824
  %v830 = vpop.permute.xlu0 %829
  %v831 = vlaneseq
  %v832 = vshrl.u32 %v831, 7
  %v833 = vadd.s32 %v832, 8
  %834 = vset.pattern.permute.xlu0 %v833
  %835 = vperm.xlu0 %834, %v824
  %v836 = vpop.permute.xlu0 %835
  %v837 = vperm.slane %v755, 3
  %v838 = vlaneseq
  %v839 = vshrl.u32 %v838, 7
  %841 = vset.pattern.permute.xlu0 %v839
  %842 = vperm.xlu0 %841, %v837
  %v843 = vpop.permute.xlu0 %842
  %v844 = vlaneseq
  %v845 = vshrl.u32 %v844, 7
  %v846 = vadd.s32 %v845, 8
  %847 = vset.pattern.permute.xlu0 %v846
  %848 = vperm.xlu0 %847, %v837
  %v849 = vpop.permute.xlu0 %848
  %v851 = vrot.slane %v823, 1
  %v853 = vrot.slane %v822, 1
  %v854 = vperm.slane %v822, 0
  %v855 = vperm.slane %v853, 0
  %856 = vrot.lane.b32.xlu0 %v854, 84
  %v857 = vpop.permute.xlu0 %856
  %858 = vrot.lane.b32.xlu0 %v855, 84
  %v859 = vpop.permute.xlu0 %858
  %v862 = vmul.f32 %v78, %v857
  %v863 = vmul.f32 %v79, %v857
  %v864 = vmul.f32 %v80, %v859
  %v865 = vmul.f32 %v81, %v859
  %v866 = vperm.slane %v823, 0
  %v867 = vperm.slane %v851, 0
  %874 = vrot.lane.b32.xlu0 %v862, 60
  %v875 = vpop.permute.xlu0 %874
  %876 = vrot.lane.b32.xlu0 %v863, 60
  %v877 = vpop.permute.xlu0 %876
  %878 = vrot.lane.b32.xlu0 %v864, 60
  %v879 = vpop.permute.xlu0 %878
  %880 = vrot.lane.b32.xlu0 %v865, 60
  %v881 = vpop.permute.xlu0 %880
  %v886 = vsub.f32 %v866, %v875
  %v887 = vsub.f32 %v866, %v877
  %v888 = vsub.f32 %v867, %v879
  %v889 = vsub.f32 %v867, %v881
  %v890 = vmul.f32 %v830, %v886
  %v891 = vmul.f32 %v836, %v887
  %v892 = vmul.f32 %v843, %v888
  %v893 = vmul.f32 %v849, %v889
  %898 = vrot.lane.b32.xlu0 %v890, 68
  %v899 = vpop.permute.xlu0 %898
  %900 = vrot.lane.b32.xlu0 %v891, 68
  %v901 = vpop.permute.xlu0 %900
  %902 = vrot.lane.b32.xlu0 %v892, 68
  %v903 = vpop.permute.xlu0 %902
  %904 = vrot.lane.b32.xlu0 %v893, 68
  %v905 = vpop.permute.xlu0 %904
  %v910 = vadd.f32 %v78, %v899
  %v911 = vadd.f32 %v79, %v901
  %v912 = vadd.f32 %v80, %v903
  %v913 = vadd.f32 %v81, %v905
  %v917 = vsel %vm410, %v803, %v794
  %918 = vrot.lane.b32.xlu0 %v917, 32
  %v919 = vpop.permute.xlu0 %918
  %v921 = vsel %vm178, %v177, %v919
  %v923 = vperm.slane %v70, 0
  %vm925 = vcmask 392192
  %v927 = vsel %vm925, %v921, 0
  %929 = vmatpush.msra.mxu0 0.0
  %930 = vmatpush.msra.mxu0 0.0
  %931 = vmatpush.msra.mxu0 0.0
  %932 = vmatpush.msra.mxu0 0.0
  %933 = vmatpush.msra.mxu0 0.0
  %934 = vmatpush.msra.mxu0 0.0
  %935 = vmatpush.msra.mxu0 0.0
  %936 = vmatpush.msra.mxu0 0.0
  %937 = vmatpush.msra.mxu0 0.0
  %938 = vmatpush.msra.mxu0 0.0
  %939 = vmatpush.msra.mxu0 %v69
  %940 = vmatpush.msra.mxu0 %v68
  %941 = vmatpush.msra.mxu0 %v67
  %942 = vmatpush.msra.mxu0 %v66
  %943 = vmatpush.msra.mxu0 %v65
  %944 = vmatpush.msra.mxu0 %v64
  %945 = vmatmul.f32.gmra.mxu0 %v927
  %v946 = vpop.f32.mrf.mxu0
  %v947 = vadd.f32 %v923, %v946
  %948 = vdwg.mxu0
  %v949 = vmax.f32 %v947, -20.0
  %v950 = vmin.f32 %v949, 20.0
  %v952 = vperm.slane %v75, 0
  %v955 = vsel %vm178, %v950, 0
  %957 = vmatpush.msra.mxu0 0.0
  %958 = vmatpush.msra.mxu0 0.0
  %959 = vmatpush.msra.mxu0 0.0
  %960 = vmatpush.msra.mxu0 0.0
  %961 = vmatpush.msra.mxu0 0.0
  %962 = vmatpush.msra.mxu0 0.0
  %963 = vmatpush.msra.mxu0 0.0
  %964 = vmatpush.msra.mxu0 0.0
  %965 = vmatpush.msra.mxu0 0.0
  %966 = vmatpush.msra.mxu0 0.0
  %967 = vmatpush.msra.mxu0 0.0
  %968 = vmatpush.msra.mxu0 0.0
  %969 = vmatpush.msra.mxu0 %v74
  %970 = vmatpush.msra.mxu0 %v73
  %971 = vmatpush.msra.mxu0 %v72
  %972 = vmatpush.msra.mxu0 %v71
  %973 = vmatmul.f32.gmra.mxu0 %v955
  %v974 = vpop.f32.mrf.mxu0
  %v975 = vadd.f32 %v952, %v974
  %976 = vdwg.mxu0
  %v977 = vsub.f32 0.0, %v975
  %v978 = vmul.f32 %v977, 1.442695
  %v979 = vpow.pop %v978
  %v980 = vadd.f32 %v979, 1.0
  %v981 = vrcp.pop %v980
  %v982 = vmul.f32 %v980, %v981
  %v983 = vsub.f32 1.0, %v982
  %v984 = vmul.f32 %v981, %v983
  %v985 = vadd.f32 %v981, %v984
  %vm986 = vweird.f32 %v980
  %vm987 = vweird.f32 %v981
  %vm988 = vmor %vm986, %vm987
  %v989 = vsel %vm988, %v981, %v985
  %v990 = vand.u32 2147483647, %v980
  %vm991 = vcmp.eq.f32.partialorder %v990, 8.507059e+37
  %v992 = vand.u32 %v980, 2147483648
  %v993 = vor.u32 1.1754944e-38, %v992
  %v994 = vsel %vm991, %v993, %v989
  %v995 = vmul.f32 1.0, %v994
  %vm996 = vcmask 58368
  %997 = vst.msk [vmem:[%s15] sm:$0x3] %vm996, %v995
  %s998 = scalar_lea.vmem %s0, 2
  %v999 = vld [vmem:[%s998] sm:$0x3]
  %1000 = vrot.lane.b32.xlu0 %v917, 10
  %v1001 = vpop.permute.xlu0 %1000
  %1004 = vrot.lane.b32.xlu0 %v169, 58
  %v1005 = vpop.permute.xlu0 %1004
  %v1007 = vsel %vm94, %v999, %v1001
  %v1008 = vsel %vm96, %v1007, %v1005
  %v1010 = vsel %vm101, %v1008, 0
  %1012 = vmatpush.msra.mxu0 0.0
  %1013 = vmatpush.msra.mxu0 0.0
  %1014 = vmatpush.msra.mxu0 0.0
  %1015 = vmatpush.msra.mxu0 0.0
  %1016 = vmatpush.msra.mxu0 0.0
  %1017 = vmatpush.msra.mxu0 0.0
  %1018 = vmatpush.msra.mxu0 0.0
  %1019 = vmatpush.msra.mxu0 0.0
  %1020 = vmatpush.msra.mxu0 %v107
  %1021 = vmatpush.msra.mxu0 %v56
  %1022 = vmatpush.msra.mxu0 %v55
  %1023 = vmatpush.msra.mxu0 %v54
  %1024 = vmatpush.msra.mxu0 %v53
  %1025 = vmatpush.msra.mxu0 %v52
  %1026 = vmatpush.msra.mxu0 %v51
  %1027 = vmatpush.msra.mxu0 %v50
  %1028 = vmatmul.f32.gmra.mxu0 %v1010
  %v1029 = vpop.f32.mrf.mxu0
  %v1030 = vadd.f32 %v99, %v1029
  %1031 = vdwg.mxu0
  %v1032 = vsub.f32 0.0, %v1030
  %v1033 = vmul.f32 %v1032, 1.442695
  %v1034 = vpow.pop %v1033
  %v1035 = vadd.f32 %v1034, 1.0
  %v1036 = vrcp.pop %v1035
  %v1037 = vmul.f32 %v1035, %v1036
  %v1038 = vsub.f32 1.0, %v1037
  %v1039 = vmul.f32 %v1036, %v1038
  %v1040 = vadd.f32 %v1036, %v1039
  %vm1041 = vweird.f32 %v1035
  %vm1042 = vweird.f32 %v1036
  %vm1043 = vmor %vm1041, %vm1042
  %v1044 = vsel %vm1043, %v1036, %v1040
  %v1045 = vand.u32 2147483647, %v1035
  %vm1046 = vcmp.eq.f32.partialorder %v1045, 8.507059e+37
  %v1047 = vand.u32 %v1035, 2147483648
  %v1048 = vor.u32 1.1754944e-38, %v1047
  %v1049 = vsel %vm1046, %v1048, %v1044
  %v1050 = vmul.f32 1.0, %v1049
  %v1051 = vtanh.pop %v1030
  %v1052 = vmul.f32 %v1050, %v163
  %1054 = vrot.lane.b32.xlu0 %v1051, 64
  %v1055 = vpop.permute.xlu0 %1054
  %v1057 = vmul.f32 %v1050, %v1055
  %1059 = vrot.lane.b32.xlu0 %v1057, 32
  %v1060 = vpop.permute.xlu0 %1059
  %v1062 = vadd.f32 %v1052, %v1060
  %v1063 = vtanh.pop %v1062
  %1065 = vrot.lane.b32.xlu0 %v1063, 64
  %v1066 = vpop.permute.xlu0 %1065
  %v1068 = vmul.f32 %v1050, %v1066
  %v1069 = vmax.f32 %v1068, -20.0
  %v1070 = vmin.f32 %v1069, 20.0
  %1072 = vrot.lane.b32.xlu0 %v1070, 32
  %v1073 = vpop.permute.xlu0 %1072
  %v1074 = vsel %vm178, %v1073, 0
  %1076 = vmatpush.msra.mxu0 0.0
  %1077 = vmatpush.msra.mxu0 0.0
  %1078 = vmatpush.msra.mxu0 0.0
  %1079 = vmatpush.msra.mxu0 0.0
  %1080 = vmatpush.msra.mxu0 0.0
  %1081 = vmatpush.msra.mxu0 0.0
  %1082 = vmatpush.msra.mxu0 0.0
  %1083 = vmatpush.msra.mxu0 0.0
  %1084 = vmatpush.msra.mxu0 0.0
  %1085 = vmatpush.msra.mxu0 0.0
  %1086 = vmatpush.msra.mxu0 0.0
  %1087 = vmatpush.msra.mxu0 0.0
  %1088 = vmatpush.msra.mxu0 %v62
  %1089 = vmatpush.msra.mxu0 %v61
  %1090 = vmatpush.msra.mxu0 %v60
  %1091 = vmatpush.msra.mxu0 %v59
  %1092 = vmatmul.f32.gmra.mxu0 %v1074
  %v1093 = vpop.f32.mrf.mxu0
  %v1094 = vadd.f32 %v173, %v1093
  %1095 = vdwg.mxu0
  %v1097 = vrot.slane %v1094, 6
  %1098 = vrot.lane.b32.xlu0 %v1097, 106
  %v1099 = vpop.permute.xlu0 %1098
  %v1101 = vsel %vm105, %v1094, %v1099
  %v1102 = vtanh.pop %v1101
  %v1103 = vmax.f32 %v1101, 0.0
  %v1104 = vand.u32 2147483647, %v1101
  %v1105 = vsub.f32 0.0, %v1104
  %v1106 = vmul.f32 %v1105, 1.442695
  %v1107 = vpow.pop %v1106
  %v1108 = vadd.f32 %v1107, 1.0
  %v1109 = vlog2.pop %v1108
  %v1110 = vmul.f32 %v1109, 0.6931472
  %v1111 = vadd.f32 %v1103, %v1110
  %v1112 = vsub.f32 0.0, %v1101
  %v1113 = vmul.f32 %v1112, 1.442695
  %v1114 = vpow.pop %v1113
  %v1115 = vadd.f32 %v1114, 1.0
  %v1116 = vrcp.pop %v1115
  %v1117 = vmul.f32 %v1115, %v1116
  %v1118 = vsub.f32 1.0, %v1117
  %v1119 = vmul.f32 %v1116, %v1118
  %v1120 = vadd.f32 %v1116, %v1119
  %vm1121 = vweird.f32 %v1115
  %vm1122 = vweird.f32 %v1116
  %vm1123 = vmor %vm1121, %vm1122
  %v1124 = vsel %vm1123, %v1116, %v1120
  %v1125 = vand.u32 2147483647, %v1115
  %vm1126 = vcmp.eq.f32.partialorder %v1125, 8.507059e+37
  %v1127 = vand.u32 %v1115, 2147483648
  %v1128 = vor.u32 1.1754944e-38, %v1127
  %v1129 = vsel %vm1126, %v1128, %v1124
  %v1130 = vmul.f32 1.0, %v1129
  %v1131 = vsel %vm240, %v1101, -inf
  %1132 = vmax.xlane.f32.xlu0 %v1131
  %v1133 = vpop.xlane.xlu0 %1132
  %v1134 = vsub.f32 %v1101, %v1133
  %v1135 = vmul.f32 %v1134, 1.442695
  %v1136 = vpow.pop %v1135
  %1138 = vrot.lane.b32.xlu0 %v1136, 110
  %v1139 = vpop.permute.xlu0 %1138
  %v1141 = vsel %vm251, %v1139, 0.0
  %1142 = vadd.xlane.f32.xlu0 %v1141
  %v1143 = vpop.xlane.xlu0 %1142
  %v1144 = vrcp.pop %v1143
  %v1145 = vmul.f32 %v1143, %v1144
  %v1146 = vsub.f32 1.0, %v1145
  %v1147 = vmul.f32 %v1144, %v1146
  %v1148 = vadd.f32 %v1144, %v1147
  %vm1149 = vweird.f32 %v1143
  %vm1150 = vweird.f32 %v1144
  %vm1151 = vmor %vm1149, %vm1150
  %v1152 = vsel %vm1151, %v1144, %v1148
  %v1153 = vand.u32 2147483647, %v1143
  %vm1154 = vcmp.eq.f32.partialorder %v1153, 8.507059e+37
  %v1155 = vand.u32 %v1143, 2147483648
  %v1156 = vor.u32 1.1754944e-38, %v1155
  %v1157 = vsel %vm1154, %v1156, %v1152
  %v1158 = vmul.f32 %v1136, %v1157
  %v1160 = vrot.slane %v1102, 1
  %v1161 = vrot.slane %v1102, 2
  %v1162 = vrot.slane %v1102, 3
  %v1163 = vperm.slane %v1102, 0
  %v1164 = vperm.slane %v1160, 0
  %v1165 = vperm.slane %v1161, 0
  %v1166 = vperm.slane %v1162, 0
  %v1171 = vmul.f32 %v910, %v1163
  %v1172 = vmul.f32 %v911, %v1163
  %v1173 = vmul.f32 %v912, %v1164
  %v1174 = vmul.f32 %v913, %v1164
  %v1175 = vmul.f32 %v910, %v1165
  %v1176 = vmul.f32 %v911, %v1165
  %v1177 = vmul.f32 %v912, %v1166
  %v1178 = vmul.f32 %v913, %v1166
  %v1179 = vsel %vm290, %v1171, 0.0
  %1180 = vadd.xlane.f32.xlu0 %v1179
  %v1181 = vpop.xlane.xlu0 %1180
  %v1182 = vsel %vm290, %v1172, 0.0
  %1183 = vadd.xlane.f32.xlu0 %v1182
  %v1184 = vpop.xlane.xlu0 %1183
  %v1185 = vsel %vm290, %v1173, 0.0
  %1186 = vadd.xlane.f32.xlu0 %v1185
  %v1187 = vpop.xlane.xlu0 %1186
  %v1188 = vsel %vm290, %v1174, 0.0
  %1189 = vadd.xlane.f32.xlu0 %v1188
  %v1190 = vpop.xlane.xlu0 %1189
  %v1191 = vsel %vm290, %v1175, 0.0
  %1192 = vadd.xlane.f32.xlu0 %v1191
  %v1193 = vpop.xlane.xlu0 %1192
  %v1194 = vsel %vm290, %v1176, 0.0
  %1195 = vadd.xlane.f32.xlu0 %v1194
  %v1196 = vpop.xlane.xlu0 %1195
  %v1197 = vsel %vm290, %v1177, 0.0
  %1198 = vadd.xlane.f32.xlu0 %v1197
  %v1199 = vpop.xlane.xlu0 %1198
  %v1200 = vsel %vm290, %v1178, 0.0
  %1201 = vadd.xlane.f32.xlu0 %v1200
  %v1202 = vpop.xlane.xlu0 %1201
  %v1203 = vmul.f32 %v1102, %v1102
  %v1204 = vsel %vm316, %v1203, 0.0
  %1205 = vadd.xlane.f32.xlu0 %v1204
  %v1206 = vpop.xlane.xlu0 %1205
  %v1207 = vrsqrt.pop %v1206
  %v1208 = vmul.f32 %v1207, %v1206
  %v1209 = vmul.f32 %v1208, %v1207
  %v1210 = vmul.f32 0.5, %v1209
  %v1211 = vsub.f32 1.5, %v1210
  %v1212 = vmul.f32 %v1207, %v1211
  %v1213 = vmul.f32 %v1206, %v1212
  %vm1214 = vcmp.eq.f32.partialorder %v1206, inf
  %v1215 = vsel %vm1214, %v1206, %v1213
  %vm1216 = vcmp.eq.f32.partialorder %v1206, 0.0
  %v1217 = vand.u32 %v1206, 2147483648
  %v1218 = vsel %vm1216, %v1217, %v1215
  %v1219 = vmul.f32 %v910, %v910
  %v1220 = vmul.f32 %v911, %v911
  %v1221 = vmul.f32 %v912, %v912
  %v1222 = vmul.f32 %v913, %v913
  %v1223 = vsel %vm290, %v1219, 0.0
  %1224 = vadd.xlane.f32.xlu0 %v1223
  %v1225 = vpop.xlane.xlu0 %1224
  %v1226 = vsel %vm290, %v1220, 0.0
  %1227 = vadd.xlane.f32.xlu0 %v1226
  %v1228 = vpop.xlane.xlu0 %1227
  %v1229 = vsel %vm290, %v1221, 0.0
  %1230 = vadd.xlane.f32.xlu0 %v1229
  %v1231 = vpop.xlane.xlu0 %1230
  %v1232 = vsel %vm290, %v1222, 0.0
  %1233 = vadd.xlane.f32.xlu0 %v1232
  %v1234 = vpop.xlane.xlu0 %1233
  %v1235 = vrsqrt.pop %v1225
  %v1236 = vmul.f32 %v1235, %v1225
  %v1237 = vmul.f32 %v1236, %v1235
  %v1238 = vmul.f32 0.5, %v1237
  %v1239 = vsub.f32 1.5, %v1238
  %v1240 = vmul.f32 %v1235, %v1239
  %v1241 = vmul.f32 %v1225, %v1240
  %vm1242 = vcmp.eq.f32.partialorder %v1225, inf
  %v1243 = vsel %vm1242, %v1225, %v1241
  %vm1244 = vcmp.eq.f32.partialorder %v1225, 0.0
  %v1245 = vand.u32 %v1225, 2147483648
  %v1246 = vsel %vm1244, %v1245, %v1243
  %v1247 = vrsqrt.pop %v1228
  %v1248 = vmul.f32 %v1247, %v1228
  %v1249 = vmul.f32 %v1248, %v1247
  %v1250 = vmul.f32 0.5, %v1249
  %v1251 = vsub.f32 1.5, %v1250
  %v1252 = vmul.f32 %v1247, %v1251
  %v1253 = vmul.f32 %v1228, %v1252
  %vm1254 = vcmp.eq.f32.partialorder %v1228, inf
  %v1255 = vsel %vm1254, %v1228, %v1253
  %vm1256 = vcmp.eq.f32.partialorder %v1228, 0.0
  %v1257 = vand.u32 %v1228, 2147483648
  %v1258 = vsel %vm1256, %v1257, %v1255
  %v1259 = vrsqrt.pop %v1231
  %v1260 = vmul.f32 %v1259, %v1231
  %v1261 = vmul.f32 %v1260, %v1259
  %v1262 = vmul.f32 0.5, %v1261
  %v1263 = vsub.f32 1.5, %v1262
  %v1264 = vmul.f32 %v1259, %v1263
  %v1265 = vmul.f32 %v1231, %v1264
  %vm1266 = vcmp.eq.f32.partialorder %v1231, inf
  %v1267 = vsel %vm1266, %v1231, %v1265
  %vm1268 = vcmp.eq.f32.partialorder %v1231, 0.0
  %v1269 = vand.u32 %v1231, 2147483648
  %v1270 = vsel %vm1268, %v1269, %v1267
  %v1271 = vrsqrt.pop %v1234
  %v1272 = vmul.f32 %v1271, %v1234
  %v1273 = vmul.f32 %v1272, %v1271
  %v1274 = vmul.f32 0.5, %v1273
  %v1275 = vsub.f32 1.5, %v1274
  %v1276 = vmul.f32 %v1271, %v1275
  %v1277 = vmul.f32 %v1234, %v1276
  %vm1278 = vcmp.eq.f32.partialorder %v1234, inf
  %v1279 = vsel %vm1278, %v1234, %v1277
  %vm1280 = vcmp.eq.f32.partialorder %v1234, 0.0
  %v1281 = vand.u32 %v1234, 2147483648
  %v1282 = vsel %vm1280, %v1281, %v1279
  %v1287 = vperm.slane %v1246, %v401
  %v1288 = vperm.slane %v1258, %v403
  %v1289 = vsel %vm405, %v1288, %v1287
  %v1290 = vperm.slane %v1270, %v401
  %v1291 = vperm.slane %v1282, %v403
  %v1292 = vsel %vm405, %v1291, %v1290
  %v1293 = vsel %vm410, %v1292, %v1289
  %v1294 = vsel %vm412, %v1289, %v1293
  %v1295 = vsel %vm414, %v1292, %v1294
  %v1297 = vmul.f32 %v1218, %v1295
  %v1298 = vadd.f32 %v1297, 1e-08
  %v1300 = vperm.slane %v1298, 0
  %v1301 = vlaneseq
  %v1302 = vshrl.u32 %v1301, 7
  %1304 = vset.pattern.permute.xlu0 %v1302
  %1305 = vperm.xlu0 %1304, %v1300
  %v1306 = vpop.permute.xlu0 %1305
  %v1307 = vlaneseq
  %v1308 = vshrl.u32 %v1307, 7
  %v1309 = vadd.s32 %v1308, 8
  %1310 = vset.pattern.permute.xlu0 %v1309
  %1311 = vperm.xlu0 %1310, %v1300
  %v1312 = vpop.permute.xlu0 %1311
  %v1313 = vperm.slane %v1298, 1
  %v1314 = vlaneseq
  %v1315 = vshrl.u32 %v1314, 7
  %1317 = vset.pattern.permute.xlu0 %v1315
  %1318 = vperm.xlu0 %1317, %v1313
  %v1319 = vpop.permute.xlu0 %1318
  %v1320 = vlaneseq
  %v1321 = vshrl.u32 %v1320, 7
  %v1322 = vadd.s32 %v1321, 8
  %1323 = vset.pattern.permute.xlu0 %v1322
  %1324 = vperm.xlu0 %1323, %v1313
  %v1325 = vpop.permute.xlu0 %1324
  %v1326 = vperm.slane %v1298, 2
  %v1327 = vlaneseq
  %v1328 = vshrl.u32 %v1327, 7
  %1330 = vset.pattern.permute.xlu0 %v1328
  %1331 = vperm.xlu0 %1330, %v1326
  %v1332 = vpop.permute.xlu0 %1331
  %v1333 = vlaneseq
  %v1334 = vshrl.u32 %v1333, 7
  %v1335 = vadd.s32 %v1334, 8
  %1336 = vset.pattern.permute.xlu0 %v1335
  %1337 = vperm.xlu0 %1336, %v1326
  %v1338 = vpop.permute.xlu0 %1337
  %v1339 = vperm.slane %v1298, 3
  %v1340 = vlaneseq
  %v1341 = vshrl.u32 %v1340, 7
  %1343 = vset.pattern.permute.xlu0 %v1341
  %1344 = vperm.xlu0 %1343, %v1339
  %v1345 = vpop.permute.xlu0 %1344
  %v1346 = vlaneseq
  %v1347 = vshrl.u32 %v1346, 7
  %v1348 = vadd.s32 %v1347, 8
  %1349 = vset.pattern.permute.xlu0 %v1348
  %1350 = vperm.xlu0 %1349, %v1339
  %v1351 = vpop.permute.xlu0 %1350
  %v1360 = vrcp.pop %v1306
  %v1361 = vmul.f32 %v1306, %v1360
  %v1362 = vsub.f32 1.0, %v1361
  %v1363 = vmul.f32 %v1360, %v1362
  %v1364 = vadd.f32 %v1360, %v1363
  %vm1365 = vweird.f32 %v1306
  %vm1366 = vweird.f32 %v1360
  %vm1367 = vmor %vm1365, %vm1366
  %v1368 = vsel %vm1367, %v1360, %v1364
  %v1369 = vand.u32 2147483647, %v1306
  %vm1370 = vcmp.eq.f32.partialorder %v1369, 8.507059e+37
  %v1371 = vand.u32 %v1306, 2147483648
  %v1372 = vor.u32 1.1754944e-38, %v1371
  %v1373 = vsel %vm1370, %v1372, %v1368
  %v1374 = vmul.f32 %v1181, %v1373
  %v1375 = vrcp.pop %v1312
  %v1376 = vmul.f32 %v1312, %v1375
  %v1377 = vsub.f32 1.0, %v1376
  %v1378 = vmul.f32 %v1375, %v1377
  %v1379 = vadd.f32 %v1375, %v1378
  %vm1380 = vweird.f32 %v1312
  %vm1381 = vweird.f32 %v1375
  %vm1382 = vmor %vm1380, %vm1381
  %v1383 = vsel %vm1382, %v1375, %v1379
  %v1384 = vand.u32 2147483647, %v1312
  %vm1385 = vcmp.eq.f32.partialorder %v1384, 8.507059e+37
  %v1386 = vand.u32 %v1312, 2147483648
  %v1387 = vor.u32 1.1754944e-38, %v1386
  %v1388 = vsel %vm1385, %v1387, %v1383
  %v1389 = vmul.f32 %v1184, %v1388
  %v1390 = vrcp.pop %v1319
  %v1391 = vmul.f32 %v1319, %v1390
  %v1392 = vsub.f32 1.0, %v1391
  %v1393 = vmul.f32 %v1390, %v1392
  %v1394 = vadd.f32 %v1390, %v1393
  %vm1395 = vweird.f32 %v1319
  %vm1396 = vweird.f32 %v1390
  %vm1397 = vmor %vm1395, %vm1396
  %v1398 = vsel %vm1397, %v1390, %v1394
  %v1399 = vand.u32 2147483647, %v1319
  %vm1400 = vcmp.eq.f32.partialorder %v1399, 8.507059e+37
  %v1401 = vand.u32 %v1319, 2147483648
  %v1402 = vor.u32 1.1754944e-38, %v1401
  %v1403 = vsel %vm1400, %v1402, %v1398
  %v1404 = vmul.f32 %v1187, %v1403
  %v1405 = vrcp.pop %v1325
  %v1406 = vmul.f32 %v1325, %v1405
  %v1407 = vsub.f32 1.0, %v1406
  %v1408 = vmul.f32 %v1405, %v1407
  %v1409 = vadd.f32 %v1405, %v1408
  %vm1410 = vweird.f32 %v1325
  %vm1411 = vweird.f32 %v1405
  %vm1412 = vmor %vm1410, %vm1411
  %v1413 = vsel %vm1412, %v1405, %v1409
  %v1414 = vand.u32 2147483647, %v1325
  %vm1415 = vcmp.eq.f32.partialorder %v1414, 8.507059e+37
  %v1416 = vand.u32 %v1325, 2147483648
  %v1417 = vor.u32 1.1754944e-38, %v1416
  %v1418 = vsel %vm1415, %v1417, %v1413
  %v1419 = vmul.f32 %v1190, %v1418
  %v1420 = vrcp.pop %v1332
  %v1421 = vmul.f32 %v1332, %v1420
  %v1422 = vsub.f32 1.0, %v1421
  %v1423 = vmul.f32 %v1420, %v1422
  %v1424 = vadd.f32 %v1420, %v1423
  %vm1425 = vweird.f32 %v1332
  %vm1426 = vweird.f32 %v1420
  %vm1427 = vmor %vm1425, %vm1426
  %v1428 = vsel %vm1427, %v1420, %v1424
  %v1429 = vand.u32 2147483647, %v1332
  %vm1430 = vcmp.eq.f32.partialorder %v1429, 8.507059e+37
  %v1431 = vand.u32 %v1332, 2147483648
  %v1432 = vor.u32 1.1754944e-38, %v1431
  %v1433 = vsel %vm1430, %v1432, %v1428
  %v1434 = vmul.f32 %v1193, %v1433
  %v1435 = vrcp.pop %v1338
  %v1436 = vmul.f32 %v1338, %v1435
  %v1437 = vsub.f32 1.0, %v1436
  %v1438 = vmul.f32 %v1435, %v1437
  %v1439 = vadd.f32 %v1435, %v1438
  %vm1440 = vweird.f32 %v1338
  %vm1441 = vweird.f32 %v1435
  %vm1442 = vmor %vm1440, %vm1441
  %v1443 = vsel %vm1442, %v1435, %v1439
  %v1444 = vand.u32 2147483647, %v1338
  %vm1445 = vcmp.eq.f32.partialorder %v1444, 8.507059e+37
  %v1446 = vand.u32 %v1338, 2147483648
  %v1447 = vor.u32 1.1754944e-38, %v1446
  %v1448 = vsel %vm1445, %v1447, %v1443
  %v1449 = vmul.f32 %v1196, %v1448
  %v1450 = vrcp.pop %v1345
  %v1451 = vmul.f32 %v1345, %v1450
  %v1452 = vsub.f32 1.0, %v1451
  %v1453 = vmul.f32 %v1450, %v1452
  %v1454 = vadd.f32 %v1450, %v1453
  %vm1455 = vweird.f32 %v1345
  %vm1456 = vweird.f32 %v1450
  %vm1457 = vmor %vm1455, %vm1456
  %v1458 = vsel %vm1457, %v1450, %v1454
  %v1459 = vand.u32 2147483647, %v1345
  %vm1460 = vcmp.eq.f32.partialorder %v1459, 8.507059e+37
  %v1461 = vand.u32 %v1345, 2147483648
  %v1462 = vor.u32 1.1754944e-38, %v1461
  %v1463 = vsel %vm1460, %v1462, %v1458
  %v1464 = vmul.f32 %v1199, %v1463
  %v1465 = vrcp.pop %v1351
  %v1466 = vmul.f32 %v1351, %v1465
  %v1467 = vsub.f32 1.0, %v1466
  %v1468 = vmul.f32 %v1465, %v1467
  %v1469 = vadd.f32 %v1465, %v1468
  %vm1470 = vweird.f32 %v1351
  %vm1471 = vweird.f32 %v1465
  %vm1472 = vmor %vm1470, %vm1471
  %v1473 = vsel %vm1472, %v1465, %v1469
  %v1474 = vand.u32 2147483647, %v1351
  %vm1475 = vcmp.eq.f32.partialorder %v1474, 8.507059e+37
  %v1476 = vand.u32 %v1351, 2147483648
  %v1477 = vor.u32 1.1754944e-38, %v1476
  %v1478 = vsel %vm1475, %v1477, %v1473
  %v1479 = vmul.f32 %v1202, %v1478
  %1481 = vset.pattern.permute.xlu0 16
  %1482 = vperm.xlu0 %1481, %v1111
  %v1483 = vpop.permute.xlu0 %1482
  %1493 = vset.pattern.permute.xlu0 0
  %1494 = vperm.xlu0 %1493, %v1374
  %v1495 = vpop.permute.xlu0 %1494
  %1496 = vset.pattern.permute.xlu0 0
  %1497 = vperm.xlu0 %1496, %v1389
  %v1498 = vpop.permute.xlu0 %1497
  %1499 = vset.pattern.permute.xlu0 0
  %1500 = vperm.xlu0 %1499, %v1404
  %v1501 = vpop.permute.xlu0 %1500
  %1502 = vset.pattern.permute.xlu0 0
  %1503 = vperm.xlu0 %1502, %v1419
  %v1504 = vpop.permute.xlu0 %1503
  %1505 = vset.pattern.permute.xlu0 0
  %1506 = vperm.xlu0 %1505, %v1434
  %v1507 = vpop.permute.xlu0 %1506
  %1508 = vset.pattern.permute.xlu0 0
  %1509 = vperm.xlu0 %1508, %v1449
  %v1510 = vpop.permute.xlu0 %1509
  %1511 = vset.pattern.permute.xlu0 0
  %1512 = vperm.xlu0 %1511, %v1464
  %v1513 = vpop.permute.xlu0 %1512
  %1514 = vset.pattern.permute.xlu0 0
  %1515 = vperm.xlu0 %1514, %v1479
  %v1516 = vpop.permute.xlu0 %1515
  %v1517 = vperm.slane %v1495, %v401
  %v1518 = vperm.slane %v1498, %v403
  %v1519 = vsel %vm405, %v1518, %v1517
  %v1520 = vperm.slane %v1501, %v401
  %v1521 = vperm.slane %v1504, %v403
  %v1522 = vsel %vm405, %v1521, %v1520
  %v1523 = vperm.slane %v1507, %v401
  %v1524 = vperm.slane %v1510, %v403
  %v1525 = vsel %vm405, %v1524, %v1523
  %v1526 = vperm.slane %v1513, %v401
  %v1527 = vperm.slane %v1516, %v403
  %v1528 = vsel %vm405, %v1527, %v1526
  %v1529 = vsel %vm410, %v1522, %v1519
  %v1530 = vsel %vm412, %v1525, %v1529
  %v1531 = vsel %vm414, %v1528, %v1530
  %v1533 = vmul.f32 %v1483, %v1531
  %v1534 = vsel %vm316, %v1533, -inf
  %1535 = vmax.xlane.f32.xlu0 %v1534
  %v1536 = vpop.xlane.xlu0 %1535
  %v1537 = vsub.f32 %v1533, %v1536
  %v1538 = vmul.f32 %v1537, 1.442695
  %v1539 = vpow.pop %v1538
  %v1540 = vsel %vm316, %v1539, 0.0
  %1541 = vadd.xlane.f32.xlu0 %v1540
  %v1542 = vpop.xlane.xlu0 %1541
  %v1543 = vrcp.pop %v1542
  %v1544 = vmul.f32 %v1542, %v1543
  %v1545 = vsub.f32 1.0, %v1544
  %v1546 = vmul.f32 %v1543, %v1545
  %v1547 = vadd.f32 %v1543, %v1546
  %vm1548 = vweird.f32 %v1542
  %vm1549 = vweird.f32 %v1543
  %vm1550 = vmor %vm1548, %vm1549
  %v1551 = vsel %vm1550, %v1543, %v1547
  %v1552 = vand.u32 2147483647, %v1542
  %vm1553 = vcmp.eq.f32.partialorder %v1552, 8.507059e+37
  %v1554 = vand.u32 %v1542, 2147483648
  %v1555 = vor.u32 1.1754944e-38, %v1554
  %v1556 = vsel %vm1553, %v1555, %v1551
  %v1557 = vmul.f32 %v1539, %v1556
  %1559 = vset.pattern.permute.xlu0 17
  %1560 = vperm.xlu0 %1559, %v1130
  %v1561 = vpop.permute.xlu0 %1560
  %v1563 = vmul.f32 %v1561, %v1557
  %v1564 = vsub.f32 1.0, %v1130
  %1566 = vset.pattern.permute.xlu0 17
  %1567 = vperm.xlu0 %1566, %v1564
  %v1568 = vpop.permute.xlu0 %1567
  %v1570 = vmul.f32 %v1568, %v755
  %v1571 = vadd.f32 %v1563, %v1570
  %1573 = vset.pattern.permute.xlu0 18
  %1574 = vperm.xlu0 %1573, %v1158
  %v1575 = vpop.permute.xlu0 %1574
  %v1577 = vmul.f32 %v1575, %v1571
  %v1578 = vadd.f32 %v1577, 0.0
  %1580 = vrot.lane.b32.xlu0 %v1571, 113
  %v1581 = vpop.permute.xlu0 %1580
  %1583 = vrot.lane.b32.xlu0 %v1571, 1
  %v1584 = vpop.permute.xlu0 %1583
  %v1586 = vsel %vm706, %v1581, %v1584
  %1587 = vset.pattern.permute.xlu0 19
  %1588 = vperm.xlu0 %1587, %v1158
  %v1589 = vpop.permute.xlu0 %1588
  %v1591 = vmul.f32 %v1589, %v1586
  %v1592 = vadd.f32 %v1578, %v1591
  %1593 = vrot.lane.b32.xlu0 %v1571, 127
  %v1594 = vpop.permute.xlu0 %1593
  %1596 = vrot.lane.b32.xlu0 %v1571, 15
  %v1597 = vpop.permute.xlu0 %1596
  %v1599 = vsel %vm720, %v1594, %v1597
  %1600 = vset.pattern.permute.xlu0 20
  %1601 = vperm.xlu0 %1600, %v1158
  %v1602 = vpop.permute.xlu0 %1601
  %v1604 = vmul.f32 %v1602, %v1599
  %v1605 = vadd.f32 %v1592, %v1604
  %v1606 = vadd.f32 %v1605, 1e-08
  %v1607 = vlog2.pop %v1606
  %v1608 = vmul.f32 %v1607, 0.6931472
  %1609 = vset.pattern.permute.xlu0 21
  %1610 = vperm.xlu0 %1609, %v1111
  %v1611 = vpop.permute.xlu0 %1610
  %v1613 = vmul.f32 %v1611, %v1608
  %v1614 = vmul.f32 %v1613, 1.442695
  %v1615 = vpow.pop %v1614
  %v1616 = vsel %vm316, %v1615, 0.0
  %1617 = vadd.xlane.f32.xlu0 %v1616
  %v1618 = vpop.xlane.xlu0 %1617
  %v1619 = vrcp.pop %v1618
  %v1620 = vmul.f32 %v1618, %v1619
  %v1621 = vsub.f32 1.0, %v1620
  %v1622 = vmul.f32 %v1619, %v1621
  %v1623 = vadd.f32 %v1619, %v1622
  %vm1624 = vweird.f32 %v1618
  %vm1625 = vweird.f32 %v1619
  %vm1626 = vmor %vm1624, %vm1625
  %v1627 = vsel %vm1626, %v1619, %v1623
  %v1628 = vand.u32 2147483647, %v1618
  %vm1629 = vcmp.eq.f32.partialorder %v1628, 8.507059e+37
  %v1630 = vand.u32 %v1618, 2147483648
  %v1631 = vor.u32 1.1754944e-38, %v1630
  %v1632 = vsel %vm1629, %v1631, %v1627
  %v1633 = vmul.f32 %v1615, %v1632
  %v1634 = vperm.slane %v1633, 0
  %v1635 = vlaneseq
  %v1636 = vshrl.u32 %v1635, 7
  %1638 = vset.pattern.permute.xlu0 %v1636
  %1639 = vperm.xlu0 %1638, %v1634
  %v1640 = vpop.permute.xlu0 %1639
  %v1641 = vlaneseq
  %v1642 = vshrl.u32 %v1641, 7
  %v1643 = vadd.s32 %v1642, 8
  %1644 = vset.pattern.permute.xlu0 %v1643
  %1645 = vperm.xlu0 %1644, %v1634
  %v1646 = vpop.permute.xlu0 %1645
  %v1647 = vperm.slane %v1633, 1
  %v1648 = vlaneseq
  %v1649 = vshrl.u32 %v1648, 7
  %1651 = vset.pattern.permute.xlu0 %v1649
  %1652 = vperm.xlu0 %1651, %v1647
  %v1653 = vpop.permute.xlu0 %1652
  %v1654 = vlaneseq
  %v1655 = vshrl.u32 %v1654, 7
  %v1656 = vadd.s32 %v1655, 8
  %1657 = vset.pattern.permute.xlu0 %v1656
  %1658 = vperm.xlu0 %1657, %v1647
  %v1659 = vpop.permute.xlu0 %1658
  %v1660 = vmul.f32 %v1640, %v910
  %v1661 = vmul.f32 %v1646, %v911
  %v1662 = vmul.f32 %v1653, %v912
  %v1663 = vmul.f32 %v1659, %v913
  %v1664 = vsel %vm290, %v1660, 0.0
  %v1665 = vsel %vm290, %v1661, 0.0
  %v1666 = vadd.f32 %v1664, %v1665
  %v1667 = vrot.slane %v1666, 4
  %v1668 = vadd.f32 %v1666, %v1667
  %v1669 = vrot.slane %v1668, 2
  %v1670 = vadd.f32 %v1668, %v1669
  %v1671 = vrot.slane %v1670, 1
  %v1672 = vadd.f32 %v1670, %v1671
  %v1673 = vsel %vm290, %v1662, 0.0
  %v1674 = vsel %vm290, %v1663, 0.0
  %v1675 = vadd.f32 %v1673, %v1674
  %v1676 = vrot.slane %v1675, 4
  %v1677 = vadd.f32 %v1675, %v1676
  %v1678 = vrot.slane %v1677, 2
  %v1679 = vadd.f32 %v1677, %v1678
  %v1680 = vrot.slane %v1679, 1
  %v1681 = vadd.f32 %v1679, %v1680
  %v1682 = vsub.f32 0.0, %v1094
  %v1683 = vmul.f32 %v1682, 1.442695
  %v1684 = vpow.pop %v1683
  %v1685 = vadd.f32 %v1684, 1.0
  %v1686 = vrcp.pop %v1685
  %v1687 = vmul.f32 %v1685, %v1686
  %v1688 = vsub.f32 1.0, %v1687
  %v1689 = vmul.f32 %v1686, %v1688
  %v1690 = vadd.f32 %v1686, %v1689
  %vm1691 = vweird.f32 %v1685
  %vm1692 = vweird.f32 %v1686
  %vm1693 = vmor %vm1691, %vm1692
  %v1694 = vsel %vm1693, %v1686, %v1690
  %v1695 = vand.u32 2147483647, %v1685
  %vm1696 = vcmp.eq.f32.partialorder %v1695, 8.507059e+37
  %v1697 = vand.u32 %v1685, 2147483648
  %v1698 = vor.u32 1.1754944e-38, %v1697
  %v1699 = vsel %vm1696, %v1698, %v1694
  %v1700 = vmul.f32 1.0, %v1699
  %v1701 = vtanh.pop %v1094
  %v1702 = vperm.slane %v1633, 2
  %v1703 = vlaneseq
  %v1704 = vshrl.u32 %v1703, 7
  %1706 = vset.pattern.permute.xlu0 %v1704
  %1707 = vperm.xlu0 %1706, %v1702
  %v1708 = vpop.permute.xlu0 %1707
  %v1709 = vlaneseq
  %v1710 = vshrl.u32 %v1709, 7
  %v1711 = vadd.s32 %v1710, 8
  %1712 = vset.pattern.permute.xlu0 %v1711
  %1713 = vperm.xlu0 %1712, %v1702
  %v1714 = vpop.permute.xlu0 %1713
  %v1715 = vperm.slane %v1633, 3
  %v1716 = vlaneseq
  %v1717 = vshrl.u32 %v1716, 7
  %1719 = vset.pattern.permute.xlu0 %v1717
  %1720 = vperm.xlu0 %1719, %v1715
  %v1721 = vpop.permute.xlu0 %1720
  %v1722 = vlaneseq
  %v1723 = vshrl.u32 %v1722, 7
  %v1724 = vadd.s32 %v1723, 8
  %1725 = vset.pattern.permute.xlu0 %v1724
  %1726 = vperm.xlu0 %1725, %v1715
  %v1727 = vpop.permute.xlu0 %1726
  %v1729 = vrot.slane %v1701, 1
  %v1731 = vrot.slane %v1700, 1
  %v1732 = vperm.slane %v1700, 0
  %v1733 = vperm.slane %v1731, 0
  %1734 = vrot.lane.b32.xlu0 %v1732, 84
  %v1735 = vpop.permute.xlu0 %1734
  %1736 = vrot.lane.b32.xlu0 %v1733, 84
  %v1737 = vpop.permute.xlu0 %1736
  %v1740 = vmul.f32 %v910, %v1735
  %v1741 = vmul.f32 %v911, %v1735
  %v1742 = vmul.f32 %v912, %v1737
  %v1743 = vmul.f32 %v913, %v1737
  %v1744 = vperm.slane %v1701, 0
  %v1745 = vperm.slane %v1729, 0
  %1752 = vrot.lane.b32.xlu0 %v1740, 60
  %v1753 = vpop.permute.xlu0 %1752
  %1754 = vrot.lane.b32.xlu0 %v1741, 60
  %v1755 = vpop.permute.xlu0 %1754
  %1756 = vrot.lane.b32.xlu0 %v1742, 60
  %v1757 = vpop.permute.xlu0 %1756
  %1758 = vrot.lane.b32.xlu0 %v1743, 60
  %v1759 = vpop.permute.xlu0 %1758
  %v1764 = vsub.f32 %v1744, %v1753
  %v1765 = vsub.f32 %v1744, %v1755
  %v1766 = vsub.f32 %v1745, %v1757
  %v1767 = vsub.f32 %v1745, %v1759
  %v1768 = vmul.f32 %v1708, %v1764
  %v1769 = vmul.f32 %v1714, %v1765
  %v1770 = vmul.f32 %v1721, %v1766
  %v1771 = vmul.f32 %v1727, %v1767
  %1776 = vrot.lane.b32.xlu0 %v1768, 68
  %v1777 = vpop.permute.xlu0 %1776
  %1778 = vrot.lane.b32.xlu0 %v1769, 68
  %v1779 = vpop.permute.xlu0 %1778
  %1780 = vrot.lane.b32.xlu0 %v1770, 68
  %v1781 = vpop.permute.xlu0 %1780
  %1782 = vrot.lane.b32.xlu0 %v1771, 68
  %v1783 = vpop.permute.xlu0 %1782
  %v1788 = vadd.f32 %v910, %v1777
  %v1789 = vadd.f32 %v911, %v1779
  %v1790 = vadd.f32 %v912, %v1781
  %v1791 = vadd.f32 %v913, %v1783
  %v1795 = vsel %vm410, %v1681, %v1672
  %1796 = vrot.lane.b32.xlu0 %v1795, 32
  %v1797 = vpop.permute.xlu0 %1796
  %v1799 = vsel %vm178, %v1073, %v1797
  %v1801 = vsel %vm925, %v1799, 0
  %1803 = vmatpush.msra.mxu0 0.0
  %1804 = vmatpush.msra.mxu0 0.0
  %1805 = vmatpush.msra.mxu0 0.0
  %1806 = vmatpush.msra.mxu0 0.0
  %1807 = vmatpush.msra.mxu0 0.0
  %1808 = vmatpush.msra.mxu0 0.0
  %1809 = vmatpush.msra.mxu0 0.0
  %1810 = vmatpush.msra.mxu0 0.0
  %1811 = vmatpush.msra.mxu0 0.0
  %1812 = vmatpush.msra.mxu0 0.0
  %1813 = vmatpush.msra.mxu0 %v69
  %1814 = vmatpush.msra.mxu0 %v68
  %1815 = vmatpush.msra.mxu0 %v67
  %1816 = vmatpush.msra.mxu0 %v66
  %1817 = vmatpush.msra.mxu0 %v65
  %1818 = vmatpush.msra.mxu0 %v64
  %1819 = vmatmul.f32.gmra.mxu0 %v1801
  %v1820 = vpop.f32.mrf.mxu0
  %v1821 = vadd.f32 %v923, %v1820
  %1822 = vdwg.mxu0
  %v1823 = vmax.f32 %v1821, -20.0
  %v1824 = vmin.f32 %v1823, 20.0
  %v1826 = vsel %vm178, %v1824, 0
  %1828 = vmatpush.msra.mxu0 0.0
  %1829 = vmatpush.msra.mxu0 0.0
  %1830 = vmatpush.msra.mxu0 0.0
  %1831 = vmatpush.msra.mxu0 0.0
  %1832 = vmatpush.msra.mxu0 0.0
  %1833 = vmatpush.msra.mxu0 0.0
  %1834 = vmatpush.msra.mxu0 0.0
  %1835 = vmatpush.msra.mxu0 0.0
  %1836 = vmatpush.msra.mxu0 0.0
  %1837 = vmatpush.msra.mxu0 0.0
  %1838 = vmatpush.msra.mxu0 0.0
  %1839 = vmatpush.msra.mxu0 0.0
  %1840 = vmatpush.msra.mxu0 %v74
  %1841 = vmatpush.msra.mxu0 %v73
  %1842 = vmatpush.msra.mxu0 %v72
  %1843 = vmatpush.msra.mxu0 %v71
  %1844 = vmatmul.f32.gmra.mxu0 %v1826
  %v1845 = vpop.f32.mrf.mxu0
  %v1846 = vadd.f32 %v952, %v1845
  %1847 = vdwg.mxu0
  %v1848 = vsub.f32 0.0, %v1846
  %v1849 = vmul.f32 %v1848, 1.442695
  %v1850 = vpow.pop %v1849
  %v1851 = vadd.f32 %v1850, 1.0
  %v1852 = vrcp.pop %v1851
  %v1853 = vmul.f32 %v1851, %v1852
  %v1854 = vsub.f32 1.0, %v1853
  %v1855 = vmul.f32 %v1852, %v1854
  %v1856 = vadd.f32 %v1852, %v1855
  %vm1857 = vweird.f32 %v1851
  %vm1858 = vweird.f32 %v1852
  %vm1859 = vmor %vm1857, %vm1858
  %v1860 = vsel %vm1859, %v1852, %v1856
  %v1861 = vand.u32 2147483647, %v1851
  %vm1862 = vcmp.eq.f32.partialorder %v1861, 8.507059e+37
  %v1863 = vand.u32 %v1851, 2147483648
  %v1864 = vor.u32 1.1754944e-38, %v1863
  %v1865 = vsel %vm1862, %v1864, %v1860
  %v1866 = vmul.f32 1.0, %v1865
  %s1867 = scalar_lea.vmem %s15, 2
  %1868 = vst.msk [vmem:[%s1867] sm:$0x3] %vm996, %v1866
  %s1869 = scalar_lea.vmem %s0, 4
  %v1870 = vld [vmem:[%s1869] sm:$0x3]
  %1871 = vrot.lane.b32.xlu0 %v1795, 10
  %v1872 = vpop.permute.xlu0 %1871
  %1875 = vrot.lane.b32.xlu0 %v1068, 58
  %v1876 = vpop.permute.xlu0 %1875
  %v1878 = vsel %vm94, %v1870, %v1872
  %v1879 = vsel %vm96, %v1878, %v1876
  %v1881 = vsel %vm101, %v1879, 0
  %1883 = vmatpush.msra.mxu0 0.0
  %1884 = vmatpush.msra.mxu0 0.0
  %1885 = vmatpush.msra.mxu0 0.0
  %1886 = vmatpush.msra.mxu0 0.0
  %1887 = vmatpush.msra.mxu0 0.0
  %1888 = vmatpush.msra.mxu0 0.0
  %1889 = vmatpush.msra.mxu0 0.0
  %1890 = vmatpush.msra.mxu0 0.0
  %1891 = vmatpush.msra.mxu0 %v107
  %1892 = vmatpush.msra.mxu0 %v56
  %1893 = vmatpush.msra.mxu0 %v55
  %1894 = vmatpush.msra.mxu0 %v54
  %1895 = vmatpush.msra.mxu0 %v53
  %1896 = vmatpush.msra.mxu0 %v52
  %1897 = vmatpush.msra.mxu0 %v51
  %1898 = vmatpush.msra.mxu0 %v50
  %1899 = vmatmul.f32.gmra.mxu0 %v1881
  %v1900 = vpop.f32.mrf.mxu0
  %v1901 = vadd.f32 %v99, %v1900
  %1902 = vdwg.mxu0
  %v1903 = vsub.f32 0.0, %v1901
  %v1904 = vmul.f32 %v1903, 1.442695
  %v1905 = vpow.pop %v1904
  %v1906 = vadd.f32 %v1905, 1.0
  %v1907 = vrcp.pop %v1906
  %v1908 = vmul.f32 %v1906, %v1907
  %v1909 = vsub.f32 1.0, %v1908
  %v1910 = vmul.f32 %v1907, %v1909
  %v1911 = vadd.f32 %v1907, %v1910
  %vm1912 = vweird.f32 %v1906
  %vm1913 = vweird.f32 %v1907
  %vm1914 = vmor %vm1912, %vm1913
  %v1915 = vsel %vm1914, %v1907, %v1911
  %v1916 = vand.u32 2147483647, %v1906
  %vm1917 = vcmp.eq.f32.partialorder %v1916, 8.507059e+37
  %v1918 = vand.u32 %v1906, 2147483648
  %v1919 = vor.u32 1.1754944e-38, %v1918
  %v1920 = vsel %vm1917, %v1919, %v1915
  %v1921 = vmul.f32 1.0, %v1920
  %v1922 = vtanh.pop %v1901
  %v1923 = vmul.f32 %v1921, %v1062
  %1925 = vrot.lane.b32.xlu0 %v1922, 64
  %v1926 = vpop.permute.xlu0 %1925
  %v1928 = vmul.f32 %v1921, %v1926
  %1930 = vrot.lane.b32.xlu0 %v1928, 32
  %v1931 = vpop.permute.xlu0 %1930
  %v1933 = vadd.f32 %v1923, %v1931
  %v1934 = vtanh.pop %v1933
  %1936 = vrot.lane.b32.xlu0 %v1934, 64
  %v1937 = vpop.permute.xlu0 %1936
  %v1939 = vmul.f32 %v1921, %v1937
  %v1940 = vmax.f32 %v1939, -20.0
  %v1941 = vmin.f32 %v1940, 20.0
  %1943 = vrot.lane.b32.xlu0 %v1941, 32
  %v1944 = vpop.permute.xlu0 %1943
  %v1945 = vsel %vm178, %v1944, 0
  %1947 = vmatpush.msra.mxu0 0.0
  %1948 = vmatpush.msra.mxu0 0.0
  %1949 = vmatpush.msra.mxu0 0.0
  %1950 = vmatpush.msra.mxu0 0.0
  %1951 = vmatpush.msra.mxu0 0.0
  %1952 = vmatpush.msra.mxu0 0.0
  %1953 = vmatpush.msra.mxu0 0.0
  %1954 = vmatpush.msra.mxu0 0.0
  %1955 = vmatpush.msra.mxu0 0.0
  %1956 = vmatpush.msra.mxu0 0.0
  %1957 = vmatpush.msra.mxu0 0.0
  %1958 = vmatpush.msra.mxu0 0.0
  %1959 = vmatpush.msra.mxu0 %v62
  %1960 = vmatpush.msra.mxu0 %v61
  %1961 = vmatpush.msra.mxu0 %v60
  %1962 = vmatpush.msra.mxu0 %v59
  %1963 = vmatmul.f32.gmra.mxu0 %v1945
  %v1964 = vpop.f32.mrf.mxu0
  %v1965 = vadd.f32 %v173, %v1964
  %1966 = vdwg.mxu0
  %v1968 = vrot.slane %v1965, 6
  %1969 = vrot.lane.b32.xlu0 %v1968, 106
  %v1970 = vpop.permute.xlu0 %1969
  %v1972 = vsel %vm105, %v1965, %v1970
  %v1973 = vtanh.pop %v1972
  %v1974 = vmax.f32 %v1972, 0.0
  %v1975 = vand.u32 2147483647, %v1972
  %v1976 = vsub.f32 0.0, %v1975
  %v1977 = vmul.f32 %v1976, 1.442695
  %v1978 = vpow.pop %v1977
  %v1979 = vadd.f32 %v1978, 1.0
  %v1980 = vlog2.pop %v1979
  %v1981 = vmul.f32 %v1980, 0.6931472
  %v1982 = vadd.f32 %v1974, %v1981
  %v1983 = vsub.f32 0.0, %v1972
  %v1984 = vmul.f32 %v1983, 1.442695
  %v1985 = vpow.pop %v1984
  %v1986 = vadd.f32 %v1985, 1.0
  %v1987 = vrcp.pop %v1986
  %v1988 = vmul.f32 %v1986, %v1987
  %v1989 = vsub.f32 1.0, %v1988
  %v1990 = vmul.f32 %v1987, %v1989
  %v1991 = vadd.f32 %v1987, %v1990
  %vm1992 = vweird.f32 %v1986
  %vm1993 = vweird.f32 %v1987
  %vm1994 = vmor %vm1992, %vm1993
  %v1995 = vsel %vm1994, %v1987, %v1991
  %v1996 = vand.u32 2147483647, %v1986
  %vm1997 = vcmp.eq.f32.partialorder %v1996, 8.507059e+37
  %v1998 = vand.u32 %v1986, 2147483648
  %v1999 = vor.u32 1.1754944e-38, %v1998
  %v2000 = vsel %vm1997, %v1999, %v1995
  %v2001 = vmul.f32 1.0, %v2000
  %v2002 = vsel %vm240, %v1972, -inf
  %2003 = vmax.xlane.f32.xlu0 %v2002
  %v2004 = vpop.xlane.xlu0 %2003
  %v2005 = vsub.f32 %v1972, %v2004
  %v2006 = vmul.f32 %v2005, 1.442695
  %v2007 = vpow.pop %v2006
  %2009 = vrot.lane.b32.xlu0 %v2007, 110
  %v2010 = vpop.permute.xlu0 %2009
  %v2012 = vsel %vm251, %v2010, 0.0
  %2013 = vadd.xlane.f32.xlu0 %v2012
  %v2014 = vpop.xlane.xlu0 %2013
  %v2015 = vrcp.pop %v2014
  %v2016 = vmul.f32 %v2014, %v2015
  %v2017 = vsub.f32 1.0, %v2016
  %v2018 = vmul.f32 %v2015, %v2017
  %v2019 = vadd.f32 %v2015, %v2018
  %vm2020 = vweird.f32 %v2014
  %vm2021 = vweird.f32 %v2015
  %vm2022 = vmor %vm2020, %vm2021
  %v2023 = vsel %vm2022, %v2015, %v2019
  %v2024 = vand.u32 2147483647, %v2014
  %vm2025 = vcmp.eq.f32.partialorder %v2024, 8.507059e+37
  %v2026 = vand.u32 %v2014, 2147483648
  %v2027 = vor.u32 1.1754944e-38, %v2026
  %v2028 = vsel %vm2025, %v2027, %v2023
  %v2029 = vmul.f32 %v2007, %v2028
  %v2031 = vrot.slane %v1973, 1
  %v2032 = vrot.slane %v1973, 2
  %v2033 = vrot.slane %v1973, 3
  %v2034 = vperm.slane %v1973, 0
  %v2035 = vperm.slane %v2031, 0
  %v2036 = vperm.slane %v2032, 0
  %v2037 = vperm.slane %v2033, 0
  %v2042 = vmul.f32 %v1788, %v2034
  %v2043 = vmul.f32 %v1789, %v2034
  %v2044 = vmul.f32 %v1790, %v2035
  %v2045 = vmul.f32 %v1791, %v2035
  %v2046 = vmul.f32 %v1788, %v2036
  %v2047 = vmul.f32 %v1789, %v2036
  %v2048 = vmul.f32 %v1790, %v2037
  %v2049 = vmul.f32 %v1791, %v2037
  %v2050 = vsel %vm290, %v2042, 0.0
  %2051 = vadd.xlane.f32.xlu0 %v2050
  %v2052 = vpop.xlane.xlu0 %2051
  %v2053 = vsel %vm290, %v2043, 0.0
  %2054 = vadd.xlane.f32.xlu0 %v2053
  %v2055 = vpop.xlane.xlu0 %2054
  %v2056 = vsel %vm290, %v2044, 0.0
  %2057 = vadd.xlane.f32.xlu0 %v2056
  %v2058 = vpop.xlane.xlu0 %2057
  %v2059 = vsel %vm290, %v2045, 0.0
  %2060 = vadd.xlane.f32.xlu0 %v2059
  %v2061 = vpop.xlane.xlu0 %2060
  %v2062 = vsel %vm290, %v2046, 0.0
  %2063 = vadd.xlane.f32.xlu0 %v2062
  %v2064 = vpop.xlane.xlu0 %2063
  %v2065 = vsel %vm290, %v2047, 0.0
  %2066 = vadd.xlane.f32.xlu0 %v2065
  %v2067 = vpop.xlane.xlu0 %2066
  %v2068 = vsel %vm290, %v2048, 0.0
  %2069 = vadd.xlane.f32.xlu0 %v2068
  %v2070 = vpop.xlane.xlu0 %2069
  %v2071 = vsel %vm290, %v2049, 0.0
  %2072 = vadd.xlane.f32.xlu0 %v2071
  %v2073 = vpop.xlane.xlu0 %2072
  %v2074 = vmul.f32 %v1973, %v1973
  %v2075 = vsel %vm316, %v2074, 0.0
  %2076 = vadd.xlane.f32.xlu0 %v2075
  %v2077 = vpop.xlane.xlu0 %2076
  %v2078 = vrsqrt.pop %v2077
  %v2079 = vmul.f32 %v2078, %v2077
  %v2080 = vmul.f32 %v2079, %v2078
  %v2081 = vmul.f32 0.5, %v2080
  %v2082 = vsub.f32 1.5, %v2081
  %v2083 = vmul.f32 %v2078, %v2082
  %v2084 = vmul.f32 %v2077, %v2083
  %vm2085 = vcmp.eq.f32.partialorder %v2077, inf
  %v2086 = vsel %vm2085, %v2077, %v2084
  %vm2087 = vcmp.eq.f32.partialorder %v2077, 0.0
  %v2088 = vand.u32 %v2077, 2147483648
  %v2089 = vsel %vm2087, %v2088, %v2086
  %v2090 = vmul.f32 %v1788, %v1788
  %v2091 = vmul.f32 %v1789, %v1789
  %v2092 = vmul.f32 %v1790, %v1790
  %v2093 = vmul.f32 %v1791, %v1791
  %v2094 = vsel %vm290, %v2090, 0.0
  %2095 = vadd.xlane.f32.xlu0 %v2094
  %v2096 = vpop.xlane.xlu0 %2095
  %v2097 = vsel %vm290, %v2091, 0.0
  %2098 = vadd.xlane.f32.xlu0 %v2097
  %v2099 = vpop.xlane.xlu0 %2098
  %v2100 = vsel %vm290, %v2092, 0.0
  %2101 = vadd.xlane.f32.xlu0 %v2100
  %v2102 = vpop.xlane.xlu0 %2101
  %v2103 = vsel %vm290, %v2093, 0.0
  %2104 = vadd.xlane.f32.xlu0 %v2103
  %v2105 = vpop.xlane.xlu0 %2104
  %v2106 = vrsqrt.pop %v2096
  %v2107 = vmul.f32 %v2106, %v2096
  %v2108 = vmul.f32 %v2107, %v2106
  %v2109 = vmul.f32 0.5, %v2108
  %v2110 = vsub.f32 1.5, %v2109
  %v2111 = vmul.f32 %v2106, %v2110
  %v2112 = vmul.f32 %v2096, %v2111
  %vm2113 = vcmp.eq.f32.partialorder %v2096, inf
  %v2114 = vsel %vm2113, %v2096, %v2112
  %vm2115 = vcmp.eq.f32.partialorder %v2096, 0.0
  %v2116 = vand.u32 %v2096, 2147483648
  %v2117 = vsel %vm2115, %v2116, %v2114
  %v2118 = vrsqrt.pop %v2099
  %v2119 = vmul.f32 %v2118, %v2099
  %v2120 = vmul.f32 %v2119, %v2118
  %v2121 = vmul.f32 0.5, %v2120
  %v2122 = vsub.f32 1.5, %v2121
  %v2123 = vmul.f32 %v2118, %v2122
  %v2124 = vmul.f32 %v2099, %v2123
  %vm2125 = vcmp.eq.f32.partialorder %v2099, inf
  %v2126 = vsel %vm2125, %v2099, %v2124
  %vm2127 = vcmp.eq.f32.partialorder %v2099, 0.0
  %v2128 = vand.u32 %v2099, 2147483648
  %v2129 = vsel %vm2127, %v2128, %v2126
  %v2130 = vrsqrt.pop %v2102
  %v2131 = vmul.f32 %v2130, %v2102
  %v2132 = vmul.f32 %v2131, %v2130
  %v2133 = vmul.f32 0.5, %v2132
  %v2134 = vsub.f32 1.5, %v2133
  %v2135 = vmul.f32 %v2130, %v2134
  %v2136 = vmul.f32 %v2102, %v2135
  %vm2137 = vcmp.eq.f32.partialorder %v2102, inf
  %v2138 = vsel %vm2137, %v2102, %v2136
  %vm2139 = vcmp.eq.f32.partialorder %v2102, 0.0
  %v2140 = vand.u32 %v2102, 2147483648
  %v2141 = vsel %vm2139, %v2140, %v2138
  %v2142 = vrsqrt.pop %v2105
  %v2143 = vmul.f32 %v2142, %v2105
  %v2144 = vmul.f32 %v2143, %v2142
  %v2145 = vmul.f32 0.5, %v2144
  %v2146 = vsub.f32 1.5, %v2145
  %v2147 = vmul.f32 %v2142, %v2146
  %v2148 = vmul.f32 %v2105, %v2147
  %vm2149 = vcmp.eq.f32.partialorder %v2105, inf
  %v2150 = vsel %vm2149, %v2105, %v2148
  %vm2151 = vcmp.eq.f32.partialorder %v2105, 0.0
  %v2152 = vand.u32 %v2105, 2147483648
  %v2153 = vsel %vm2151, %v2152, %v2150
  %v2158 = vperm.slane %v2117, %v401
  %v2159 = vperm.slane %v2129, %v403
  %v2160 = vsel %vm405, %v2159, %v2158
  %v2161 = vperm.slane %v2141, %v401
  %v2162 = vperm.slane %v2153, %v403
  %v2163 = vsel %vm405, %v2162, %v2161
  %v2164 = vsel %vm410, %v2163, %v2160
  %v2165 = vsel %vm412, %v2160, %v2164
  %v2166 = vsel %vm414, %v2163, %v2165
  %v2168 = vmul.f32 %v2089, %v2166
  %v2169 = vadd.f32 %v2168, 1e-08
  %v2171 = vperm.slane %v2169, 0
  %v2172 = vlaneseq
  %v2173 = vshrl.u32 %v2172, 7
  %2175 = vset.pattern.permute.xlu0 %v2173
  %2176 = vperm.xlu0 %2175, %v2171
  %v2177 = vpop.permute.xlu0 %2176
  %v2178 = vlaneseq
  %v2179 = vshrl.u32 %v2178, 7
  %v2180 = vadd.s32 %v2179, 8
  %2181 = vset.pattern.permute.xlu0 %v2180
  %2182 = vperm.xlu0 %2181, %v2171
  %v2183 = vpop.permute.xlu0 %2182
  %v2184 = vperm.slane %v2169, 1
  %v2185 = vlaneseq
  %v2186 = vshrl.u32 %v2185, 7
  %2188 = vset.pattern.permute.xlu0 %v2186
  %2189 = vperm.xlu0 %2188, %v2184
  %v2190 = vpop.permute.xlu0 %2189
  %v2191 = vlaneseq
  %v2192 = vshrl.u32 %v2191, 7
  %v2193 = vadd.s32 %v2192, 8
  %2194 = vset.pattern.permute.xlu0 %v2193
  %2195 = vperm.xlu0 %2194, %v2184
  %v2196 = vpop.permute.xlu0 %2195
  %v2197 = vperm.slane %v2169, 2
  %v2198 = vlaneseq
  %v2199 = vshrl.u32 %v2198, 7
  %2201 = vset.pattern.permute.xlu0 %v2199
  %2202 = vperm.xlu0 %2201, %v2197
  %v2203 = vpop.permute.xlu0 %2202
  %v2204 = vlaneseq
  %v2205 = vshrl.u32 %v2204, 7
  %v2206 = vadd.s32 %v2205, 8
  %2207 = vset.pattern.permute.xlu0 %v2206
  %2208 = vperm.xlu0 %2207, %v2197
  %v2209 = vpop.permute.xlu0 %2208
  %v2210 = vperm.slane %v2169, 3
  %v2211 = vlaneseq
  %v2212 = vshrl.u32 %v2211, 7
  %2214 = vset.pattern.permute.xlu0 %v2212
  %2215 = vperm.xlu0 %2214, %v2210
  %v2216 = vpop.permute.xlu0 %2215
  %v2217 = vlaneseq
  %v2218 = vshrl.u32 %v2217, 7
  %v2219 = vadd.s32 %v2218, 8
  %2220 = vset.pattern.permute.xlu0 %v2219
  %2221 = vperm.xlu0 %2220, %v2210
  %v2222 = vpop.permute.xlu0 %2221
  %v2231 = vrcp.pop %v2177
  %v2232 = vmul.f32 %v2177, %v2231
  %v2233 = vsub.f32 1.0, %v2232
  %v2234 = vmul.f32 %v2231, %v2233
  %v2235 = vadd.f32 %v2231, %v2234
  %vm2236 = vweird.f32 %v2177
  %vm2237 = vweird.f32 %v2231
  %vm2238 = vmor %vm2236, %vm2237
  %v2239 = vsel %vm2238, %v2231, %v2235
  %v2240 = vand.u32 2147483647, %v2177
  %vm2241 = vcmp.eq.f32.partialorder %v2240, 8.507059e+37
  %v2242 = vand.u32 %v2177, 2147483648
  %v2243 = vor.u32 1.1754944e-38, %v2242
  %v2244 = vsel %vm2241, %v2243, %v2239
  %v2245 = vmul.f32 %v2052, %v2244
  %v2246 = vrcp.pop %v2183
  %v2247 = vmul.f32 %v2183, %v2246
  %v2248 = vsub.f32 1.0, %v2247
  %v2249 = vmul.f32 %v2246, %v2248
  %v2250 = vadd.f32 %v2246, %v2249
  %vm2251 = vweird.f32 %v2183
  %vm2252 = vweird.f32 %v2246
  %vm2253 = vmor %vm2251, %vm2252
  %v2254 = vsel %vm2253, %v2246, %v2250
  %v2255 = vand.u32 2147483647, %v2183
  %vm2256 = vcmp.eq.f32.partialorder %v2255, 8.507059e+37
  %v2257 = vand.u32 %v2183, 2147483648
  %v2258 = vor.u32 1.1754944e-38, %v2257
  %v2259 = vsel %vm2256, %v2258, %v2254
  %v2260 = vmul.f32 %v2055, %v2259
  %v2261 = vrcp.pop %v2190
  %v2262 = vmul.f32 %v2190, %v2261
  %v2263 = vsub.f32 1.0, %v2262
  %v2264 = vmul.f32 %v2261, %v2263
  %v2265 = vadd.f32 %v2261, %v2264
  %vm2266 = vweird.f32 %v2190
  %vm2267 = vweird.f32 %v2261
  %vm2268 = vmor %vm2266, %vm2267
  %v2269 = vsel %vm2268, %v2261, %v2265
  %v2270 = vand.u32 2147483647, %v2190
  %vm2271 = vcmp.eq.f32.partialorder %v2270, 8.507059e+37
  %v2272 = vand.u32 %v2190, 2147483648
  %v2273 = vor.u32 1.1754944e-38, %v2272
  %v2274 = vsel %vm2271, %v2273, %v2269
  %v2275 = vmul.f32 %v2058, %v2274
  %v2276 = vrcp.pop %v2196
  %v2277 = vmul.f32 %v2196, %v2276
  %v2278 = vsub.f32 1.0, %v2277
  %v2279 = vmul.f32 %v2276, %v2278
  %v2280 = vadd.f32 %v2276, %v2279
  %vm2281 = vweird.f32 %v2196
  %vm2282 = vweird.f32 %v2276
  %vm2283 = vmor %vm2281, %vm2282
  %v2284 = vsel %vm2283, %v2276, %v2280
  %v2285 = vand.u32 2147483647, %v2196
  %vm2286 = vcmp.eq.f32.partialorder %v2285, 8.507059e+37
  %v2287 = vand.u32 %v2196, 2147483648
  %v2288 = vor.u32 1.1754944e-38, %v2287
  %v2289 = vsel %vm2286, %v2288, %v2284
  %v2290 = vmul.f32 %v2061, %v2289
  %v2291 = vrcp.pop %v2203
  %v2292 = vmul.f32 %v2203, %v2291
  %v2293 = vsub.f32 1.0, %v2292
  %v2294 = vmul.f32 %v2291, %v2293
  %v2295 = vadd.f32 %v2291, %v2294
  %vm2296 = vweird.f32 %v2203
  %vm2297 = vweird.f32 %v2291
  %vm2298 = vmor %vm2296, %vm2297
  %v2299 = vsel %vm2298, %v2291, %v2295
  %v2300 = vand.u32 2147483647, %v2203
  %vm2301 = vcmp.eq.f32.partialorder %v2300, 8.507059e+37
  %v2302 = vand.u32 %v2203, 2147483648
  %v2303 = vor.u32 1.1754944e-38, %v2302
  %v2304 = vsel %vm2301, %v2303, %v2299
  %v2305 = vmul.f32 %v2064, %v2304
  %v2306 = vrcp.pop %v2209
  %v2307 = vmul.f32 %v2209, %v2306
  %v2308 = vsub.f32 1.0, %v2307
  %v2309 = vmul.f32 %v2306, %v2308
  %v2310 = vadd.f32 %v2306, %v2309
  %vm2311 = vweird.f32 %v2209
  %vm2312 = vweird.f32 %v2306
  %vm2313 = vmor %vm2311, %vm2312
  %v2314 = vsel %vm2313, %v2306, %v2310
  %v2315 = vand.u32 2147483647, %v2209
  %vm2316 = vcmp.eq.f32.partialorder %v2315, 8.507059e+37
  %v2317 = vand.u32 %v2209, 2147483648
  %v2318 = vor.u32 1.1754944e-38, %v2317
  %v2319 = vsel %vm2316, %v2318, %v2314
  %v2320 = vmul.f32 %v2067, %v2319
  %v2321 = vrcp.pop %v2216
  %v2322 = vmul.f32 %v2216, %v2321
  %v2323 = vsub.f32 1.0, %v2322
  %v2324 = vmul.f32 %v2321, %v2323
  %v2325 = vadd.f32 %v2321, %v2324
  %vm2326 = vweird.f32 %v2216
  %vm2327 = vweird.f32 %v2321
  %vm2328 = vmor %vm2326, %vm2327
  %v2329 = vsel %vm2328, %v2321, %v2325
  %v2330 = vand.u32 2147483647, %v2216
  %vm2331 = vcmp.eq.f32.partialorder %v2330, 8.507059e+37
  %v2332 = vand.u32 %v2216, 2147483648
  %v2333 = vor.u32 1.1754944e-38, %v2332
  %v2334 = vsel %vm2331, %v2333, %v2329
  %v2335 = vmul.f32 %v2070, %v2334
  %v2336 = vrcp.pop %v2222
  %v2337 = vmul.f32 %v2222, %v2336
  %v2338 = vsub.f32 1.0, %v2337
  %v2339 = vmul.f32 %v2336, %v2338
  %v2340 = vadd.f32 %v2336, %v2339
  %vm2341 = vweird.f32 %v2222
  %vm2342 = vweird.f32 %v2336
  %vm2343 = vmor %vm2341, %vm2342
  %v2344 = vsel %vm2343, %v2336, %v2340
  %v2345 = vand.u32 2147483647, %v2222
  %vm2346 = vcmp.eq.f32.partialorder %v2345, 8.507059e+37
  %v2347 = vand.u32 %v2222, 2147483648
  %v2348 = vor.u32 1.1754944e-38, %v2347
  %v2349 = vsel %vm2346, %v2348, %v2344
  %v2350 = vmul.f32 %v2073, %v2349
  %2352 = vset.pattern.permute.xlu0 16
  %2353 = vperm.xlu0 %2352, %v1982
  %v2354 = vpop.permute.xlu0 %2353
  %2364 = vset.pattern.permute.xlu0 0
  %2365 = vperm.xlu0 %2364, %v2245
  %v2366 = vpop.permute.xlu0 %2365
  %2367 = vset.pattern.permute.xlu0 0
  %2368 = vperm.xlu0 %2367, %v2260
  %v2369 = vpop.permute.xlu0 %2368
  %2370 = vset.pattern.permute.xlu0 0
  %2371 = vperm.xlu0 %2370, %v2275
  %v2372 = vpop.permute.xlu0 %2371
  %2373 = vset.pattern.permute.xlu0 0
  %2374 = vperm.xlu0 %2373, %v2290
  %v2375 = vpop.permute.xlu0 %2374
  %2376 = vset.pattern.permute.xlu0 0
  %2377 = vperm.xlu0 %2376, %v2305
  %v2378 = vpop.permute.xlu0 %2377
  %2379 = vset.pattern.permute.xlu0 0
  %2380 = vperm.xlu0 %2379, %v2320
  %v2381 = vpop.permute.xlu0 %2380
  %2382 = vset.pattern.permute.xlu0 0
  %2383 = vperm.xlu0 %2382, %v2335
  %v2384 = vpop.permute.xlu0 %2383
  %2385 = vset.pattern.permute.xlu0 0
  %2386 = vperm.xlu0 %2385, %v2350
  %v2387 = vpop.permute.xlu0 %2386
  %v2388 = vperm.slane %v2366, %v401
  %v2389 = vperm.slane %v2369, %v403
  %v2390 = vsel %vm405, %v2389, %v2388
  %v2391 = vperm.slane %v2372, %v401
  %v2392 = vperm.slane %v2375, %v403
  %v2393 = vsel %vm405, %v2392, %v2391
  %v2394 = vperm.slane %v2378, %v401
  %v2395 = vperm.slane %v2381, %v403
  %v2396 = vsel %vm405, %v2395, %v2394
  %v2397 = vperm.slane %v2384, %v401
  %v2398 = vperm.slane %v2387, %v403
  %v2399 = vsel %vm405, %v2398, %v2397
  %v2400 = vsel %vm410, %v2393, %v2390
  %v2401 = vsel %vm412, %v2396, %v2400
  %v2402 = vsel %vm414, %v2399, %v2401
  %v2404 = vmul.f32 %v2354, %v2402
  %v2405 = vsel %vm316, %v2404, -inf
  %2406 = vmax.xlane.f32.xlu0 %v2405
  %v2407 = vpop.xlane.xlu0 %2406
  %v2408 = vsub.f32 %v2404, %v2407
  %v2409 = vmul.f32 %v2408, 1.442695
  %v2410 = vpow.pop %v2409
  %v2411 = vsel %vm316, %v2410, 0.0
  %2412 = vadd.xlane.f32.xlu0 %v2411
  %v2413 = vpop.xlane.xlu0 %2412
  %v2414 = vrcp.pop %v2413
  %v2415 = vmul.f32 %v2413, %v2414
  %v2416 = vsub.f32 1.0, %v2415
  %v2417 = vmul.f32 %v2414, %v2416
  %v2418 = vadd.f32 %v2414, %v2417
  %vm2419 = vweird.f32 %v2413
  %vm2420 = vweird.f32 %v2414
  %vm2421 = vmor %vm2419, %vm2420
  %v2422 = vsel %vm2421, %v2414, %v2418
  %v2423 = vand.u32 2147483647, %v2413
  %vm2424 = vcmp.eq.f32.partialorder %v2423, 8.507059e+37
  %v2425 = vand.u32 %v2413, 2147483648
  %v2426 = vor.u32 1.1754944e-38, %v2425
  %v2427 = vsel %vm2424, %v2426, %v2422
  %v2428 = vmul.f32 %v2410, %v2427
  %2430 = vset.pattern.permute.xlu0 17
  %2431 = vperm.xlu0 %2430, %v2001
  %v2432 = vpop.permute.xlu0 %2431
  %v2434 = vmul.f32 %v2432, %v2428
  %v2435 = vsub.f32 1.0, %v2001
  %2437 = vset.pattern.permute.xlu0 17
  %2438 = vperm.xlu0 %2437, %v2435
  %v2439 = vpop.permute.xlu0 %2438
  %v2441 = vmul.f32 %v2439, %v1633
  %v2442 = vadd.f32 %v2434, %v2441
  %2444 = vset.pattern.permute.xlu0 18
  %2445 = vperm.xlu0 %2444, %v2029
  %v2446 = vpop.permute.xlu0 %2445
  %v2448 = vmul.f32 %v2446, %v2442
  %v2449 = vadd.f32 %v2448, 0.0
  %2451 = vrot.lane.b32.xlu0 %v2442, 113
  %v2452 = vpop.permute.xlu0 %2451
  %2454 = vrot.lane.b32.xlu0 %v2442, 1
  %v2455 = vpop.permute.xlu0 %2454
  %v2457 = vsel %vm706, %v2452, %v2455
  %2458 = vset.pattern.permute.xlu0 19
  %2459 = vperm.xlu0 %2458, %v2029
  %v2460 = vpop.permute.xlu0 %2459
  %v2462 = vmul.f32 %v2460, %v2457
  %v2463 = vadd.f32 %v2449, %v2462
  %2464 = vrot.lane.b32.xlu0 %v2442, 127
  %v2465 = vpop.permute.xlu0 %2464
  %2467 = vrot.lane.b32.xlu0 %v2442, 15
  %v2468 = vpop.permute.xlu0 %2467
  %v2470 = vsel %vm720, %v2465, %v2468
  %2471 = vset.pattern.permute.xlu0 20
  %2472 = vperm.xlu0 %2471, %v2029
  %v2473 = vpop.permute.xlu0 %2472
  %v2475 = vmul.f32 %v2473, %v2470
  %v2476 = vadd.f32 %v2463, %v2475
  %v2477 = vadd.f32 %v2476, 1e-08
  %v2478 = vlog2.pop %v2477
  %v2479 = vmul.f32 %v2478, 0.6931472
  %2480 = vset.pattern.permute.xlu0 21
  %2481 = vperm.xlu0 %2480, %v1982
  %v2482 = vpop.permute.xlu0 %2481
  %v2484 = vmul.f32 %v2482, %v2479
  %v2485 = vmul.f32 %v2484, 1.442695
  %v2486 = vpow.pop %v2485
  %v2487 = vsel %vm316, %v2486, 0.0
  %2488 = vadd.xlane.f32.xlu0 %v2487
  %v2489 = vpop.xlane.xlu0 %2488
  %v2490 = vrcp.pop %v2489
  %v2491 = vmul.f32 %v2489, %v2490
  %v2492 = vsub.f32 1.0, %v2491
  %v2493 = vmul.f32 %v2490, %v2492
  %v2494 = vadd.f32 %v2490, %v2493
  %vm2495 = vweird.f32 %v2489
  %vm2496 = vweird.f32 %v2490
  %vm2497 = vmor %vm2495, %vm2496
  %v2498 = vsel %vm2497, %v2490, %v2494
  %v2499 = vand.u32 2147483647, %v2489
  %vm2500 = vcmp.eq.f32.partialorder %v2499, 8.507059e+37
  %v2501 = vand.u32 %v2489, 2147483648
  %v2502 = vor.u32 1.1754944e-38, %v2501
  %v2503 = vsel %vm2500, %v2502, %v2498
  %v2504 = vmul.f32 %v2486, %v2503
  %v2505 = vperm.slane %v2504, 0
  %v2506 = vlaneseq
  %v2507 = vshrl.u32 %v2506, 7
  %2509 = vset.pattern.permute.xlu0 %v2507
  %2510 = vperm.xlu0 %2509, %v2505
  %v2511 = vpop.permute.xlu0 %2510
  %v2512 = vlaneseq
  %v2513 = vshrl.u32 %v2512, 7
  %v2514 = vadd.s32 %v2513, 8
  %2515 = vset.pattern.permute.xlu0 %v2514
  %2516 = vperm.xlu0 %2515, %v2505
  %v2517 = vpop.permute.xlu0 %2516
  %v2518 = vperm.slane %v2504, 1
  %v2519 = vlaneseq
  %v2520 = vshrl.u32 %v2519, 7
  %2522 = vset.pattern.permute.xlu0 %v2520
  %2523 = vperm.xlu0 %2522, %v2518
  %v2524 = vpop.permute.xlu0 %2523
  %v2525 = vlaneseq
  %v2526 = vshrl.u32 %v2525, 7
  %v2527 = vadd.s32 %v2526, 8
  %2528 = vset.pattern.permute.xlu0 %v2527
  %2529 = vperm.xlu0 %2528, %v2518
  %v2530 = vpop.permute.xlu0 %2529
  %v2531 = vmul.f32 %v2511, %v1788
  %v2532 = vmul.f32 %v2517, %v1789
  %v2533 = vmul.f32 %v2524, %v1790
  %v2534 = vmul.f32 %v2530, %v1791
  %v2535 = vsel %vm290, %v2531, 0.0
  %v2536 = vsel %vm290, %v2532, 0.0
  %v2537 = vadd.f32 %v2535, %v2536
  %v2538 = vrot.slane %v2537, 4
  %v2539 = vadd.f32 %v2537, %v2538
  %v2540 = vrot.slane %v2539, 2
  %v2541 = vadd.f32 %v2539, %v2540
  %v2542 = vrot.slane %v2541, 1
  %v2543 = vadd.f32 %v2541, %v2542
  %v2544 = vsel %vm290, %v2533, 0.0
  %v2545 = vsel %vm290, %v2534, 0.0
  %v2546 = vadd.f32 %v2544, %v2545
  %v2547 = vrot.slane %v2546, 4
  %v2548 = vadd.f32 %v2546, %v2547
  %v2549 = vrot.slane %v2548, 2
  %v2550 = vadd.f32 %v2548, %v2549
  %v2551 = vrot.slane %v2550, 1
  %v2552 = vadd.f32 %v2550, %v2551
  %v2553 = vsub.f32 0.0, %v1965
  %v2554 = vmul.f32 %v2553, 1.442695
  %v2555 = vpow.pop %v2554
  %v2556 = vadd.f32 %v2555, 1.0
  %v2557 = vrcp.pop %v2556
  %v2558 = vmul.f32 %v2556, %v2557
  %v2559 = vsub.f32 1.0, %v2558
  %v2560 = vmul.f32 %v2557, %v2559
  %v2561 = vadd.f32 %v2557, %v2560
  %vm2562 = vweird.f32 %v2556
  %vm2563 = vweird.f32 %v2557
  %vm2564 = vmor %vm2562, %vm2563
  %v2565 = vsel %vm2564, %v2557, %v2561
  %v2566 = vand.u32 2147483647, %v2556
  %vm2567 = vcmp.eq.f32.partialorder %v2566, 8.507059e+37
  %v2568 = vand.u32 %v2556, 2147483648
  %v2569 = vor.u32 1.1754944e-38, %v2568
  %v2570 = vsel %vm2567, %v2569, %v2565
  %v2571 = vmul.f32 1.0, %v2570
  %v2572 = vtanh.pop %v1965
  %v2573 = vperm.slane %v2504, 2
  %v2574 = vlaneseq
  %v2575 = vshrl.u32 %v2574, 7
  %2577 = vset.pattern.permute.xlu0 %v2575
  %2578 = vperm.xlu0 %2577, %v2573
  %v2579 = vpop.permute.xlu0 %2578
  %v2580 = vlaneseq
  %v2581 = vshrl.u32 %v2580, 7
  %v2582 = vadd.s32 %v2581, 8
  %2583 = vset.pattern.permute.xlu0 %v2582
  %2584 = vperm.xlu0 %2583, %v2573
  %v2585 = vpop.permute.xlu0 %2584
  %v2586 = vperm.slane %v2504, 3
  %v2587 = vlaneseq
  %v2588 = vshrl.u32 %v2587, 7
  %2590 = vset.pattern.permute.xlu0 %v2588
  %2591 = vperm.xlu0 %2590, %v2586
  %v2592 = vpop.permute.xlu0 %2591
  %v2593 = vlaneseq
  %v2594 = vshrl.u32 %v2593, 7
  %v2595 = vadd.s32 %v2594, 8
  %2596 = vset.pattern.permute.xlu0 %v2595
  %2597 = vperm.xlu0 %2596, %v2586
  %v2598 = vpop.permute.xlu0 %2597
  %v2600 = vrot.slane %v2572, 1
  %v2602 = vrot.slane %v2571, 1
  %v2603 = vperm.slane %v2571, 0
  %v2604 = vperm.slane %v2602, 0
  %2605 = vrot.lane.b32.xlu0 %v2603, 84
  %v2606 = vpop.permute.xlu0 %2605
  %2607 = vrot.lane.b32.xlu0 %v2604, 84
  %v2608 = vpop.permute.xlu0 %2607
  %v2611 = vmul.f32 %v1788, %v2606
  %v2612 = vmul.f32 %v1789, %v2606
  %v2613 = vmul.f32 %v1790, %v2608
  %v2614 = vmul.f32 %v1791, %v2608
  %v2615 = vperm.slane %v2572, 0
  %v2616 = vperm.slane %v2600, 0
  %2623 = vrot.lane.b32.xlu0 %v2611, 60
  %v2624 = vpop.permute.xlu0 %2623
  %2625 = vrot.lane.b32.xlu0 %v2612, 60
  %v2626 = vpop.permute.xlu0 %2625
  %2627 = vrot.lane.b32.xlu0 %v2613, 60
  %v2628 = vpop.permute.xlu0 %2627
  %2629 = vrot.lane.b32.xlu0 %v2614, 60
  %v2630 = vpop.permute.xlu0 %2629
  %v2635 = vsub.f32 %v2615, %v2624
  %v2636 = vsub.f32 %v2615, %v2626
  %v2637 = vsub.f32 %v2616, %v2628
  %v2638 = vsub.f32 %v2616, %v2630
  %v2639 = vmul.f32 %v2579, %v2635
  %v2640 = vmul.f32 %v2585, %v2636
  %v2641 = vmul.f32 %v2592, %v2637
  %v2642 = vmul.f32 %v2598, %v2638
  %2647 = vrot.lane.b32.xlu0 %v2639, 68
  %v2648 = vpop.permute.xlu0 %2647
  %2649 = vrot.lane.b32.xlu0 %v2640, 68
  %v2650 = vpop.permute.xlu0 %2649
  %2651 = vrot.lane.b32.xlu0 %v2641, 68
  %v2652 = vpop.permute.xlu0 %2651
  %2653 = vrot.lane.b32.xlu0 %v2642, 68
  %v2654 = vpop.permute.xlu0 %2653
  %v2659 = vadd.f32 %v1788, %v2648
  %v2660 = vadd.f32 %v1789, %v2650
  %v2661 = vadd.f32 %v1790, %v2652
  %v2662 = vadd.f32 %v1791, %v2654
  %v2666 = vsel %vm410, %v2552, %v2543
  %2667 = vrot.lane.b32.xlu0 %v2666, 32
  %v2668 = vpop.permute.xlu0 %2667
  %v2670 = vsel %vm178, %v1944, %v2668
  %v2672 = vsel %vm925, %v2670, 0
  %2674 = vmatpush.msra.mxu0 0.0
  %2675 = vmatpush.msra.mxu0 0.0
  %2676 = vmatpush.msra.mxu0 0.0
  %2677 = vmatpush.msra.mxu0 0.0
  %2678 = vmatpush.msra.mxu0 0.0
  %2679 = vmatpush.msra.mxu0 0.0
  %2680 = vmatpush.msra.mxu0 0.0
  %2681 = vmatpush.msra.mxu0 0.0
  %2682 = vmatpush.msra.mxu0 0.0
  %2683 = vmatpush.msra.mxu0 0.0
  %2684 = vmatpush.msra.mxu0 %v69
  %2685 = vmatpush.msra.mxu0 %v68
  %2686 = vmatpush.msra.mxu0 %v67
  %2687 = vmatpush.msra.mxu0 %v66
  %2688 = vmatpush.msra.mxu0 %v65
  %2689 = vmatpush.msra.mxu0 %v64
  %2690 = vmatmul.f32.gmra.mxu0 %v2672
  %v2691 = vpop.f32.mrf.mxu0
  %v2692 = vadd.f32 %v923, %v2691
  %2693 = vdwg.mxu0
  %v2694 = vmax.f32 %v2692, -20.0
  %v2695 = vmin.f32 %v2694, 20.0
  %v2697 = vsel %vm178, %v2695, 0
  %2699 = vmatpush.msra.mxu0 0.0
  %2700 = vmatpush.msra.mxu0 0.0
  %2701 = vmatpush.msra.mxu0 0.0
  %2702 = vmatpush.msra.mxu0 0.0
  %2703 = vmatpush.msra.mxu0 0.0
  %2704 = vmatpush.msra.mxu0 0.0
  %2705 = vmatpush.msra.mxu0 0.0
  %2706 = vmatpush.msra.mxu0 0.0
  %2707 = vmatpush.msra.mxu0 0.0
  %2708 = vmatpush.msra.mxu0 0.0
  %2709 = vmatpush.msra.mxu0 0.0
  %2710 = vmatpush.msra.mxu0 0.0
  %2711 = vmatpush.msra.mxu0 %v74
  %2712 = vmatpush.msra.mxu0 %v73
  %2713 = vmatpush.msra.mxu0 %v72
  %2714 = vmatpush.msra.mxu0 %v71
  %2715 = vmatmul.f32.gmra.mxu0 %v2697
  %v2716 = vpop.f32.mrf.mxu0
  %v2717 = vadd.f32 %v952, %v2716
  %2718 = vdwg.mxu0
  %v2719 = vsub.f32 0.0, %v2717
  %v2720 = vmul.f32 %v2719, 1.442695
  %v2721 = vpow.pop %v2720
  %v2722 = vadd.f32 %v2721, 1.0
  %v2723 = vrcp.pop %v2722
  %v2724 = vmul.f32 %v2722, %v2723
  %v2725 = vsub.f32 1.0, %v2724
  %v2726 = vmul.f32 %v2723, %v2725
  %v2727 = vadd.f32 %v2723, %v2726
  %vm2728 = vweird.f32 %v2722
  %vm2729 = vweird.f32 %v2723
  %vm2730 = vmor %vm2728, %vm2729
  %v2731 = vsel %vm2730, %v2723, %v2727
  %v2732 = vand.u32 2147483647, %v2722
  %vm2733 = vcmp.eq.f32.partialorder %v2732, 8.507059e+37
  %v2734 = vand.u32 %v2722, 2147483648
  %v2735 = vor.u32 1.1754944e-38, %v2734
  %v2736 = vsel %vm2733, %v2735, %v2731
  %v2737 = vmul.f32 1.0, %v2736
  %s2738 = scalar_lea.vmem %s15, 4
  %2739 = vst.msk [vmem:[%s2738] sm:$0x3] %vm996, %v2737
  %s2740 = scalar_lea.vmem %s0, 6
  %v2741 = vld [vmem:[%s2740] sm:$0x3]
  %2742 = vrot.lane.b32.xlu0 %v2666, 10
  %v2743 = vpop.permute.xlu0 %2742
  %2746 = vrot.lane.b32.xlu0 %v1939, 58
  %v2747 = vpop.permute.xlu0 %2746
  %v2749 = vsel %vm94, %v2741, %v2743
  %v2750 = vsel %vm96, %v2749, %v2747
  %v2752 = vsel %vm101, %v2750, 0
  %2754 = vmatpush.msra.mxu0 0.0
  %2755 = vmatpush.msra.mxu0 0.0
  %2756 = vmatpush.msra.mxu0 0.0
  %2757 = vmatpush.msra.mxu0 0.0
  %2758 = vmatpush.msra.mxu0 0.0
  %2759 = vmatpush.msra.mxu0 0.0
  %2760 = vmatpush.msra.mxu0 0.0
  %2761 = vmatpush.msra.mxu0 0.0
  %2762 = vmatpush.msra.mxu0 %v107
  %2763 = vmatpush.msra.mxu0 %v56
  %2764 = vmatpush.msra.mxu0 %v55
  %2765 = vmatpush.msra.mxu0 %v54
  %2766 = vmatpush.msra.mxu0 %v53
  %2767 = vmatpush.msra.mxu0 %v52
  %2768 = vmatpush.msra.mxu0 %v51
  %2769 = vmatpush.msra.mxu0 %v50
  %2770 = vmatmul.f32.gmra.mxu0 %v2752
  %v2771 = vpop.f32.mrf.mxu0
  %v2772 = vadd.f32 %v99, %v2771
  %2773 = vdwg.mxu0
  %v2774 = vsub.f32 0.0, %v2772
  %v2775 = vmul.f32 %v2774, 1.442695
  %v2776 = vpow.pop %v2775
  %v2777 = vadd.f32 %v2776, 1.0
  %v2778 = vrcp.pop %v2777
  %v2779 = vmul.f32 %v2777, %v2778
  %v2780 = vsub.f32 1.0, %v2779
  %v2781 = vmul.f32 %v2778, %v2780
  %v2782 = vadd.f32 %v2778, %v2781
  %vm2783 = vweird.f32 %v2777
  %vm2784 = vweird.f32 %v2778
  %vm2785 = vmor %vm2783, %vm2784
  %v2786 = vsel %vm2785, %v2778, %v2782
  %v2787 = vand.u32 2147483647, %v2777
  %vm2788 = vcmp.eq.f32.partialorder %v2787, 8.507059e+37
  %v2789 = vand.u32 %v2777, 2147483648
  %v2790 = vor.u32 1.1754944e-38, %v2789
  %v2791 = vsel %vm2788, %v2790, %v2786
  %v2792 = vmul.f32 1.0, %v2791
  %v2793 = vtanh.pop %v2772
  %v2794 = vmul.f32 %v2792, %v1933
  %2796 = vrot.lane.b32.xlu0 %v2793, 64
  %v2797 = vpop.permute.xlu0 %2796
  %v2799 = vmul.f32 %v2792, %v2797
  %2801 = vrot.lane.b32.xlu0 %v2799, 32
  %v2802 = vpop.permute.xlu0 %2801
  %v2804 = vadd.f32 %v2794, %v2802
  %v2805 = vtanh.pop %v2804
  %2807 = vrot.lane.b32.xlu0 %v2805, 64
  %v2808 = vpop.permute.xlu0 %2807
  %v2810 = vmul.f32 %v2792, %v2808
  %v2811 = vmax.f32 %v2810, -20.0
  %v2812 = vmin.f32 %v2811, 20.0
  %2814 = vrot.lane.b32.xlu0 %v2812, 32
  %v2815 = vpop.permute.xlu0 %2814
  %v2816 = vsel %vm178, %v2815, 0
  %2818 = vmatpush.msra.mxu0 0.0
  %2819 = vmatpush.msra.mxu0 0.0
  %2820 = vmatpush.msra.mxu0 0.0
  %2821 = vmatpush.msra.mxu0 0.0
  %2822 = vmatpush.msra.mxu0 0.0
  %2823 = vmatpush.msra.mxu0 0.0
  %2824 = vmatpush.msra.mxu0 0.0
  %2825 = vmatpush.msra.mxu0 0.0
  %2826 = vmatpush.msra.mxu0 0.0
  %2827 = vmatpush.msra.mxu0 0.0
  %2828 = vmatpush.msra.mxu0 0.0
  %2829 = vmatpush.msra.mxu0 0.0
  %2830 = vmatpush.msra.mxu0 %v62
  %2831 = vmatpush.msra.mxu0 %v61
  %2832 = vmatpush.msra.mxu0 %v60
  %2833 = vmatpush.msra.mxu0 %v59
  %2834 = vmatmul.f32.gmra.mxu0 %v2816
  %v2835 = vpop.f32.mrf.mxu0
  %v2836 = vadd.f32 %v173, %v2835
  %2837 = vdwg.mxu0
  %v2839 = vrot.slane %v2836, 6
  %2840 = vrot.lane.b32.xlu0 %v2839, 106
  %v2841 = vpop.permute.xlu0 %2840
  %v2843 = vsel %vm105, %v2836, %v2841
  %v2844 = vtanh.pop %v2843
  %v2845 = vmax.f32 %v2843, 0.0
  %v2846 = vand.u32 2147483647, %v2843
  %v2847 = vsub.f32 0.0, %v2846
  %v2848 = vmul.f32 %v2847, 1.442695
  %v2849 = vpow.pop %v2848
  %v2850 = vadd.f32 %v2849, 1.0
  %v2851 = vlog2.pop %v2850
  %v2852 = vmul.f32 %v2851, 0.6931472
  %v2853 = vadd.f32 %v2845, %v2852
  %v2854 = vsub.f32 0.0, %v2843
  %v2855 = vmul.f32 %v2854, 1.442695
  %v2856 = vpow.pop %v2855
  %v2857 = vadd.f32 %v2856, 1.0
  %v2858 = vrcp.pop %v2857
  %v2859 = vmul.f32 %v2857, %v2858
  %v2860 = vsub.f32 1.0, %v2859
  %v2861 = vmul.f32 %v2858, %v2860
  %v2862 = vadd.f32 %v2858, %v2861
  %vm2863 = vweird.f32 %v2857
  %vm2864 = vweird.f32 %v2858
  %vm2865 = vmor %vm2863, %vm2864
  %v2866 = vsel %vm2865, %v2858, %v2862
  %v2867 = vand.u32 2147483647, %v2857
  %vm2868 = vcmp.eq.f32.partialorder %v2867, 8.507059e+37
  %v2869 = vand.u32 %v2857, 2147483648
  %v2870 = vor.u32 1.1754944e-38, %v2869
  %v2871 = vsel %vm2868, %v2870, %v2866
  %v2872 = vmul.f32 1.0, %v2871
  %v2873 = vsel %vm240, %v2843, -inf
  %2874 = vmax.xlane.f32.xlu0 %v2873
  %v2875 = vpop.xlane.xlu0 %2874
  %v2876 = vsub.f32 %v2843, %v2875
  %v2877 = vmul.f32 %v2876, 1.442695
  %v2878 = vpow.pop %v2877
  %2880 = vrot.lane.b32.xlu0 %v2878, 110
  %v2881 = vpop.permute.xlu0 %2880
  %v2883 = vsel %vm251, %v2881, 0.0
  %2884 = vadd.xlane.f32.xlu0 %v2883
  %v2885 = vpop.xlane.xlu0 %2884
  %v2886 = vrcp.pop %v2885
  %v2887 = vmul.f32 %v2885, %v2886
  %v2888 = vsub.f32 1.0, %v2887
  %v2889 = vmul.f32 %v2886, %v2888
  %v2890 = vadd.f32 %v2886, %v2889
  %vm2891 = vweird.f32 %v2885
  %vm2892 = vweird.f32 %v2886
  %vm2893 = vmor %vm2891, %vm2892
  %v2894 = vsel %vm2893, %v2886, %v2890
  %v2895 = vand.u32 2147483647, %v2885
  %vm2896 = vcmp.eq.f32.partialorder %v2895, 8.507059e+37
  %v2897 = vand.u32 %v2885, 2147483648
  %v2898 = vor.u32 1.1754944e-38, %v2897
  %v2899 = vsel %vm2896, %v2898, %v2894
  %v2900 = vmul.f32 %v2878, %v2899
  %v2902 = vrot.slane %v2844, 1
  %v2903 = vrot.slane %v2844, 2
  %v2904 = vrot.slane %v2844, 3
  %v2905 = vperm.slane %v2844, 0
  %v2906 = vperm.slane %v2902, 0
  %v2907 = vperm.slane %v2903, 0
  %v2908 = vperm.slane %v2904, 0
  %v2913 = vmul.f32 %v2659, %v2905
  %v2914 = vmul.f32 %v2660, %v2905
  %v2915 = vmul.f32 %v2661, %v2906
  %v2916 = vmul.f32 %v2662, %v2906
  %v2917 = vmul.f32 %v2659, %v2907
  %v2918 = vmul.f32 %v2660, %v2907
  %v2919 = vmul.f32 %v2661, %v2908
  %v2920 = vmul.f32 %v2662, %v2908
  %v2921 = vsel %vm290, %v2913, 0.0
  %2922 = vadd.xlane.f32.xlu0 %v2921
  %v2923 = vpop.xlane.xlu0 %2922
  %v2924 = vsel %vm290, %v2914, 0.0
  %2925 = vadd.xlane.f32.xlu0 %v2924
  %v2926 = vpop.xlane.xlu0 %2925
  %v2927 = vsel %vm290, %v2915, 0.0
  %2928 = vadd.xlane.f32.xlu0 %v2927
  %v2929 = vpop.xlane.xlu0 %2928
  %v2930 = vsel %vm290, %v2916, 0.0
  %2931 = vadd.xlane.f32.xlu0 %v2930
  %v2932 = vpop.xlane.xlu0 %2931
  %v2933 = vsel %vm290, %v2917, 0.0
  %2934 = vadd.xlane.f32.xlu0 %v2933
  %v2935 = vpop.xlane.xlu0 %2934
  %v2936 = vsel %vm290, %v2918, 0.0
  %2937 = vadd.xlane.f32.xlu0 %v2936
  %v2938 = vpop.xlane.xlu0 %2937
  %v2939 = vsel %vm290, %v2919, 0.0
  %2940 = vadd.xlane.f32.xlu0 %v2939
  %v2941 = vpop.xlane.xlu0 %2940
  %v2942 = vsel %vm290, %v2920, 0.0
  %2943 = vadd.xlane.f32.xlu0 %v2942
  %v2944 = vpop.xlane.xlu0 %2943
  %v2945 = vmul.f32 %v2844, %v2844
  %v2946 = vsel %vm316, %v2945, 0.0
  %2947 = vadd.xlane.f32.xlu0 %v2946
  %v2948 = vpop.xlane.xlu0 %2947
  %v2949 = vrsqrt.pop %v2948
  %v2950 = vmul.f32 %v2949, %v2948
  %v2951 = vmul.f32 %v2950, %v2949
  %v2952 = vmul.f32 0.5, %v2951
  %v2953 = vsub.f32 1.5, %v2952
  %v2954 = vmul.f32 %v2949, %v2953
  %v2955 = vmul.f32 %v2948, %v2954
  %vm2956 = vcmp.eq.f32.partialorder %v2948, inf
  %v2957 = vsel %vm2956, %v2948, %v2955
  %vm2958 = vcmp.eq.f32.partialorder %v2948, 0.0
  %v2959 = vand.u32 %v2948, 2147483648
  %v2960 = vsel %vm2958, %v2959, %v2957
  %v2961 = vmul.f32 %v2659, %v2659
  %v2962 = vmul.f32 %v2660, %v2660
  %v2963 = vmul.f32 %v2661, %v2661
  %v2964 = vmul.f32 %v2662, %v2662
  %v2965 = vsel %vm290, %v2961, 0.0
  %2966 = vadd.xlane.f32.xlu0 %v2965
  %v2967 = vpop.xlane.xlu0 %2966
  %v2968 = vsel %vm290, %v2962, 0.0
  %2969 = vadd.xlane.f32.xlu0 %v2968
  %v2970 = vpop.xlane.xlu0 %2969
  %v2971 = vsel %vm290, %v2963, 0.0
  %2972 = vadd.xlane.f32.xlu0 %v2971
  %v2973 = vpop.xlane.xlu0 %2972
  %v2974 = vsel %vm290, %v2964, 0.0
  %2975 = vadd.xlane.f32.xlu0 %v2974
  %v2976 = vpop.xlane.xlu0 %2975
  %v2977 = vrsqrt.pop %v2967
  %v2978 = vmul.f32 %v2977, %v2967
  %v2979 = vmul.f32 %v2978, %v2977
  %v2980 = vmul.f32 0.5, %v2979
  %v2981 = vsub.f32 1.5, %v2980
  %v2982 = vmul.f32 %v2977, %v2981
  %v2983 = vmul.f32 %v2967, %v2982
  %vm2984 = vcmp.eq.f32.partialorder %v2967, inf
  %v2985 = vsel %vm2984, %v2967, %v2983
  %vm2986 = vcmp.eq.f32.partialorder %v2967, 0.0
  %v2987 = vand.u32 %v2967, 2147483648
  %v2988 = vsel %vm2986, %v2987, %v2985
  %v2989 = vrsqrt.pop %v2970
  %v2990 = vmul.f32 %v2989, %v2970
  %v2991 = vmul.f32 %v2990, %v2989
  %v2992 = vmul.f32 0.5, %v2991
  %v2993 = vsub.f32 1.5, %v2992
  %v2994 = vmul.f32 %v2989, %v2993
  %v2995 = vmul.f32 %v2970, %v2994
  %vm2996 = vcmp.eq.f32.partialorder %v2970, inf
  %v2997 = vsel %vm2996, %v2970, %v2995
  %vm2998 = vcmp.eq.f32.partialorder %v2970, 0.0
  %v2999 = vand.u32 %v2970, 2147483648
  %v3000 = vsel %vm2998, %v2999, %v2997
  %v3001 = vrsqrt.pop %v2973
  %v3002 = vmul.f32 %v3001, %v2973
  %v3003 = vmul.f32 %v3002, %v3001
  %v3004 = vmul.f32 0.5, %v3003
  %v3005 = vsub.f32 1.5, %v3004
  %v3006 = vmul.f32 %v3001, %v3005
  %v3007 = vmul.f32 %v2973, %v3006
  %vm3008 = vcmp.eq.f32.partialorder %v2973, inf
  %v3009 = vsel %vm3008, %v2973, %v3007
  %vm3010 = vcmp.eq.f32.partialorder %v2973, 0.0
  %v3011 = vand.u32 %v2973, 2147483648
  %v3012 = vsel %vm3010, %v3011, %v3009
  %v3013 = vrsqrt.pop %v2976
  %v3014 = vmul.f32 %v3013, %v2976
  %v3015 = vmul.f32 %v3014, %v3013
  %v3016 = vmul.f32 0.5, %v3015
  %v3017 = vsub.f32 1.5, %v3016
  %v3018 = vmul.f32 %v3013, %v3017
  %v3019 = vmul.f32 %v2976, %v3018
  %vm3020 = vcmp.eq.f32.partialorder %v2976, inf
  %v3021 = vsel %vm3020, %v2976, %v3019
  %vm3022 = vcmp.eq.f32.partialorder %v2976, 0.0
  %v3023 = vand.u32 %v2976, 2147483648
  %v3024 = vsel %vm3022, %v3023, %v3021
  %v3029 = vperm.slane %v2988, %v401
  %v3030 = vperm.slane %v3000, %v403
  %v3031 = vsel %vm405, %v3030, %v3029
  %v3032 = vperm.slane %v3012, %v401
  %v3033 = vperm.slane %v3024, %v403
  %v3034 = vsel %vm405, %v3033, %v3032
  %v3035 = vsel %vm410, %v3034, %v3031
  %v3036 = vsel %vm412, %v3031, %v3035
  %v3037 = vsel %vm414, %v3034, %v3036
  %v3039 = vmul.f32 %v2960, %v3037
  %v3040 = vadd.f32 %v3039, 1e-08
  %v3042 = vperm.slane %v3040, 0
  %v3043 = vlaneseq
  %v3044 = vshrl.u32 %v3043, 7
  %3046 = vset.pattern.permute.xlu0 %v3044
  %3047 = vperm.xlu0 %3046, %v3042
  %v3048 = vpop.permute.xlu0 %3047
  %v3049 = vlaneseq
  %v3050 = vshrl.u32 %v3049, 7
  %v3051 = vadd.s32 %v3050, 8
  %3052 = vset.pattern.permute.xlu0 %v3051
  %3053 = vperm.xlu0 %3052, %v3042
  %v3054 = vpop.permute.xlu0 %3053
  %v3055 = vperm.slane %v3040, 1
  %v3056 = vlaneseq
  %v3057 = vshrl.u32 %v3056, 7
  %3059 = vset.pattern.permute.xlu0 %v3057
  %3060 = vperm.xlu0 %3059, %v3055
  %v3061 = vpop.permute.xlu0 %3060
  %v3062 = vlaneseq
  %v3063 = vshrl.u32 %v3062, 7
  %v3064 = vadd.s32 %v3063, 8
  %3065 = vset.pattern.permute.xlu0 %v3064
  %3066 = vperm.xlu0 %3065, %v3055
  %v3067 = vpop.permute.xlu0 %3066
  %v3068 = vperm.slane %v3040, 2
  %v3069 = vlaneseq
  %v3070 = vshrl.u32 %v3069, 7
  %3072 = vset.pattern.permute.xlu0 %v3070
  %3073 = vperm.xlu0 %3072, %v3068
  %v3074 = vpop.permute.xlu0 %3073
  %v3075 = vlaneseq
  %v3076 = vshrl.u32 %v3075, 7
  %v3077 = vadd.s32 %v3076, 8
  %3078 = vset.pattern.permute.xlu0 %v3077
  %3079 = vperm.xlu0 %3078, %v3068
  %v3080 = vpop.permute.xlu0 %3079
  %v3081 = vperm.slane %v3040, 3
  %v3082 = vlaneseq
  %v3083 = vshrl.u32 %v3082, 7
  %3085 = vset.pattern.permute.xlu0 %v3083
  %3086 = vperm.xlu0 %3085, %v3081
  %v3087 = vpop.permute.xlu0 %3086
  %v3088 = vlaneseq
  %v3089 = vshrl.u32 %v3088, 7
  %v3090 = vadd.s32 %v3089, 8
  %3091 = vset.pattern.permute.xlu0 %v3090
  %3092 = vperm.xlu0 %3091, %v3081
  %v3093 = vpop.permute.xlu0 %3092
  %v3102 = vrcp.pop %v3048
  %v3103 = vmul.f32 %v3048, %v3102
  %v3104 = vsub.f32 1.0, %v3103
  %v3105 = vmul.f32 %v3102, %v3104
  %v3106 = vadd.f32 %v3102, %v3105
  %vm3107 = vweird.f32 %v3048
  %vm3108 = vweird.f32 %v3102
  %vm3109 = vmor %vm3107, %vm3108
  %v3110 = vsel %vm3109, %v3102, %v3106
  %v3111 = vand.u32 2147483647, %v3048
  %vm3112 = vcmp.eq.f32.partialorder %v3111, 8.507059e+37
  %v3113 = vand.u32 %v3048, 2147483648
  %v3114 = vor.u32 1.1754944e-38, %v3113
  %v3115 = vsel %vm3112, %v3114, %v3110
  %v3116 = vmul.f32 %v2923, %v3115
  %v3117 = vrcp.pop %v3054
  %v3118 = vmul.f32 %v3054, %v3117
  %v3119 = vsub.f32 1.0, %v3118
  %v3120 = vmul.f32 %v3117, %v3119
  %v3121 = vadd.f32 %v3117, %v3120
  %vm3122 = vweird.f32 %v3054
  %vm3123 = vweird.f32 %v3117
  %vm3124 = vmor %vm3122, %vm3123
  %v3125 = vsel %vm3124, %v3117, %v3121
  %v3126 = vand.u32 2147483647, %v3054
  %vm3127 = vcmp.eq.f32.partialorder %v3126, 8.507059e+37
  %v3128 = vand.u32 %v3054, 2147483648
  %v3129 = vor.u32 1.1754944e-38, %v3128
  %v3130 = vsel %vm3127, %v3129, %v3125
  %v3131 = vmul.f32 %v2926, %v3130
  %v3132 = vrcp.pop %v3061
  %v3133 = vmul.f32 %v3061, %v3132
  %v3134 = vsub.f32 1.0, %v3133
  %v3135 = vmul.f32 %v3132, %v3134
  %v3136 = vadd.f32 %v3132, %v3135
  %vm3137 = vweird.f32 %v3061
  %vm3138 = vweird.f32 %v3132
  %vm3139 = vmor %vm3137, %vm3138
  %v3140 = vsel %vm3139, %v3132, %v3136
  %v3141 = vand.u32 2147483647, %v3061
  %vm3142 = vcmp.eq.f32.partialorder %v3141, 8.507059e+37
  %v3143 = vand.u32 %v3061, 2147483648
  %v3144 = vor.u32 1.1754944e-38, %v3143
  %v3145 = vsel %vm3142, %v3144, %v3140
  %v3146 = vmul.f32 %v2929, %v3145
  %v3147 = vrcp.pop %v3067
  %v3148 = vmul.f32 %v3067, %v3147
  %v3149 = vsub.f32 1.0, %v3148
  %v3150 = vmul.f32 %v3147, %v3149
  %v3151 = vadd.f32 %v3147, %v3150
  %vm3152 = vweird.f32 %v3067
  %vm3153 = vweird.f32 %v3147
  %vm3154 = vmor %vm3152, %vm3153
  %v3155 = vsel %vm3154, %v3147, %v3151
  %v3156 = vand.u32 2147483647, %v3067
  %vm3157 = vcmp.eq.f32.partialorder %v3156, 8.507059e+37
  %v3158 = vand.u32 %v3067, 2147483648
  %v3159 = vor.u32 1.1754944e-38, %v3158
  %v3160 = vsel %vm3157, %v3159, %v3155
  %v3161 = vmul.f32 %v2932, %v3160
  %v3162 = vrcp.pop %v3074
  %v3163 = vmul.f32 %v3074, %v3162
  %v3164 = vsub.f32 1.0, %v3163
  %v3165 = vmul.f32 %v3162, %v3164
  %v3166 = vadd.f32 %v3162, %v3165
  %vm3167 = vweird.f32 %v3074
  %vm3168 = vweird.f32 %v3162
  %vm3169 = vmor %vm3167, %vm3168
  %v3170 = vsel %vm3169, %v3162, %v3166
  %v3171 = vand.u32 2147483647, %v3074
  %vm3172 = vcmp.eq.f32.partialorder %v3171, 8.507059e+37
  %v3173 = vand.u32 %v3074, 2147483648
  %v3174 = vor.u32 1.1754944e-38, %v3173
  %v3175 = vsel %vm3172, %v3174, %v3170
  %v3176 = vmul.f32 %v2935, %v3175
  %v3177 = vrcp.pop %v3080
  %v3178 = vmul.f32 %v3080, %v3177
  %v3179 = vsub.f32 1.0, %v3178
  %v3180 = vmul.f32 %v3177, %v3179
  %v3181 = vadd.f32 %v3177, %v3180
  %vm3182 = vweird.f32 %v3080
  %vm3183 = vweird.f32 %v3177
  %vm3184 = vmor %vm3182, %vm3183
  %v3185 = vsel %vm3184, %v3177, %v3181
  %v3186 = vand.u32 2147483647, %v3080
  %vm3187 = vcmp.eq.f32.partialorder %v3186, 8.507059e+37
  %v3188 = vand.u32 %v3080, 2147483648
  %v3189 = vor.u32 1.1754944e-38, %v3188
  %v3190 = vsel %vm3187, %v3189, %v3185
  %v3191 = vmul.f32 %v2938, %v3190
  %v3192 = vrcp.pop %v3087
  %v3193 = vmul.f32 %v3087, %v3192
  %v3194 = vsub.f32 1.0, %v3193
  %v3195 = vmul.f32 %v3192, %v3194
  %v3196 = vadd.f32 %v3192, %v3195
  %vm3197 = vweird.f32 %v3087
  %vm3198 = vweird.f32 %v3192
  %vm3199 = vmor %vm3197, %vm3198
  %v3200 = vsel %vm3199, %v3192, %v3196
  %v3201 = vand.u32 2147483647, %v3087
  %vm3202 = vcmp.eq.f32.partialorder %v3201, 8.507059e+37
  %v3203 = vand.u32 %v3087, 2147483648
  %v3204 = vor.u32 1.1754944e-38, %v3203
  %v3205 = vsel %vm3202, %v3204, %v3200
  %v3206 = vmul.f32 %v2941, %v3205
  %v3207 = vrcp.pop %v3093
  %v3208 = vmul.f32 %v3093, %v3207
  %v3209 = vsub.f32 1.0, %v3208
  %v3210 = vmul.f32 %v3207, %v3209
  %v3211 = vadd.f32 %v3207, %v3210
  %vm3212 = vweird.f32 %v3093
  %vm3213 = vweird.f32 %v3207
  %vm3214 = vmor %vm3212, %vm3213
  %v3215 = vsel %vm3214, %v3207, %v3211
  %v3216 = vand.u32 2147483647, %v3093
  %vm3217 = vcmp.eq.f32.partialorder %v3216, 8.507059e+37
  %v3218 = vand.u32 %v3093, 2147483648
  %v3219 = vor.u32 1.1754944e-38, %v3218
  %v3220 = vsel %vm3217, %v3219, %v3215
  %v3221 = vmul.f32 %v2944, %v3220
  %3223 = vset.pattern.permute.xlu0 16
  %3224 = vperm.xlu0 %3223, %v2853
  %v3225 = vpop.permute.xlu0 %3224
  %3235 = vset.pattern.permute.xlu0 0
  %3236 = vperm.xlu0 %3235, %v3116
  %v3237 = vpop.permute.xlu0 %3236
  %3238 = vset.pattern.permute.xlu0 0
  %3239 = vperm.xlu0 %3238, %v3131
  %v3240 = vpop.permute.xlu0 %3239
  %3241 = vset.pattern.permute.xlu0 0
  %3242 = vperm.xlu0 %3241, %v3146
  %v3243 = vpop.permute.xlu0 %3242
  %3244 = vset.pattern.permute.xlu0 0
  %3245 = vperm.xlu0 %3244, %v3161
  %v3246 = vpop.permute.xlu0 %3245
  %3247 = vset.pattern.permute.xlu0 0
  %3248 = vperm.xlu0 %3247, %v3176
  %v3249 = vpop.permute.xlu0 %3248
  %3250 = vset.pattern.permute.xlu0 0
  %3251 = vperm.xlu0 %3250, %v3191
  %v3252 = vpop.permute.xlu0 %3251
  %3253 = vset.pattern.permute.xlu0 0
  %3254 = vperm.xlu0 %3253, %v3206
  %v3255 = vpop.permute.xlu0 %3254
  %3256 = vset.pattern.permute.xlu0 0
  %3257 = vperm.xlu0 %3256, %v3221
  %v3258 = vpop.permute.xlu0 %3257
  %v3259 = vperm.slane %v3237, %v401
  %v3260 = vperm.slane %v3240, %v403
  %v3261 = vsel %vm405, %v3260, %v3259
  %v3262 = vperm.slane %v3243, %v401
  %v3263 = vperm.slane %v3246, %v403
  %v3264 = vsel %vm405, %v3263, %v3262
  %v3265 = vperm.slane %v3249, %v401
  %v3266 = vperm.slane %v3252, %v403
  %v3267 = vsel %vm405, %v3266, %v3265
  %v3268 = vperm.slane %v3255, %v401
  %v3269 = vperm.slane %v3258, %v403
  %v3270 = vsel %vm405, %v3269, %v3268
  %v3271 = vsel %vm410, %v3264, %v3261
  %v3272 = vsel %vm412, %v3267, %v3271
  %v3273 = vsel %vm414, %v3270, %v3272
  %v3275 = vmul.f32 %v3225, %v3273
  %v3276 = vsel %vm316, %v3275, -inf
  %3277 = vmax.xlane.f32.xlu0 %v3276
  %v3278 = vpop.xlane.xlu0 %3277
  %v3279 = vsub.f32 %v3275, %v3278
  %v3280 = vmul.f32 %v3279, 1.442695
  %v3281 = vpow.pop %v3280
  %v3282 = vsel %vm316, %v3281, 0.0
  %3283 = vadd.xlane.f32.xlu0 %v3282
  %v3284 = vpop.xlane.xlu0 %3283
  %v3285 = vrcp.pop %v3284
  %v3286 = vmul.f32 %v3284, %v3285
  %v3287 = vsub.f32 1.0, %v3286
  %v3288 = vmul.f32 %v3285, %v3287
  %v3289 = vadd.f32 %v3285, %v3288
  %vm3290 = vweird.f32 %v3284
  %vm3291 = vweird.f32 %v3285
  %vm3292 = vmor %vm3290, %vm3291
  %v3293 = vsel %vm3292, %v3285, %v3289
  %v3294 = vand.u32 2147483647, %v3284
  %vm3295 = vcmp.eq.f32.partialorder %v3294, 8.507059e+37
  %v3296 = vand.u32 %v3284, 2147483648
  %v3297 = vor.u32 1.1754944e-38, %v3296
  %v3298 = vsel %vm3295, %v3297, %v3293
  %v3299 = vmul.f32 %v3281, %v3298
  %3301 = vset.pattern.permute.xlu0 17
  %3302 = vperm.xlu0 %3301, %v2872
  %v3303 = vpop.permute.xlu0 %3302
  %v3305 = vmul.f32 %v3303, %v3299
  %v3306 = vsub.f32 1.0, %v2872
  %3308 = vset.pattern.permute.xlu0 17
  %3309 = vperm.xlu0 %3308, %v3306
  %v3310 = vpop.permute.xlu0 %3309
  %v3312 = vmul.f32 %v3310, %v2504
  %v3313 = vadd.f32 %v3305, %v3312
  %3315 = vset.pattern.permute.xlu0 18
  %3316 = vperm.xlu0 %3315, %v2900
  %v3317 = vpop.permute.xlu0 %3316
  %v3319 = vmul.f32 %v3317, %v3313
  %v3320 = vadd.f32 %v3319, 0.0
  %3322 = vrot.lane.b32.xlu0 %v3313, 113
  %v3323 = vpop.permute.xlu0 %3322
  %3325 = vrot.lane.b32.xlu0 %v3313, 1
  %v3326 = vpop.permute.xlu0 %3325
  %v3328 = vsel %vm706, %v3323, %v3326
  %3329 = vset.pattern.permute.xlu0 19
  %3330 = vperm.xlu0 %3329, %v2900
  %v3331 = vpop.permute.xlu0 %3330
  %v3333 = vmul.f32 %v3331, %v3328
  %v3334 = vadd.f32 %v3320, %v3333
  %3335 = vrot.lane.b32.xlu0 %v3313, 127
  %v3336 = vpop.permute.xlu0 %3335
  %3338 = vrot.lane.b32.xlu0 %v3313, 15
  %v3339 = vpop.permute.xlu0 %3338
  %v3341 = vsel %vm720, %v3336, %v3339
  %3342 = vset.pattern.permute.xlu0 20
  %3343 = vperm.xlu0 %3342, %v2900
  %v3344 = vpop.permute.xlu0 %3343
  %v3346 = vmul.f32 %v3344, %v3341
  %v3347 = vadd.f32 %v3334, %v3346
  %v3348 = vadd.f32 %v3347, 1e-08
  %v3349 = vlog2.pop %v3348
  %v3350 = vmul.f32 %v3349, 0.6931472
  %3351 = vset.pattern.permute.xlu0 21
  %3352 = vperm.xlu0 %3351, %v2853
  %v3353 = vpop.permute.xlu0 %3352
  %v3355 = vmul.f32 %v3353, %v3350
  %v3356 = vmul.f32 %v3355, 1.442695
  %v3357 = vpow.pop %v3356
  %v3358 = vsel %vm316, %v3357, 0.0
  %3359 = vadd.xlane.f32.xlu0 %v3358
  %v3360 = vpop.xlane.xlu0 %3359
  %v3361 = vrcp.pop %v3360
  %v3362 = vmul.f32 %v3360, %v3361
  %v3363 = vsub.f32 1.0, %v3362
  %v3364 = vmul.f32 %v3361, %v3363
  %v3365 = vadd.f32 %v3361, %v3364
  %vm3366 = vweird.f32 %v3360
  %vm3367 = vweird.f32 %v3361
  %vm3368 = vmor %vm3366, %vm3367
  %v3369 = vsel %vm3368, %v3361, %v3365
  %v3370 = vand.u32 2147483647, %v3360
  %vm3371 = vcmp.eq.f32.partialorder %v3370, 8.507059e+37
  %v3372 = vand.u32 %v3360, 2147483648
  %v3373 = vor.u32 1.1754944e-38, %v3372
  %v3374 = vsel %vm3371, %v3373, %v3369
  %v3375 = vmul.f32 %v3357, %v3374
  %v3376 = vperm.slane %v3375, 0
  %v3377 = vlaneseq
  %v3378 = vshrl.u32 %v3377, 7
  %3380 = vset.pattern.permute.xlu0 %v3378
  %3381 = vperm.xlu0 %3380, %v3376
  %v3382 = vpop.permute.xlu0 %3381
  %v3383 = vlaneseq
  %v3384 = vshrl.u32 %v3383, 7
  %v3385 = vadd.s32 %v3384, 8
  %3386 = vset.pattern.permute.xlu0 %v3385
  %3387 = vperm.xlu0 %3386, %v3376
  %v3388 = vpop.permute.xlu0 %3387
  %v3389 = vperm.slane %v3375, 1
  %v3390 = vlaneseq
  %v3391 = vshrl.u32 %v3390, 7
  %3393 = vset.pattern.permute.xlu0 %v3391
  %3394 = vperm.xlu0 %3393, %v3389
  %v3395 = vpop.permute.xlu0 %3394
  %v3396 = vlaneseq
  %v3397 = vshrl.u32 %v3396, 7
  %v3398 = vadd.s32 %v3397, 8
  %3399 = vset.pattern.permute.xlu0 %v3398
  %3400 = vperm.xlu0 %3399, %v3389
  %v3401 = vpop.permute.xlu0 %3400
  %v3402 = vmul.f32 %v3382, %v2659
  %v3403 = vmul.f32 %v3388, %v2660
  %v3404 = vmul.f32 %v3395, %v2661
  %v3405 = vmul.f32 %v3401, %v2662
  %v3406 = vsel %vm290, %v3402, 0.0
  %v3407 = vsel %vm290, %v3403, 0.0
  %v3408 = vadd.f32 %v3406, %v3407
  %v3409 = vrot.slane %v3408, 4
  %v3410 = vadd.f32 %v3408, %v3409
  %v3411 = vrot.slane %v3410, 2
  %v3412 = vadd.f32 %v3410, %v3411
  %v3413 = vrot.slane %v3412, 1
  %v3414 = vadd.f32 %v3412, %v3413
  %v3415 = vsel %vm290, %v3404, 0.0
  %v3416 = vsel %vm290, %v3405, 0.0
  %v3417 = vadd.f32 %v3415, %v3416
  %v3418 = vrot.slane %v3417, 4
  %v3419 = vadd.f32 %v3417, %v3418
  %v3420 = vrot.slane %v3419, 2
  %v3421 = vadd.f32 %v3419, %v3420
  %v3422 = vrot.slane %v3421, 1
  %v3423 = vadd.f32 %v3421, %v3422
  %v3424 = vsub.f32 0.0, %v2836
  %v3425 = vmul.f32 %v3424, 1.442695
  %v3426 = vpow.pop %v3425
  %v3427 = vadd.f32 %v3426, 1.0
  %v3428 = vrcp.pop %v3427
  %v3429 = vmul.f32 %v3427, %v3428
  %v3430 = vsub.f32 1.0, %v3429
  %v3431 = vmul.f32 %v3428, %v3430
  %v3432 = vadd.f32 %v3428, %v3431
  %vm3433 = vweird.f32 %v3427
  %vm3434 = vweird.f32 %v3428
  %vm3435 = vmor %vm3433, %vm3434
  %v3436 = vsel %vm3435, %v3428, %v3432
  %v3437 = vand.u32 2147483647, %v3427
  %vm3438 = vcmp.eq.f32.partialorder %v3437, 8.507059e+37
  %v3439 = vand.u32 %v3427, 2147483648
  %v3440 = vor.u32 1.1754944e-38, %v3439
  %v3441 = vsel %vm3438, %v3440, %v3436
  %v3442 = vmul.f32 1.0, %v3441
  %v3443 = vtanh.pop %v2836
  %v3444 = vperm.slane %v3375, 2
  %v3445 = vlaneseq
  %v3446 = vshrl.u32 %v3445, 7
  %3448 = vset.pattern.permute.xlu0 %v3446
  %3449 = vperm.xlu0 %3448, %v3444
  %v3450 = vpop.permute.xlu0 %3449
  %v3451 = vlaneseq
  %v3452 = vshrl.u32 %v3451, 7
  %v3453 = vadd.s32 %v3452, 8
  %3454 = vset.pattern.permute.xlu0 %v3453
  %3455 = vperm.xlu0 %3454, %v3444
  %v3456 = vpop.permute.xlu0 %3455
  %v3457 = vperm.slane %v3375, 3
  %v3458 = vlaneseq
  %v3459 = vshrl.u32 %v3458, 7
  %3461 = vset.pattern.permute.xlu0 %v3459
  %3462 = vperm.xlu0 %3461, %v3457
  %v3463 = vpop.permute.xlu0 %3462
  %v3464 = vlaneseq
  %v3465 = vshrl.u32 %v3464, 7
  %v3466 = vadd.s32 %v3465, 8
  %3467 = vset.pattern.permute.xlu0 %v3466
  %3468 = vperm.xlu0 %3467, %v3457
  %v3469 = vpop.permute.xlu0 %3468
  %v3471 = vrot.slane %v3443, 1
  %v3473 = vrot.slane %v3442, 1
  %v3474 = vperm.slane %v3442, 0
  %v3475 = vperm.slane %v3473, 0
  %3476 = vrot.lane.b32.xlu0 %v3474, 84
  %v3477 = vpop.permute.xlu0 %3476
  %3478 = vrot.lane.b32.xlu0 %v3475, 84
  %v3479 = vpop.permute.xlu0 %3478
  %v3482 = vmul.f32 %v2659, %v3477
  %v3483 = vmul.f32 %v2660, %v3477
  %v3484 = vmul.f32 %v2661, %v3479
  %v3485 = vmul.f32 %v2662, %v3479
  %v3486 = vperm.slane %v3443, 0
  %v3487 = vperm.slane %v3471, 0
  %3494 = vrot.lane.b32.xlu0 %v3482, 60
  %v3495 = vpop.permute.xlu0 %3494
  %3496 = vrot.lane.b32.xlu0 %v3483, 60
  %v3497 = vpop.permute.xlu0 %3496
  %3498 = vrot.lane.b32.xlu0 %v3484, 60
  %v3499 = vpop.permute.xlu0 %3498
  %3500 = vrot.lane.b32.xlu0 %v3485, 60
  %v3501 = vpop.permute.xlu0 %3500
  %v3506 = vsub.f32 %v3486, %v3495
  %v3507 = vsub.f32 %v3486, %v3497
  %v3508 = vsub.f32 %v3487, %v3499
  %v3509 = vsub.f32 %v3487, %v3501
  %v3510 = vmul.f32 %v3450, %v3506
  %v3511 = vmul.f32 %v3456, %v3507
  %v3512 = vmul.f32 %v3463, %v3508
  %v3513 = vmul.f32 %v3469, %v3509
  %3518 = vrot.lane.b32.xlu0 %v3510, 68
  %v3519 = vpop.permute.xlu0 %3518
  %3520 = vrot.lane.b32.xlu0 %v3511, 68
  %v3521 = vpop.permute.xlu0 %3520
  %3522 = vrot.lane.b32.xlu0 %v3512, 68
  %v3523 = vpop.permute.xlu0 %3522
  %3524 = vrot.lane.b32.xlu0 %v3513, 68
  %v3525 = vpop.permute.xlu0 %3524
  %v3530 = vadd.f32 %v2659, %v3519
  %v3531 = vadd.f32 %v2660, %v3521
  %v3532 = vadd.f32 %v2661, %v3523
  %v3533 = vadd.f32 %v2662, %v3525
  %v3537 = vsel %vm410, %v3423, %v3414
  %3538 = vrot.lane.b32.xlu0 %v3537, 32
  %v3539 = vpop.permute.xlu0 %3538
  %v3541 = vsel %vm178, %v2815, %v3539
  %v3543 = vsel %vm925, %v3541, 0
  %3545 = vmatpush.msra.mxu0 0.0
  %3546 = vmatpush.msra.mxu0 0.0
  %3547 = vmatpush.msra.mxu0 0.0
  %3548 = vmatpush.msra.mxu0 0.0
  %3549 = vmatpush.msra.mxu0 0.0
  %3550 = vmatpush.msra.mxu0 0.0
  %3551 = vmatpush.msra.mxu0 0.0
  %3552 = vmatpush.msra.mxu0 0.0
  %3553 = vmatpush.msra.mxu0 0.0
  %3554 = vmatpush.msra.mxu0 0.0
  %3555 = vmatpush.msra.mxu0 %v69
  %3556 = vmatpush.msra.mxu0 %v68
  %3557 = vmatpush.msra.mxu0 %v67
  %3558 = vmatpush.msra.mxu0 %v66
  %3559 = vmatpush.msra.mxu0 %v65
  %3560 = vmatpush.msra.mxu0 %v64
  %3561 = vmatmul.f32.gmra.mxu0 %v3543
  %v3562 = vpop.f32.mrf.mxu0
  %v3563 = vadd.f32 %v923, %v3562
  %3564 = vdwg.mxu0
  %v3565 = vmax.f32 %v3563, -20.0
  %v3566 = vmin.f32 %v3565, 20.0
  %v3568 = vsel %vm178, %v3566, 0
  %3570 = vmatpush.msra.mxu0 0.0
  %3571 = vmatpush.msra.mxu0 0.0
  %3572 = vmatpush.msra.mxu0 0.0
  %3573 = vmatpush.msra.mxu0 0.0
  %3574 = vmatpush.msra.mxu0 0.0
  %3575 = vmatpush.msra.mxu0 0.0
  %3576 = vmatpush.msra.mxu0 0.0
  %3577 = vmatpush.msra.mxu0 0.0
  %3578 = vmatpush.msra.mxu0 0.0
  %3579 = vmatpush.msra.mxu0 0.0
  %3580 = vmatpush.msra.mxu0 0.0
  %3581 = vmatpush.msra.mxu0 0.0
  %3582 = vmatpush.msra.mxu0 %v74
  %3583 = vmatpush.msra.mxu0 %v73
  %3584 = vmatpush.msra.mxu0 %v72
  %3585 = vmatpush.msra.mxu0 %v71
  %3586 = vmatmul.f32.gmra.mxu0 %v3568
  %v3587 = vpop.f32.mrf.mxu0
  %v3588 = vadd.f32 %v952, %v3587
  %3589 = vdwg.mxu0
  %v3590 = vsub.f32 0.0, %v3588
  %v3591 = vmul.f32 %v3590, 1.442695
  %v3592 = vpow.pop %v3591
  %v3593 = vadd.f32 %v3592, 1.0
  %v3594 = vrcp.pop %v3593
  %v3595 = vmul.f32 %v3593, %v3594
  %v3596 = vsub.f32 1.0, %v3595
  %v3597 = vmul.f32 %v3594, %v3596
  %v3598 = vadd.f32 %v3594, %v3597
  %vm3599 = vweird.f32 %v3593
  %vm3600 = vweird.f32 %v3594
  %vm3601 = vmor %vm3599, %vm3600
  %v3602 = vsel %vm3601, %v3594, %v3598
  %v3603 = vand.u32 2147483647, %v3593
  %vm3604 = vcmp.eq.f32.partialorder %v3603, 8.507059e+37
  %v3605 = vand.u32 %v3593, 2147483648
  %v3606 = vor.u32 1.1754944e-38, %v3605
  %v3607 = vsel %vm3604, %v3606, %v3602
  %v3608 = vmul.f32 1.0, %v3607
  %s3609 = scalar_lea.vmem %s15, 6
  %3610 = vst.msk [vmem:[%s3609] sm:$0x3] %vm996, %v3608
  %s3611 = scalar_lea.vmem %s0, 8
  %v3612 = vld [vmem:[%s3611] sm:$0x3]
  %3613 = vrot.lane.b32.xlu0 %v3537, 10
  %v3614 = vpop.permute.xlu0 %3613
  %3617 = vrot.lane.b32.xlu0 %v2810, 58
  %v3618 = vpop.permute.xlu0 %3617
  %v3620 = vsel %vm94, %v3612, %v3614
  %v3621 = vsel %vm96, %v3620, %v3618
  %v3623 = vsel %vm101, %v3621, 0
  %3625 = vmatpush.msra.mxu0 0.0
  %3626 = vmatpush.msra.mxu0 0.0
  %3627 = vmatpush.msra.mxu0 0.0
  %3628 = vmatpush.msra.mxu0 0.0
  %3629 = vmatpush.msra.mxu0 0.0
  %3630 = vmatpush.msra.mxu0 0.0
  %3631 = vmatpush.msra.mxu0 0.0
  %3632 = vmatpush.msra.mxu0 0.0
  %3633 = vmatpush.msra.mxu0 %v107
  %3634 = vmatpush.msra.mxu0 %v56
  %3635 = vmatpush.msra.mxu0 %v55
  %3636 = vmatpush.msra.mxu0 %v54
  %3637 = vmatpush.msra.mxu0 %v53
  %3638 = vmatpush.msra.mxu0 %v52
  %3639 = vmatpush.msra.mxu0 %v51
  %3640 = vmatpush.msra.mxu0 %v50
  %3641 = vmatmul.f32.gmra.mxu0 %v3623
  %v3642 = vpop.f32.mrf.mxu0
  %v3643 = vadd.f32 %v99, %v3642
  %3644 = vdwg.mxu0
  %v3645 = vsub.f32 0.0, %v3643
  %v3646 = vmul.f32 %v3645, 1.442695
  %v3647 = vpow.pop %v3646
  %v3648 = vadd.f32 %v3647, 1.0
  %v3649 = vrcp.pop %v3648
  %v3650 = vmul.f32 %v3648, %v3649
  %v3651 = vsub.f32 1.0, %v3650
  %v3652 = vmul.f32 %v3649, %v3651
  %v3653 = vadd.f32 %v3649, %v3652
  %vm3654 = vweird.f32 %v3648
  %vm3655 = vweird.f32 %v3649
  %vm3656 = vmor %vm3654, %vm3655
  %v3657 = vsel %vm3656, %v3649, %v3653
  %v3658 = vand.u32 2147483647, %v3648
  %vm3659 = vcmp.eq.f32.partialorder %v3658, 8.507059e+37
  %v3660 = vand.u32 %v3648, 2147483648
  %v3661 = vor.u32 1.1754944e-38, %v3660
  %v3662 = vsel %vm3659, %v3661, %v3657
  %v3663 = vmul.f32 1.0, %v3662
  %v3664 = vtanh.pop %v3643
  %v3665 = vmul.f32 %v3663, %v2804
  %3667 = vrot.lane.b32.xlu0 %v3664, 64
  %v3668 = vpop.permute.xlu0 %3667
  %v3670 = vmul.f32 %v3663, %v3668
  %3672 = vrot.lane.b32.xlu0 %v3670, 32
  %v3673 = vpop.permute.xlu0 %3672
  %v3675 = vadd.f32 %v3665, %v3673
  %v3676 = vtanh.pop %v3675
  %3678 = vrot.lane.b32.xlu0 %v3676, 64
  %v3679 = vpop.permute.xlu0 %3678
  %v3681 = vmul.f32 %v3663, %v3679
  %v3682 = vmax.f32 %v3681, -20.0
  %v3683 = vmin.f32 %v3682, 20.0
  %3685 = vrot.lane.b32.xlu0 %v3683, 32
  %v3686 = vpop.permute.xlu0 %3685
  %v3687 = vsel %vm178, %v3686, 0
  %3689 = vmatpush.msra.mxu0 0.0
  %3690 = vmatpush.msra.mxu0 0.0
  %3691 = vmatpush.msra.mxu0 0.0
  %3692 = vmatpush.msra.mxu0 0.0
  %3693 = vmatpush.msra.mxu0 0.0
  %3694 = vmatpush.msra.mxu0 0.0
  %3695 = vmatpush.msra.mxu0 0.0
  %3696 = vmatpush.msra.mxu0 0.0
  %3697 = vmatpush.msra.mxu0 0.0
  %3698 = vmatpush.msra.mxu0 0.0
  %3699 = vmatpush.msra.mxu0 0.0
  %3700 = vmatpush.msra.mxu0 0.0
  %3701 = vmatpush.msra.mxu0 %v62
  %3702 = vmatpush.msra.mxu0 %v61
  %3703 = vmatpush.msra.mxu0 %v60
  %3704 = vmatpush.msra.mxu0 %v59
  %3705 = vmatmul.f32.gmra.mxu0 %v3687
  %v3706 = vpop.f32.mrf.mxu0
  %v3707 = vadd.f32 %v173, %v3706
  %3708 = vdwg.mxu0
  %v3710 = vrot.slane %v3707, 6
  %3711 = vrot.lane.b32.xlu0 %v3710, 106
  %v3712 = vpop.permute.xlu0 %3711
  %v3714 = vsel %vm105, %v3707, %v3712
  %v3715 = vtanh.pop %v3714
  %v3716 = vmax.f32 %v3714, 0.0
  %v3717 = vand.u32 2147483647, %v3714
  %v3718 = vsub.f32 0.0, %v3717
  %v3719 = vmul.f32 %v3718, 1.442695
  %v3720 = vpow.pop %v3719
  %v3721 = vadd.f32 %v3720, 1.0
  %v3722 = vlog2.pop %v3721
  %v3723 = vmul.f32 %v3722, 0.6931472
  %v3724 = vadd.f32 %v3716, %v3723
  %v3725 = vsub.f32 0.0, %v3714
  %v3726 = vmul.f32 %v3725, 1.442695
  %v3727 = vpow.pop %v3726
  %v3728 = vadd.f32 %v3727, 1.0
  %v3729 = vrcp.pop %v3728
  %v3730 = vmul.f32 %v3728, %v3729
  %v3731 = vsub.f32 1.0, %v3730
  %v3732 = vmul.f32 %v3729, %v3731
  %v3733 = vadd.f32 %v3729, %v3732
  %vm3734 = vweird.f32 %v3728
  %vm3735 = vweird.f32 %v3729
  %vm3736 = vmor %vm3734, %vm3735
  %v3737 = vsel %vm3736, %v3729, %v3733
  %v3738 = vand.u32 2147483647, %v3728
  %vm3739 = vcmp.eq.f32.partialorder %v3738, 8.507059e+37
  %v3740 = vand.u32 %v3728, 2147483648
  %v3741 = vor.u32 1.1754944e-38, %v3740
  %v3742 = vsel %vm3739, %v3741, %v3737
  %v3743 = vmul.f32 1.0, %v3742
  %v3744 = vsel %vm240, %v3714, -inf
  %3745 = vmax.xlane.f32.xlu0 %v3744
  %v3746 = vpop.xlane.xlu0 %3745
  %v3747 = vsub.f32 %v3714, %v3746
  %v3748 = vmul.f32 %v3747, 1.442695
  %v3749 = vpow.pop %v3748
  %3751 = vrot.lane.b32.xlu0 %v3749, 110
  %v3752 = vpop.permute.xlu0 %3751
  %v3754 = vsel %vm251, %v3752, 0.0
  %3755 = vadd.xlane.f32.xlu0 %v3754
  %v3756 = vpop.xlane.xlu0 %3755
  %v3757 = vrcp.pop %v3756
  %v3758 = vmul.f32 %v3756, %v3757
  %v3759 = vsub.f32 1.0, %v3758
  %v3760 = vmul.f32 %v3757, %v3759
  %v3761 = vadd.f32 %v3757, %v3760
  %vm3762 = vweird.f32 %v3756
  %vm3763 = vweird.f32 %v3757
  %vm3764 = vmor %vm3762, %vm3763
  %v3765 = vsel %vm3764, %v3757, %v3761
  %v3766 = vand.u32 2147483647, %v3756
  %vm3767 = vcmp.eq.f32.partialorder %v3766, 8.507059e+37
  %v3768 = vand.u32 %v3756, 2147483648
  %v3769 = vor.u32 1.1754944e-38, %v3768
  %v3770 = vsel %vm3767, %v3769, %v3765
  %v3771 = vmul.f32 %v3749, %v3770
  %v3773 = vrot.slane %v3715, 1
  %v3774 = vrot.slane %v3715, 2
  %v3775 = vrot.slane %v3715, 3
  %v3776 = vperm.slane %v3715, 0
  %v3777 = vperm.slane %v3773, 0
  %v3778 = vperm.slane %v3774, 0
  %v3779 = vperm.slane %v3775, 0
  %v3784 = vmul.f32 %v3530, %v3776
  %v3785 = vmul.f32 %v3531, %v3776
  %v3786 = vmul.f32 %v3532, %v3777
  %v3787 = vmul.f32 %v3533, %v3777
  %v3788 = vmul.f32 %v3530, %v3778
  %v3789 = vmul.f32 %v3531, %v3778
  %v3790 = vmul.f32 %v3532, %v3779
  %v3791 = vmul.f32 %v3533, %v3779
  %v3792 = vsel %vm290, %v3784, 0.0
  %3793 = vadd.xlane.f32.xlu0 %v3792
  %v3794 = vpop.xlane.xlu0 %3793
  %v3795 = vsel %vm290, %v3785, 0.0
  %3796 = vadd.xlane.f32.xlu0 %v3795
  %v3797 = vpop.xlane.xlu0 %3796
  %v3798 = vsel %vm290, %v3786, 0.0
  %3799 = vadd.xlane.f32.xlu0 %v3798
  %v3800 = vpop.xlane.xlu0 %3799
  %v3801 = vsel %vm290, %v3787, 0.0
  %3802 = vadd.xlane.f32.xlu0 %v3801
  %v3803 = vpop.xlane.xlu0 %3802
  %v3804 = vsel %vm290, %v3788, 0.0
  %3805 = vadd.xlane.f32.xlu0 %v3804
  %v3806 = vpop.xlane.xlu0 %3805
  %v3807 = vsel %vm290, %v3789, 0.0
  %3808 = vadd.xlane.f32.xlu0 %v3807
  %v3809 = vpop.xlane.xlu0 %3808
  %v3810 = vsel %vm290, %v3790, 0.0
  %3811 = vadd.xlane.f32.xlu0 %v3810
  %v3812 = vpop.xlane.xlu0 %3811
  %v3813 = vsel %vm290, %v3791, 0.0
  %3814 = vadd.xlane.f32.xlu0 %v3813
  %v3815 = vpop.xlane.xlu0 %3814
  %v3816 = vmul.f32 %v3715, %v3715
  %v3817 = vsel %vm316, %v3816, 0.0
  %3818 = vadd.xlane.f32.xlu0 %v3817
  %v3819 = vpop.xlane.xlu0 %3818
  %v3820 = vrsqrt.pop %v3819
  %v3821 = vmul.f32 %v3820, %v3819
  %v3822 = vmul.f32 %v3821, %v3820
  %v3823 = vmul.f32 0.5, %v3822
  %v3824 = vsub.f32 1.5, %v3823
  %v3825 = vmul.f32 %v3820, %v3824
  %v3826 = vmul.f32 %v3819, %v3825
  %vm3827 = vcmp.eq.f32.partialorder %v3819, inf
  %v3828 = vsel %vm3827, %v3819, %v3826
  %vm3829 = vcmp.eq.f32.partialorder %v3819, 0.0
  %v3830 = vand.u32 %v3819, 2147483648
  %v3831 = vsel %vm3829, %v3830, %v3828
  %v3832 = vmul.f32 %v3530, %v3530
  %v3833 = vmul.f32 %v3531, %v3531
  %v3834 = vmul.f32 %v3532, %v3532
  %v3835 = vmul.f32 %v3533, %v3533
  %v3836 = vsel %vm290, %v3832, 0.0
  %3837 = vadd.xlane.f32.xlu0 %v3836
  %v3838 = vpop.xlane.xlu0 %3837
  %v3839 = vsel %vm290, %v3833, 0.0
  %3840 = vadd.xlane.f32.xlu0 %v3839
  %v3841 = vpop.xlane.xlu0 %3840
  %v3842 = vsel %vm290, %v3834, 0.0
  %3843 = vadd.xlane.f32.xlu0 %v3842
  %v3844 = vpop.xlane.xlu0 %3843
  %v3845 = vsel %vm290, %v3835, 0.0
  %3846 = vadd.xlane.f32.xlu0 %v3845
  %v3847 = vpop.xlane.xlu0 %3846
  %v3848 = vrsqrt.pop %v3838
  %v3849 = vmul.f32 %v3848, %v3838
  %v3850 = vmul.f32 %v3849, %v3848
  %v3851 = vmul.f32 0.5, %v3850
  %v3852 = vsub.f32 1.5, %v3851
  %v3853 = vmul.f32 %v3848, %v3852
  %v3854 = vmul.f32 %v3838, %v3853
  %vm3855 = vcmp.eq.f32.partialorder %v3838, inf
  %v3856 = vsel %vm3855, %v3838, %v3854
  %vm3857 = vcmp.eq.f32.partialorder %v3838, 0.0
  %v3858 = vand.u32 %v3838, 2147483648
  %v3859 = vsel %vm3857, %v3858, %v3856
  %v3860 = vrsqrt.pop %v3841
  %v3861 = vmul.f32 %v3860, %v3841
  %v3862 = vmul.f32 %v3861, %v3860
  %v3863 = vmul.f32 0.5, %v3862
  %v3864 = vsub.f32 1.5, %v3863
  %v3865 = vmul.f32 %v3860, %v3864
  %v3866 = vmul.f32 %v3841, %v3865
  %vm3867 = vcmp.eq.f32.partialorder %v3841, inf
  %v3868 = vsel %vm3867, %v3841, %v3866
  %vm3869 = vcmp.eq.f32.partialorder %v3841, 0.0
  %v3870 = vand.u32 %v3841, 2147483648
  %v3871 = vsel %vm3869, %v3870, %v3868
  %v3872 = vrsqrt.pop %v3844
  %v3873 = vmul.f32 %v3872, %v3844
  %v3874 = vmul.f32 %v3873, %v3872
  %v3875 = vmul.f32 0.5, %v3874
  %v3876 = vsub.f32 1.5, %v3875
  %v3877 = vmul.f32 %v3872, %v3876
  %v3878 = vmul.f32 %v3844, %v3877
  %vm3879 = vcmp.eq.f32.partialorder %v3844, inf
  %v3880 = vsel %vm3879, %v3844, %v3878
  %vm3881 = vcmp.eq.f32.partialorder %v3844, 0.0
  %v3882 = vand.u32 %v3844, 2147483648
  %v3883 = vsel %vm3881, %v3882, %v3880
  %v3884 = vrsqrt.pop %v3847
  %v3885 = vmul.f32 %v3884, %v3847
  %v3886 = vmul.f32 %v3885, %v3884
  %v3887 = vmul.f32 0.5, %v3886
  %v3888 = vsub.f32 1.5, %v3887
  %v3889 = vmul.f32 %v3884, %v3888
  %v3890 = vmul.f32 %v3847, %v3889
  %vm3891 = vcmp.eq.f32.partialorder %v3847, inf
  %v3892 = vsel %vm3891, %v3847, %v3890
  %vm3893 = vcmp.eq.f32.partialorder %v3847, 0.0
  %v3894 = vand.u32 %v3847, 2147483648
  %v3895 = vsel %vm3893, %v3894, %v3892
  %v3900 = vperm.slane %v3859, %v401
  %v3901 = vperm.slane %v3871, %v403
  %v3902 = vsel %vm405, %v3901, %v3900
  %v3903 = vperm.slane %v3883, %v401
  %v3904 = vperm.slane %v3895, %v403
  %v3905 = vsel %vm405, %v3904, %v3903
  %v3906 = vsel %vm410, %v3905, %v3902
  %v3907 = vsel %vm412, %v3902, %v3906
  %v3908 = vsel %vm414, %v3905, %v3907
  %v3910 = vmul.f32 %v3831, %v3908
  %v3911 = vadd.f32 %v3910, 1e-08
  %v3913 = vperm.slane %v3911, 0
  %v3914 = vlaneseq
  %v3915 = vshrl.u32 %v3914, 7
  %3917 = vset.pattern.permute.xlu0 %v3915
  %3918 = vperm.xlu0 %3917, %v3913
  %v3919 = vpop.permute.xlu0 %3918
  %v3920 = vlaneseq
  %v3921 = vshrl.u32 %v3920, 7
  %v3922 = vadd.s32 %v3921, 8
  %3923 = vset.pattern.permute.xlu0 %v3922
  %3924 = vperm.xlu0 %3923, %v3913
  %v3925 = vpop.permute.xlu0 %3924
  %v3926 = vperm.slane %v3911, 1
  %v3927 = vlaneseq
  %v3928 = vshrl.u32 %v3927, 7
  %3930 = vset.pattern.permute.xlu0 %v3928
  %3931 = vperm.xlu0 %3930, %v3926
  %v3932 = vpop.permute.xlu0 %3931
  %v3933 = vlaneseq
  %v3934 = vshrl.u32 %v3933, 7
  %v3935 = vadd.s32 %v3934, 8
  %3936 = vset.pattern.permute.xlu0 %v3935
  %3937 = vperm.xlu0 %3936, %v3926
  %v3938 = vpop.permute.xlu0 %3937
  %v3939 = vperm.slane %v3911, 2
  %v3940 = vlaneseq
  %v3941 = vshrl.u32 %v3940, 7
  %3943 = vset.pattern.permute.xlu0 %v3941
  %3944 = vperm.xlu0 %3943, %v3939
  %v3945 = vpop.permute.xlu0 %3944
  %v3946 = vlaneseq
  %v3947 = vshrl.u32 %v3946, 7
  %v3948 = vadd.s32 %v3947, 8
  %3949 = vset.pattern.permute.xlu0 %v3948
  %3950 = vperm.xlu0 %3949, %v3939
  %v3951 = vpop.permute.xlu0 %3950
  %v3952 = vperm.slane %v3911, 3
  %v3953 = vlaneseq
  %v3954 = vshrl.u32 %v3953, 7
  %3956 = vset.pattern.permute.xlu0 %v3954
  %3957 = vperm.xlu0 %3956, %v3952
  %v3958 = vpop.permute.xlu0 %3957
  %v3959 = vlaneseq
  %v3960 = vshrl.u32 %v3959, 7
  %v3961 = vadd.s32 %v3960, 8
  %3962 = vset.pattern.permute.xlu0 %v3961
  %3963 = vperm.xlu0 %3962, %v3952
  %v3964 = vpop.permute.xlu0 %3963
  %v3973 = vrcp.pop %v3919
  %v3974 = vmul.f32 %v3919, %v3973
  %v3975 = vsub.f32 1.0, %v3974
  %v3976 = vmul.f32 %v3973, %v3975
  %v3977 = vadd.f32 %v3973, %v3976
  %vm3978 = vweird.f32 %v3919
  %vm3979 = vweird.f32 %v3973
  %vm3980 = vmor %vm3978, %vm3979
  %v3981 = vsel %vm3980, %v3973, %v3977
  %v3982 = vand.u32 2147483647, %v3919
  %vm3983 = vcmp.eq.f32.partialorder %v3982, 8.507059e+37
  %v3984 = vand.u32 %v3919, 2147483648
  %v3985 = vor.u32 1.1754944e-38, %v3984
  %v3986 = vsel %vm3983, %v3985, %v3981
  %v3987 = vmul.f32 %v3794, %v3986
  %v3988 = vrcp.pop %v3925
  %v3989 = vmul.f32 %v3925, %v3988
  %v3990 = vsub.f32 1.0, %v3989
  %v3991 = vmul.f32 %v3988, %v3990
  %v3992 = vadd.f32 %v3988, %v3991
  %vm3993 = vweird.f32 %v3925
  %vm3994 = vweird.f32 %v3988
  %vm3995 = vmor %vm3993, %vm3994
  %v3996 = vsel %vm3995, %v3988, %v3992
  %v3997 = vand.u32 2147483647, %v3925
  %vm3998 = vcmp.eq.f32.partialorder %v3997, 8.507059e+37
  %v3999 = vand.u32 %v3925, 2147483648
  %v4000 = vor.u32 1.1754944e-38, %v3999
  %v4001 = vsel %vm3998, %v4000, %v3996
  %v4002 = vmul.f32 %v3797, %v4001
  %v4003 = vrcp.pop %v3932
  %v4004 = vmul.f32 %v3932, %v4003
  %v4005 = vsub.f32 1.0, %v4004
  %v4006 = vmul.f32 %v4003, %v4005
  %v4007 = vadd.f32 %v4003, %v4006
  %vm4008 = vweird.f32 %v3932
  %vm4009 = vweird.f32 %v4003
  %vm4010 = vmor %vm4008, %vm4009
  %v4011 = vsel %vm4010, %v4003, %v4007
  %v4012 = vand.u32 2147483647, %v3932
  %vm4013 = vcmp.eq.f32.partialorder %v4012, 8.507059e+37
  %v4014 = vand.u32 %v3932, 2147483648
  %v4015 = vor.u32 1.1754944e-38, %v4014
  %v4016 = vsel %vm4013, %v4015, %v4011
  %v4017 = vmul.f32 %v3800, %v4016
  %v4018 = vrcp.pop %v3938
  %v4019 = vmul.f32 %v3938, %v4018
  %v4020 = vsub.f32 1.0, %v4019
  %v4021 = vmul.f32 %v4018, %v4020
  %v4022 = vadd.f32 %v4018, %v4021
  %vm4023 = vweird.f32 %v3938
  %vm4024 = vweird.f32 %v4018
  %vm4025 = vmor %vm4023, %vm4024
  %v4026 = vsel %vm4025, %v4018, %v4022
  %v4027 = vand.u32 2147483647, %v3938
  %vm4028 = vcmp.eq.f32.partialorder %v4027, 8.507059e+37
  %v4029 = vand.u32 %v3938, 2147483648
  %v4030 = vor.u32 1.1754944e-38, %v4029
  %v4031 = vsel %vm4028, %v4030, %v4026
  %v4032 = vmul.f32 %v3803, %v4031
  %v4033 = vrcp.pop %v3945
  %v4034 = vmul.f32 %v3945, %v4033
  %v4035 = vsub.f32 1.0, %v4034
  %v4036 = vmul.f32 %v4033, %v4035
  %v4037 = vadd.f32 %v4033, %v4036
  %vm4038 = vweird.f32 %v3945
  %vm4039 = vweird.f32 %v4033
  %vm4040 = vmor %vm4038, %vm4039
  %v4041 = vsel %vm4040, %v4033, %v4037
  %v4042 = vand.u32 2147483647, %v3945
  %vm4043 = vcmp.eq.f32.partialorder %v4042, 8.507059e+37
  %v4044 = vand.u32 %v3945, 2147483648
  %v4045 = vor.u32 1.1754944e-38, %v4044
  %v4046 = vsel %vm4043, %v4045, %v4041
  %v4047 = vmul.f32 %v3806, %v4046
  %v4048 = vrcp.pop %v3951
  %v4049 = vmul.f32 %v3951, %v4048
  %v4050 = vsub.f32 1.0, %v4049
  %v4051 = vmul.f32 %v4048, %v4050
  %v4052 = vadd.f32 %v4048, %v4051
  %vm4053 = vweird.f32 %v3951
  %vm4054 = vweird.f32 %v4048
  %vm4055 = vmor %vm4053, %vm4054
  %v4056 = vsel %vm4055, %v4048, %v4052
  %v4057 = vand.u32 2147483647, %v3951
  %vm4058 = vcmp.eq.f32.partialorder %v4057, 8.507059e+37
  %v4059 = vand.u32 %v3951, 2147483648
  %v4060 = vor.u32 1.1754944e-38, %v4059
  %v4061 = vsel %vm4058, %v4060, %v4056
  %v4062 = vmul.f32 %v3809, %v4061
  %v4063 = vrcp.pop %v3958
  %v4064 = vmul.f32 %v3958, %v4063
  %v4065 = vsub.f32 1.0, %v4064
  %v4066 = vmul.f32 %v4063, %v4065
  %v4067 = vadd.f32 %v4063, %v4066
  %vm4068 = vweird.f32 %v3958
  %vm4069 = vweird.f32 %v4063
  %vm4070 = vmor %vm4068, %vm4069
  %v4071 = vsel %vm4070, %v4063, %v4067
  %v4072 = vand.u32 2147483647, %v3958
  %vm4073 = vcmp.eq.f32.partialorder %v4072, 8.507059e+37
  %v4074 = vand.u32 %v3958, 2147483648
  %v4075 = vor.u32 1.1754944e-38, %v4074
  %v4076 = vsel %vm4073, %v4075, %v4071
  %v4077 = vmul.f32 %v3812, %v4076
  %v4078 = vrcp.pop %v3964
  %v4079 = vmul.f32 %v3964, %v4078
  %v4080 = vsub.f32 1.0, %v4079
  %v4081 = vmul.f32 %v4078, %v4080
  %v4082 = vadd.f32 %v4078, %v4081
  %vm4083 = vweird.f32 %v3964
  %vm4084 = vweird.f32 %v4078
  %vm4085 = vmor %vm4083, %vm4084
  %v4086 = vsel %vm4085, %v4078, %v4082
  %v4087 = vand.u32 2147483647, %v3964
  %vm4088 = vcmp.eq.f32.partialorder %v4087, 8.507059e+37
  %v4089 = vand.u32 %v3964, 2147483648
  %v4090 = vor.u32 1.1754944e-38, %v4089
  %v4091 = vsel %vm4088, %v4090, %v4086
  %v4092 = vmul.f32 %v3815, %v4091
  %4094 = vset.pattern.permute.xlu0 16
  %4095 = vperm.xlu0 %4094, %v3724
  %v4096 = vpop.permute.xlu0 %4095
  %4106 = vset.pattern.permute.xlu0 0
  %4107 = vperm.xlu0 %4106, %v3987
  %v4108 = vpop.permute.xlu0 %4107
  %4109 = vset.pattern.permute.xlu0 0
  %4110 = vperm.xlu0 %4109, %v4002
  %v4111 = vpop.permute.xlu0 %4110
  %4112 = vset.pattern.permute.xlu0 0
  %4113 = vperm.xlu0 %4112, %v4017
  %v4114 = vpop.permute.xlu0 %4113
  %4115 = vset.pattern.permute.xlu0 0
  %4116 = vperm.xlu0 %4115, %v4032
  %v4117 = vpop.permute.xlu0 %4116
  %4118 = vset.pattern.permute.xlu0 0
  %4119 = vperm.xlu0 %4118, %v4047
  %v4120 = vpop.permute.xlu0 %4119
  %4121 = vset.pattern.permute.xlu0 0
  %4122 = vperm.xlu0 %4121, %v4062
  %v4123 = vpop.permute.xlu0 %4122
  %4124 = vset.pattern.permute.xlu0 0
  %4125 = vperm.xlu0 %4124, %v4077
  %v4126 = vpop.permute.xlu0 %4125
  %4127 = vset.pattern.permute.xlu0 0
  %4128 = vperm.xlu0 %4127, %v4092
  %v4129 = vpop.permute.xlu0 %4128
  %v4130 = vperm.slane %v4108, %v401
  %v4131 = vperm.slane %v4111, %v403
  %v4132 = vsel %vm405, %v4131, %v4130
  %v4133 = vperm.slane %v4114, %v401
  %v4134 = vperm.slane %v4117, %v403
  %v4135 = vsel %vm405, %v4134, %v4133
  %v4136 = vperm.slane %v4120, %v401
  %v4137 = vperm.slane %v4123, %v403
  %v4138 = vsel %vm405, %v4137, %v4136
  %v4139 = vperm.slane %v4126, %v401
  %v4140 = vperm.slane %v4129, %v403
  %v4141 = vsel %vm405, %v4140, %v4139
  %v4142 = vsel %vm410, %v4135, %v4132
  %v4143 = vsel %vm412, %v4138, %v4142
  %v4144 = vsel %vm414, %v4141, %v4143
  %v4146 = vmul.f32 %v4096, %v4144
  %v4147 = vsel %vm316, %v4146, -inf
  %4148 = vmax.xlane.f32.xlu0 %v4147
  %v4149 = vpop.xlane.xlu0 %4148
  %v4150 = vsub.f32 %v4146, %v4149
  %v4151 = vmul.f32 %v4150, 1.442695
  %v4152 = vpow.pop %v4151
  %v4153 = vsel %vm316, %v4152, 0.0
  %4154 = vadd.xlane.f32.xlu0 %v4153
  %v4155 = vpop.xlane.xlu0 %4154
  %v4156 = vrcp.pop %v4155
  %v4157 = vmul.f32 %v4155, %v4156
  %v4158 = vsub.f32 1.0, %v4157
  %v4159 = vmul.f32 %v4156, %v4158
  %v4160 = vadd.f32 %v4156, %v4159
  %vm4161 = vweird.f32 %v4155
  %vm4162 = vweird.f32 %v4156
  %vm4163 = vmor %vm4161, %vm4162
  %v4164 = vsel %vm4163, %v4156, %v4160
  %v4165 = vand.u32 2147483647, %v4155
  %vm4166 = vcmp.eq.f32.partialorder %v4165, 8.507059e+37
  %v4167 = vand.u32 %v4155, 2147483648
  %v4168 = vor.u32 1.1754944e-38, %v4167
  %v4169 = vsel %vm4166, %v4168, %v4164
  %v4170 = vmul.f32 %v4152, %v4169
  %4172 = vset.pattern.permute.xlu0 17
  %4173 = vperm.xlu0 %4172, %v3743
  %v4174 = vpop.permute.xlu0 %4173
  %v4176 = vmul.f32 %v4174, %v4170
  %v4177 = vsub.f32 1.0, %v3743
  %4179 = vset.pattern.permute.xlu0 17
  %4180 = vperm.xlu0 %4179, %v4177
  %v4181 = vpop.permute.xlu0 %4180
  %v4183 = vmul.f32 %v4181, %v3375
  %v4184 = vadd.f32 %v4176, %v4183
  %4186 = vset.pattern.permute.xlu0 18
  %4187 = vperm.xlu0 %4186, %v3771
  %v4188 = vpop.permute.xlu0 %4187
  %v4190 = vmul.f32 %v4188, %v4184
  %v4191 = vadd.f32 %v4190, 0.0
  %4193 = vrot.lane.b32.xlu0 %v4184, 113
  %v4194 = vpop.permute.xlu0 %4193
  %4196 = vrot.lane.b32.xlu0 %v4184, 1
  %v4197 = vpop.permute.xlu0 %4196
  %v4199 = vsel %vm706, %v4194, %v4197
  %4200 = vset.pattern.permute.xlu0 19
  %4201 = vperm.xlu0 %4200, %v3771
  %v4202 = vpop.permute.xlu0 %4201
  %v4204 = vmul.f32 %v4202, %v4199
  %v4205 = vadd.f32 %v4191, %v4204
  %4206 = vrot.lane.b32.xlu0 %v4184, 127
  %v4207 = vpop.permute.xlu0 %4206
  %4209 = vrot.lane.b32.xlu0 %v4184, 15
  %v4210 = vpop.permute.xlu0 %4209
  %v4212 = vsel %vm720, %v4207, %v4210
  %4213 = vset.pattern.permute.xlu0 20
  %4214 = vperm.xlu0 %4213, %v3771
  %v4215 = vpop.permute.xlu0 %4214
  %v4217 = vmul.f32 %v4215, %v4212
  %v4218 = vadd.f32 %v4205, %v4217
  %v4219 = vadd.f32 %v4218, 1e-08
  %v4220 = vlog2.pop %v4219
  %v4221 = vmul.f32 %v4220, 0.6931472
  %4222 = vset.pattern.permute.xlu0 21
  %4223 = vperm.xlu0 %4222, %v3724
  %v4224 = vpop.permute.xlu0 %4223
  %v4226 = vmul.f32 %v4224, %v4221
  %v4227 = vmul.f32 %v4226, 1.442695
  %v4228 = vpow.pop %v4227
  %v4229 = vsel %vm316, %v4228, 0.0
  %4230 = vadd.xlane.f32.xlu0 %v4229
  %v4231 = vpop.xlane.xlu0 %4230
  %v4232 = vrcp.pop %v4231
  %v4233 = vmul.f32 %v4231, %v4232
  %v4234 = vsub.f32 1.0, %v4233
  %v4235 = vmul.f32 %v4232, %v4234
  %v4236 = vadd.f32 %v4232, %v4235
  %vm4237 = vweird.f32 %v4231
  %vm4238 = vweird.f32 %v4232
  %vm4239 = vmor %vm4237, %vm4238
  %v4240 = vsel %vm4239, %v4232, %v4236
  %v4241 = vand.u32 2147483647, %v4231
  %vm4242 = vcmp.eq.f32.partialorder %v4241, 8.507059e+37
  %v4243 = vand.u32 %v4231, 2147483648
  %v4244 = vor.u32 1.1754944e-38, %v4243
  %v4245 = vsel %vm4242, %v4244, %v4240
  %v4246 = vmul.f32 %v4228, %v4245
  %v4247 = vperm.slane %v4246, 0
  %v4248 = vlaneseq
  %v4249 = vshrl.u32 %v4248, 7
  %4251 = vset.pattern.permute.xlu0 %v4249
  %4252 = vperm.xlu0 %4251, %v4247
  %v4253 = vpop.permute.xlu0 %4252
  %v4254 = vlaneseq
  %v4255 = vshrl.u32 %v4254, 7
  %v4256 = vadd.s32 %v4255, 8
  %4257 = vset.pattern.permute.xlu0 %v4256
  %4258 = vperm.xlu0 %4257, %v4247
  %v4259 = vpop.permute.xlu0 %4258
  %v4260 = vperm.slane %v4246, 1
  %v4261 = vlaneseq
  %v4262 = vshrl.u32 %v4261, 7
  %4264 = vset.pattern.permute.xlu0 %v4262
  %4265 = vperm.xlu0 %4264, %v4260
  %v4266 = vpop.permute.xlu0 %4265
  %v4267 = vlaneseq
  %v4268 = vshrl.u32 %v4267, 7
  %v4269 = vadd.s32 %v4268, 8
  %4270 = vset.pattern.permute.xlu0 %v4269
  %4271 = vperm.xlu0 %4270, %v4260
  %v4272 = vpop.permute.xlu0 %4271
  %v4273 = vmul.f32 %v4253, %v3530
  %v4274 = vmul.f32 %v4259, %v3531
  %v4275 = vmul.f32 %v4266, %v3532
  %v4276 = vmul.f32 %v4272, %v3533
  %v4277 = vsel %vm290, %v4273, 0.0
  %v4278 = vsel %vm290, %v4274, 0.0
  %v4279 = vadd.f32 %v4277, %v4278
  %v4280 = vrot.slane %v4279, 4
  %v4281 = vadd.f32 %v4279, %v4280
  %v4282 = vrot.slane %v4281, 2
  %v4283 = vadd.f32 %v4281, %v4282
  %v4284 = vrot.slane %v4283, 1
  %v4285 = vadd.f32 %v4283, %v4284
  %v4286 = vsel %vm290, %v4275, 0.0
  %v4287 = vsel %vm290, %v4276, 0.0
  %v4288 = vadd.f32 %v4286, %v4287
  %v4289 = vrot.slane %v4288, 4
  %v4290 = vadd.f32 %v4288, %v4289
  %v4291 = vrot.slane %v4290, 2
  %v4292 = vadd.f32 %v4290, %v4291
  %v4293 = vrot.slane %v4292, 1
  %v4294 = vadd.f32 %v4292, %v4293
  %v4295 = vsub.f32 0.0, %v3707
  %v4296 = vmul.f32 %v4295, 1.442695
  %v4297 = vpow.pop %v4296
  %v4298 = vadd.f32 %v4297, 1.0
  %v4299 = vrcp.pop %v4298
  %v4300 = vmul.f32 %v4298, %v4299
  %v4301 = vsub.f32 1.0, %v4300
  %v4302 = vmul.f32 %v4299, %v4301
  %v4303 = vadd.f32 %v4299, %v4302
  %vm4304 = vweird.f32 %v4298
  %vm4305 = vweird.f32 %v4299
  %vm4306 = vmor %vm4304, %vm4305
  %v4307 = vsel %vm4306, %v4299, %v4303
  %v4308 = vand.u32 2147483647, %v4298
  %vm4309 = vcmp.eq.f32.partialorder %v4308, 8.507059e+37
  %v4310 = vand.u32 %v4298, 2147483648
  %v4311 = vor.u32 1.1754944e-38, %v4310
  %v4312 = vsel %vm4309, %v4311, %v4307
  %v4313 = vmul.f32 1.0, %v4312
  %v4314 = vtanh.pop %v3707
  %v4315 = vperm.slane %v4246, 2
  %v4316 = vlaneseq
  %v4317 = vshrl.u32 %v4316, 7
  %4319 = vset.pattern.permute.xlu0 %v4317
  %4320 = vperm.xlu0 %4319, %v4315
  %v4321 = vpop.permute.xlu0 %4320
  %v4322 = vlaneseq
  %v4323 = vshrl.u32 %v4322, 7
  %v4324 = vadd.s32 %v4323, 8
  %4325 = vset.pattern.permute.xlu0 %v4324
  %4326 = vperm.xlu0 %4325, %v4315
  %v4327 = vpop.permute.xlu0 %4326
  %v4328 = vperm.slane %v4246, 3
  %v4329 = vlaneseq
  %v4330 = vshrl.u32 %v4329, 7
  %4332 = vset.pattern.permute.xlu0 %v4330
  %4333 = vperm.xlu0 %4332, %v4328
  %v4334 = vpop.permute.xlu0 %4333
  %v4335 = vlaneseq
  %v4336 = vshrl.u32 %v4335, 7
  %v4337 = vadd.s32 %v4336, 8
  %4338 = vset.pattern.permute.xlu0 %v4337
  %4339 = vperm.xlu0 %4338, %v4328
  %v4340 = vpop.permute.xlu0 %4339
  %v4342 = vrot.slane %v4314, 1
  %v4344 = vrot.slane %v4313, 1
  %v4345 = vperm.slane %v4313, 0
  %v4346 = vperm.slane %v4344, 0
  %4347 = vrot.lane.b32.xlu0 %v4345, 84
  %v4348 = vpop.permute.xlu0 %4347
  %4349 = vrot.lane.b32.xlu0 %v4346, 84
  %v4350 = vpop.permute.xlu0 %4349
  %v4353 = vmul.f32 %v3530, %v4348
  %v4354 = vmul.f32 %v3531, %v4348
  %v4355 = vmul.f32 %v3532, %v4350
  %v4356 = vmul.f32 %v3533, %v4350
  %v4357 = vperm.slane %v4314, 0
  %v4358 = vperm.slane %v4342, 0
  %4365 = vrot.lane.b32.xlu0 %v4353, 60
  %v4366 = vpop.permute.xlu0 %4365
  %4367 = vrot.lane.b32.xlu0 %v4354, 60
  %v4368 = vpop.permute.xlu0 %4367
  %4369 = vrot.lane.b32.xlu0 %v4355, 60
  %v4370 = vpop.permute.xlu0 %4369
  %4371 = vrot.lane.b32.xlu0 %v4356, 60
  %v4372 = vpop.permute.xlu0 %4371
  %v4377 = vsub.f32 %v4357, %v4366
  %v4378 = vsub.f32 %v4357, %v4368
  %v4379 = vsub.f32 %v4358, %v4370
  %v4380 = vsub.f32 %v4358, %v4372
  %v4381 = vmul.f32 %v4321, %v4377
  %v4382 = vmul.f32 %v4327, %v4378
  %v4383 = vmul.f32 %v4334, %v4379
  %v4384 = vmul.f32 %v4340, %v4380
  %4389 = vrot.lane.b32.xlu0 %v4381, 68
  %v4390 = vpop.permute.xlu0 %4389
  %4391 = vrot.lane.b32.xlu0 %v4382, 68
  %v4392 = vpop.permute.xlu0 %4391
  %4393 = vrot.lane.b32.xlu0 %v4383, 68
  %v4394 = vpop.permute.xlu0 %4393
  %4395 = vrot.lane.b32.xlu0 %v4384, 68
  %v4396 = vpop.permute.xlu0 %4395
  %v4401 = vadd.f32 %v3530, %v4390
  %v4402 = vadd.f32 %v3531, %v4392
  %v4403 = vadd.f32 %v3532, %v4394
  %v4404 = vadd.f32 %v3533, %v4396
  %v4408 = vsel %vm410, %v4294, %v4285
  %4409 = vrot.lane.b32.xlu0 %v4408, 32
  %v4410 = vpop.permute.xlu0 %4409
  %v4412 = vsel %vm178, %v3686, %v4410
  %v4414 = vsel %vm925, %v4412, 0
  %4416 = vmatpush.msra.mxu0 0.0
  %4417 = vmatpush.msra.mxu0 0.0
  %4418 = vmatpush.msra.mxu0 0.0
  %4419 = vmatpush.msra.mxu0 0.0
  %4420 = vmatpush.msra.mxu0 0.0
  %4421 = vmatpush.msra.mxu0 0.0
  %4422 = vmatpush.msra.mxu0 0.0
  %4423 = vmatpush.msra.mxu0 0.0
  %4424 = vmatpush.msra.mxu0 0.0
  %4425 = vmatpush.msra.mxu0 0.0
  %4426 = vmatpush.msra.mxu0 %v69
  %4427 = vmatpush.msra.mxu0 %v68
  %4428 = vmatpush.msra.mxu0 %v67
  %4429 = vmatpush.msra.mxu0 %v66
  %4430 = vmatpush.msra.mxu0 %v65
  %4431 = vmatpush.msra.mxu0 %v64
  %4432 = vmatmul.f32.gmra.mxu0 %v4414
  %v4433 = vpop.f32.mrf.mxu0
  %v4434 = vadd.f32 %v923, %v4433
  %4435 = vdwg.mxu0
  %v4436 = vmax.f32 %v4434, -20.0
  %v4437 = vmin.f32 %v4436, 20.0
  %v4439 = vsel %vm178, %v4437, 0
  %4441 = vmatpush.msra.mxu0 0.0
  %4442 = vmatpush.msra.mxu0 0.0
  %4443 = vmatpush.msra.mxu0 0.0
  %4444 = vmatpush.msra.mxu0 0.0
  %4445 = vmatpush.msra.mxu0 0.0
  %4446 = vmatpush.msra.mxu0 0.0
  %4447 = vmatpush.msra.mxu0 0.0
  %4448 = vmatpush.msra.mxu0 0.0
  %4449 = vmatpush.msra.mxu0 0.0
  %4450 = vmatpush.msra.mxu0 0.0
  %4451 = vmatpush.msra.mxu0 0.0
  %4452 = vmatpush.msra.mxu0 0.0
  %4453 = vmatpush.msra.mxu0 %v74
  %4454 = vmatpush.msra.mxu0 %v73
  %4455 = vmatpush.msra.mxu0 %v72
  %4456 = vmatpush.msra.mxu0 %v71
  %4457 = vmatmul.f32.gmra.mxu0 %v4439
  %v4458 = vpop.f32.mrf.mxu0
  %v4459 = vadd.f32 %v952, %v4458
  %4460 = vdwg.mxu0
  %v4461 = vsub.f32 0.0, %v4459
  %v4462 = vmul.f32 %v4461, 1.442695
  %v4463 = vpow.pop %v4462
  %v4464 = vadd.f32 %v4463, 1.0
  %v4465 = vrcp.pop %v4464
  %v4466 = vmul.f32 %v4464, %v4465
  %v4467 = vsub.f32 1.0, %v4466
  %v4468 = vmul.f32 %v4465, %v4467
  %v4469 = vadd.f32 %v4465, %v4468
  %vm4470 = vweird.f32 %v4464
  %vm4471 = vweird.f32 %v4465
  %vm4472 = vmor %vm4470, %vm4471
  %v4473 = vsel %vm4472, %v4465, %v4469
  %v4474 = vand.u32 2147483647, %v4464
  %vm4475 = vcmp.eq.f32.partialorder %v4474, 8.507059e+37
  %v4476 = vand.u32 %v4464, 2147483648
  %v4477 = vor.u32 1.1754944e-38, %v4476
  %v4478 = vsel %vm4475, %v4477, %v4473
  %v4479 = vmul.f32 1.0, %v4478
  %s4480 = scalar_lea.vmem %s15, 8
  %4481 = vst.msk [vmem:[%s4480] sm:$0x3] %vm996, %v4479
  %s4482 = scalar_lea.vmem %s0, 10
  %v4483 = vld [vmem:[%s4482] sm:$0x3]
  %4484 = vrot.lane.b32.xlu0 %v4408, 10
  %v4485 = vpop.permute.xlu0 %4484
  %4488 = vrot.lane.b32.xlu0 %v3681, 58
  %v4489 = vpop.permute.xlu0 %4488
  %v4491 = vsel %vm94, %v4483, %v4485
  %v4492 = vsel %vm96, %v4491, %v4489
  %v4494 = vsel %vm101, %v4492, 0
  %4496 = vmatpush.msra.mxu0 0.0
  %4497 = vmatpush.msra.mxu0 0.0
  %4498 = vmatpush.msra.mxu0 0.0
  %4499 = vmatpush.msra.mxu0 0.0
  %4500 = vmatpush.msra.mxu0 0.0
  %4501 = vmatpush.msra.mxu0 0.0
  %4502 = vmatpush.msra.mxu0 0.0
  %4503 = vmatpush.msra.mxu0 0.0
  %4504 = vmatpush.msra.mxu0 %v107
  %4505 = vmatpush.msra.mxu0 %v56
  %4506 = vmatpush.msra.mxu0 %v55
  %4507 = vmatpush.msra.mxu0 %v54
  %4508 = vmatpush.msra.mxu0 %v53
  %4509 = vmatpush.msra.mxu0 %v52
  %4510 = vmatpush.msra.mxu0 %v51
  %4511 = vmatpush.msra.mxu0 %v50
  %4512 = vmatmul.f32.gmra.mxu0 %v4494
  %v4513 = vpop.f32.mrf.mxu0
  %v4514 = vadd.f32 %v99, %v4513
  %4515 = vdwg.mxu0
  %v4516 = vsub.f32 0.0, %v4514
  %v4517 = vmul.f32 %v4516, 1.442695
  %v4518 = vpow.pop %v4517
  %v4519 = vadd.f32 %v4518, 1.0
  %v4520 = vrcp.pop %v4519
  %v4521 = vmul.f32 %v4519, %v4520
  %v4522 = vsub.f32 1.0, %v4521
  %v4523 = vmul.f32 %v4520, %v4522
  %v4524 = vadd.f32 %v4520, %v4523
  %vm4525 = vweird.f32 %v4519
  %vm4526 = vweird.f32 %v4520
  %vm4527 = vmor %vm4525, %vm4526
  %v4528 = vsel %vm4527, %v4520, %v4524
  %v4529 = vand.u32 2147483647, %v4519
  %vm4530 = vcmp.eq.f32.partialorder %v4529, 8.507059e+37
  %v4531 = vand.u32 %v4519, 2147483648
  %v4532 = vor.u32 1.1754944e-38, %v4531
  %v4533 = vsel %vm4530, %v4532, %v4528
  %v4534 = vmul.f32 1.0, %v4533
  %v4535 = vtanh.pop %v4514
  %v4536 = vmul.f32 %v4534, %v3675
  %4538 = vrot.lane.b32.xlu0 %v4535, 64
  %v4539 = vpop.permute.xlu0 %4538
  %v4541 = vmul.f32 %v4534, %v4539
  %4543 = vrot.lane.b32.xlu0 %v4541, 32
  %v4544 = vpop.permute.xlu0 %4543
  %v4546 = vadd.f32 %v4536, %v4544
  %v4547 = vtanh.pop %v4546
  %4549 = vrot.lane.b32.xlu0 %v4547, 64
  %v4550 = vpop.permute.xlu0 %4549
  %v4552 = vmul.f32 %v4534, %v4550
  %v4553 = vmax.f32 %v4552, -20.0
  %v4554 = vmin.f32 %v4553, 20.0
  %4556 = vrot.lane.b32.xlu0 %v4554, 32
  %v4557 = vpop.permute.xlu0 %4556
  %v4558 = vsel %vm178, %v4557, 0
  %4560 = vmatpush.msra.mxu0 0.0
  %4561 = vmatpush.msra.mxu0 0.0
  %4562 = vmatpush.msra.mxu0 0.0
  %4563 = vmatpush.msra.mxu0 0.0
  %4564 = vmatpush.msra.mxu0 0.0
  %4565 = vmatpush.msra.mxu0 0.0
  %4566 = vmatpush.msra.mxu0 0.0
  %4567 = vmatpush.msra.mxu0 0.0
  %4568 = vmatpush.msra.mxu0 0.0
  %4569 = vmatpush.msra.mxu0 0.0
  %4570 = vmatpush.msra.mxu0 0.0
  %4571 = vmatpush.msra.mxu0 0.0
  %4572 = vmatpush.msra.mxu0 %v62
  %4573 = vmatpush.msra.mxu0 %v61
  %4574 = vmatpush.msra.mxu0 %v60
  %4575 = vmatpush.msra.mxu0 %v59
  %4576 = vmatmul.f32.gmra.mxu0 %v4558
  %v4577 = vpop.f32.mrf.mxu0
  %v4578 = vadd.f32 %v173, %v4577
  %4579 = vdwg.mxu0
  %v4581 = vrot.slane %v4578, 6
  %4582 = vrot.lane.b32.xlu0 %v4581, 106
  %v4583 = vpop.permute.xlu0 %4582
  %v4585 = vsel %vm105, %v4578, %v4583
  %v4586 = vtanh.pop %v4585
  %v4587 = vmax.f32 %v4585, 0.0
  %v4588 = vand.u32 2147483647, %v4585
  %v4589 = vsub.f32 0.0, %v4588
  %v4590 = vmul.f32 %v4589, 1.442695
  %v4591 = vpow.pop %v4590
  %v4592 = vadd.f32 %v4591, 1.0
  %v4593 = vlog2.pop %v4592
  %v4594 = vmul.f32 %v4593, 0.6931472
  %v4595 = vadd.f32 %v4587, %v4594
  %v4596 = vsub.f32 0.0, %v4585
  %v4597 = vmul.f32 %v4596, 1.442695
  %v4598 = vpow.pop %v4597
  %v4599 = vadd.f32 %v4598, 1.0
  %v4600 = vrcp.pop %v4599
  %v4601 = vmul.f32 %v4599, %v4600
  %v4602 = vsub.f32 1.0, %v4601
  %v4603 = vmul.f32 %v4600, %v4602
  %v4604 = vadd.f32 %v4600, %v4603
  %vm4605 = vweird.f32 %v4599
  %vm4606 = vweird.f32 %v4600
  %vm4607 = vmor %vm4605, %vm4606
  %v4608 = vsel %vm4607, %v4600, %v4604
  %v4609 = vand.u32 2147483647, %v4599
  %vm4610 = vcmp.eq.f32.partialorder %v4609, 8.507059e+37
  %v4611 = vand.u32 %v4599, 2147483648
  %v4612 = vor.u32 1.1754944e-38, %v4611
  %v4613 = vsel %vm4610, %v4612, %v4608
  %v4614 = vmul.f32 1.0, %v4613
  %v4615 = vsel %vm240, %v4585, -inf
  %4616 = vmax.xlane.f32.xlu0 %v4615
  %v4617 = vpop.xlane.xlu0 %4616
  %v4618 = vsub.f32 %v4585, %v4617
  %v4619 = vmul.f32 %v4618, 1.442695
  %v4620 = vpow.pop %v4619
  %4622 = vrot.lane.b32.xlu0 %v4620, 110
  %v4623 = vpop.permute.xlu0 %4622
  %v4625 = vsel %vm251, %v4623, 0.0
  %4626 = vadd.xlane.f32.xlu0 %v4625
  %v4627 = vpop.xlane.xlu0 %4626
  %v4628 = vrcp.pop %v4627
  %v4629 = vmul.f32 %v4627, %v4628
  %v4630 = vsub.f32 1.0, %v4629
  %v4631 = vmul.f32 %v4628, %v4630
  %v4632 = vadd.f32 %v4628, %v4631
  %vm4633 = vweird.f32 %v4627
  %vm4634 = vweird.f32 %v4628
  %vm4635 = vmor %vm4633, %vm4634
  %v4636 = vsel %vm4635, %v4628, %v4632
  %v4637 = vand.u32 2147483647, %v4627
  %vm4638 = vcmp.eq.f32.partialorder %v4637, 8.507059e+37
  %v4639 = vand.u32 %v4627, 2147483648
  %v4640 = vor.u32 1.1754944e-38, %v4639
  %v4641 = vsel %vm4638, %v4640, %v4636
  %v4642 = vmul.f32 %v4620, %v4641
  %v4644 = vrot.slane %v4586, 1
  %v4645 = vrot.slane %v4586, 2
  %v4646 = vrot.slane %v4586, 3
  %v4647 = vperm.slane %v4586, 0
  %v4648 = vperm.slane %v4644, 0
  %v4649 = vperm.slane %v4645, 0
  %v4650 = vperm.slane %v4646, 0
  %v4655 = vmul.f32 %v4401, %v4647
  %v4656 = vmul.f32 %v4402, %v4647
  %v4657 = vmul.f32 %v4403, %v4648
  %v4658 = vmul.f32 %v4404, %v4648
  %v4659 = vmul.f32 %v4401, %v4649
  %v4660 = vmul.f32 %v4402, %v4649
  %v4661 = vmul.f32 %v4403, %v4650
  %v4662 = vmul.f32 %v4404, %v4650
  %v4663 = vsel %vm290, %v4655, 0.0
  %4664 = vadd.xlane.f32.xlu0 %v4663
  %v4665 = vpop.xlane.xlu0 %4664
  %v4666 = vsel %vm290, %v4656, 0.0
  %4667 = vadd.xlane.f32.xlu0 %v4666
  %v4668 = vpop.xlane.xlu0 %4667
  %v4669 = vsel %vm290, %v4657, 0.0
  %4670 = vadd.xlane.f32.xlu0 %v4669
  %v4671 = vpop.xlane.xlu0 %4670
  %v4672 = vsel %vm290, %v4658, 0.0
  %4673 = vadd.xlane.f32.xlu0 %v4672
  %v4674 = vpop.xlane.xlu0 %4673
  %v4675 = vsel %vm290, %v4659, 0.0
  %4676 = vadd.xlane.f32.xlu0 %v4675
  %v4677 = vpop.xlane.xlu0 %4676
  %v4678 = vsel %vm290, %v4660, 0.0
  %4679 = vadd.xlane.f32.xlu0 %v4678
  %v4680 = vpop.xlane.xlu0 %4679
  %v4681 = vsel %vm290, %v4661, 0.0
  %4682 = vadd.xlane.f32.xlu0 %v4681
  %v4683 = vpop.xlane.xlu0 %4682
  %v4684 = vsel %vm290, %v4662, 0.0
  %4685 = vadd.xlane.f32.xlu0 %v4684
  %v4686 = vpop.xlane.xlu0 %4685
  %v4687 = vmul.f32 %v4586, %v4586
  %v4688 = vsel %vm316, %v4687, 0.0
  %4689 = vadd.xlane.f32.xlu0 %v4688
  %v4690 = vpop.xlane.xlu0 %4689
  %v4691 = vrsqrt.pop %v4690
  %v4692 = vmul.f32 %v4691, %v4690
  %v4693 = vmul.f32 %v4692, %v4691
  %v4694 = vmul.f32 0.5, %v4693
  %v4695 = vsub.f32 1.5, %v4694
  %v4696 = vmul.f32 %v4691, %v4695
  %v4697 = vmul.f32 %v4690, %v4696
  %vm4698 = vcmp.eq.f32.partialorder %v4690, inf
  %v4699 = vsel %vm4698, %v4690, %v4697
  %vm4700 = vcmp.eq.f32.partialorder %v4690, 0.0
  %v4701 = vand.u32 %v4690, 2147483648
  %v4702 = vsel %vm4700, %v4701, %v4699
  %v4703 = vmul.f32 %v4401, %v4401
  %v4704 = vmul.f32 %v4402, %v4402
  %v4705 = vmul.f32 %v4403, %v4403
  %v4706 = vmul.f32 %v4404, %v4404
  %v4707 = vsel %vm290, %v4703, 0.0
  %4708 = vadd.xlane.f32.xlu0 %v4707
  %v4709 = vpop.xlane.xlu0 %4708
  %v4710 = vsel %vm290, %v4704, 0.0
  %4711 = vadd.xlane.f32.xlu0 %v4710
  %v4712 = vpop.xlane.xlu0 %4711
  %v4713 = vsel %vm290, %v4705, 0.0
  %4714 = vadd.xlane.f32.xlu0 %v4713
  %v4715 = vpop.xlane.xlu0 %4714
  %v4716 = vsel %vm290, %v4706, 0.0
  %4717 = vadd.xlane.f32.xlu0 %v4716
  %v4718 = vpop.xlane.xlu0 %4717
  %v4719 = vrsqrt.pop %v4709
  %v4720 = vmul.f32 %v4719, %v4709
  %v4721 = vmul.f32 %v4720, %v4719
  %v4722 = vmul.f32 0.5, %v4721
  %v4723 = vsub.f32 1.5, %v4722
  %v4724 = vmul.f32 %v4719, %v4723
  %v4725 = vmul.f32 %v4709, %v4724
  %vm4726 = vcmp.eq.f32.partialorder %v4709, inf
  %v4727 = vsel %vm4726, %v4709, %v4725
  %vm4728 = vcmp.eq.f32.partialorder %v4709, 0.0
  %v4729 = vand.u32 %v4709, 2147483648
  %v4730 = vsel %vm4728, %v4729, %v4727
  %v4731 = vrsqrt.pop %v4712
  %v4732 = vmul.f32 %v4731, %v4712
  %v4733 = vmul.f32 %v4732, %v4731
  %v4734 = vmul.f32 0.5, %v4733
  %v4735 = vsub.f32 1.5, %v4734
  %v4736 = vmul.f32 %v4731, %v4735
  %v4737 = vmul.f32 %v4712, %v4736
  %vm4738 = vcmp.eq.f32.partialorder %v4712, inf
  %v4739 = vsel %vm4738, %v4712, %v4737
  %vm4740 = vcmp.eq.f32.partialorder %v4712, 0.0
  %v4741 = vand.u32 %v4712, 2147483648
  %v4742 = vsel %vm4740, %v4741, %v4739
  %v4743 = vrsqrt.pop %v4715
  %v4744 = vmul.f32 %v4743, %v4715
  %v4745 = vmul.f32 %v4744, %v4743
  %v4746 = vmul.f32 0.5, %v4745
  %v4747 = vsub.f32 1.5, %v4746
  %v4748 = vmul.f32 %v4743, %v4747
  %v4749 = vmul.f32 %v4715, %v4748
  %vm4750 = vcmp.eq.f32.partialorder %v4715, inf
  %v4751 = vsel %vm4750, %v4715, %v4749
  %vm4752 = vcmp.eq.f32.partialorder %v4715, 0.0
  %v4753 = vand.u32 %v4715, 2147483648
  %v4754 = vsel %vm4752, %v4753, %v4751
  %v4755 = vrsqrt.pop %v4718
  %v4756 = vmul.f32 %v4755, %v4718
  %v4757 = vmul.f32 %v4756, %v4755
  %v4758 = vmul.f32 0.5, %v4757
  %v4759 = vsub.f32 1.5, %v4758
  %v4760 = vmul.f32 %v4755, %v4759
  %v4761 = vmul.f32 %v4718, %v4760
  %vm4762 = vcmp.eq.f32.partialorder %v4718, inf
  %v4763 = vsel %vm4762, %v4718, %v4761
  %vm4764 = vcmp.eq.f32.partialorder %v4718, 0.0
  %v4765 = vand.u32 %v4718, 2147483648
  %v4766 = vsel %vm4764, %v4765, %v4763
  %v4771 = vperm.slane %v4730, %v401
  %v4772 = vperm.slane %v4742, %v403
  %v4773 = vsel %vm405, %v4772, %v4771
  %v4774 = vperm.slane %v4754, %v401
  %v4775 = vperm.slane %v4766, %v403
  %v4776 = vsel %vm405, %v4775, %v4774
  %v4777 = vsel %vm410, %v4776, %v4773
  %v4778 = vsel %vm412, %v4773, %v4777
  %v4779 = vsel %vm414, %v4776, %v4778
  %v4781 = vmul.f32 %v4702, %v4779
  %v4782 = vadd.f32 %v4781, 1e-08
  %v4784 = vperm.slane %v4782, 0
  %v4785 = vlaneseq
  %v4786 = vshrl.u32 %v4785, 7
  %4788 = vset.pattern.permute.xlu0 %v4786
  %4789 = vperm.xlu0 %4788, %v4784
  %v4790 = vpop.permute.xlu0 %4789
  %v4791 = vlaneseq
  %v4792 = vshrl.u32 %v4791, 7
  %v4793 = vadd.s32 %v4792, 8
  %4794 = vset.pattern.permute.xlu0 %v4793
  %4795 = vperm.xlu0 %4794, %v4784
  %v4796 = vpop.permute.xlu0 %4795
  %v4797 = vperm.slane %v4782, 1
  %v4798 = vlaneseq
  %v4799 = vshrl.u32 %v4798, 7
  %4801 = vset.pattern.permute.xlu0 %v4799
  %4802 = vperm.xlu0 %4801, %v4797
  %v4803 = vpop.permute.xlu0 %4802
  %v4804 = vlaneseq
  %v4805 = vshrl.u32 %v4804, 7
  %v4806 = vadd.s32 %v4805, 8
  %4807 = vset.pattern.permute.xlu0 %v4806
  %4808 = vperm.xlu0 %4807, %v4797
  %v4809 = vpop.permute.xlu0 %4808
  %v4810 = vperm.slane %v4782, 2
  %v4811 = vlaneseq
  %v4812 = vshrl.u32 %v4811, 7
  %4814 = vset.pattern.permute.xlu0 %v4812
  %4815 = vperm.xlu0 %4814, %v4810
  %v4816 = vpop.permute.xlu0 %4815
  %v4817 = vlaneseq
  %v4818 = vshrl.u32 %v4817, 7
  %v4819 = vadd.s32 %v4818, 8
  %4820 = vset.pattern.permute.xlu0 %v4819
  %4821 = vperm.xlu0 %4820, %v4810
  %v4822 = vpop.permute.xlu0 %4821
  %v4823 = vperm.slane %v4782, 3
  %v4824 = vlaneseq
  %v4825 = vshrl.u32 %v4824, 7
  %4827 = vset.pattern.permute.xlu0 %v4825
  %4828 = vperm.xlu0 %4827, %v4823
  %v4829 = vpop.permute.xlu0 %4828
  %v4830 = vlaneseq
  %v4831 = vshrl.u32 %v4830, 7
  %v4832 = vadd.s32 %v4831, 8
  %4833 = vset.pattern.permute.xlu0 %v4832
  %4834 = vperm.xlu0 %4833, %v4823
  %v4835 = vpop.permute.xlu0 %4834
  %v4844 = vrcp.pop %v4790
  %v4845 = vmul.f32 %v4790, %v4844
  %v4846 = vsub.f32 1.0, %v4845
  %v4847 = vmul.f32 %v4844, %v4846
  %v4848 = vadd.f32 %v4844, %v4847
  %vm4849 = vweird.f32 %v4790
  %vm4850 = vweird.f32 %v4844
  %vm4851 = vmor %vm4849, %vm4850
  %v4852 = vsel %vm4851, %v4844, %v4848
  %v4853 = vand.u32 2147483647, %v4790
  %vm4854 = vcmp.eq.f32.partialorder %v4853, 8.507059e+37
  %v4855 = vand.u32 %v4790, 2147483648
  %v4856 = vor.u32 1.1754944e-38, %v4855
  %v4857 = vsel %vm4854, %v4856, %v4852
  %v4858 = vmul.f32 %v4665, %v4857
  %v4859 = vrcp.pop %v4796
  %v4860 = vmul.f32 %v4796, %v4859
  %v4861 = vsub.f32 1.0, %v4860
  %v4862 = vmul.f32 %v4859, %v4861
  %v4863 = vadd.f32 %v4859, %v4862
  %vm4864 = vweird.f32 %v4796
  %vm4865 = vweird.f32 %v4859
  %vm4866 = vmor %vm4864, %vm4865
  %v4867 = vsel %vm4866, %v4859, %v4863
  %v4868 = vand.u32 2147483647, %v4796
  %vm4869 = vcmp.eq.f32.partialorder %v4868, 8.507059e+37
  %v4870 = vand.u32 %v4796, 2147483648
  %v4871 = vor.u32 1.1754944e-38, %v4870
  %v4872 = vsel %vm4869, %v4871, %v4867
  %v4873 = vmul.f32 %v4668, %v4872
  %v4874 = vrcp.pop %v4803
  %v4875 = vmul.f32 %v4803, %v4874
  %v4876 = vsub.f32 1.0, %v4875
  %v4877 = vmul.f32 %v4874, %v4876
  %v4878 = vadd.f32 %v4874, %v4877
  %vm4879 = vweird.f32 %v4803
  %vm4880 = vweird.f32 %v4874
  %vm4881 = vmor %vm4879, %vm4880
  %v4882 = vsel %vm4881, %v4874, %v4878
  %v4883 = vand.u32 2147483647, %v4803
  %vm4884 = vcmp.eq.f32.partialorder %v4883, 8.507059e+37
  %v4885 = vand.u32 %v4803, 2147483648
  %v4886 = vor.u32 1.1754944e-38, %v4885
  %v4887 = vsel %vm4884, %v4886, %v4882
  %v4888 = vmul.f32 %v4671, %v4887
  %v4889 = vrcp.pop %v4809
  %v4890 = vmul.f32 %v4809, %v4889
  %v4891 = vsub.f32 1.0, %v4890
  %v4892 = vmul.f32 %v4889, %v4891
  %v4893 = vadd.f32 %v4889, %v4892
  %vm4894 = vweird.f32 %v4809
  %vm4895 = vweird.f32 %v4889
  %vm4896 = vmor %vm4894, %vm4895
  %v4897 = vsel %vm4896, %v4889, %v4893
  %v4898 = vand.u32 2147483647, %v4809
  %vm4899 = vcmp.eq.f32.partialorder %v4898, 8.507059e+37
  %v4900 = vand.u32 %v4809, 2147483648
  %v4901 = vor.u32 1.1754944e-38, %v4900
  %v4902 = vsel %vm4899, %v4901, %v4897
  %v4903 = vmul.f32 %v4674, %v4902
  %v4904 = vrcp.pop %v4816
  %v4905 = vmul.f32 %v4816, %v4904
  %v4906 = vsub.f32 1.0, %v4905
  %v4907 = vmul.f32 %v4904, %v4906
  %v4908 = vadd.f32 %v4904, %v4907
  %vm4909 = vweird.f32 %v4816
  %vm4910 = vweird.f32 %v4904
  %vm4911 = vmor %vm4909, %vm4910
  %v4912 = vsel %vm4911, %v4904, %v4908
  %v4913 = vand.u32 2147483647, %v4816
  %vm4914 = vcmp.eq.f32.partialorder %v4913, 8.507059e+37
  %v4915 = vand.u32 %v4816, 2147483648
  %v4916 = vor.u32 1.1754944e-38, %v4915
  %v4917 = vsel %vm4914, %v4916, %v4912
  %v4918 = vmul.f32 %v4677, %v4917
  %v4919 = vrcp.pop %v4822
  %v4920 = vmul.f32 %v4822, %v4919
  %v4921 = vsub.f32 1.0, %v4920
  %v4922 = vmul.f32 %v4919, %v4921
  %v4923 = vadd.f32 %v4919, %v4922
  %vm4924 = vweird.f32 %v4822
  %vm4925 = vweird.f32 %v4919
  %vm4926 = vmor %vm4924, %vm4925
  %v4927 = vsel %vm4926, %v4919, %v4923
  %v4928 = vand.u32 2147483647, %v4822
  %vm4929 = vcmp.eq.f32.partialorder %v4928, 8.507059e+37
  %v4930 = vand.u32 %v4822, 2147483648
  %v4931 = vor.u32 1.1754944e-38, %v4930
  %v4932 = vsel %vm4929, %v4931, %v4927
  %v4933 = vmul.f32 %v4680, %v4932
  %v4934 = vrcp.pop %v4829
  %v4935 = vmul.f32 %v4829, %v4934
  %v4936 = vsub.f32 1.0, %v4935
  %v4937 = vmul.f32 %v4934, %v4936
  %v4938 = vadd.f32 %v4934, %v4937
  %vm4939 = vweird.f32 %v4829
  %vm4940 = vweird.f32 %v4934
  %vm4941 = vmor %vm4939, %vm4940
  %v4942 = vsel %vm4941, %v4934, %v4938
  %v4943 = vand.u32 2147483647, %v4829
  %vm4944 = vcmp.eq.f32.partialorder %v4943, 8.507059e+37
  %v4945 = vand.u32 %v4829, 2147483648
  %v4946 = vor.u32 1.1754944e-38, %v4945
  %v4947 = vsel %vm4944, %v4946, %v4942
  %v4948 = vmul.f32 %v4683, %v4947
  %v4949 = vrcp.pop %v4835
  %v4950 = vmul.f32 %v4835, %v4949
  %v4951 = vsub.f32 1.0, %v4950
  %v4952 = vmul.f32 %v4949, %v4951
  %v4953 = vadd.f32 %v4949, %v4952
  %vm4954 = vweird.f32 %v4835
  %vm4955 = vweird.f32 %v4949
  %vm4956 = vmor %vm4954, %vm4955
  %v4957 = vsel %vm4956, %v4949, %v4953
  %v4958 = vand.u32 2147483647, %v4835
  %vm4959 = vcmp.eq.f32.partialorder %v4958, 8.507059e+37
  %v4960 = vand.u32 %v4835, 2147483648
  %v4961 = vor.u32 1.1754944e-38, %v4960
  %v4962 = vsel %vm4959, %v4961, %v4957
  %v4963 = vmul.f32 %v4686, %v4962
  %4965 = vset.pattern.permute.xlu0 16
  %4966 = vperm.xlu0 %4965, %v4595
  %v4967 = vpop.permute.xlu0 %4966
  %4977 = vset.pattern.permute.xlu0 0
  %4978 = vperm.xlu0 %4977, %v4858
  %v4979 = vpop.permute.xlu0 %4978
  %4980 = vset.pattern.permute.xlu0 0
  %4981 = vperm.xlu0 %4980, %v4873
  %v4982 = vpop.permute.xlu0 %4981
  %4983 = vset.pattern.permute.xlu0 0
  %4984 = vperm.xlu0 %4983, %v4888
  %v4985 = vpop.permute.xlu0 %4984
  %4986 = vset.pattern.permute.xlu0 0
  %4987 = vperm.xlu0 %4986, %v4903
  %v4988 = vpop.permute.xlu0 %4987
  %4989 = vset.pattern.permute.xlu0 0
  %4990 = vperm.xlu0 %4989, %v4918
  %v4991 = vpop.permute.xlu0 %4990
  %4992 = vset.pattern.permute.xlu0 0
  %4993 = vperm.xlu0 %4992, %v4933
  %v4994 = vpop.permute.xlu0 %4993
  %4995 = vset.pattern.permute.xlu0 0
  %4996 = vperm.xlu0 %4995, %v4948
  %v4997 = vpop.permute.xlu0 %4996
  %4998 = vset.pattern.permute.xlu0 0
  %4999 = vperm.xlu0 %4998, %v4963
  %v5000 = vpop.permute.xlu0 %4999
  %v5001 = vperm.slane %v4979, %v401
  %v5002 = vperm.slane %v4982, %v403
  %v5003 = vsel %vm405, %v5002, %v5001
  %v5004 = vperm.slane %v4985, %v401
  %v5005 = vperm.slane %v4988, %v403
  %v5006 = vsel %vm405, %v5005, %v5004
  %v5007 = vperm.slane %v4991, %v401
  %v5008 = vperm.slane %v4994, %v403
  %v5009 = vsel %vm405, %v5008, %v5007
  %v5010 = vperm.slane %v4997, %v401
  %v5011 = vperm.slane %v5000, %v403
  %v5012 = vsel %vm405, %v5011, %v5010
  %v5013 = vsel %vm410, %v5006, %v5003
  %v5014 = vsel %vm412, %v5009, %v5013
  %v5015 = vsel %vm414, %v5012, %v5014
  %v5017 = vmul.f32 %v4967, %v5015
  %v5018 = vsel %vm316, %v5017, -inf
  %5019 = vmax.xlane.f32.xlu0 %v5018
  %v5020 = vpop.xlane.xlu0 %5019
  %v5021 = vsub.f32 %v5017, %v5020
  %v5022 = vmul.f32 %v5021, 1.442695
  %v5023 = vpow.pop %v5022
  %v5024 = vsel %vm316, %v5023, 0.0
  %5025 = vadd.xlane.f32.xlu0 %v5024
  %v5026 = vpop.xlane.xlu0 %5025
  %v5027 = vrcp.pop %v5026
  %v5028 = vmul.f32 %v5026, %v5027
  %v5029 = vsub.f32 1.0, %v5028
  %v5030 = vmul.f32 %v5027, %v5029
  %v5031 = vadd.f32 %v5027, %v5030
  %vm5032 = vweird.f32 %v5026
  %vm5033 = vweird.f32 %v5027
  %vm5034 = vmor %vm5032, %vm5033
  %v5035 = vsel %vm5034, %v5027, %v5031
  %v5036 = vand.u32 2147483647, %v5026
  %vm5037 = vcmp.eq.f32.partialorder %v5036, 8.507059e+37
  %v5038 = vand.u32 %v5026, 2147483648
  %v5039 = vor.u32 1.1754944e-38, %v5038
  %v5040 = vsel %vm5037, %v5039, %v5035
  %v5041 = vmul.f32 %v5023, %v5040
  %5043 = vset.pattern.permute.xlu0 17
  %5044 = vperm.xlu0 %5043, %v4614
  %v5045 = vpop.permute.xlu0 %5044
  %v5047 = vmul.f32 %v5045, %v5041
  %v5048 = vsub.f32 1.0, %v4614
  %5050 = vset.pattern.permute.xlu0 17
  %5051 = vperm.xlu0 %5050, %v5048
  %v5052 = vpop.permute.xlu0 %5051
  %v5054 = vmul.f32 %v5052, %v4246
  %v5055 = vadd.f32 %v5047, %v5054
  %5057 = vset.pattern.permute.xlu0 18
  %5058 = vperm.xlu0 %5057, %v4642
  %v5059 = vpop.permute.xlu0 %5058
  %v5061 = vmul.f32 %v5059, %v5055
  %v5062 = vadd.f32 %v5061, 0.0
  %5064 = vrot.lane.b32.xlu0 %v5055, 113
  %v5065 = vpop.permute.xlu0 %5064
  %5067 = vrot.lane.b32.xlu0 %v5055, 1
  %v5068 = vpop.permute.xlu0 %5067
  %v5070 = vsel %vm706, %v5065, %v5068
  %5071 = vset.pattern.permute.xlu0 19
  %5072 = vperm.xlu0 %5071, %v4642
  %v5073 = vpop.permute.xlu0 %5072
  %v5075 = vmul.f32 %v5073, %v5070
  %v5076 = vadd.f32 %v5062, %v5075
  %5077 = vrot.lane.b32.xlu0 %v5055, 127
  %v5078 = vpop.permute.xlu0 %5077
  %5080 = vrot.lane.b32.xlu0 %v5055, 15
  %v5081 = vpop.permute.xlu0 %5080
  %v5083 = vsel %vm720, %v5078, %v5081
  %5084 = vset.pattern.permute.xlu0 20
  %5085 = vperm.xlu0 %5084, %v4642
  %v5086 = vpop.permute.xlu0 %5085
  %v5088 = vmul.f32 %v5086, %v5083
  %v5089 = vadd.f32 %v5076, %v5088
  %v5090 = vadd.f32 %v5089, 1e-08
  %v5091 = vlog2.pop %v5090
  %v5092 = vmul.f32 %v5091, 0.6931472
  %5093 = vset.pattern.permute.xlu0 21
  %5094 = vperm.xlu0 %5093, %v4595
  %v5095 = vpop.permute.xlu0 %5094
  %v5097 = vmul.f32 %v5095, %v5092
  %v5098 = vmul.f32 %v5097, 1.442695
  %v5099 = vpow.pop %v5098
  %v5100 = vsel %vm316, %v5099, 0.0
  %5101 = vadd.xlane.f32.xlu0 %v5100
  %v5102 = vpop.xlane.xlu0 %5101
  %v5103 = vrcp.pop %v5102
  %v5104 = vmul.f32 %v5102, %v5103
  %v5105 = vsub.f32 1.0, %v5104
  %v5106 = vmul.f32 %v5103, %v5105
  %v5107 = vadd.f32 %v5103, %v5106
  %vm5108 = vweird.f32 %v5102
  %vm5109 = vweird.f32 %v5103
  %vm5110 = vmor %vm5108, %vm5109
  %v5111 = vsel %vm5110, %v5103, %v5107
  %v5112 = vand.u32 2147483647, %v5102
  %vm5113 = vcmp.eq.f32.partialorder %v5112, 8.507059e+37
  %v5114 = vand.u32 %v5102, 2147483648
  %v5115 = vor.u32 1.1754944e-38, %v5114
  %v5116 = vsel %vm5113, %v5115, %v5111
  %v5117 = vmul.f32 %v5099, %v5116
  %v5118 = vperm.slane %v5117, 0
  %v5119 = vlaneseq
  %v5120 = vshrl.u32 %v5119, 7
  %5122 = vset.pattern.permute.xlu0 %v5120
  %5123 = vperm.xlu0 %5122, %v5118
  %v5124 = vpop.permute.xlu0 %5123
  %v5125 = vlaneseq
  %v5126 = vshrl.u32 %v5125, 7
  %v5127 = vadd.s32 %v5126, 8
  %5128 = vset.pattern.permute.xlu0 %v5127
  %5129 = vperm.xlu0 %5128, %v5118
  %v5130 = vpop.permute.xlu0 %5129
  %v5131 = vperm.slane %v5117, 1
  %v5132 = vlaneseq
  %v5133 = vshrl.u32 %v5132, 7
  %5135 = vset.pattern.permute.xlu0 %v5133
  %5136 = vperm.xlu0 %5135, %v5131
  %v5137 = vpop.permute.xlu0 %5136
  %v5138 = vlaneseq
  %v5139 = vshrl.u32 %v5138, 7
  %v5140 = vadd.s32 %v5139, 8
  %5141 = vset.pattern.permute.xlu0 %v5140
  %5142 = vperm.xlu0 %5141, %v5131
  %v5143 = vpop.permute.xlu0 %5142
  %v5144 = vmul.f32 %v5124, %v4401
  %v5145 = vmul.f32 %v5130, %v4402
  %v5146 = vmul.f32 %v5137, %v4403
  %v5147 = vmul.f32 %v5143, %v4404
  %v5148 = vsel %vm290, %v5144, 0.0
  %v5149 = vsel %vm290, %v5145, 0.0
  %v5150 = vadd.f32 %v5148, %v5149
  %v5151 = vrot.slane %v5150, 4
  %v5152 = vadd.f32 %v5150, %v5151
  %v5153 = vrot.slane %v5152, 2
  %v5154 = vadd.f32 %v5152, %v5153
  %v5155 = vrot.slane %v5154, 1
  %v5156 = vadd.f32 %v5154, %v5155
  %v5157 = vsel %vm290, %v5146, 0.0
  %v5158 = vsel %vm290, %v5147, 0.0
  %v5159 = vadd.f32 %v5157, %v5158
  %v5160 = vrot.slane %v5159, 4
  %v5161 = vadd.f32 %v5159, %v5160
  %v5162 = vrot.slane %v5161, 2
  %v5163 = vadd.f32 %v5161, %v5162
  %v5164 = vrot.slane %v5163, 1
  %v5165 = vadd.f32 %v5163, %v5164
  %v5166 = vsub.f32 0.0, %v4578
  %v5167 = vmul.f32 %v5166, 1.442695
  %v5168 = vpow.pop %v5167
  %v5169 = vadd.f32 %v5168, 1.0
  %v5170 = vrcp.pop %v5169
  %v5171 = vmul.f32 %v5169, %v5170
  %v5172 = vsub.f32 1.0, %v5171
  %v5173 = vmul.f32 %v5170, %v5172
  %v5174 = vadd.f32 %v5170, %v5173
  %vm5175 = vweird.f32 %v5169
  %vm5176 = vweird.f32 %v5170
  %vm5177 = vmor %vm5175, %vm5176
  %v5178 = vsel %vm5177, %v5170, %v5174
  %v5179 = vand.u32 2147483647, %v5169
  %vm5180 = vcmp.eq.f32.partialorder %v5179, 8.507059e+37
  %v5181 = vand.u32 %v5169, 2147483648
  %v5182 = vor.u32 1.1754944e-38, %v5181
  %v5183 = vsel %vm5180, %v5182, %v5178
  %v5184 = vmul.f32 1.0, %v5183
  %v5185 = vtanh.pop %v4578
  %v5186 = vperm.slane %v5117, 2
  %v5187 = vlaneseq
  %v5188 = vshrl.u32 %v5187, 7
  %5190 = vset.pattern.permute.xlu0 %v5188
  %5191 = vperm.xlu0 %5190, %v5186
  %v5192 = vpop.permute.xlu0 %5191
  %v5193 = vlaneseq
  %v5194 = vshrl.u32 %v5193, 7
  %v5195 = vadd.s32 %v5194, 8
  %5196 = vset.pattern.permute.xlu0 %v5195
  %5197 = vperm.xlu0 %5196, %v5186
  %v5198 = vpop.permute.xlu0 %5197
  %v5199 = vperm.slane %v5117, 3
  %v5200 = vlaneseq
  %v5201 = vshrl.u32 %v5200, 7
  %5203 = vset.pattern.permute.xlu0 %v5201
  %5204 = vperm.xlu0 %5203, %v5199
  %v5205 = vpop.permute.xlu0 %5204
  %v5206 = vlaneseq
  %v5207 = vshrl.u32 %v5206, 7
  %v5208 = vadd.s32 %v5207, 8
  %5209 = vset.pattern.permute.xlu0 %v5208
  %5210 = vperm.xlu0 %5209, %v5199
  %v5211 = vpop.permute.xlu0 %5210
  %v5213 = vrot.slane %v5185, 1
  %v5215 = vrot.slane %v5184, 1
  %v5216 = vperm.slane %v5184, 0
  %v5217 = vperm.slane %v5215, 0
  %5218 = vrot.lane.b32.xlu0 %v5216, 84
  %v5219 = vpop.permute.xlu0 %5218
  %5220 = vrot.lane.b32.xlu0 %v5217, 84
  %v5221 = vpop.permute.xlu0 %5220
  %v5224 = vmul.f32 %v4401, %v5219
  %v5225 = vmul.f32 %v4402, %v5219
  %v5226 = vmul.f32 %v4403, %v5221
  %v5227 = vmul.f32 %v4404, %v5221
  %v5228 = vperm.slane %v5185, 0
  %v5229 = vperm.slane %v5213, 0
  %5236 = vrot.lane.b32.xlu0 %v5224, 60
  %v5237 = vpop.permute.xlu0 %5236
  %5238 = vrot.lane.b32.xlu0 %v5225, 60
  %v5239 = vpop.permute.xlu0 %5238
  %5240 = vrot.lane.b32.xlu0 %v5226, 60
  %v5241 = vpop.permute.xlu0 %5240
  %5242 = vrot.lane.b32.xlu0 %v5227, 60
  %v5243 = vpop.permute.xlu0 %5242
  %v5248 = vsub.f32 %v5228, %v5237
  %v5249 = vsub.f32 %v5228, %v5239
  %v5250 = vsub.f32 %v5229, %v5241
  %v5251 = vsub.f32 %v5229, %v5243
  %v5252 = vmul.f32 %v5192, %v5248
  %v5253 = vmul.f32 %v5198, %v5249
  %v5254 = vmul.f32 %v5205, %v5250
  %v5255 = vmul.f32 %v5211, %v5251
  %5260 = vrot.lane.b32.xlu0 %v5252, 68
  %v5261 = vpop.permute.xlu0 %5260
  %5262 = vrot.lane.b32.xlu0 %v5253, 68
  %v5263 = vpop.permute.xlu0 %5262
  %5264 = vrot.lane.b32.xlu0 %v5254, 68
  %v5265 = vpop.permute.xlu0 %5264
  %5266 = vrot.lane.b32.xlu0 %v5255, 68
  %v5267 = vpop.permute.xlu0 %5266
  %v5272 = vadd.f32 %v4401, %v5261
  %v5273 = vadd.f32 %v4402, %v5263
  %v5274 = vadd.f32 %v4403, %v5265
  %v5275 = vadd.f32 %v4404, %v5267
  %v5279 = vsel %vm410, %v5165, %v5156
  %5280 = vrot.lane.b32.xlu0 %v5279, 32
  %v5281 = vpop.permute.xlu0 %5280
  %v5283 = vsel %vm178, %v4557, %v5281
  %v5285 = vsel %vm925, %v5283, 0
  %5287 = vmatpush.msra.mxu0 0.0
  %5288 = vmatpush.msra.mxu0 0.0
  %5289 = vmatpush.msra.mxu0 0.0
  %5290 = vmatpush.msra.mxu0 0.0
  %5291 = vmatpush.msra.mxu0 0.0
  %5292 = vmatpush.msra.mxu0 0.0
  %5293 = vmatpush.msra.mxu0 0.0
  %5294 = vmatpush.msra.mxu0 0.0
  %5295 = vmatpush.msra.mxu0 0.0
  %5296 = vmatpush.msra.mxu0 0.0
  %5297 = vmatpush.msra.mxu0 %v69
  %5298 = vmatpush.msra.mxu0 %v68
  %5299 = vmatpush.msra.mxu0 %v67
  %5300 = vmatpush.msra.mxu0 %v66
  %5301 = vmatpush.msra.mxu0 %v65
  %5302 = vmatpush.msra.mxu0 %v64
  %5303 = vmatmul.f32.gmra.mxu0 %v5285
  %v5304 = vpop.f32.mrf.mxu0
  %v5305 = vadd.f32 %v923, %v5304
  %5306 = vdwg.mxu0
  %v5307 = vmax.f32 %v5305, -20.0
  %v5308 = vmin.f32 %v5307, 20.0
  %v5310 = vsel %vm178, %v5308, 0
  %5312 = vmatpush.msra.mxu0 0.0
  %5313 = vmatpush.msra.mxu0 0.0
  %5314 = vmatpush.msra.mxu0 0.0
  %5315 = vmatpush.msra.mxu0 0.0
  %5316 = vmatpush.msra.mxu0 0.0
  %5317 = vmatpush.msra.mxu0 0.0
  %5318 = vmatpush.msra.mxu0 0.0
  %5319 = vmatpush.msra.mxu0 0.0
  %5320 = vmatpush.msra.mxu0 0.0
  %5321 = vmatpush.msra.mxu0 0.0
  %5322 = vmatpush.msra.mxu0 0.0
  %5323 = vmatpush.msra.mxu0 0.0
  %5324 = vmatpush.msra.mxu0 %v74
  %5325 = vmatpush.msra.mxu0 %v73
  %5326 = vmatpush.msra.mxu0 %v72
  %5327 = vmatpush.msra.mxu0 %v71
  %5328 = vmatmul.f32.gmra.mxu0 %v5310
  %v5329 = vpop.f32.mrf.mxu0
  %v5330 = vadd.f32 %v952, %v5329
  %5331 = vdwg.mxu0
  %v5332 = vsub.f32 0.0, %v5330
  %v5333 = vmul.f32 %v5332, 1.442695
  %v5334 = vpow.pop %v5333
  %v5335 = vadd.f32 %v5334, 1.0
  %v5336 = vrcp.pop %v5335
  %v5337 = vmul.f32 %v5335, %v5336
  %v5338 = vsub.f32 1.0, %v5337
  %v5339 = vmul.f32 %v5336, %v5338
  %v5340 = vadd.f32 %v5336, %v5339
  %vm5341 = vweird.f32 %v5335
  %vm5342 = vweird.f32 %v5336
  %vm5343 = vmor %vm5341, %vm5342
  %v5344 = vsel %vm5343, %v5336, %v5340
  %v5345 = vand.u32 2147483647, %v5335
  %vm5346 = vcmp.eq.f32.partialorder %v5345, 8.507059e+37
  %v5347 = vand.u32 %v5335, 2147483648
  %v5348 = vor.u32 1.1754944e-38, %v5347
  %v5349 = vsel %vm5346, %v5348, %v5344
  %v5350 = vmul.f32 1.0, %v5349
  %s5351 = scalar_lea.vmem %s15, 10
  %5352 = vst.msk [vmem:[%s5351] sm:$0x3] %vm996, %v5350
  %s5353 = scalar_lea.vmem %s0, 12
  %v5354 = vld [vmem:[%s5353] sm:$0x3]
  %5355 = vrot.lane.b32.xlu0 %v5279, 10
  %v5356 = vpop.permute.xlu0 %5355
  %5359 = vrot.lane.b32.xlu0 %v4552, 58
  %v5360 = vpop.permute.xlu0 %5359
  %v5362 = vsel %vm94, %v5354, %v5356
  %v5363 = vsel %vm96, %v5362, %v5360
  %v5365 = vsel %vm101, %v5363, 0
  %5367 = vmatpush.msra.mxu0 0.0
  %5368 = vmatpush.msra.mxu0 0.0
  %5369 = vmatpush.msra.mxu0 0.0
  %5370 = vmatpush.msra.mxu0 0.0
  %5371 = vmatpush.msra.mxu0 0.0
  %5372 = vmatpush.msra.mxu0 0.0
  %5373 = vmatpush.msra.mxu0 0.0
  %5374 = vmatpush.msra.mxu0 0.0
  %5375 = vmatpush.msra.mxu0 %v107
  %5376 = vmatpush.msra.mxu0 %v56
  %5377 = vmatpush.msra.mxu0 %v55
  %5378 = vmatpush.msra.mxu0 %v54
  %5379 = vmatpush.msra.mxu0 %v53
  %5380 = vmatpush.msra.mxu0 %v52
  %5381 = vmatpush.msra.mxu0 %v51
  %5382 = vmatpush.msra.mxu0 %v50
  %5383 = vmatmul.f32.gmra.mxu0 %v5365
  %v5384 = vpop.f32.mrf.mxu0
  %v5385 = vadd.f32 %v99, %v5384
  %5386 = vdwg.mxu0
  %v5387 = vsub.f32 0.0, %v5385
  %v5388 = vmul.f32 %v5387, 1.442695
  %v5389 = vpow.pop %v5388
  %v5390 = vadd.f32 %v5389, 1.0
  %v5391 = vrcp.pop %v5390
  %v5392 = vmul.f32 %v5390, %v5391
  %v5393 = vsub.f32 1.0, %v5392
  %v5394 = vmul.f32 %v5391, %v5393
  %v5395 = vadd.f32 %v5391, %v5394
  %vm5396 = vweird.f32 %v5390
  %vm5397 = vweird.f32 %v5391
  %vm5398 = vmor %vm5396, %vm5397
  %v5399 = vsel %vm5398, %v5391, %v5395
  %v5400 = vand.u32 2147483647, %v5390
  %vm5401 = vcmp.eq.f32.partialorder %v5400, 8.507059e+37
  %v5402 = vand.u32 %v5390, 2147483648
  %v5403 = vor.u32 1.1754944e-38, %v5402
  %v5404 = vsel %vm5401, %v5403, %v5399
  %v5405 = vmul.f32 1.0, %v5404
  %v5406 = vtanh.pop %v5385
  %v5407 = vmul.f32 %v5405, %v4546
  %5409 = vrot.lane.b32.xlu0 %v5406, 64
  %v5410 = vpop.permute.xlu0 %5409
  %v5412 = vmul.f32 %v5405, %v5410
  %5414 = vrot.lane.b32.xlu0 %v5412, 32
  %v5415 = vpop.permute.xlu0 %5414
  %v5417 = vadd.f32 %v5407, %v5415
  %v5418 = vtanh.pop %v5417
  %5420 = vrot.lane.b32.xlu0 %v5418, 64
  %v5421 = vpop.permute.xlu0 %5420
  %v5423 = vmul.f32 %v5405, %v5421
  %v5424 = vmax.f32 %v5423, -20.0
  %v5425 = vmin.f32 %v5424, 20.0
  %5427 = vrot.lane.b32.xlu0 %v5425, 32
  %v5428 = vpop.permute.xlu0 %5427
  %v5429 = vsel %vm178, %v5428, 0
  %5431 = vmatpush.msra.mxu0 0.0
  %5432 = vmatpush.msra.mxu0 0.0
  %5433 = vmatpush.msra.mxu0 0.0
  %5434 = vmatpush.msra.mxu0 0.0
  %5435 = vmatpush.msra.mxu0 0.0
  %5436 = vmatpush.msra.mxu0 0.0
  %5437 = vmatpush.msra.mxu0 0.0
  %5438 = vmatpush.msra.mxu0 0.0
  %5439 = vmatpush.msra.mxu0 0.0
  %5440 = vmatpush.msra.mxu0 0.0
  %5441 = vmatpush.msra.mxu0 0.0
  %5442 = vmatpush.msra.mxu0 0.0
  %5443 = vmatpush.msra.mxu0 %v62
  %5444 = vmatpush.msra.mxu0 %v61
  %5445 = vmatpush.msra.mxu0 %v60
  %5446 = vmatpush.msra.mxu0 %v59
  %5447 = vmatmul.f32.gmra.mxu0 %v5429
  %v5448 = vpop.f32.mrf.mxu0
  %v5449 = vadd.f32 %v173, %v5448
  %5450 = vdwg.mxu0
  %v5452 = vrot.slane %v5449, 6
  %5453 = vrot.lane.b32.xlu0 %v5452, 106
  %v5454 = vpop.permute.xlu0 %5453
  %v5456 = vsel %vm105, %v5449, %v5454
  %v5457 = vtanh.pop %v5456
  %v5458 = vmax.f32 %v5456, 0.0
  %v5459 = vand.u32 2147483647, %v5456
  %v5460 = vsub.f32 0.0, %v5459
  %v5461 = vmul.f32 %v5460, 1.442695
  %v5462 = vpow.pop %v5461
  %v5463 = vadd.f32 %v5462, 1.0
  %v5464 = vlog2.pop %v5463
  %v5465 = vmul.f32 %v5464, 0.6931472
  %v5466 = vadd.f32 %v5458, %v5465
  %v5467 = vsub.f32 0.0, %v5456
  %v5468 = vmul.f32 %v5467, 1.442695
  %v5469 = vpow.pop %v5468
  %v5470 = vadd.f32 %v5469, 1.0
  %v5471 = vrcp.pop %v5470
  %v5472 = vmul.f32 %v5470, %v5471
  %v5473 = vsub.f32 1.0, %v5472
  %v5474 = vmul.f32 %v5471, %v5473
  %v5475 = vadd.f32 %v5471, %v5474
  %vm5476 = vweird.f32 %v5470
  %vm5477 = vweird.f32 %v5471
  %vm5478 = vmor %vm5476, %vm5477
  %v5479 = vsel %vm5478, %v5471, %v5475
  %v5480 = vand.u32 2147483647, %v5470
  %vm5481 = vcmp.eq.f32.partialorder %v5480, 8.507059e+37
  %v5482 = vand.u32 %v5470, 2147483648
  %v5483 = vor.u32 1.1754944e-38, %v5482
  %v5484 = vsel %vm5481, %v5483, %v5479
  %v5485 = vmul.f32 1.0, %v5484
  %v5486 = vsel %vm240, %v5456, -inf
  %5487 = vmax.xlane.f32.xlu0 %v5486
  %v5488 = vpop.xlane.xlu0 %5487
  %v5489 = vsub.f32 %v5456, %v5488
  %v5490 = vmul.f32 %v5489, 1.442695
  %v5491 = vpow.pop %v5490
  %5493 = vrot.lane.b32.xlu0 %v5491, 110
  %v5494 = vpop.permute.xlu0 %5493
  %v5496 = vsel %vm251, %v5494, 0.0
  %5497 = vadd.xlane.f32.xlu0 %v5496
  %v5498 = vpop.xlane.xlu0 %5497
  %v5499 = vrcp.pop %v5498
  %v5500 = vmul.f32 %v5498, %v5499
  %v5501 = vsub.f32 1.0, %v5500
  %v5502 = vmul.f32 %v5499, %v5501
  %v5503 = vadd.f32 %v5499, %v5502
  %vm5504 = vweird.f32 %v5498
  %vm5505 = vweird.f32 %v5499
  %vm5506 = vmor %vm5504, %vm5505
  %v5507 = vsel %vm5506, %v5499, %v5503
  %v5508 = vand.u32 2147483647, %v5498
  %vm5509 = vcmp.eq.f32.partialorder %v5508, 8.507059e+37
  %v5510 = vand.u32 %v5498, 2147483648
  %v5511 = vor.u32 1.1754944e-38, %v5510
  %v5512 = vsel %vm5509, %v5511, %v5507
  %v5513 = vmul.f32 %v5491, %v5512
  %v5515 = vrot.slane %v5457, 1
  %v5516 = vrot.slane %v5457, 2
  %v5517 = vrot.slane %v5457, 3
  %v5518 = vperm.slane %v5457, 0
  %v5519 = vperm.slane %v5515, 0
  %v5520 = vperm.slane %v5516, 0
  %v5521 = vperm.slane %v5517, 0
  %v5526 = vmul.f32 %v5272, %v5518
  %v5527 = vmul.f32 %v5273, %v5518
  %v5528 = vmul.f32 %v5274, %v5519
  %v5529 = vmul.f32 %v5275, %v5519
  %v5530 = vmul.f32 %v5272, %v5520
  %v5531 = vmul.f32 %v5273, %v5520
  %v5532 = vmul.f32 %v5274, %v5521
  %v5533 = vmul.f32 %v5275, %v5521
  %v5534 = vsel %vm290, %v5526, 0.0
  %5535 = vadd.xlane.f32.xlu0 %v5534
  %v5536 = vpop.xlane.xlu0 %5535
  %v5537 = vsel %vm290, %v5527, 0.0
  %5538 = vadd.xlane.f32.xlu0 %v5537
  %v5539 = vpop.xlane.xlu0 %5538
  %v5540 = vsel %vm290, %v5528, 0.0
  %5541 = vadd.xlane.f32.xlu0 %v5540
  %v5542 = vpop.xlane.xlu0 %5541
  %v5543 = vsel %vm290, %v5529, 0.0
  %5544 = vadd.xlane.f32.xlu0 %v5543
  %v5545 = vpop.xlane.xlu0 %5544
  %v5546 = vsel %vm290, %v5530, 0.0
  %5547 = vadd.xlane.f32.xlu0 %v5546
  %v5548 = vpop.xlane.xlu0 %5547
  %v5549 = vsel %vm290, %v5531, 0.0
  %5550 = vadd.xlane.f32.xlu0 %v5549
  %v5551 = vpop.xlane.xlu0 %5550
  %v5552 = vsel %vm290, %v5532, 0.0
  %5553 = vadd.xlane.f32.xlu0 %v5552
  %v5554 = vpop.xlane.xlu0 %5553
  %v5555 = vsel %vm290, %v5533, 0.0
  %5556 = vadd.xlane.f32.xlu0 %v5555
  %v5557 = vpop.xlane.xlu0 %5556
  %v5558 = vmul.f32 %v5457, %v5457
  %v5559 = vsel %vm316, %v5558, 0.0
  %5560 = vadd.xlane.f32.xlu0 %v5559
  %v5561 = vpop.xlane.xlu0 %5560
  %v5562 = vrsqrt.pop %v5561
  %v5563 = vmul.f32 %v5562, %v5561
  %v5564 = vmul.f32 %v5563, %v5562
  %v5565 = vmul.f32 0.5, %v5564
  %v5566 = vsub.f32 1.5, %v5565
  %v5567 = vmul.f32 %v5562, %v5566
  %v5568 = vmul.f32 %v5561, %v5567
  %vm5569 = vcmp.eq.f32.partialorder %v5561, inf
  %v5570 = vsel %vm5569, %v5561, %v5568
  %vm5571 = vcmp.eq.f32.partialorder %v5561, 0.0
  %v5572 = vand.u32 %v5561, 2147483648
  %v5573 = vsel %vm5571, %v5572, %v5570
  %v5574 = vmul.f32 %v5272, %v5272
  %v5575 = vmul.f32 %v5273, %v5273
  %v5576 = vmul.f32 %v5274, %v5274
  %v5577 = vmul.f32 %v5275, %v5275
  %v5578 = vsel %vm290, %v5574, 0.0
  %5579 = vadd.xlane.f32.xlu0 %v5578
  %v5580 = vpop.xlane.xlu0 %5579
  %v5581 = vsel %vm290, %v5575, 0.0
  %5582 = vadd.xlane.f32.xlu0 %v5581
  %v5583 = vpop.xlane.xlu0 %5582
  %v5584 = vsel %vm290, %v5576, 0.0
  %5585 = vadd.xlane.f32.xlu0 %v5584
  %v5586 = vpop.xlane.xlu0 %5585
  %v5587 = vsel %vm290, %v5577, 0.0
  %5588 = vadd.xlane.f32.xlu0 %v5587
  %v5589 = vpop.xlane.xlu0 %5588
  %v5590 = vrsqrt.pop %v5580
  %v5591 = vmul.f32 %v5590, %v5580
  %v5592 = vmul.f32 %v5591, %v5590
  %v5593 = vmul.f32 0.5, %v5592
  %v5594 = vsub.f32 1.5, %v5593
  %v5595 = vmul.f32 %v5590, %v5594
  %v5596 = vmul.f32 %v5580, %v5595
  %vm5597 = vcmp.eq.f32.partialorder %v5580, inf
  %v5598 = vsel %vm5597, %v5580, %v5596
  %vm5599 = vcmp.eq.f32.partialorder %v5580, 0.0
  %v5600 = vand.u32 %v5580, 2147483648
  %v5601 = vsel %vm5599, %v5600, %v5598
  %v5602 = vrsqrt.pop %v5583
  %v5603 = vmul.f32 %v5602, %v5583
  %v5604 = vmul.f32 %v5603, %v5602
  %v5605 = vmul.f32 0.5, %v5604
  %v5606 = vsub.f32 1.5, %v5605
  %v5607 = vmul.f32 %v5602, %v5606
  %v5608 = vmul.f32 %v5583, %v5607
  %vm5609 = vcmp.eq.f32.partialorder %v5583, inf
  %v5610 = vsel %vm5609, %v5583, %v5608
  %vm5611 = vcmp.eq.f32.partialorder %v5583, 0.0
  %v5612 = vand.u32 %v5583, 2147483648
  %v5613 = vsel %vm5611, %v5612, %v5610
  %v5614 = vrsqrt.pop %v5586
  %v5615 = vmul.f32 %v5614, %v5586
  %v5616 = vmul.f32 %v5615, %v5614
  %v5617 = vmul.f32 0.5, %v5616
  %v5618 = vsub.f32 1.5, %v5617
  %v5619 = vmul.f32 %v5614, %v5618
  %v5620 = vmul.f32 %v5586, %v5619
  %vm5621 = vcmp.eq.f32.partialorder %v5586, inf
  %v5622 = vsel %vm5621, %v5586, %v5620
  %vm5623 = vcmp.eq.f32.partialorder %v5586, 0.0
  %v5624 = vand.u32 %v5586, 2147483648
  %v5625 = vsel %vm5623, %v5624, %v5622
  %v5626 = vrsqrt.pop %v5589
  %v5627 = vmul.f32 %v5626, %v5589
  %v5628 = vmul.f32 %v5627, %v5626
  %v5629 = vmul.f32 0.5, %v5628
  %v5630 = vsub.f32 1.5, %v5629
  %v5631 = vmul.f32 %v5626, %v5630
  %v5632 = vmul.f32 %v5589, %v5631
  %vm5633 = vcmp.eq.f32.partialorder %v5589, inf
  %v5634 = vsel %vm5633, %v5589, %v5632
  %vm5635 = vcmp.eq.f32.partialorder %v5589, 0.0
  %v5636 = vand.u32 %v5589, 2147483648
  %v5637 = vsel %vm5635, %v5636, %v5634
  %v5642 = vperm.slane %v5601, %v401
  %v5643 = vperm.slane %v5613, %v403
  %v5644 = vsel %vm405, %v5643, %v5642
  %v5645 = vperm.slane %v5625, %v401
  %v5646 = vperm.slane %v5637, %v403
  %v5647 = vsel %vm405, %v5646, %v5645
  %v5648 = vsel %vm410, %v5647, %v5644
  %v5649 = vsel %vm412, %v5644, %v5648
  %v5650 = vsel %vm414, %v5647, %v5649
  %v5652 = vmul.f32 %v5573, %v5650
  %v5653 = vadd.f32 %v5652, 1e-08
  %v5655 = vperm.slane %v5653, 0
  %v5656 = vlaneseq
  %v5657 = vshrl.u32 %v5656, 7
  %5659 = vset.pattern.permute.xlu0 %v5657
  %5660 = vperm.xlu0 %5659, %v5655
  %v5661 = vpop.permute.xlu0 %5660
  %v5662 = vlaneseq
  %v5663 = vshrl.u32 %v5662, 7
  %v5664 = vadd.s32 %v5663, 8
  %5665 = vset.pattern.permute.xlu0 %v5664
  %5666 = vperm.xlu0 %5665, %v5655
  %v5667 = vpop.permute.xlu0 %5666
  %v5668 = vperm.slane %v5653, 1
  %v5669 = vlaneseq
  %v5670 = vshrl.u32 %v5669, 7
  %5672 = vset.pattern.permute.xlu0 %v5670
  %5673 = vperm.xlu0 %5672, %v5668
  %v5674 = vpop.permute.xlu0 %5673
  %v5675 = vlaneseq
  %v5676 = vshrl.u32 %v5675, 7
  %v5677 = vadd.s32 %v5676, 8
  %5678 = vset.pattern.permute.xlu0 %v5677
  %5679 = vperm.xlu0 %5678, %v5668
  %v5680 = vpop.permute.xlu0 %5679
  %v5681 = vperm.slane %v5653, 2
  %v5682 = vlaneseq
  %v5683 = vshrl.u32 %v5682, 7
  %5685 = vset.pattern.permute.xlu0 %v5683
  %5686 = vperm.xlu0 %5685, %v5681
  %v5687 = vpop.permute.xlu0 %5686
  %v5688 = vlaneseq
  %v5689 = vshrl.u32 %v5688, 7
  %v5690 = vadd.s32 %v5689, 8
  %5691 = vset.pattern.permute.xlu0 %v5690
  %5692 = vperm.xlu0 %5691, %v5681
  %v5693 = vpop.permute.xlu0 %5692
  %v5694 = vperm.slane %v5653, 3
  %v5695 = vlaneseq
  %v5696 = vshrl.u32 %v5695, 7
  %5698 = vset.pattern.permute.xlu0 %v5696
  %5699 = vperm.xlu0 %5698, %v5694
  %v5700 = vpop.permute.xlu0 %5699
  %v5701 = vlaneseq
  %v5702 = vshrl.u32 %v5701, 7
  %v5703 = vadd.s32 %v5702, 8
  %5704 = vset.pattern.permute.xlu0 %v5703
  %5705 = vperm.xlu0 %5704, %v5694
  %v5706 = vpop.permute.xlu0 %5705
  %v5715 = vrcp.pop %v5661
  %v5716 = vmul.f32 %v5661, %v5715
  %v5717 = vsub.f32 1.0, %v5716
  %v5718 = vmul.f32 %v5715, %v5717
  %v5719 = vadd.f32 %v5715, %v5718
  %vm5720 = vweird.f32 %v5661
  %vm5721 = vweird.f32 %v5715
  %vm5722 = vmor %vm5720, %vm5721
  %v5723 = vsel %vm5722, %v5715, %v5719
  %v5724 = vand.u32 2147483647, %v5661
  %vm5725 = vcmp.eq.f32.partialorder %v5724, 8.507059e+37
  %v5726 = vand.u32 %v5661, 2147483648
  %v5727 = vor.u32 1.1754944e-38, %v5726
  %v5728 = vsel %vm5725, %v5727, %v5723
  %v5729 = vmul.f32 %v5536, %v5728
  %v5730 = vrcp.pop %v5667
  %v5731 = vmul.f32 %v5667, %v5730
  %v5732 = vsub.f32 1.0, %v5731
  %v5733 = vmul.f32 %v5730, %v5732
  %v5734 = vadd.f32 %v5730, %v5733
  %vm5735 = vweird.f32 %v5667
  %vm5736 = vweird.f32 %v5730
  %vm5737 = vmor %vm5735, %vm5736
  %v5738 = vsel %vm5737, %v5730, %v5734
  %v5739 = vand.u32 2147483647, %v5667
  %vm5740 = vcmp.eq.f32.partialorder %v5739, 8.507059e+37
  %v5741 = vand.u32 %v5667, 2147483648
  %v5742 = vor.u32 1.1754944e-38, %v5741
  %v5743 = vsel %vm5740, %v5742, %v5738
  %v5744 = vmul.f32 %v5539, %v5743
  %v5745 = vrcp.pop %v5674
  %v5746 = vmul.f32 %v5674, %v5745
  %v5747 = vsub.f32 1.0, %v5746
  %v5748 = vmul.f32 %v5745, %v5747
  %v5749 = vadd.f32 %v5745, %v5748
  %vm5750 = vweird.f32 %v5674
  %vm5751 = vweird.f32 %v5745
  %vm5752 = vmor %vm5750, %vm5751
  %v5753 = vsel %vm5752, %v5745, %v5749
  %v5754 = vand.u32 2147483647, %v5674
  %vm5755 = vcmp.eq.f32.partialorder %v5754, 8.507059e+37
  %v5756 = vand.u32 %v5674, 2147483648
  %v5757 = vor.u32 1.1754944e-38, %v5756
  %v5758 = vsel %vm5755, %v5757, %v5753
  %v5759 = vmul.f32 %v5542, %v5758
  %v5760 = vrcp.pop %v5680
  %v5761 = vmul.f32 %v5680, %v5760
  %v5762 = vsub.f32 1.0, %v5761
  %v5763 = vmul.f32 %v5760, %v5762
  %v5764 = vadd.f32 %v5760, %v5763
  %vm5765 = vweird.f32 %v5680
  %vm5766 = vweird.f32 %v5760
  %vm5767 = vmor %vm5765, %vm5766
  %v5768 = vsel %vm5767, %v5760, %v5764
  %v5769 = vand.u32 2147483647, %v5680
  %vm5770 = vcmp.eq.f32.partialorder %v5769, 8.507059e+37
  %v5771 = vand.u32 %v5680, 2147483648
  %v5772 = vor.u32 1.1754944e-38, %v5771
  %v5773 = vsel %vm5770, %v5772, %v5768
  %v5774 = vmul.f32 %v5545, %v5773
  %v5775 = vrcp.pop %v5687
  %v5776 = vmul.f32 %v5687, %v5775
  %v5777 = vsub.f32 1.0, %v5776
  %v5778 = vmul.f32 %v5775, %v5777
  %v5779 = vadd.f32 %v5775, %v5778
  %vm5780 = vweird.f32 %v5687
  %vm5781 = vweird.f32 %v5775
  %vm5782 = vmor %vm5780, %vm5781
  %v5783 = vsel %vm5782, %v5775, %v5779
  %v5784 = vand.u32 2147483647, %v5687
  %vm5785 = vcmp.eq.f32.partialorder %v5784, 8.507059e+37
  %v5786 = vand.u32 %v5687, 2147483648
  %v5787 = vor.u32 1.1754944e-38, %v5786
  %v5788 = vsel %vm5785, %v5787, %v5783
  %v5789 = vmul.f32 %v5548, %v5788
  %v5790 = vrcp.pop %v5693
  %v5791 = vmul.f32 %v5693, %v5790
  %v5792 = vsub.f32 1.0, %v5791
  %v5793 = vmul.f32 %v5790, %v5792
  %v5794 = vadd.f32 %v5790, %v5793
  %vm5795 = vweird.f32 %v5693
  %vm5796 = vweird.f32 %v5790
  %vm5797 = vmor %vm5795, %vm5796
  %v5798 = vsel %vm5797, %v5790, %v5794
  %v5799 = vand.u32 2147483647, %v5693
  %vm5800 = vcmp.eq.f32.partialorder %v5799, 8.507059e+37
  %v5801 = vand.u32 %v5693, 2147483648
  %v5802 = vor.u32 1.1754944e-38, %v5801
  %v5803 = vsel %vm5800, %v5802, %v5798
  %v5804 = vmul.f32 %v5551, %v5803
  %v5805 = vrcp.pop %v5700
  %v5806 = vmul.f32 %v5700, %v5805
  %v5807 = vsub.f32 1.0, %v5806
  %v5808 = vmul.f32 %v5805, %v5807
  %v5809 = vadd.f32 %v5805, %v5808
  %vm5810 = vweird.f32 %v5700
  %vm5811 = vweird.f32 %v5805
  %vm5812 = vmor %vm5810, %vm5811
  %v5813 = vsel %vm5812, %v5805, %v5809
  %v5814 = vand.u32 2147483647, %v5700
  %vm5815 = vcmp.eq.f32.partialorder %v5814, 8.507059e+37
  %v5816 = vand.u32 %v5700, 2147483648
  %v5817 = vor.u32 1.1754944e-38, %v5816
  %v5818 = vsel %vm5815, %v5817, %v5813
  %v5819 = vmul.f32 %v5554, %v5818
  %v5820 = vrcp.pop %v5706
  %v5821 = vmul.f32 %v5706, %v5820
  %v5822 = vsub.f32 1.0, %v5821
  %v5823 = vmul.f32 %v5820, %v5822
  %v5824 = vadd.f32 %v5820, %v5823
  %vm5825 = vweird.f32 %v5706
  %vm5826 = vweird.f32 %v5820
  %vm5827 = vmor %vm5825, %vm5826
  %v5828 = vsel %vm5827, %v5820, %v5824
  %v5829 = vand.u32 2147483647, %v5706
  %vm5830 = vcmp.eq.f32.partialorder %v5829, 8.507059e+37
  %v5831 = vand.u32 %v5706, 2147483648
  %v5832 = vor.u32 1.1754944e-38, %v5831
  %v5833 = vsel %vm5830, %v5832, %v5828
  %v5834 = vmul.f32 %v5557, %v5833
  %5836 = vset.pattern.permute.xlu0 16
  %5837 = vperm.xlu0 %5836, %v5466
  %v5838 = vpop.permute.xlu0 %5837
  %5848 = vset.pattern.permute.xlu0 0
  %5849 = vperm.xlu0 %5848, %v5729
  %v5850 = vpop.permute.xlu0 %5849
  %5851 = vset.pattern.permute.xlu0 0
  %5852 = vperm.xlu0 %5851, %v5744
  %v5853 = vpop.permute.xlu0 %5852
  %5854 = vset.pattern.permute.xlu0 0
  %5855 = vperm.xlu0 %5854, %v5759
  %v5856 = vpop.permute.xlu0 %5855
  %5857 = vset.pattern.permute.xlu0 0
  %5858 = vperm.xlu0 %5857, %v5774
  %v5859 = vpop.permute.xlu0 %5858
  %5860 = vset.pattern.permute.xlu0 0
  %5861 = vperm.xlu0 %5860, %v5789
  %v5862 = vpop.permute.xlu0 %5861
  %5863 = vset.pattern.permute.xlu0 0
  %5864 = vperm.xlu0 %5863, %v5804
  %v5865 = vpop.permute.xlu0 %5864
  %5866 = vset.pattern.permute.xlu0 0
  %5867 = vperm.xlu0 %5866, %v5819
  %v5868 = vpop.permute.xlu0 %5867
  %5869 = vset.pattern.permute.xlu0 0
  %5870 = vperm.xlu0 %5869, %v5834
  %v5871 = vpop.permute.xlu0 %5870
  %v5872 = vperm.slane %v5850, %v401
  %v5873 = vperm.slane %v5853, %v403
  %v5874 = vsel %vm405, %v5873, %v5872
  %v5875 = vperm.slane %v5856, %v401
  %v5876 = vperm.slane %v5859, %v403
  %v5877 = vsel %vm405, %v5876, %v5875
  %v5878 = vperm.slane %v5862, %v401
  %v5879 = vperm.slane %v5865, %v403
  %v5880 = vsel %vm405, %v5879, %v5878
  %v5881 = vperm.slane %v5868, %v401
  %v5882 = vperm.slane %v5871, %v403
  %v5883 = vsel %vm405, %v5882, %v5881
  %v5884 = vsel %vm410, %v5877, %v5874
  %v5885 = vsel %vm412, %v5880, %v5884
  %v5886 = vsel %vm414, %v5883, %v5885
  %v5888 = vmul.f32 %v5838, %v5886
  %v5889 = vsel %vm316, %v5888, -inf
  %5890 = vmax.xlane.f32.xlu0 %v5889
  %v5891 = vpop.xlane.xlu0 %5890
  %v5892 = vsub.f32 %v5888, %v5891
  %v5893 = vmul.f32 %v5892, 1.442695
  %v5894 = vpow.pop %v5893
  %v5895 = vsel %vm316, %v5894, 0.0
  %5896 = vadd.xlane.f32.xlu0 %v5895
  %v5897 = vpop.xlane.xlu0 %5896
  %v5898 = vrcp.pop %v5897
  %v5899 = vmul.f32 %v5897, %v5898
  %v5900 = vsub.f32 1.0, %v5899
  %v5901 = vmul.f32 %v5898, %v5900
  %v5902 = vadd.f32 %v5898, %v5901
  %vm5903 = vweird.f32 %v5897
  %vm5904 = vweird.f32 %v5898
  %vm5905 = vmor %vm5903, %vm5904
  %v5906 = vsel %vm5905, %v5898, %v5902
  %v5907 = vand.u32 2147483647, %v5897
  %vm5908 = vcmp.eq.f32.partialorder %v5907, 8.507059e+37
  %v5909 = vand.u32 %v5897, 2147483648
  %v5910 = vor.u32 1.1754944e-38, %v5909
  %v5911 = vsel %vm5908, %v5910, %v5906
  %v5912 = vmul.f32 %v5894, %v5911
  %5914 = vset.pattern.permute.xlu0 17
  %5915 = vperm.xlu0 %5914, %v5485
  %v5916 = vpop.permute.xlu0 %5915
  %v5918 = vmul.f32 %v5916, %v5912
  %v5919 = vsub.f32 1.0, %v5485
  %5921 = vset.pattern.permute.xlu0 17
  %5922 = vperm.xlu0 %5921, %v5919
  %v5923 = vpop.permute.xlu0 %5922
  %v5925 = vmul.f32 %v5923, %v5117
  %v5926 = vadd.f32 %v5918, %v5925
  %5928 = vset.pattern.permute.xlu0 18
  %5929 = vperm.xlu0 %5928, %v5513
  %v5930 = vpop.permute.xlu0 %5929
  %v5932 = vmul.f32 %v5930, %v5926
  %v5933 = vadd.f32 %v5932, 0.0
  %5935 = vrot.lane.b32.xlu0 %v5926, 113
  %v5936 = vpop.permute.xlu0 %5935
  %5938 = vrot.lane.b32.xlu0 %v5926, 1
  %v5939 = vpop.permute.xlu0 %5938
  %v5941 = vsel %vm706, %v5936, %v5939
  %5942 = vset.pattern.permute.xlu0 19
  %5943 = vperm.xlu0 %5942, %v5513
  %v5944 = vpop.permute.xlu0 %5943
  %v5946 = vmul.f32 %v5944, %v5941
  %v5947 = vadd.f32 %v5933, %v5946
  %5948 = vrot.lane.b32.xlu0 %v5926, 127
  %v5949 = vpop.permute.xlu0 %5948
  %5951 = vrot.lane.b32.xlu0 %v5926, 15
  %v5952 = vpop.permute.xlu0 %5951
  %v5954 = vsel %vm720, %v5949, %v5952
  %5955 = vset.pattern.permute.xlu0 20
  %5956 = vperm.xlu0 %5955, %v5513
  %v5957 = vpop.permute.xlu0 %5956
  %v5959 = vmul.f32 %v5957, %v5954
  %v5960 = vadd.f32 %v5947, %v5959
  %v5961 = vadd.f32 %v5960, 1e-08
  %v5962 = vlog2.pop %v5961
  %v5963 = vmul.f32 %v5962, 0.6931472
  %5964 = vset.pattern.permute.xlu0 21
  %5965 = vperm.xlu0 %5964, %v5466
  %v5966 = vpop.permute.xlu0 %5965
  %v5968 = vmul.f32 %v5966, %v5963
  %v5969 = vmul.f32 %v5968, 1.442695
  %v5970 = vpow.pop %v5969
  %v5971 = vsel %vm316, %v5970, 0.0
  %5972 = vadd.xlane.f32.xlu0 %v5971
  %v5973 = vpop.xlane.xlu0 %5972
  %v5974 = vrcp.pop %v5973
  %v5975 = vmul.f32 %v5973, %v5974
  %v5976 = vsub.f32 1.0, %v5975
  %v5977 = vmul.f32 %v5974, %v5976
  %v5978 = vadd.f32 %v5974, %v5977
  %vm5979 = vweird.f32 %v5973
  %vm5980 = vweird.f32 %v5974
  %vm5981 = vmor %vm5979, %vm5980
  %v5982 = vsel %vm5981, %v5974, %v5978
  %v5983 = vand.u32 2147483647, %v5973
  %vm5984 = vcmp.eq.f32.partialorder %v5983, 8.507059e+37
  %v5985 = vand.u32 %v5973, 2147483648
  %v5986 = vor.u32 1.1754944e-38, %v5985
  %v5987 = vsel %vm5984, %v5986, %v5982
  %v5988 = vmul.f32 %v5970, %v5987
  %v5989 = vperm.slane %v5988, 0
  %v5990 = vlaneseq
  %v5991 = vshrl.u32 %v5990, 7
  %5993 = vset.pattern.permute.xlu0 %v5991
  %5994 = vperm.xlu0 %5993, %v5989
  %v5995 = vpop.permute.xlu0 %5994
  %v5996 = vlaneseq
  %v5997 = vshrl.u32 %v5996, 7
  %v5998 = vadd.s32 %v5997, 8
  %5999 = vset.pattern.permute.xlu0 %v5998
  %6000 = vperm.xlu0 %5999, %v5989
  %v6001 = vpop.permute.xlu0 %6000
  %v6002 = vperm.slane %v5988, 1
  %v6003 = vlaneseq
  %v6004 = vshrl.u32 %v6003, 7
  %6006 = vset.pattern.permute.xlu0 %v6004
  %6007 = vperm.xlu0 %6006, %v6002
  %v6008 = vpop.permute.xlu0 %6007
  %v6009 = vlaneseq
  %v6010 = vshrl.u32 %v6009, 7
  %v6011 = vadd.s32 %v6010, 8
  %6012 = vset.pattern.permute.xlu0 %v6011
  %6013 = vperm.xlu0 %6012, %v6002
  %v6014 = vpop.permute.xlu0 %6013
  %v6015 = vmul.f32 %v5995, %v5272
  %v6016 = vmul.f32 %v6001, %v5273
  %v6017 = vmul.f32 %v6008, %v5274
  %v6018 = vmul.f32 %v6014, %v5275
  %v6019 = vsel %vm290, %v6015, 0.0
  %v6020 = vsel %vm290, %v6016, 0.0
  %v6021 = vadd.f32 %v6019, %v6020
  %v6022 = vrot.slane %v6021, 4
  %v6023 = vadd.f32 %v6021, %v6022
  %v6024 = vrot.slane %v6023, 2
  %v6025 = vadd.f32 %v6023, %v6024
  %v6026 = vrot.slane %v6025, 1
  %v6027 = vadd.f32 %v6025, %v6026
  %v6028 = vsel %vm290, %v6017, 0.0
  %v6029 = vsel %vm290, %v6018, 0.0
  %v6030 = vadd.f32 %v6028, %v6029
  %v6031 = vrot.slane %v6030, 4
  %v6032 = vadd.f32 %v6030, %v6031
  %v6033 = vrot.slane %v6032, 2
  %v6034 = vadd.f32 %v6032, %v6033
  %v6035 = vrot.slane %v6034, 1
  %v6036 = vadd.f32 %v6034, %v6035
  %v6037 = vsub.f32 0.0, %v5449
  %v6038 = vmul.f32 %v6037, 1.442695
  %v6039 = vpow.pop %v6038
  %v6040 = vadd.f32 %v6039, 1.0
  %v6041 = vrcp.pop %v6040
  %v6042 = vmul.f32 %v6040, %v6041
  %v6043 = vsub.f32 1.0, %v6042
  %v6044 = vmul.f32 %v6041, %v6043
  %v6045 = vadd.f32 %v6041, %v6044
  %vm6046 = vweird.f32 %v6040
  %vm6047 = vweird.f32 %v6041
  %vm6048 = vmor %vm6046, %vm6047
  %v6049 = vsel %vm6048, %v6041, %v6045
  %v6050 = vand.u32 2147483647, %v6040
  %vm6051 = vcmp.eq.f32.partialorder %v6050, 8.507059e+37
  %v6052 = vand.u32 %v6040, 2147483648
  %v6053 = vor.u32 1.1754944e-38, %v6052
  %v6054 = vsel %vm6051, %v6053, %v6049
  %v6055 = vmul.f32 1.0, %v6054
  %v6056 = vtanh.pop %v5449
  %v6057 = vperm.slane %v5988, 2
  %v6058 = vlaneseq
  %v6059 = vshrl.u32 %v6058, 7
  %6061 = vset.pattern.permute.xlu0 %v6059
  %6062 = vperm.xlu0 %6061, %v6057
  %v6063 = vpop.permute.xlu0 %6062
  %v6064 = vlaneseq
  %v6065 = vshrl.u32 %v6064, 7
  %v6066 = vadd.s32 %v6065, 8
  %6067 = vset.pattern.permute.xlu0 %v6066
  %6068 = vperm.xlu0 %6067, %v6057
  %v6069 = vpop.permute.xlu0 %6068
  %v6070 = vperm.slane %v5988, 3
  %v6071 = vlaneseq
  %v6072 = vshrl.u32 %v6071, 7
  %6074 = vset.pattern.permute.xlu0 %v6072
  %6075 = vperm.xlu0 %6074, %v6070
  %v6076 = vpop.permute.xlu0 %6075
  %v6077 = vlaneseq
  %v6078 = vshrl.u32 %v6077, 7
  %v6079 = vadd.s32 %v6078, 8
  %6080 = vset.pattern.permute.xlu0 %v6079
  %6081 = vperm.xlu0 %6080, %v6070
  %v6082 = vpop.permute.xlu0 %6081
  %v6084 = vrot.slane %v6056, 1
  %v6086 = vrot.slane %v6055, 1
  %v6087 = vperm.slane %v6055, 0
  %v6088 = vperm.slane %v6086, 0
  %6089 = vrot.lane.b32.xlu0 %v6087, 84
  %v6090 = vpop.permute.xlu0 %6089
  %6091 = vrot.lane.b32.xlu0 %v6088, 84
  %v6092 = vpop.permute.xlu0 %6091
  %v6095 = vmul.f32 %v5272, %v6090
  %v6096 = vmul.f32 %v5273, %v6090
  %v6097 = vmul.f32 %v5274, %v6092
  %v6098 = vmul.f32 %v5275, %v6092
  %v6099 = vperm.slane %v6056, 0
  %v6100 = vperm.slane %v6084, 0
  %6107 = vrot.lane.b32.xlu0 %v6095, 60
  %v6108 = vpop.permute.xlu0 %6107
  %6109 = vrot.lane.b32.xlu0 %v6096, 60
  %v6110 = vpop.permute.xlu0 %6109
  %6111 = vrot.lane.b32.xlu0 %v6097, 60
  %v6112 = vpop.permute.xlu0 %6111
  %6113 = vrot.lane.b32.xlu0 %v6098, 60
  %v6114 = vpop.permute.xlu0 %6113
  %v6119 = vsub.f32 %v6099, %v6108
  %v6120 = vsub.f32 %v6099, %v6110
  %v6121 = vsub.f32 %v6100, %v6112
  %v6122 = vsub.f32 %v6100, %v6114
  %v6123 = vmul.f32 %v6063, %v6119
  %v6124 = vmul.f32 %v6069, %v6120
  %v6125 = vmul.f32 %v6076, %v6121
  %v6126 = vmul.f32 %v6082, %v6122
  %6131 = vrot.lane.b32.xlu0 %v6123, 68
  %v6132 = vpop.permute.xlu0 %6131
  %6133 = vrot.lane.b32.xlu0 %v6124, 68
  %v6134 = vpop.permute.xlu0 %6133
  %6135 = vrot.lane.b32.xlu0 %v6125, 68
  %v6136 = vpop.permute.xlu0 %6135
  %6137 = vrot.lane.b32.xlu0 %v6126, 68
  %v6138 = vpop.permute.xlu0 %6137
  %v6143 = vadd.f32 %v5272, %v6132
  %v6144 = vadd.f32 %v5273, %v6134
  %v6145 = vadd.f32 %v5274, %v6136
  %v6146 = vadd.f32 %v5275, %v6138
  %v6150 = vsel %vm410, %v6036, %v6027
  %6151 = vrot.lane.b32.xlu0 %v6150, 32
  %v6152 = vpop.permute.xlu0 %6151
  %v6154 = vsel %vm178, %v5428, %v6152
  %v6156 = vsel %vm925, %v6154, 0
  %6158 = vmatpush.msra.mxu0 0.0
  %6159 = vmatpush.msra.mxu0 0.0
  %6160 = vmatpush.msra.mxu0 0.0
  %6161 = vmatpush.msra.mxu0 0.0
  %6162 = vmatpush.msra.mxu0 0.0
  %6163 = vmatpush.msra.mxu0 0.0
  %6164 = vmatpush.msra.mxu0 0.0
  %6165 = vmatpush.msra.mxu0 0.0
  %6166 = vmatpush.msra.mxu0 0.0
  %6167 = vmatpush.msra.mxu0 0.0
  %6168 = vmatpush.msra.mxu0 %v69
  %6169 = vmatpush.msra.mxu0 %v68
  %6170 = vmatpush.msra.mxu0 %v67
  %6171 = vmatpush.msra.mxu0 %v66
  %6172 = vmatpush.msra.mxu0 %v65
  %6173 = vmatpush.msra.mxu0 %v64
  %6174 = vmatmul.f32.gmra.mxu0 %v6156
  %v6175 = vpop.f32.mrf.mxu0
  %v6176 = vadd.f32 %v923, %v6175
  %6177 = vdwg.mxu0
  %v6178 = vmax.f32 %v6176, -20.0
  %v6179 = vmin.f32 %v6178, 20.0
  %v6181 = vsel %vm178, %v6179, 0
  %6183 = vmatpush.msra.mxu0 0.0
  %6184 = vmatpush.msra.mxu0 0.0
  %6185 = vmatpush.msra.mxu0 0.0
  %6186 = vmatpush.msra.mxu0 0.0
  %6187 = vmatpush.msra.mxu0 0.0
  %6188 = vmatpush.msra.mxu0 0.0
  %6189 = vmatpush.msra.mxu0 0.0
  %6190 = vmatpush.msra.mxu0 0.0
  %6191 = vmatpush.msra.mxu0 0.0
  %6192 = vmatpush.msra.mxu0 0.0
  %6193 = vmatpush.msra.mxu0 0.0
  %6194 = vmatpush.msra.mxu0 0.0
  %6195 = vmatpush.msra.mxu0 %v74
  %6196 = vmatpush.msra.mxu0 %v73
  %6197 = vmatpush.msra.mxu0 %v72
  %6198 = vmatpush.msra.mxu0 %v71
  %6199 = vmatmul.f32.gmra.mxu0 %v6181
  %v6200 = vpop.f32.mrf.mxu0
  %v6201 = vadd.f32 %v952, %v6200
  %6202 = vdwg.mxu0
  %v6203 = vsub.f32 0.0, %v6201
  %v6204 = vmul.f32 %v6203, 1.442695
  %v6205 = vpow.pop %v6204
  %v6206 = vadd.f32 %v6205, 1.0
  %v6207 = vrcp.pop %v6206
  %v6208 = vmul.f32 %v6206, %v6207
  %v6209 = vsub.f32 1.0, %v6208
  %v6210 = vmul.f32 %v6207, %v6209
  %v6211 = vadd.f32 %v6207, %v6210
  %vm6212 = vweird.f32 %v6206
  %vm6213 = vweird.f32 %v6207
  %vm6214 = vmor %vm6212, %vm6213
  %v6215 = vsel %vm6214, %v6207, %v6211
  %v6216 = vand.u32 2147483647, %v6206
  %vm6217 = vcmp.eq.f32.partialorder %v6216, 8.507059e+37
  %v6218 = vand.u32 %v6206, 2147483648
  %v6219 = vor.u32 1.1754944e-38, %v6218
  %v6220 = vsel %vm6217, %v6219, %v6215
  %v6221 = vmul.f32 1.0, %v6220
  %s6222 = scalar_lea.vmem %s15, 12
  %6223 = vst.msk [vmem:[%s6222] sm:$0x3] %vm996, %v6221
  %s6224 = scalar_lea.vmem %s0, 14
  %v6225 = vld [vmem:[%s6224] sm:$0x3]
  %6226 = vrot.lane.b32.xlu0 %v6150, 10
  %v6227 = vpop.permute.xlu0 %6226
  %6230 = vrot.lane.b32.xlu0 %v5423, 58
  %v6231 = vpop.permute.xlu0 %6230
  %v6233 = vsel %vm94, %v6225, %v6227
  %v6234 = vsel %vm96, %v6233, %v6231
  %v6236 = vsel %vm101, %v6234, 0
  %6238 = vmatpush.msra.mxu0 0.0
  %6239 = vmatpush.msra.mxu0 0.0
  %6240 = vmatpush.msra.mxu0 0.0
  %6241 = vmatpush.msra.mxu0 0.0
  %6242 = vmatpush.msra.mxu0 0.0
  %6243 = vmatpush.msra.mxu0 0.0
  %6244 = vmatpush.msra.mxu0 0.0
  %6245 = vmatpush.msra.mxu0 0.0
  %6246 = vmatpush.msra.mxu0 %v107
  %6247 = vmatpush.msra.mxu0 %v56
  %6248 = vmatpush.msra.mxu0 %v55
  %6249 = vmatpush.msra.mxu0 %v54
  %6250 = vmatpush.msra.mxu0 %v53
  %6251 = vmatpush.msra.mxu0 %v52
  %6252 = vmatpush.msra.mxu0 %v51
  %6253 = vmatpush.msra.mxu0 %v50
  %6254 = vmatmul.f32.gmra.mxu0 %v6236
  %v6255 = vpop.f32.mrf.mxu0
  %v6256 = vadd.f32 %v99, %v6255
  %6257 = vdwg.mxu0
  %v6258 = vsub.f32 0.0, %v6256
  %v6259 = vmul.f32 %v6258, 1.442695
  %v6260 = vpow.pop %v6259
  %v6261 = vadd.f32 %v6260, 1.0
  %v6262 = vrcp.pop %v6261
  %v6263 = vmul.f32 %v6261, %v6262
  %v6264 = vsub.f32 1.0, %v6263
  %v6265 = vmul.f32 %v6262, %v6264
  %v6266 = vadd.f32 %v6262, %v6265
  %vm6267 = vweird.f32 %v6261
  %vm6268 = vweird.f32 %v6262
  %vm6269 = vmor %vm6267, %vm6268
  %v6270 = vsel %vm6269, %v6262, %v6266
  %v6271 = vand.u32 2147483647, %v6261
  %vm6272 = vcmp.eq.f32.partialorder %v6271, 8.507059e+37
  %v6273 = vand.u32 %v6261, 2147483648
  %v6274 = vor.u32 1.1754944e-38, %v6273
  %v6275 = vsel %vm6272, %v6274, %v6270
  %v6276 = vmul.f32 1.0, %v6275
  %v6277 = vtanh.pop %v6256
  %v6278 = vmul.f32 %v6276, %v5417
  %6280 = vrot.lane.b32.xlu0 %v6277, 64
  %v6281 = vpop.permute.xlu0 %6280
  %v6283 = vmul.f32 %v6276, %v6281
  %6285 = vrot.lane.b32.xlu0 %v6283, 32
  %v6286 = vpop.permute.xlu0 %6285
  %v6288 = vadd.f32 %v6278, %v6286
  %v6289 = vtanh.pop %v6288
  %6291 = vrot.lane.b32.xlu0 %v6289, 64
  %v6292 = vpop.permute.xlu0 %6291
  %v6294 = vmul.f32 %v6276, %v6292
  %v6295 = vmax.f32 %v6294, -20.0
  %v6296 = vmin.f32 %v6295, 20.0
  %6298 = vrot.lane.b32.xlu0 %v6296, 32
  %v6299 = vpop.permute.xlu0 %6298
  %v6300 = vsel %vm178, %v6299, 0
  %6302 = vmatpush.msra.mxu0 0.0
  %6303 = vmatpush.msra.mxu0 0.0
  %6304 = vmatpush.msra.mxu0 0.0
  %6305 = vmatpush.msra.mxu0 0.0
  %6306 = vmatpush.msra.mxu0 0.0
  %6307 = vmatpush.msra.mxu0 0.0
  %6308 = vmatpush.msra.mxu0 0.0
  %6309 = vmatpush.msra.mxu0 0.0
  %6310 = vmatpush.msra.mxu0 0.0
  %6311 = vmatpush.msra.mxu0 0.0
  %6312 = vmatpush.msra.mxu0 0.0
  %6313 = vmatpush.msra.mxu0 0.0
  %6314 = vmatpush.msra.mxu0 %v62
  %6315 = vmatpush.msra.mxu0 %v61
  %6316 = vmatpush.msra.mxu0 %v60
  %6317 = vmatpush.msra.mxu0 %v59
  %6318 = vmatmul.f32.gmra.mxu0 %v6300
  %v6319 = vpop.f32.mrf.mxu0
  %v6320 = vadd.f32 %v173, %v6319
  %6321 = vdwg.mxu0
  %v6323 = vrot.slane %v6320, 6
  %6324 = vrot.lane.b32.xlu0 %v6323, 106
  %v6325 = vpop.permute.xlu0 %6324
  %v6327 = vsel %vm105, %v6320, %v6325
  %v6328 = vtanh.pop %v6327
  %v6329 = vmax.f32 %v6327, 0.0
  %v6330 = vand.u32 2147483647, %v6327
  %v6331 = vsub.f32 0.0, %v6330
  %v6332 = vmul.f32 %v6331, 1.442695
  %v6333 = vpow.pop %v6332
  %v6334 = vadd.f32 %v6333, 1.0
  %v6335 = vlog2.pop %v6334
  %v6336 = vmul.f32 %v6335, 0.6931472
  %v6337 = vadd.f32 %v6329, %v6336
  %v6338 = vsub.f32 0.0, %v6327
  %v6339 = vmul.f32 %v6338, 1.442695
  %v6340 = vpow.pop %v6339
  %v6341 = vadd.f32 %v6340, 1.0
  %v6342 = vrcp.pop %v6341
  %v6343 = vmul.f32 %v6341, %v6342
  %v6344 = vsub.f32 1.0, %v6343
  %v6345 = vmul.f32 %v6342, %v6344
  %v6346 = vadd.f32 %v6342, %v6345
  %vm6347 = vweird.f32 %v6341
  %vm6348 = vweird.f32 %v6342
  %vm6349 = vmor %vm6347, %vm6348
  %v6350 = vsel %vm6349, %v6342, %v6346
  %v6351 = vand.u32 2147483647, %v6341
  %vm6352 = vcmp.eq.f32.partialorder %v6351, 8.507059e+37
  %v6353 = vand.u32 %v6341, 2147483648
  %v6354 = vor.u32 1.1754944e-38, %v6353
  %v6355 = vsel %vm6352, %v6354, %v6350
  %v6356 = vmul.f32 1.0, %v6355
  %v6357 = vsel %vm240, %v6327, -inf
  %6358 = vmax.xlane.f32.xlu0 %v6357
  %v6359 = vpop.xlane.xlu0 %6358
  %v6360 = vsub.f32 %v6327, %v6359
  %v6361 = vmul.f32 %v6360, 1.442695
  %v6362 = vpow.pop %v6361
  %6364 = vrot.lane.b32.xlu0 %v6362, 110
  %v6365 = vpop.permute.xlu0 %6364
  %v6367 = vsel %vm251, %v6365, 0.0
  %6368 = vadd.xlane.f32.xlu0 %v6367
  %v6369 = vpop.xlane.xlu0 %6368
  %v6370 = vrcp.pop %v6369
  %v6371 = vmul.f32 %v6369, %v6370
  %v6372 = vsub.f32 1.0, %v6371
  %v6373 = vmul.f32 %v6370, %v6372
  %v6374 = vadd.f32 %v6370, %v6373
  %vm6375 = vweird.f32 %v6369
  %vm6376 = vweird.f32 %v6370
  %vm6377 = vmor %vm6375, %vm6376
  %v6378 = vsel %vm6377, %v6370, %v6374
  %v6379 = vand.u32 2147483647, %v6369
  %vm6380 = vcmp.eq.f32.partialorder %v6379, 8.507059e+37
  %v6381 = vand.u32 %v6369, 2147483648
  %v6382 = vor.u32 1.1754944e-38, %v6381
  %v6383 = vsel %vm6380, %v6382, %v6378
  %v6384 = vmul.f32 %v6362, %v6383
  %v6386 = vrot.slane %v6328, 1
  %v6387 = vrot.slane %v6328, 2
  %v6388 = vrot.slane %v6328, 3
  %v6389 = vperm.slane %v6328, 0
  %v6390 = vperm.slane %v6386, 0
  %v6391 = vperm.slane %v6387, 0
  %v6392 = vperm.slane %v6388, 0
  %v6397 = vmul.f32 %v6143, %v6389
  %v6398 = vmul.f32 %v6144, %v6389
  %v6399 = vmul.f32 %v6145, %v6390
  %v6400 = vmul.f32 %v6146, %v6390
  %v6401 = vmul.f32 %v6143, %v6391
  %v6402 = vmul.f32 %v6144, %v6391
  %v6403 = vmul.f32 %v6145, %v6392
  %v6404 = vmul.f32 %v6146, %v6392
  %v6405 = vsel %vm290, %v6397, 0.0
  %6406 = vadd.xlane.f32.xlu0 %v6405
  %v6407 = vpop.xlane.xlu0 %6406
  %v6408 = vsel %vm290, %v6398, 0.0
  %6409 = vadd.xlane.f32.xlu0 %v6408
  %v6410 = vpop.xlane.xlu0 %6409
  %v6411 = vsel %vm290, %v6399, 0.0
  %6412 = vadd.xlane.f32.xlu0 %v6411
  %v6413 = vpop.xlane.xlu0 %6412
  %v6414 = vsel %vm290, %v6400, 0.0
  %6415 = vadd.xlane.f32.xlu0 %v6414
  %v6416 = vpop.xlane.xlu0 %6415
  %v6417 = vsel %vm290, %v6401, 0.0
  %6418 = vadd.xlane.f32.xlu0 %v6417
  %v6419 = vpop.xlane.xlu0 %6418
  %v6420 = vsel %vm290, %v6402, 0.0
  %6421 = vadd.xlane.f32.xlu0 %v6420
  %v6422 = vpop.xlane.xlu0 %6421
  %v6423 = vsel %vm290, %v6403, 0.0
  %6424 = vadd.xlane.f32.xlu0 %v6423
  %v6425 = vpop.xlane.xlu0 %6424
  %v6426 = vsel %vm290, %v6404, 0.0
  %6427 = vadd.xlane.f32.xlu0 %v6426
  %v6428 = vpop.xlane.xlu0 %6427
  %v6429 = vmul.f32 %v6328, %v6328
  %v6430 = vsel %vm316, %v6429, 0.0
  %6431 = vadd.xlane.f32.xlu0 %v6430
  %v6432 = vpop.xlane.xlu0 %6431
  %v6433 = vrsqrt.pop %v6432
  %v6434 = vmul.f32 %v6433, %v6432
  %v6435 = vmul.f32 %v6434, %v6433
  %v6436 = vmul.f32 0.5, %v6435
  %v6437 = vsub.f32 1.5, %v6436
  %v6438 = vmul.f32 %v6433, %v6437
  %v6439 = vmul.f32 %v6432, %v6438
  %vm6440 = vcmp.eq.f32.partialorder %v6432, inf
  %v6441 = vsel %vm6440, %v6432, %v6439
  %vm6442 = vcmp.eq.f32.partialorder %v6432, 0.0
  %v6443 = vand.u32 %v6432, 2147483648
  %v6444 = vsel %vm6442, %v6443, %v6441
  %v6445 = vmul.f32 %v6143, %v6143
  %v6446 = vmul.f32 %v6144, %v6144
  %v6447 = vmul.f32 %v6145, %v6145
  %v6448 = vmul.f32 %v6146, %v6146
  %v6449 = vsel %vm290, %v6445, 0.0
  %6450 = vadd.xlane.f32.xlu0 %v6449
  %v6451 = vpop.xlane.xlu0 %6450
  %v6452 = vsel %vm290, %v6446, 0.0
  %6453 = vadd.xlane.f32.xlu0 %v6452
  %v6454 = vpop.xlane.xlu0 %6453
  %v6455 = vsel %vm290, %v6447, 0.0
  %6456 = vadd.xlane.f32.xlu0 %v6455
  %v6457 = vpop.xlane.xlu0 %6456
  %v6458 = vsel %vm290, %v6448, 0.0
  %6459 = vadd.xlane.f32.xlu0 %v6458
  %v6460 = vpop.xlane.xlu0 %6459
  %v6461 = vrsqrt.pop %v6451
  %v6462 = vmul.f32 %v6461, %v6451
  %v6463 = vmul.f32 %v6462, %v6461
  %v6464 = vmul.f32 0.5, %v6463
  %v6465 = vsub.f32 1.5, %v6464
  %v6466 = vmul.f32 %v6461, %v6465
  %v6467 = vmul.f32 %v6451, %v6466
  %vm6468 = vcmp.eq.f32.partialorder %v6451, inf
  %v6469 = vsel %vm6468, %v6451, %v6467
  %vm6470 = vcmp.eq.f32.partialorder %v6451, 0.0
  %v6471 = vand.u32 %v6451, 2147483648
  %v6472 = vsel %vm6470, %v6471, %v6469
  %v6473 = vrsqrt.pop %v6454
  %v6474 = vmul.f32 %v6473, %v6454
  %v6475 = vmul.f32 %v6474, %v6473
  %v6476 = vmul.f32 0.5, %v6475
  %v6477 = vsub.f32 1.5, %v6476
  %v6478 = vmul.f32 %v6473, %v6477
  %v6479 = vmul.f32 %v6454, %v6478
  %vm6480 = vcmp.eq.f32.partialorder %v6454, inf
  %v6481 = vsel %vm6480, %v6454, %v6479
  %vm6482 = vcmp.eq.f32.partialorder %v6454, 0.0
  %v6483 = vand.u32 %v6454, 2147483648
  %v6484 = vsel %vm6482, %v6483, %v6481
  %v6485 = vrsqrt.pop %v6457
  %v6486 = vmul.f32 %v6485, %v6457
  %v6487 = vmul.f32 %v6486, %v6485
  %v6488 = vmul.f32 0.5, %v6487
  %v6489 = vsub.f32 1.5, %v6488
  %v6490 = vmul.f32 %v6485, %v6489
  %v6491 = vmul.f32 %v6457, %v6490
  %vm6492 = vcmp.eq.f32.partialorder %v6457, inf
  %v6493 = vsel %vm6492, %v6457, %v6491
  %vm6494 = vcmp.eq.f32.partialorder %v6457, 0.0
  %v6495 = vand.u32 %v6457, 2147483648
  %v6496 = vsel %vm6494, %v6495, %v6493
  %v6497 = vrsqrt.pop %v6460
  %v6498 = vmul.f32 %v6497, %v6460
  %v6499 = vmul.f32 %v6498, %v6497
  %v6500 = vmul.f32 0.5, %v6499
  %v6501 = vsub.f32 1.5, %v6500
  %v6502 = vmul.f32 %v6497, %v6501
  %v6503 = vmul.f32 %v6460, %v6502
  %vm6504 = vcmp.eq.f32.partialorder %v6460, inf
  %v6505 = vsel %vm6504, %v6460, %v6503
  %vm6506 = vcmp.eq.f32.partialorder %v6460, 0.0
  %v6507 = vand.u32 %v6460, 2147483648
  %v6508 = vsel %vm6506, %v6507, %v6505
  %v6513 = vperm.slane %v6472, %v401
  %v6514 = vperm.slane %v6484, %v403
  %v6515 = vsel %vm405, %v6514, %v6513
  %v6516 = vperm.slane %v6496, %v401
  %v6517 = vperm.slane %v6508, %v403
  %v6518 = vsel %vm405, %v6517, %v6516
  %v6519 = vsel %vm410, %v6518, %v6515
  %v6520 = vsel %vm412, %v6515, %v6519
  %v6521 = vsel %vm414, %v6518, %v6520
  %v6523 = vmul.f32 %v6444, %v6521
  %v6524 = vadd.f32 %v6523, 1e-08
  %v6526 = vperm.slane %v6524, 0
  %v6527 = vlaneseq
  %v6528 = vshrl.u32 %v6527, 7
  %6530 = vset.pattern.permute.xlu0 %v6528
  %6531 = vperm.xlu0 %6530, %v6526
  %v6532 = vpop.permute.xlu0 %6531
  %v6533 = vlaneseq
  %v6534 = vshrl.u32 %v6533, 7
  %v6535 = vadd.s32 %v6534, 8
  %6536 = vset.pattern.permute.xlu0 %v6535
  %6537 = vperm.xlu0 %6536, %v6526
  %v6538 = vpop.permute.xlu0 %6537
  %v6539 = vperm.slane %v6524, 1
  %v6540 = vlaneseq
  %v6541 = vshrl.u32 %v6540, 7
  %6543 = vset.pattern.permute.xlu0 %v6541
  %6544 = vperm.xlu0 %6543, %v6539
  %v6545 = vpop.permute.xlu0 %6544
  %v6546 = vlaneseq
  %v6547 = vshrl.u32 %v6546, 7
  %v6548 = vadd.s32 %v6547, 8
  %6549 = vset.pattern.permute.xlu0 %v6548
  %6550 = vperm.xlu0 %6549, %v6539
  %v6551 = vpop.permute.xlu0 %6550
  %v6552 = vperm.slane %v6524, 2
  %v6553 = vlaneseq
  %v6554 = vshrl.u32 %v6553, 7
  %6556 = vset.pattern.permute.xlu0 %v6554
  %6557 = vperm.xlu0 %6556, %v6552
  %v6558 = vpop.permute.xlu0 %6557
  %v6559 = vlaneseq
  %v6560 = vshrl.u32 %v6559, 7
  %v6561 = vadd.s32 %v6560, 8
  %6562 = vset.pattern.permute.xlu0 %v6561
  %6563 = vperm.xlu0 %6562, %v6552
  %v6564 = vpop.permute.xlu0 %6563
  %v6565 = vperm.slane %v6524, 3
  %v6566 = vlaneseq
  %v6567 = vshrl.u32 %v6566, 7
  %6569 = vset.pattern.permute.xlu0 %v6567
  %6570 = vperm.xlu0 %6569, %v6565
  %v6571 = vpop.permute.xlu0 %6570
  %v6572 = vlaneseq
  %v6573 = vshrl.u32 %v6572, 7
  %v6574 = vadd.s32 %v6573, 8
  %6575 = vset.pattern.permute.xlu0 %v6574
  %6576 = vperm.xlu0 %6575, %v6565
  %v6577 = vpop.permute.xlu0 %6576
  %v6586 = vrcp.pop %v6532
  %v6587 = vmul.f32 %v6532, %v6586
  %v6588 = vsub.f32 1.0, %v6587
  %v6589 = vmul.f32 %v6586, %v6588
  %v6590 = vadd.f32 %v6586, %v6589
  %vm6591 = vweird.f32 %v6532
  %vm6592 = vweird.f32 %v6586
  %vm6593 = vmor %vm6591, %vm6592
  %v6594 = vsel %vm6593, %v6586, %v6590
  %v6595 = vand.u32 2147483647, %v6532
  %vm6596 = vcmp.eq.f32.partialorder %v6595, 8.507059e+37
  %v6597 = vand.u32 %v6532, 2147483648
  %v6598 = vor.u32 1.1754944e-38, %v6597
  %v6599 = vsel %vm6596, %v6598, %v6594
  %v6600 = vmul.f32 %v6407, %v6599
  %v6601 = vrcp.pop %v6538
  %v6602 = vmul.f32 %v6538, %v6601
  %v6603 = vsub.f32 1.0, %v6602
  %v6604 = vmul.f32 %v6601, %v6603
  %v6605 = vadd.f32 %v6601, %v6604
  %vm6606 = vweird.f32 %v6538
  %vm6607 = vweird.f32 %v6601
  %vm6608 = vmor %vm6606, %vm6607
  %v6609 = vsel %vm6608, %v6601, %v6605
  %v6610 = vand.u32 2147483647, %v6538
  %vm6611 = vcmp.eq.f32.partialorder %v6610, 8.507059e+37
  %v6612 = vand.u32 %v6538, 2147483648
  %v6613 = vor.u32 1.1754944e-38, %v6612
  %v6614 = vsel %vm6611, %v6613, %v6609
  %v6615 = vmul.f32 %v6410, %v6614
  %v6616 = vrcp.pop %v6545
  %v6617 = vmul.f32 %v6545, %v6616
  %v6618 = vsub.f32 1.0, %v6617
  %v6619 = vmul.f32 %v6616, %v6618
  %v6620 = vadd.f32 %v6616, %v6619
  %vm6621 = vweird.f32 %v6545
  %vm6622 = vweird.f32 %v6616
  %vm6623 = vmor %vm6621, %vm6622
  %v6624 = vsel %vm6623, %v6616, %v6620
  %v6625 = vand.u32 2147483647, %v6545
  %vm6626 = vcmp.eq.f32.partialorder %v6625, 8.507059e+37
  %v6627 = vand.u32 %v6545, 2147483648
  %v6628 = vor.u32 1.1754944e-38, %v6627
  %v6629 = vsel %vm6626, %v6628, %v6624
  %v6630 = vmul.f32 %v6413, %v6629
  %v6631 = vrcp.pop %v6551
  %v6632 = vmul.f32 %v6551, %v6631
  %v6633 = vsub.f32 1.0, %v6632
  %v6634 = vmul.f32 %v6631, %v6633
  %v6635 = vadd.f32 %v6631, %v6634
  %vm6636 = vweird.f32 %v6551
  %vm6637 = vweird.f32 %v6631
  %vm6638 = vmor %vm6636, %vm6637
  %v6639 = vsel %vm6638, %v6631, %v6635
  %v6640 = vand.u32 2147483647, %v6551
  %vm6641 = vcmp.eq.f32.partialorder %v6640, 8.507059e+37
  %v6642 = vand.u32 %v6551, 2147483648
  %v6643 = vor.u32 1.1754944e-38, %v6642
  %v6644 = vsel %vm6641, %v6643, %v6639
  %v6645 = vmul.f32 %v6416, %v6644
  %v6646 = vrcp.pop %v6558
  %v6647 = vmul.f32 %v6558, %v6646
  %v6648 = vsub.f32 1.0, %v6647
  %v6649 = vmul.f32 %v6646, %v6648
  %v6650 = vadd.f32 %v6646, %v6649
  %vm6651 = vweird.f32 %v6558
  %vm6652 = vweird.f32 %v6646
  %vm6653 = vmor %vm6651, %vm6652
  %v6654 = vsel %vm6653, %v6646, %v6650
  %v6655 = vand.u32 2147483647, %v6558
  %vm6656 = vcmp.eq.f32.partialorder %v6655, 8.507059e+37
  %v6657 = vand.u32 %v6558, 2147483648
  %v6658 = vor.u32 1.1754944e-38, %v6657
  %v6659 = vsel %vm6656, %v6658, %v6654
  %v6660 = vmul.f32 %v6419, %v6659
  %v6661 = vrcp.pop %v6564
  %v6662 = vmul.f32 %v6564, %v6661
  %v6663 = vsub.f32 1.0, %v6662
  %v6664 = vmul.f32 %v6661, %v6663
  %v6665 = vadd.f32 %v6661, %v6664
  %vm6666 = vweird.f32 %v6564
  %vm6667 = vweird.f32 %v6661
  %vm6668 = vmor %vm6666, %vm6667
  %v6669 = vsel %vm6668, %v6661, %v6665
  %v6670 = vand.u32 2147483647, %v6564
  %vm6671 = vcmp.eq.f32.partialorder %v6670, 8.507059e+37
  %v6672 = vand.u32 %v6564, 2147483648
  %v6673 = vor.u32 1.1754944e-38, %v6672
  %v6674 = vsel %vm6671, %v6673, %v6669
  %v6675 = vmul.f32 %v6422, %v6674
  %v6676 = vrcp.pop %v6571
  %v6677 = vmul.f32 %v6571, %v6676
  %v6678 = vsub.f32 1.0, %v6677
  %v6679 = vmul.f32 %v6676, %v6678
  %v6680 = vadd.f32 %v6676, %v6679
  %vm6681 = vweird.f32 %v6571
  %vm6682 = vweird.f32 %v6676
  %vm6683 = vmor %vm6681, %vm6682
  %v6684 = vsel %vm6683, %v6676, %v6680
  %v6685 = vand.u32 2147483647, %v6571
  %vm6686 = vcmp.eq.f32.partialorder %v6685, 8.507059e+37
  %v6687 = vand.u32 %v6571, 2147483648
  %v6688 = vor.u32 1.1754944e-38, %v6687
  %v6689 = vsel %vm6686, %v6688, %v6684
  %v6690 = vmul.f32 %v6425, %v6689
  %v6691 = vrcp.pop %v6577
  %v6692 = vmul.f32 %v6577, %v6691
  %v6693 = vsub.f32 1.0, %v6692
  %v6694 = vmul.f32 %v6691, %v6693
  %v6695 = vadd.f32 %v6691, %v6694
  %vm6696 = vweird.f32 %v6577
  %vm6697 = vweird.f32 %v6691
  %vm6698 = vmor %vm6696, %vm6697
  %v6699 = vsel %vm6698, %v6691, %v6695
  %v6700 = vand.u32 2147483647, %v6577
  %vm6701 = vcmp.eq.f32.partialorder %v6700, 8.507059e+37
  %v6702 = vand.u32 %v6577, 2147483648
  %v6703 = vor.u32 1.1754944e-38, %v6702
  %v6704 = vsel %vm6701, %v6703, %v6699
  %v6705 = vmul.f32 %v6428, %v6704
  %6707 = vset.pattern.permute.xlu0 16
  %6708 = vperm.xlu0 %6707, %v6337
  %v6709 = vpop.permute.xlu0 %6708
  %6719 = vset.pattern.permute.xlu0 0
  %6720 = vperm.xlu0 %6719, %v6600
  %v6721 = vpop.permute.xlu0 %6720
  %6722 = vset.pattern.permute.xlu0 0
  %6723 = vperm.xlu0 %6722, %v6615
  %v6724 = vpop.permute.xlu0 %6723
  %6725 = vset.pattern.permute.xlu0 0
  %6726 = vperm.xlu0 %6725, %v6630
  %v6727 = vpop.permute.xlu0 %6726
  %6728 = vset.pattern.permute.xlu0 0
  %6729 = vperm.xlu0 %6728, %v6645
  %v6730 = vpop.permute.xlu0 %6729
  %6731 = vset.pattern.permute.xlu0 0
  %6732 = vperm.xlu0 %6731, %v6660
  %v6733 = vpop.permute.xlu0 %6732
  %6734 = vset.pattern.permute.xlu0 0
  %6735 = vperm.xlu0 %6734, %v6675
  %v6736 = vpop.permute.xlu0 %6735
  %6737 = vset.pattern.permute.xlu0 0
  %6738 = vperm.xlu0 %6737, %v6690
  %v6739 = vpop.permute.xlu0 %6738
  %6740 = vset.pattern.permute.xlu0 0
  %6741 = vperm.xlu0 %6740, %v6705
  %v6742 = vpop.permute.xlu0 %6741
  %v6743 = vperm.slane %v6721, %v401
  %v6744 = vperm.slane %v6724, %v403
  %v6745 = vsel %vm405, %v6744, %v6743
  %v6746 = vperm.slane %v6727, %v401
  %v6747 = vperm.slane %v6730, %v403
  %v6748 = vsel %vm405, %v6747, %v6746
  %v6749 = vperm.slane %v6733, %v401
  %v6750 = vperm.slane %v6736, %v403
  %v6751 = vsel %vm405, %v6750, %v6749
  %v6752 = vperm.slane %v6739, %v401
  %v6753 = vperm.slane %v6742, %v403
  %v6754 = vsel %vm405, %v6753, %v6752
  %v6755 = vsel %vm410, %v6748, %v6745
  %v6756 = vsel %vm412, %v6751, %v6755
  %v6757 = vsel %vm414, %v6754, %v6756
  %v6759 = vmul.f32 %v6709, %v6757
  %v6760 = vsel %vm316, %v6759, -inf
  %6761 = vmax.xlane.f32.xlu0 %v6760
  %v6762 = vpop.xlane.xlu0 %6761
  %v6763 = vsub.f32 %v6759, %v6762
  %v6764 = vmul.f32 %v6763, 1.442695
  %v6765 = vpow.pop %v6764
  %v6766 = vsel %vm316, %v6765, 0.0
  %6767 = vadd.xlane.f32.xlu0 %v6766
  %v6768 = vpop.xlane.xlu0 %6767
  %v6769 = vrcp.pop %v6768
  %v6770 = vmul.f32 %v6768, %v6769
  %v6771 = vsub.f32 1.0, %v6770
  %v6772 = vmul.f32 %v6769, %v6771
  %v6773 = vadd.f32 %v6769, %v6772
  %vm6774 = vweird.f32 %v6768
  %vm6775 = vweird.f32 %v6769
  %vm6776 = vmor %vm6774, %vm6775
  %v6777 = vsel %vm6776, %v6769, %v6773
  %v6778 = vand.u32 2147483647, %v6768
  %vm6779 = vcmp.eq.f32.partialorder %v6778, 8.507059e+37
  %v6780 = vand.u32 %v6768, 2147483648
  %v6781 = vor.u32 1.1754944e-38, %v6780
  %v6782 = vsel %vm6779, %v6781, %v6777
  %v6783 = vmul.f32 %v6765, %v6782
  %6785 = vset.pattern.permute.xlu0 17
  %6786 = vperm.xlu0 %6785, %v6356
  %v6787 = vpop.permute.xlu0 %6786
  %v6789 = vmul.f32 %v6787, %v6783
  %v6790 = vsub.f32 1.0, %v6356
  %6792 = vset.pattern.permute.xlu0 17
  %6793 = vperm.xlu0 %6792, %v6790
  %v6794 = vpop.permute.xlu0 %6793
  %v6796 = vmul.f32 %v6794, %v5988
  %v6797 = vadd.f32 %v6789, %v6796
  %6799 = vset.pattern.permute.xlu0 18
  %6800 = vperm.xlu0 %6799, %v6384
  %v6801 = vpop.permute.xlu0 %6800
  %v6803 = vmul.f32 %v6801, %v6797
  %v6804 = vadd.f32 %v6803, 0.0
  %6806 = vrot.lane.b32.xlu0 %v6797, 113
  %v6807 = vpop.permute.xlu0 %6806
  %6809 = vrot.lane.b32.xlu0 %v6797, 1
  %v6810 = vpop.permute.xlu0 %6809
  %v6812 = vsel %vm706, %v6807, %v6810
  %6813 = vset.pattern.permute.xlu0 19
  %6814 = vperm.xlu0 %6813, %v6384
  %v6815 = vpop.permute.xlu0 %6814
  %v6817 = vmul.f32 %v6815, %v6812
  %v6818 = vadd.f32 %v6804, %v6817
  %6819 = vrot.lane.b32.xlu0 %v6797, 127
  %v6820 = vpop.permute.xlu0 %6819
  %6822 = vrot.lane.b32.xlu0 %v6797, 15
  %v6823 = vpop.permute.xlu0 %6822
  %v6825 = vsel %vm720, %v6820, %v6823
  %6826 = vset.pattern.permute.xlu0 20
  %6827 = vperm.xlu0 %6826, %v6384
  %v6828 = vpop.permute.xlu0 %6827
  %v6830 = vmul.f32 %v6828, %v6825
  %v6831 = vadd.f32 %v6818, %v6830
  %v6832 = vadd.f32 %v6831, 1e-08
  %v6833 = vlog2.pop %v6832
  %v6834 = vmul.f32 %v6833, 0.6931472
  %6835 = vset.pattern.permute.xlu0 21
  %6836 = vperm.xlu0 %6835, %v6337
  %v6837 = vpop.permute.xlu0 %6836
  %v6839 = vmul.f32 %v6837, %v6834
  %v6840 = vmul.f32 %v6839, 1.442695
  %v6841 = vpow.pop %v6840
  %v6842 = vsel %vm316, %v6841, 0.0
  %6843 = vadd.xlane.f32.xlu0 %v6842
  %v6844 = vpop.xlane.xlu0 %6843
  %v6845 = vrcp.pop %v6844
  %v6846 = vmul.f32 %v6844, %v6845
  %v6847 = vsub.f32 1.0, %v6846
  %v6848 = vmul.f32 %v6845, %v6847
  %v6849 = vadd.f32 %v6845, %v6848
  %vm6850 = vweird.f32 %v6844
  %vm6851 = vweird.f32 %v6845
  %vm6852 = vmor %vm6850, %vm6851
  %v6853 = vsel %vm6852, %v6845, %v6849
  %v6854 = vand.u32 2147483647, %v6844
  %vm6855 = vcmp.eq.f32.partialorder %v6854, 8.507059e+37
  %v6856 = vand.u32 %v6844, 2147483648
  %v6857 = vor.u32 1.1754944e-38, %v6856
  %v6858 = vsel %vm6855, %v6857, %v6853
  %v6859 = vmul.f32 %v6841, %v6858
  %v6860 = vperm.slane %v6859, 0
  %v6861 = vlaneseq
  %v6862 = vshrl.u32 %v6861, 7
  %6864 = vset.pattern.permute.xlu0 %v6862
  %6865 = vperm.xlu0 %6864, %v6860
  %v6866 = vpop.permute.xlu0 %6865
  %v6867 = vlaneseq
  %v6868 = vshrl.u32 %v6867, 7
  %v6869 = vadd.s32 %v6868, 8
  %6870 = vset.pattern.permute.xlu0 %v6869
  %6871 = vperm.xlu0 %6870, %v6860
  %v6872 = vpop.permute.xlu0 %6871
  %v6873 = vperm.slane %v6859, 1
  %v6874 = vlaneseq
  %v6875 = vshrl.u32 %v6874, 7
  %6877 = vset.pattern.permute.xlu0 %v6875
  %6878 = vperm.xlu0 %6877, %v6873
  %v6879 = vpop.permute.xlu0 %6878
  %v6880 = vlaneseq
  %v6881 = vshrl.u32 %v6880, 7
  %v6882 = vadd.s32 %v6881, 8
  %6883 = vset.pattern.permute.xlu0 %v6882
  %6884 = vperm.xlu0 %6883, %v6873
  %v6885 = vpop.permute.xlu0 %6884
  %v6886 = vmul.f32 %v6866, %v6143
  %v6887 = vmul.f32 %v6872, %v6144
  %v6888 = vmul.f32 %v6879, %v6145
  %v6889 = vmul.f32 %v6885, %v6146
  %v6890 = vsel %vm290, %v6886, 0.0
  %v6891 = vsel %vm290, %v6887, 0.0
  %v6892 = vadd.f32 %v6890, %v6891
  %v6893 = vrot.slane %v6892, 4
  %v6894 = vadd.f32 %v6892, %v6893
  %v6895 = vrot.slane %v6894, 2
  %v6896 = vadd.f32 %v6894, %v6895
  %v6897 = vrot.slane %v6896, 1
  %v6898 = vadd.f32 %v6896, %v6897
  %v6899 = vsel %vm290, %v6888, 0.0
  %v6900 = vsel %vm290, %v6889, 0.0
  %v6901 = vadd.f32 %v6899, %v6900
  %v6902 = vrot.slane %v6901, 4
  %v6903 = vadd.f32 %v6901, %v6902
  %v6904 = vrot.slane %v6903, 2
  %v6905 = vadd.f32 %v6903, %v6904
  %v6906 = vrot.slane %v6905, 1
  %v6907 = vadd.f32 %v6905, %v6906
  %v6911 = vsel %vm410, %v6907, %v6898
  %6912 = vrot.lane.b32.xlu0 %v6911, 32
  %v6913 = vpop.permute.xlu0 %6912
  %v6915 = vsel %vm178, %v6299, %v6913
  %v6917 = vsel %vm925, %v6915, 0
  %6919 = vmatpush.msra.mxu0 0.0
  %6920 = vmatpush.msra.mxu0 0.0
  %6921 = vmatpush.msra.mxu0 0.0
  %6922 = vmatpush.msra.mxu0 0.0
  %6923 = vmatpush.msra.mxu0 0.0
  %6924 = vmatpush.msra.mxu0 0.0
  %6925 = vmatpush.msra.mxu0 0.0
  %6926 = vmatpush.msra.mxu0 0.0
  %6927 = vmatpush.msra.mxu0 0.0
  %6928 = vmatpush.msra.mxu0 0.0
  %6929 = vmatpush.msra.mxu0 %v69
  %6930 = vmatpush.msra.mxu0 %v68
  %6931 = vmatpush.msra.mxu0 %v67
  %6932 = vmatpush.msra.mxu0 %v66
  %6933 = vmatpush.msra.mxu0 %v65
  %6934 = vmatpush.msra.mxu0 %v64
  %6935 = vmatmul.f32.gmra.mxu0 %v6917
  %v6936 = vpop.f32.mrf.mxu0
  %v6937 = vadd.f32 %v923, %v6936
  %6938 = vdwg.mxu0
  %v6939 = vmax.f32 %v6937, -20.0
  %v6940 = vmin.f32 %v6939, 20.0
  %v6942 = vsel %vm178, %v6940, 0
  %6944 = vmatpush.msra.mxu0 0.0
  %6945 = vmatpush.msra.mxu0 0.0
  %6946 = vmatpush.msra.mxu0 0.0
  %6947 = vmatpush.msra.mxu0 0.0
  %6948 = vmatpush.msra.mxu0 0.0
  %6949 = vmatpush.msra.mxu0 0.0
  %6950 = vmatpush.msra.mxu0 0.0
  %6951 = vmatpush.msra.mxu0 0.0
  %6952 = vmatpush.msra.mxu0 0.0
  %6953 = vmatpush.msra.mxu0 0.0
  %6954 = vmatpush.msra.mxu0 0.0
  %6955 = vmatpush.msra.mxu0 0.0
  %6956 = vmatpush.msra.mxu0 %v74
  %6957 = vmatpush.msra.mxu0 %v73
  %6958 = vmatpush.msra.mxu0 %v72
  %6959 = vmatpush.msra.mxu0 %v71
  %6960 = vmatmul.f32.gmra.mxu0 %v6942
  %v6961 = vpop.f32.mrf.mxu0
  %v6962 = vadd.f32 %v952, %v6961
  %6963 = vdwg.mxu0
  %v6964 = vsub.f32 0.0, %v6962
  %v6965 = vmul.f32 %v6964, 1.442695
  %v6966 = vpow.pop %v6965
  %v6967 = vadd.f32 %v6966, 1.0
  %v6968 = vrcp.pop %v6967
  %v6969 = vmul.f32 %v6967, %v6968
  %v6970 = vsub.f32 1.0, %v6969
  %v6971 = vmul.f32 %v6968, %v6970
  %v6972 = vadd.f32 %v6968, %v6971
  %vm6973 = vweird.f32 %v6967
  %vm6974 = vweird.f32 %v6968
  %vm6975 = vmor %vm6973, %vm6974
  %v6976 = vsel %vm6975, %v6968, %v6972
  %v6977 = vand.u32 2147483647, %v6967
  %vm6978 = vcmp.eq.f32.partialorder %v6977, 8.507059e+37
  %v6979 = vand.u32 %v6967, 2147483648
  %v6980 = vor.u32 1.1754944e-38, %v6979
  %v6981 = vsel %vm6978, %v6980, %v6976
  %v6982 = vmul.f32 1.0, %v6981
  %s6983 = scalar_lea.vmem %s15, 14
  %6984 = vst.msk [vmem:[%s6983] sm:$0x3] %vm996, %v6982
  // Predicated region
  $region62: #{ntm_forward.1} parent=0 // pred_check
    _
  $region63: #{ntm_forward.1} parent=0 // pred_check_branch
    %6986 = sbr.rel (0) target = $region65
  $region64: #{ntm_forward.1} parent=0 // pred_region
    _
  $region65: #{ntm_forward.1} parent=0 // pred_fallthru
    _
  // Predicated region
  $region66: #{ntm_forward.1} parent=0 // pred_check
    _
  $region67: #{ntm_forward.1} parent=0 // pred_check_branch
    %6988 = sbr.rel (0) target = $region69
  $region68: #{ntm_forward.1} parent=0 // pred_region
    _
  $region69: #{ntm_forward.1} parent=0 // pred_fallthru
    _

</llo_original>
